<compile_context>
chip_gen: v6e
topology: v6e:2x2x1
jax: 0.10.0
libtpu: 0.0.40
codegen_flags: <defaults>
</compile_context>

<pallas_src>
import functools

import numpy as np
import jax
import jax.numpy as jnp
from jax.experimental import pallas as pl
from jax.experimental.pallas import tpu as pltpu

# --- DiscreteVAE constants from get_d_vae in the reference module ---
NUM_TOKENS = 8192
NUM_LAYERS = 3
HID_DIM = 256
CHANNELS = 3
IMAGE_SIZE = 16
MIM_PROBABILITY = 0.4

KSIZE, STRIDE, PAD = 4, 2, 1
KK = KSIZE * KSIZE          # 16 kernel taps
K1_PAD = 64                 # layer-1 im2col feature dim (3*16=48) padded to 64 (lane alignment)
TOKEN_TILE = 4096           # 8192 tokens in 2 tiles (int8 tile = 1 MiB, double-buffered)


# ----------------------------------------------------------------------------
# Fused kernel: encoder (step 0) -> streamed token-head argmax -> MIM mask epilogue
# ----------------------------------------------------------------------------
def _fused_mim_kernel(cols0_ref, w1_ref, b1_ref,                 # layer 1 (im2col'd, bf16)
                      g2_ref, w2_ref, s2_ref, b2_ref,            # layer 2 (gather + int8 weights)
                      g3_ref, w3_ref, s3_ref, b3_ref,            # layer 3 (gather + int8 weights)
                      wt_ref, st_ref, bt_ref,                    # token head tile (int8 + scale)
                      unif_ref,                                  # Bernoulli uniforms [M3,1]
                      labels_ref, mask_ref,                      # outputs
                      act3_ref, patch2_ref, patch3_ref,          # VMEM scratch
                      run_max_ref, run_arg_ref,                  # running argmax carry
                      *, token_tile, mim_probability):
    j = pl.program_id(0)

    # ---- step 0: whole encoder, computed once, final activation stays in VMEM scratch ----
    @pl.when(j == 0)
    def _():
        # Layer 1: plain matmul on pre-extracted (and lane-padded) patches.
        a1 = jnp.dot(cols0_ref[...], w1_ref[...], preferred_element_type=jnp.float32)
        a1 = jnp.maximum(a1 + b1_ref[...], 0.0).astype(jnp.bfloat16)

        # Layer 2: conv(k=4,s=2,p=1): 16 exact 0/1-gather matmuls write lane-aligned column
        # slices of the patch scratch, then ONE fused [M,4096]@[4096,256] weight matmul.
        for k in range(KK):
            pk = jnp.dot(g2_ref[k], a1, preferred_element_type=jnp.float32)   # exact selection
            patch2_ref[:, k * HID_DIM:(k + 1) * HID_DIM] = pk.astype(jnp.bfloat16)
        acc2 = jnp.dot(patch2_ref[...], w2_ref[...].astype(jnp.bfloat16),
                       preferred_element_type=jnp.float32)
        a2 = jnp.maximum(acc2 * s2_ref[...] + b2_ref[...], 0.0).astype(jnp.bfloat16)

        # Layer 3: same trick, 4x4 -> 2x2 spatial.
        for k in range(KK):
            pk = jnp.dot(g3_ref[k], a2, preferred_element_type=jnp.float32)
            patch3_ref[:, k * HID_DIM:(k + 1) * HID_DIM] = pk.astype(jnp.bfloat16)
        acc3 = jnp.dot(patch3_ref[...], w3_ref[...].astype(jnp.bfloat16),
                       preferred_element_type=jnp.float32)
        a3 = jnp.maximum(acc3 * s3_ref[...] + b3_ref[...], 0.0)
        act3_ref[...] = a3.astype(jnp.bfloat16)

        run_max_ref[...] = jnp.full(run_max_ref.shape, -jnp.inf, jnp.float32)
        run_arg_ref[...] = jnp.zeros(run_arg_ref.shape, jnp.int32)

    # ---- every step: token logits for this 4096-wide tile + running (max, argmax) ----
    wt_bf = wt_ref[...].astype(jnp.bfloat16)                     # int8 -> bf16 on the VPU (slack)
    logits = jnp.dot(act3_ref[...], wt_bf, preferred_element_type=jnp.float32)
    logits = logits * st_ref[...] + bt_ref[...]                  # per-token dequant scale + bias
    col = jax.lax.broadcasted_iota(jnp.int32, logits.shape, 1) + j * token_tile
    tile_max = jnp.max(logits, axis=-1, keepdims=True)
    big = jnp.iinfo(jnp.int32).max
    tile_arg = jnp.min(jnp.where(logits == tile_max, col, big), axis=-1, keepdims=True)
    better = tile_max > run_max_ref[...]        # strict '>' keeps first occurrence across tiles
    run_arg_ref[...] = jnp.where(better, tile_arg, run_arg_ref[...])
    run_max_ref[...] = jnp.maximum(run_max_ref[...], tile_max)

    # ---- last step: Bernoulli mask (wrapper-drawn uniforms) + -100 labeling ----
    @pl.when(j == pl.num_programs(0) - 1)
    def _():
        ids = run_arg_ref[...]                                   # [M3, 1] int32
        keep = unif_ref[...] < mim_probability                   # P(keep) == mim_probability
        mask_ref[...] = keep.astype(jnp.float32)
        labels_ref[...] = jnp.where(keep, ids, jnp.full(ids.shape, -100, jnp.int32))


# ----------------------------------------------------------------------------
# Host-side setup: synthetic weights (PyTorch layout), packing/quantization, gather matrices
# ----------------------------------------------------------------------------
def init_params(key):
    """Deterministic synthetic weights in PyTorch [Cout, Cin, kh, kw] layout (no checkpoint)."""
    keys = jax.random.split(key, 2 * NUM_LAYERS + 2)
    conv_ws, conv_bs = [], []
    in_ch = CHANNELS
    for l in range(NUM_LAYERS):
        fan_in = in_ch * KK
        w = jax.random.normal(keys[2 * l], (HID_DIM, in_ch, KSIZE, KSIZE), jnp.float32) / jnp.sqrt(fan_in)
        b = 0.01 * jax.random.normal(keys[2 * l + 1], (HID_DIM,), jnp.float32)
        conv_ws.append(w)
        conv_bs.append(b)
        in_ch = HID_DIM
    wt = jax.random.normal(keys[-2], (NUM_TOKENS, HID_DIM, 1, 1), jnp.float32) / jnp.sqrt(HID_DIM)
    bt = 0.01 * jax.random.normal(keys[-1], (NUM_TOKENS,), jnp.float32)
    return conv_ws, conv_bs, wt, bt


def _quant_per_col(w):
    """Symmetric per-output-column int8 quantization: w ~= w_i8 * scale  (scale: [1, N] f32)."""
    amax = jnp.max(jnp.abs(w), axis=0, keepdims=True)
    scale = jnp.where(amax > 0, amax / 127.0, jnp.ones_like(amax))
    w_i8 = jnp.clip(jnp.round(w / scale), -127, 127).astype(jnp.int8)
    return w_i8, scale.astype(jnp.float32)


def pack_params(params):
    """PyTorch-layout weights -> kernel-ready matrices (w1 bf16; w2/w3/wt int8 + f32 scales)."""
    conv_ws, conv_bs, wt, bt = params
    # layer 1: [Cout,Cin,4,4] -> [(kh*4+kw)*Cin + c, Cout], rows zero-padded 48 -> 64
    w1 = jnp.transpose(conv_ws[0], (2, 3, 1, 0)).reshape(KK * CHANNELS, HID_DIM)
    w1 = jnp.pad(w1, ((0, K1_PAD - KK * CHANNELS), (0, 0))).astype(jnp.bfloat16)
    # layers 2/3: [Cout,Cin,4,4] -> [(kh*4+kw)*Cin + cin, Cout]  (matches patch column order)
    w2 = jnp.transpose(conv_ws[1], (2, 3, 1, 0)).reshape(KK * HID_DIM, HID_DIM)
    w3 = jnp.transpose(conv_ws[2], (2, 3, 1, 0)).reshape(KK * HID_DIM, HID_DIM)
    w2_i8, s2 = _quant_per_col(w2)
    w3_i8, s3 = _quant_per_col(w3)
    # token head: [NUM_TOKENS, HID, 1, 1] -> [HID, NUM_TOKENS], per-token-column int8 scales
    wt_m = wt.reshape(NUM_TOKENS, HID_DIM).T
    wt_i8, st = _quant_per_col(wt_m)
    b1 = conv_bs[0].reshape(1, HID_DIM)
    b2 = conv_bs[1].reshape(1, HID_DIM)
    b3 = conv_bs[2].reshape(1, HID_DIM)
    bt_m = bt.reshape(1, NUM_TOKENS)
    return w1, b1, w2_i8, s2, b2, w3_i8, s3, b3, wt_i8, st, bt_m


def _conv_gather_mats(B, H, W):
    """0/1 selection matrices G[k] with G[k] @ A == k-th shifted (stride-2, pad-1) patch rows.

    A is the NHWC-flattened activation [B*H*W, C]; rows of G[k] index output positions
    (b, oi, oj) row-major, zero rows encode the padding."""
    Ho = (H + 2 * PAD - KSIZE) // STRIDE + 1
    Wo = (W + 2 * PAD - KSIZE) // STRIDE + 1
    G = np.zeros((KK, B * Ho * Wo, B * H * W), np.float32)
    for kh in range(KSIZE):
        for kw in range(KSIZE):
            k = kh * KSIZE + kw
            for b in range(B):
                for oi in range(Ho):
                    for oj in range(Wo):
                        r = STRIDE * oi + kh - PAD
                        s = STRIDE * oj + kw - PAD
                        if 0 <= r < H and 0 <= s < W:
                            G[k, b * Ho * Wo + oi * Wo + oj, b * H * W + r * W + s] = 1.0
    return jnp.asarray(G, jnp.bfloat16)   # exact 0/1 in bf16


def _im2col_layer1(images_nchw):
    """Tiny (32 KB) layer-1 patch extraction; feature order (kh,kw) outer, channel inner."""
    B = images_nchw.shape[0]
    x = jnp.transpose(images_nchw, (0, 2, 3, 1))                       # NCHW -> NHWC
    xp = jnp.pad(x, ((0, 0), (PAD, PAD), (PAD, PAD), (0, 0)))
    H = W = IMAGE_SIZE
    Ho, Wo = H // STRIDE, W // STRIDE
    patches = []
    for kh in range(KSIZE):
        for kw in range(KSIZE):
            patches.append(xp[:, kh:kh + STRIDE * Ho:STRIDE, kw:kw + STRIDE * Wo:STRIDE, :])
    cols = jnp.stack(patches, axis=3).reshape(B * Ho * Wo, KK * CHANNELS)
    cols = jnp.pad(cols, ((0, 0), (0, K1_PAD - KK * CHANNELS)))        # K: 48 -> 64
    return cols.astype(jnp.bfloat16), Ho, Wo


# ----------------------------------------------------------------------------
# Forward: one fused pallas_call
# ----------------------------------------------------------------------------
@functools.partial(jax.jit, static_argnames=("mim_probability",))
def mim_processor_forward(images_nchw, packed, rng_key, mim_probability=MIM_PROBABILITY):
    w1, b1, w2_i8, s2, b2, w3_i8, s3, b3, wt_i8, st, bt_m = packed
    B = images_nchw.shape[0]

    cols0, Ho1, Wo1 = _im2col_layer1(images_nchw)       # [B*64, 64] bf16
    Ho2, Wo2 = Ho1 // 2, Wo1 // 2                       # 8 -> 4
    Ho3, Wo3 = Ho2 // 2, Wo2 // 2                       # 4 -> 2
    g2 = _conv_gather_mats(B, Ho1, Wo1)                 # [16, B*16, B*64]
    g3 = _conv_gather_mats(B, Ho2, Wo2)                 # [16, B*4,  B*16]

    M1 = B * Ho1 * Wo1                                  # 128
    M2 = B * Ho2 * Wo2                                  # 32
    M3 = B * Ho3 * Wo3                                  # 8  (token-head rows)
    n_tiles = NUM_TOKENS // TOKEN_TILE                  # 2

    # Bernoulli uniforms drawn in the wrapper (TPU hardware PRNG has no interpret lowering).
    uniforms = jax.random.uniform(rng_key, (M3, 1), jnp.float32)

    kernel = functools.partial(_fused_mim_kernel, token_tile=TOKEN_TILE,
                               mim_probability=mim_probability)
    resident = dict(pipeline_mode=pl.Buffered(1))       # single-buffer the grid-invariant inputs

    labels_flat, mask_flat = pl.pallas_call(
        kernel,
        out_shape=(jax.ShapeDtypeStruct((M3, 1), jnp.int32),
                   jax.ShapeDtypeStruct((M3, 1), jnp.float32)),
        grid_spec=pltpu.PrefetchScalarGridSpec(
            num_scalar_prefetch=0,
            grid=(n_tiles,),
            in_specs=[
                pl.BlockSpec((M1, K1_PAD), lambda j: (0, 0), **resident),               # cols0
                pl.BlockSpec((K1_PAD, HID_DIM), lambda j: (0, 0), **resident),          # w1
                pl.BlockSpec((1, HID_DIM), lambda j: (0, 0), **resident),               # b1
                pl.BlockSpec((KK, M2, M1), lambda j: (0, 0, 0), **resident),            # g2
                pl.BlockSpec((KK * HID_DIM, HID_DIM), lambda j: (0, 0), **resident),    # w2 int8
                pl.BlockSpec((1, HID_DIM), lambda j: (0, 0), **resident),               # s2
                pl.BlockSpec((1, HID_DIM), lambda j: (0, 0), **resident),               # b2
                pl.BlockSpec((KK, M3, M2), lambda j: (0, 0, 0), **resident),            # g3
                pl.BlockSpec((KK * HID_DIM, HID_DIM), lambda j: (0, 0), **resident),    # w3 int8
                pl.BlockSpec((1, HID_DIM), lambda j: (0, 0), **resident),               # s3
                pl.BlockSpec((1, HID_DIM), lambda j: (0, 0), **resident),               # b3
                pl.BlockSpec((HID_DIM, TOKEN_TILE), lambda j: (0, j)),                  # wt tile int8
                pl.BlockSpec((1, TOKEN_TILE), lambda j: (0, j)),                        # st tile
                pl.BlockSpec((1, TOKEN_TILE), lambda j: (0, j)),                        # bt tile
                pl.BlockSpec((M3, 1), lambda j: (0, 0), **resident),                    # uniforms
            ],
            out_specs=(pl.BlockSpec((M3, 1), lambda j: (0, 0)),
                       pl.BlockSpec((M3, 1), lambda j: (0, 0))),
            scratch_shapes=[pltpu.VMEM((M3, HID_DIM), jnp.bfloat16),        # act3 (resident)
                            pltpu.VMEM((M2, KK * HID_DIM), jnp.bfloat16),   # layer-2 patches
                            pltpu.VMEM((M3, KK * HID_DIM), jnp.bfloat16),   # layer-3 patches
                            pltpu.VMEM((M3, 1), jnp.float32),               # running max
                            pltpu.VMEM((M3, 1), jnp.int32)],                # running argmax
        ),
        compiler_params=pltpu.CompilerParams(
            dimension_semantics=("arbitrary",),          # token axis carries the argmax reduction
            vmem_limit_bytes=16 * 1024 * 1024),          # ~5 MiB used; leaves Mosaic headroom
    )(cols0, w1, b1, g2, w2_i8, s2, b2, g3, w3_i8, s3, b3, wt_i8, st, bt_m, uniforms)

    n_tok = Ho3 * Wo3
    labels = labels_flat.reshape(B, n_tok)               # int32 (reference would be int64)
    bool_mask = mask_flat.reshape(B, n_tok)
    return labels, bool_mask


if __name__ == "__main__":
    key = jax.random.PRNGKey(0)
    k_param, k_img, k_mask = jax.random.split(key, 3)

    params = init_params(k_param)
    packed = pack_params(params)

    # PyTorch-convention NCHW images: batch=2, channels=3, 16x16
    images = jax.random.normal(k_img, (2, CHANNELS, IMAGE_SIZE, IMAGE_SIZE), jnp.float32)

    labels, bool_mask = mim_processor_forward(images, packed, k_mask)
    jax.block_until_ready((labels, bool_mask))

    n_tok = (IMAGE_SIZE // 8) ** 2
    assert labels.shape == (2, n_tok) and labels.dtype == jnp.int32
    assert bool_mask.shape == (2, n_tok) and bool_mask.dtype == jnp.float32
    m = np.asarray(bool_mask)
    l = np.asarray(labels)
    assert set(np.unique(m)).issubset({0.0, 1.0})
    assert np.all(l[m == 0.0] == -100)
    assert np.all((l[m == 1.0] >= 0) & (l[m == 1.0] < NUM_TOKENS))
    print("KERNEL_OK")
</pallas_src>

<mosaic_0001>
module attributes {stable_mosaic.version = 11 : i64} {
  func.func @_fused_mim_kernel(%arg0: i32, %arg1: memref<128x64xbf16, #tpu.memory_space<vmem>>, %arg2: memref<64x256xbf16, #tpu.memory_space<vmem>>, %arg3: memref<1x256xf32, #tpu.memory_space<vmem>>, %arg4: memref<16x32x128xbf16, #tpu.memory_space<vmem>>, %arg5: memref<4096x256xi8, #tpu.memory_space<vmem>>, %arg6: memref<1x256xf32, #tpu.memory_space<vmem>>, %arg7: memref<1x256xf32, #tpu.memory_space<vmem>>, %arg8: memref<16x8x32xbf16, #tpu.memory_space<vmem>>, %arg9: memref<4096x256xi8, #tpu.memory_space<vmem>>, %arg10: memref<1x256xf32, #tpu.memory_space<vmem>>, %arg11: memref<1x256xf32, #tpu.memory_space<vmem>>, %arg12: memref<256x4096xi8, #tpu.memory_space<vmem>>, %arg13: memref<1x4096xf32, #tpu.memory_space<vmem>>, %arg14: memref<1x4096xf32, #tpu.memory_space<vmem>>, %arg15: memref<8x1xf32, #tpu.memory_space<vmem>>, %arg16: memref<8x1xi32, #tpu.memory_space<vmem>>, %arg17: memref<8x1xf32, #tpu.memory_space<vmem>>, %arg18: memref<8x256xbf16, #tpu.memory_space<vmem>>, %arg19: memref<32x4096xbf16, #tpu.memory_space<vmem>>, %arg20: memref<8x4096xbf16, #tpu.memory_space<vmem>>, %arg21: memref<8x1xf32, #tpu.memory_space<vmem>>, %arg22: memref<8x1xi32, #tpu.memory_space<vmem>>) attributes {dimension_semantics = [#tpu.dimension_semantics<arbitrary>], iteration_bounds = array<i64: 2>, scalar_prefetch = 0 : i64, scratch_operands = 5 : i64, tpu.core_type = #tpu.core_type<tc>, window_params = [{pipeline_mode = #tpu.pipeline_mode<synchronous>, transform_indices = @transform_0, window_bounds = array<i64: 128, 64>}, {pipeline_mode = #tpu.pipeline_mode<synchronous>, transform_indices = @transform_1, window_bounds = array<i64: 64, 256>}, {pipeline_mode = #tpu.pipeline_mode<synchronous>, transform_indices = @transform_2, window_bounds = array<i64: 1, 256>}, {pipeline_mode = #tpu.pipeline_mode<synchronous>, transform_indices = @transform_3, window_bounds = array<i64: 16, 32, 128>}, {pipeline_mode = #tpu.pipeline_mode<synchronous>, transform_indices = @transform_4, window_bounds = array<i64: 4096, 256>}, {pipeline_mode = #tpu.pipeline_mode<synchronous>, transform_indices = @transform_5, window_bounds = array<i64: 1, 256>}, {pipeline_mode = #tpu.pipeline_mode<synchronous>, transform_indices = @transform_6, window_bounds = array<i64: 1, 256>}, {pipeline_mode = #tpu.pipeline_mode<synchronous>, transform_indices = @transform_7, window_bounds = array<i64: 16, 8, 32>}, {pipeline_mode = #tpu.pipeline_mode<synchronous>, transform_indices = @transform_8, window_bounds = array<i64: 4096, 256>}, {pipeline_mode = #tpu.pipeline_mode<synchronous>, transform_indices = @transform_9, window_bounds = array<i64: 1, 256>}, {pipeline_mode = #tpu.pipeline_mode<synchronous>, transform_indices = @transform_10, window_bounds = array<i64: 1, 256>}, {transform_indices = @transform_11, window_bounds = array<i64: 256, 4096>}, {transform_indices = @transform_12, window_bounds = array<i64: 1, 4096>}, {transform_indices = @transform_13, window_bounds = array<i64: 1, 4096>}, {pipeline_mode = #tpu.pipeline_mode<synchronous>, transform_indices = @transform_14, window_bounds = array<i64: 8, 1>}, {pipeline_mode = #tpu.pipeline_mode<synchronous>, transform_indices = @transform_15, window_bounds = array<i64: 8, 1>}, {pipeline_mode = #tpu.pipeline_mode<synchronous>, transform_indices = @transform_16, window_bounds = array<i64: 8, 1>}]} {
    %c0_i32 = arith.constant 0 : i32
    %0 = arith.cmpi eq, %arg0, %c0_i32 : i32
    %1 = arith.extui %0 : i1 to i32
    %c0_i32_0 = arith.constant 0 : i32
    %2 = arith.cmpi ne, %1, %c0_i32_0 : i32
    scf.if %2 {
      %c0_21 = arith.constant 0 : index
      %c0_22 = arith.constant 0 : index
      %36 = vector.load %arg1[%c0_21, %c0_22] : memref<128x64xbf16, #tpu.memory_space<vmem>>, vector<128x64xbf16>
      %c0_23 = arith.constant 0 : index
      %c0_24 = arith.constant 0 : index
      %37 = vector.load %arg2[%c0_23, %c0_24] : memref<64x256xbf16, #tpu.memory_space<vmem>>, vector<64x256xbf16>
      %cst_25 = arith.constant dense<0.000000e+00> : vector<128x256xf32>
      %38 = tpu.matmul %36, %37, %cst_25 {dimension_numbers = #tpu.dot_dimension_numbers<[1], [0], [0], [1], [0, 0, 1, 1], [], []>} : vector<128x64xbf16>, vector<64x256xbf16>, vector<128x256xf32> -> vector<128x256xf32>
      %c0_26 = arith.constant 0 : index
      %c0_27 = arith.constant 0 : index
      %39 = vector.load %arg3[%c0_26, %c0_27] : memref<1x256xf32, #tpu.memory_space<vmem>>, vector<1x256xf32>
      %40 = vector.broadcast %39 : vector<1x256xf32> to vector<128x256xf32>
      %41 = arith.addf %38, %40 : vector<128x256xf32>
      %cst_28 = arith.constant 0.000000e+00 : f32
      %42 = vector.broadcast %cst_28 : f32 to vector<128x256xf32>
      %43 = arith.maximumf %41, %42 : vector<128x256xf32>
      %44 = arith.truncf %43 : vector<128x256xf32> to vector<128x256xbf16>
      %c0_29 = arith.constant 0 : index
      %c0_30 = arith.constant 0 : index
      %c0_31 = arith.constant 0 : index
      %45 = vector.load %arg4[%c0_29, %c0_30, %c0_31] : memref<16x32x128xbf16, #tpu.memory_space<vmem>>, vector<1x32x128xbf16>
      %46 = vector.shape_cast %45 : vector<1x32x128xbf16> to vector<32x128xbf16>
      %cst_32 = arith.constant dense<0.000000e+00> : vector<32x256xf32>
      %47 = tpu.matmul %46, %44, %cst_32 {dimension_numbers = #tpu.dot_dimension_numbers<[1], [0], [0], [1], [0, 0, 1, 1], [], []>} : vector<32x128xbf16>, vector<128x256xbf16>, vector<32x256xf32> -> vector<32x256xf32>
      %48 = arith.truncf %47 : vector<32x256xf32> to vector<32x256xbf16>
      %c0_33 = arith.constant 0 : index
      %c0_34 = arith.constant 0 : index
      %49 = vector.load %arg19[%c0_33, %c0_34] : memref<32x4096xbf16, #tpu.memory_space<vmem>>, vector<32x256xbf16>
      tpu.vector_store %arg19[%c0_33, %c0_34], %48 {strides = array<i32>} : memref<32x4096xbf16, #tpu.memory_space<vmem>>, vector<32x256xbf16>,
      %c1 = arith.constant 1 : index
      %c0_35 = arith.constant 0 : index
      %c0_36 = arith.constant 0 : index
      %50 = vector.load %arg4[%c1, %c0_35, %c0_36] : memref<16x32x128xbf16, #tpu.memory_space<vmem>>, vector<1x32x128xbf16>
      %51 = vector.shape_cast %50 : vector<1x32x128xbf16> to vector<32x128xbf16>
      %cst_37 = arith.constant dense<0.000000e+00> : vector<32x256xf32>
      %52 = tpu.matmul %51, %44, %cst_37 {dimension_numbers = #tpu.dot_dimension_numbers<[1], [0], [0], [1], [0, 0, 1, 1], [], []>} : vector<32x128xbf16>, vector<128x256xbf16>, vector<32x256xf32> -> vector<32x256xf32>
      %53 = arith.truncf %52 : vector<32x256xf32> to vector<32x256xbf16>
      %c0_38 = arith.constant 0 : index
      %c256 = arith.constant 256 : index
      %54 = vector.load %arg19[%c0_38, %c256] : memref<32x4096xbf16, #tpu.memory_space<vmem>>, vector<32x256xbf16>
      tpu.vector_store %arg19[%c0_38, %c256], %53 {strides = array<i32>} : memref<32x4096xbf16, #tpu.memory_space<vmem>>, vector<32x256xbf16>,
      %c2 = arith.constant 2 : index
      %c0_39 = arith.constant 0 : index
      %c0_40 = arith.constant 0 : index
      %55 = vector.load %arg4[%c2, %c0_39, %c0_40] : memref<16x32x128xbf16, #tpu.memory_space<vmem>>, vector<1x32x128xbf16>
      %56 = vector.shape_cast %55 : vector<1x32x128xbf16> to vector<32x128xbf16>
      %cst_41 = arith.constant dense<0.000000e+00> : vector<32x256xf32>
      %57 = tpu.matmul %56, %44, %cst_41 {dimension_numbers = #tpu.dot_dimension_numbers<[1], [0], [0], [1], [0, 0, 1, 1], [], []>} : vector<32x128xbf16>, vector<128x256xbf16>, vector<32x256xf32> -> vector<32x256xf32>
      %58 = arith.truncf %57 : vector<32x256xf32> to vector<32x256xbf16>
      %c0_42 = arith.constant 0 : index
      %c512 = arith.constant 512 : index
      %59 = vector.load %arg19[%c0_42, %c512] : memref<32x4096xbf16, #tpu.memory_space<vmem>>, vector<32x256xbf16>
      tpu.vector_store %arg19[%c0_42, %c512], %58 {strides = array<i32>} : memref<32x4096xbf16, #tpu.memory_space<vmem>>, vector<32x256xbf16>,
      %c3 = arith.constant 3 : index
      %c0_43 = arith.constant 0 : index
      %c0_44 = arith.constant 0 : index
      %60 = vector.load %arg4[%c3, %c0_43, %c0_44] : memref<16x32x128xbf16, #tpu.memory_space<vmem>>, vector<1x32x128xbf16>
      %61 = vector.shape_cast %60 : vector<1x32x128xbf16> to vector<32x128xbf16>
      %cst_45 = arith.constant dense<0.000000e+00> : vector<32x256xf32>
      %62 = tpu.matmul %61, %44, %cst_45 {dimension_numbers = #tpu.dot_dimension_numbers<[1], [0], [0], [1], [0, 0, 1, 1], [], []>} : vector<32x128xbf16>, vector<128x256xbf16>, vector<32x256xf32> -> vector<32x256xf32>
      %63 = arith.truncf %62 : vector<32x256xf32> to vector<32x256xbf16>
      %c0_46 = arith.constant 0 : index
      %c768 = arith.constant 768 : index
      %64 = vector.load %arg19[%c0_46, %c768] : memref<32x4096xbf16, #tpu.memory_space<vmem>>, vector<32x256xbf16>
      tpu.vector_store %arg19[%c0_46, %c768], %63 {strides = array<i32>} : memref<32x4096xbf16, #tpu.memory_space<vmem>>, vector<32x256xbf16>,
      %c4 = arith.constant 4 : index
      %c0_47 = arith.constant 0 : index
      %c0_48 = arith.constant 0 : index
      %65 = vector.load %arg4[%c4, %c0_47, %c0_48] : memref<16x32x128xbf16, #tpu.memory_space<vmem>>, vector<1x32x128xbf16>
      %66 = vector.shape_cast %65 : vector<1x32x128xbf16> to vector<32x128xbf16>
      %cst_49 = arith.constant dense<0.000000e+00> : vector<32x256xf32>
      %67 = tpu.matmul %66, %44, %cst_49 {dimension_numbers = #tpu.dot_dimension_numbers<[1], [0], [0], [1], [0, 0, 1, 1], [], []>} : vector<32x128xbf16>, vector<128x256xbf16>, vector<32x256xf32> -> vector<32x256xf32>
      %68 = arith.truncf %67 : vector<32x256xf32> to vector<32x256xbf16>
      %c0_50 = arith.constant 0 : index
      %c1024 = arith.constant 1024 : index
      %69 = vector.load %arg19[%c0_50, %c1024] : memref<32x4096xbf16, #tpu.memory_space<vmem>>, vector<32x256xbf16>
      tpu.vector_store %arg19[%c0_50, %c1024], %68 {strides = array<i32>} : memref<32x4096xbf16, #tpu.memory_space<vmem>>, vector<32x256xbf16>,
      %c5 = arith.constant 5 : index
      %c0_51 = arith.constant 0 : index
      %c0_52 = arith.constant 0 : index
      %70 = vector.load %arg4[%c5, %c0_51, %c0_52] : memref<16x32x128xbf16, #tpu.memory_space<vmem>>, vector<1x32x128xbf16>
      %71 = vector.shape_cast %70 : vector<1x32x128xbf16> to vector<32x128xbf16>
      %cst_53 = arith.constant dense<0.000000e+00> : vector<32x256xf32>
      %72 = tpu.matmul %71, %44, %cst_53 {dimension_numbers = #tpu.dot_dimension_numbers<[1], [0], [0], [1], [0, 0, 1, 1], [], []>} : vector<32x128xbf16>, vector<128x256xbf16>, vector<32x256xf32> -> vector<32x256xf32>
      %73 = arith.truncf %72 : vector<32x256xf32> to vector<32x256xbf16>
      %c0_54 = arith.constant 0 : index
      %c1280 = arith.constant 1280 : index
      %74 = vector.load %arg19[%c0_54, %c1280] : memref<32x4096xbf16, #tpu.memory_space<vmem>>, vector<32x256xbf16>
      tpu.vector_store %arg19[%c0_54, %c1280], %73 {strides = array<i32>} : memref<32x4096xbf16, #tpu.memory_space<vmem>>, vector<32x256xbf16>,
      %c6 = arith.constant 6 : index
      %c0_55 = arith.constant 0 : index
      %c0_56 = arith.constant 0 : index
      %75 = vector.load %arg4[%c6, %c0_55, %c0_56] : memref<16x32x128xbf16, #tpu.memory_space<vmem>>, vector<1x32x128xbf16>
      %76 = vector.shape_cast %75 : vector<1x32x128xbf16> to vector<32x128xbf16>
      %cst_57 = arith.constant dense<0.000000e+00> : vector<32x256xf32>
      %77 = tpu.matmul %76, %44, %cst_57 {dimension_numbers = #tpu.dot_dimension_numbers<[1], [0], [0], [1], [0, 0, 1, 1], [], []>} : vector<32x128xbf16>, vector<128x256xbf16>, vector<32x256xf32> -> vector<32x256xf32>
      %78 = arith.truncf %77 : vector<32x256xf32> to vector<32x256xbf16>
      %c0_58 = arith.constant 0 : index
      %c1536 = arith.constant 1536 : index
      %79 = vector.load %arg19[%c0_58, %c1536] : memref<32x4096xbf16, #tpu.memory_space<vmem>>, vector<32x256xbf16>
      tpu.vector_store %arg19[%c0_58, %c1536], %78 {strides = array<i32>} : memref<32x4096xbf16, #tpu.memory_space<vmem>>, vector<32x256xbf16>,
      %c7 = arith.constant 7 : index
      %c0_59 = arith.constant 0 : index
      %c0_60 = arith.constant 0 : index
      %80 = vector.load %arg4[%c7, %c0_59, %c0_60] : memref<16x32x128xbf16, #tpu.memory_space<vmem>>, vector<1x32x128xbf16>
      %81 = vector.shape_cast %80 : vector<1x32x128xbf16> to vector<32x128xbf16>
      %cst_61 = arith.constant dense<0.000000e+00> : vector<32x256xf32>
      %82 = tpu.matmul %81, %44, %cst_61 {dimension_numbers = #tpu.dot_dimension_numbers<[1], [0], [0], [1], [0, 0, 1, 1], [], []>} : vector<32x128xbf16>, vector<128x256xbf16>, vector<32x256xf32> -> vector<32x256xf32>
      %83 = arith.truncf %82 : vector<32x256xf32> to vector<32x256xbf16>
      %c0_62 = arith.constant 0 : index
      %c1792 = arith.constant 1792 : index
      %84 = vector.load %arg19[%c0_62, %c1792] : memref<32x4096xbf16, #tpu.memory_space<vmem>>, vector<32x256xbf16>
      tpu.vector_store %arg19[%c0_62, %c1792], %83 {strides = array<i32>} : memref<32x4096xbf16, #tpu.memory_space<vmem>>, vector<32x256xbf16>,
      %c8 = arith.constant 8 : index
      %c0_63 = arith.constant 0 : index
      %c0_64 = arith.constant 0 : index
      %85 = vector.load %arg4[%c8, %c0_63, %c0_64] : memref<16x32x128xbf16, #tpu.memory_space<vmem>>, vector<1x32x128xbf16>
      %86 = vector.shape_cast %85 : vector<1x32x128xbf16> to vector<32x128xbf16>
      %cst_65 = arith.constant dense<0.000000e+00> : vector<32x256xf32>
      %87 = tpu.matmul %86, %44, %cst_65 {dimension_numbers = #tpu.dot_dimension_numbers<[1], [0], [0], [1], [0, 0, 1, 1], [], []>} : vector<32x128xbf16>, vector<128x256xbf16>, vector<32x256xf32> -> vector<32x256xf32>
      %88 = arith.truncf %87 : vector<32x256xf32> to vector<32x256xbf16>
      %c0_66 = arith.constant 0 : index
      %c2048 = arith.constant 2048 : index
      %89 = vector.load %arg19[%c0_66, %c2048] : memref<32x4096xbf16, #tpu.memory_space<vmem>>, vector<32x256xbf16>
      tpu.vector_store %arg19[%c0_66, %c2048], %88 {strides = array<i32>} : memref<32x4096xbf16, #tpu.memory_space<vmem>>, vector<32x256xbf16>,
      %c9 = arith.constant 9 : index
      %c0_67 = arith.constant 0 : index
      %c0_68 = arith.constant 0 : index
      %90 = vector.load %arg4[%c9, %c0_67, %c0_68] : memref<16x32x128xbf16, #tpu.memory_space<vmem>>, vector<1x32x128xbf16>
      %91 = vector.shape_cast %90 : vector<1x32x128xbf16> to vector<32x128xbf16>
      %cst_69 = arith.constant dense<0.000000e+00> : vector<32x256xf32>
      %92 = tpu.matmul %91, %44, %cst_69 {dimension_numbers = #tpu.dot_dimension_numbers<[1], [0], [0], [1], [0, 0, 1, 1], [], []>} : vector<32x128xbf16>, vector<128x256xbf16>, vector<32x256xf32> -> vector<32x256xf32>
      %93 = arith.truncf %92 : vector<32x256xf32> to vector<32x256xbf16>
      %c0_70 = arith.constant 0 : index
      %c2304 = arith.constant 2304 : index
      %94 = vector.load %arg19[%c0_70, %c2304] : memref<32x4096xbf16, #tpu.memory_space<vmem>>, vector<32x256xbf16>
      tpu.vector_store %arg19[%c0_70, %c2304], %93 {strides = array<i32>} : memref<32x4096xbf16, #tpu.memory_space<vmem>>, vector<32x256xbf16>,
      %c10 = arith.constant 10 : index
      %c0_71 = arith.constant 0 : index
      %c0_72 = arith.constant 0 : index
      %95 = vector.load %arg4[%c10, %c0_71, %c0_72] : memref<16x32x128xbf16, #tpu.memory_space<vmem>>, vector<1x32x128xbf16>
      %96 = vector.shape_cast %95 : vector<1x32x128xbf16> to vector<32x128xbf16>
      %cst_73 = arith.constant dense<0.000000e+00> : vector<32x256xf32>
      %97 = tpu.matmul %96, %44, %cst_73 {dimension_numbers = #tpu.dot_dimension_numbers<[1], [0], [0], [1], [0, 0, 1, 1], [], []>} : vector<32x128xbf16>, vector<128x256xbf16>, vector<32x256xf32> -> vector<32x256xf32>
      %98 = arith.truncf %97 : vector<32x256xf32> to vector<32x256xbf16>
      %c0_74 = arith.constant 0 : index
      %c2560 = arith.constant 2560 : index
      %99 = vector.load %arg19[%c0_74, %c2560] : memref<32x4096xbf16, #tpu.memory_space<vmem>>, vector<32x256xbf16>
      tpu.vector_store %arg19[%c0_74, %c2560], %98 {strides = array<i32>} : memref<32x4096xbf16, #tpu.memory_space<vmem>>, vector<32x256xbf16>,
      %c11 = arith.constant 11 : index
      %c0_75 = arith.constant 0 : index
      %c0_76 = arith.constant 0 : index
      %100 = vector.load %arg4[%c11, %c0_75, %c0_76] : memref<16x32x128xbf16, #tpu.memory_space<vmem>>, vector<1x32x128xbf16>
      %101 = vector.shape_cast %100 : vector<1x32x128xbf16> to vector<32x128xbf16>
      %cst_77 = arith.constant dense<0.000000e+00> : vector<32x256xf32>
      %102 = tpu.matmul %101, %44, %cst_77 {dimension_numbers = #tpu.dot_dimension_numbers<[1], [0], [0], [1], [0, 0, 1, 1], [], []>} : vector<32x128xbf16>, vector<128x256xbf16>, vector<32x256xf32> -> vector<32x256xf32>
      %103 = arith.truncf %102 : vector<32x256xf32> to vector<32x256xbf16>
      %c0_78 = arith.constant 0 : index
      %c2816 = arith.constant 2816 : index
      %104 = vector.load %arg19[%c0_78, %c2816] : memref<32x4096xbf16, #tpu.memory_space<vmem>>, vector<32x256xbf16>
      tpu.vector_store %arg19[%c0_78, %c2816], %103 {strides = array<i32>} : memref<32x4096xbf16, #tpu.memory_space<vmem>>, vector<32x256xbf16>,
      %c12 = arith.constant 12 : index
      %c0_79 = arith.constant 0 : index
      %c0_80 = arith.constant 0 : index
      %105 = vector.load %arg4[%c12, %c0_79, %c0_80] : memref<16x32x128xbf16, #tpu.memory_space<vmem>>, vector<1x32x128xbf16>
      %106 = vector.shape_cast %105 : vector<1x32x128xbf16> to vector<32x128xbf16>
      %cst_81 = arith.constant dense<0.000000e+00> : vector<32x256xf32>
      %107 = tpu.matmul %106, %44, %cst_81 {dimension_numbers = #tpu.dot_dimension_numbers<[1], [0], [0], [1], [0, 0, 1, 1], [], []>} : vector<32x128xbf16>, vector<128x256xbf16>, vector<32x256xf32> -> vector<32x256xf32>
      %108 = arith.truncf %107 : vector<32x256xf32> to vector<32x256xbf16>
      %c0_82 = arith.constant 0 : index
      %c3072 = arith.constant 3072 : index
      %109 = vector.load %arg19[%c0_82, %c3072] : memref<32x4096xbf16, #tpu.memory_space<vmem>>, vector<32x256xbf16>
      tpu.vector_store %arg19[%c0_82, %c3072], %108 {strides = array<i32>} : memref<32x4096xbf16, #tpu.memory_space<vmem>>, vector<32x256xbf16>,
      %c13 = arith.constant 13 : index
      %c0_83 = arith.constant 0 : index
      %c0_84 = arith.constant 0 : index
      %110 = vector.load %arg4[%c13, %c0_83, %c0_84] : memref<16x32x128xbf16, #tpu.memory_space<vmem>>, vector<1x32x128xbf16>
      %111 = vector.shape_cast %110 : vector<1x32x128xbf16> to vector<32x128xbf16>
      %cst_85 = arith.constant dense<0.000000e+00> : vector<32x256xf32>
      %112 = tpu.matmul %111, %44, %cst_85 {dimension_numbers = #tpu.dot_dimension_numbers<[1], [0], [0], [1], [0, 0, 1, 1], [], []>} : vector<32x128xbf16>, vector<128x256xbf16>, vector<32x256xf32> -> vector<32x256xf32>
      %113 = arith.truncf %112 : vector<32x256xf32> to vector<32x256xbf16>
      %c0_86 = arith.constant 0 : index
      %c3328 = arith.constant 3328 : index
      %114 = vector.load %arg19[%c0_86, %c3328] : memref<32x4096xbf16, #tpu.memory_space<vmem>>, vector<32x256xbf16>
      tpu.vector_store %arg19[%c0_86, %c3328], %113 {strides = array<i32>} : memref<32x4096xbf16, #tpu.memory_space<vmem>>, vector<32x256xbf16>,
      %c14 = arith.constant 14 : index
      %c0_87 = arith.constant 0 : index
      %c0_88 = arith.constant 0 : index
      %115 = vector.load %arg4[%c14, %c0_87, %c0_88] : memref<16x32x128xbf16, #tpu.memory_space<vmem>>, vector<1x32x128xbf16>
      %116 = vector.shape_cast %115 : vector<1x32x128xbf16> to vector<32x128xbf16>
      %cst_89 = arith.constant dense<0.000000e+00> : vector<32x256xf32>
      %117 = tpu.matmul %116, %44, %cst_89 {dimension_numbers = #tpu.dot_dimension_numbers<[1], [0], [0], [1], [0, 0, 1, 1], [], []>} : vector<32x128xbf16>, vector<128x256xbf16>, vector<32x256xf32> -> vector<32x256xf32>
      %118 = arith.truncf %117 : vector<32x256xf32> to vector<32x256xbf16>
      %c0_90 = arith.constant 0 : index
      %c3584 = arith.constant 3584 : index
      %119 = vector.load %arg19[%c0_90, %c3584] : memref<32x4096xbf16, #tpu.memory_space<vmem>>, vector<32x256xbf16>
      tpu.vector_store %arg19[%c0_90, %c3584], %118 {strides = array<i32>} : memref<32x4096xbf16, #tpu.memory_space<vmem>>, vector<32x256xbf16>,
      %c15 = arith.constant 15 : index
      %c0_91 = arith.constant 0 : index
      %c0_92 = arith.constant 0 : index
      %120 = vector.load %arg4[%c15, %c0_91, %c0_92] : memref<16x32x128xbf16, #tpu.memory_space<vmem>>, vector<1x32x128xbf16>
      %121 = vector.shape_cast %120 : vector<1x32x128xbf16> to vector<32x128xbf16>
      %cst_93 = arith.constant dense<0.000000e+00> : vector<32x256xf32>
      %122 = tpu.matmul %121, %44, %cst_93 {dimension_numbers = #tpu.dot_dimension_numbers<[1], [0], [0], [1], [0, 0, 1, 1], [], []>} : vector<32x128xbf16>, vector<128x256xbf16>, vector<32x256xf32> -> vector<32x256xf32>
      %123 = arith.truncf %122 : vector<32x256xf32> to vector<32x256xbf16>
      %c0_94 = arith.constant 0 : index
      %c3840 = arith.constant 3840 : index
      %124 = vector.load %arg19[%c0_94, %c3840] : memref<32x4096xbf16, #tpu.memory_space<vmem>>, vector<32x256xbf16>
      tpu.vector_store %arg19[%c0_94, %c3840], %123 {strides = array<i32>} : memref<32x4096xbf16, #tpu.memory_space<vmem>>, vector<32x256xbf16>,
      %c0_95 = arith.constant 0 : index
      %c0_96 = arith.constant 0 : index
      %125 = vector.load %arg19[%c0_95, %c0_96] : memref<32x4096xbf16, #tpu.memory_space<vmem>>, vector<32x4096xbf16>
      %c0_97 = arith.constant 0 : index
      %c0_98 = arith.constant 0 : index
      %126 = vector.load %arg5[%c0_97, %c0_98] : memref<4096x256xi8, #tpu.memory_space<vmem>>, vector<4096x256xi8>
      %127 = arith.sitofp %126 : vector<4096x256xi8> to vector<4096x256xbf16>
      %cst_99 = arith.constant dense<0.000000e+00> : vector<32x256xf32>
      %128 = tpu.matmul %125, %127, %cst_99 {dimension_numbers = #tpu.dot_dimension_numbers<[1], [0], [0], [1], [0, 0, 1, 1], [], []>} : vector<32x4096xbf16>, vector<4096x256xbf16>, vector<32x256xf32> -> vector<32x256xf32>
      %c0_100 = arith.constant 0 : index
      %c0_101 = arith.constant 0 : index
      %129 = vector.load %arg6[%c0_100, %c0_101] : memref<1x256xf32, #tpu.memory_space<vmem>>, vector<1x256xf32>
      %130 = vector.broadcast %129 : vector<1x256xf32> to vector<32x256xf32>
      %131 = arith.mulf %128, %130 : vector<32x256xf32>
      %c0_102 = arith.constant 0 : index
      %c0_103 = arith.constant 0 : index
      %132 = vector.load %arg7[%c0_102, %c0_103] : memref<1x256xf32, #tpu.memory_space<vmem>>, vector<1x256xf32>
      %133 = vector.broadcast %132 : vector<1x256xf32> to vector<32x256xf32>
      %134 = arith.addf %131, %133 : vector<32x256xf32>
      %cst_104 = arith.constant 0.000000e+00 : f32
      %135 = vector.broadcast %cst_104 : f32 to vector<32x256xf32>
      %136 = arith.maximumf %134, %135 : vector<32x256xf32>
      %137 = arith.truncf %136 : vector<32x256xf32> to vector<32x256xbf16>
      %c0_105 = arith.constant 0 : index
      %c0_106 = arith.constant 0 : index
      %c0_107 = arith.constant 0 : index
      %138 = vector.load %arg8[%c0_105, %c0_106, %c0_107] : memref<16x8x32xbf16, #tpu.memory_space<vmem>>, vector<1x8x32xbf16>
      %139 = vector.shape_cast %138 : vector<1x8x32xbf16> to vector<8x32xbf16>
      %cst_108 = arith.constant dense<0.000000e+00> : vector<8x256xf32>
      %140 = tpu.matmul %139, %137, %cst_108 {dimension_numbers = #tpu.dot_dimension_numbers<[1], [0], [0], [1], [0, 0, 1, 1], [], []>} : vector<8x32xbf16>, vector<32x256xbf16>, vector<8x256xf32> -> vector<8x256xf32>
      %141 = arith.truncf %140 : vector<8x256xf32> to vector<8x256xbf16>
      %c0_109 = arith.constant 0 : index
      %c0_110 = arith.constant 0 : index
      %142 = vector.load %arg20[%c0_109, %c0_110] : memref<8x4096xbf16, #tpu.memory_space<vmem>>, vector<8x256xbf16>
      tpu.vector_store %arg20[%c0_109, %c0_110], %141 {strides = array<i32>} : memref<8x4096xbf16, #tpu.memory_space<vmem>>, vector<8x256xbf16>,
      %c1_111 = arith.constant 1 : index
      %c0_112 = arith.constant 0 : index
      %c0_113 = arith.constant 0 : index
      %143 = vector.load %arg8[%c1_111, %c0_112, %c0_113] : memref<16x8x32xbf16, #tpu.memory_space<vmem>>, vector<1x8x32xbf16>
      %144 = vector.shape_cast %143 : vector<1x8x32xbf16> to vector<8x32xbf16>
      %cst_114 = arith.constant dense<0.000000e+00> : vector<8x256xf32>
      %145 = tpu.matmul %144, %137, %cst_114 {dimension_numbers = #tpu.dot_dimension_numbers<[1], [0], [0], [1], [0, 0, 1, 1], [], []>} : vector<8x32xbf16>, vector<32x256xbf16>, vector<8x256xf32> -> vector<8x256xf32>
      %146 = arith.truncf %145 : vector<8x256xf32> to vector<8x256xbf16>
      %c0_115 = arith.constant 0 : index
      %c256_116 = arith.constant 256 : index
      %147 = vector.load %arg20[%c0_115, %c256_116] : memref<8x4096xbf16, #tpu.memory_space<vmem>>, vector<8x256xbf16>
      tpu.vector_store %arg20[%c0_115, %c256_116], %146 {strides = array<i32>} : memref<8x4096xbf16, #tpu.memory_space<vmem>>, vector<8x256xbf16>,
      %c2_117 = arith.constant 2 : index
      %c0_118 = arith.constant 0 : index
      %c0_119 = arith.constant 0 : index
      %148 = vector.load %arg8[%c2_117, %c0_118, %c0_119] : memref<16x8x32xbf16, #tpu.memory_space<vmem>>, vector<1x8x32xbf16>
      %149 = vector.shape_cast %148 : vector<1x8x32xbf16> to vector<8x32xbf16>
      %cst_120 = arith.constant dense<0.000000e+00> : vector<8x256xf32>
      %150 = tpu.matmul %149, %137, %cst_120 {dimension_numbers = #tpu.dot_dimension_numbers<[1], [0], [0], [1], [0, 0, 1, 1], [], []>} : vector<8x32xbf16>, vector<32x256xbf16>, vector<8x256xf32> -> vector<8x256xf32>
      %151 = arith.truncf %150 : vector<8x256xf32> to vector<8x256xbf16>
      %c0_121 = arith.constant 0 : index
      %c512_122 = arith.constant 512 : index
      %152 = vector.load %arg20[%c0_121, %c512_122] : memref<8x4096xbf16, #tpu.memory_space<vmem>>, vector<8x256xbf16>
      tpu.vector_store %arg20[%c0_121, %c512_122], %151 {strides = array<i32>} : memref<8x4096xbf16, #tpu.memory_space<vmem>>, vector<8x256xbf16>,
      %c3_123 = arith.constant 3 : index
      %c0_124 = arith.constant 0 : index
      %c0_125 = arith.constant 0 : index
      %153 = vector.load %arg8[%c3_123, %c0_124, %c0_125] : memref<16x8x32xbf16, #tpu.memory_space<vmem>>, vector<1x8x32xbf16>
      %154 = vector.shape_cast %153 : vector<1x8x32xbf16> to vector<8x32xbf16>
      %cst_126 = arith.constant dense<0.000000e+00> : vector<8x256xf32>
      %155 = tpu.matmul %154, %137, %cst_126 {dimension_numbers = #tpu.dot_dimension_numbers<[1], [0], [0], [1], [0, 0, 1, 1], [], []>} : vector<8x32xbf16>, vector<32x256xbf16>, vector<8x256xf32> -> vector<8x256xf32>
      %156 = arith.truncf %155 : vector<8x256xf32> to vector<8x256xbf16>
      %c0_127 = arith.constant 0 : index
      %c768_128 = arith.constant 768 : index
      %157 = vector.load %arg20[%c0_127, %c768_128] : memref<8x4096xbf16, #tpu.memory_space<vmem>>, vector<8x256xbf16>
      tpu.vector_store %arg20[%c0_127, %c768_128], %156 {strides = array<i32>} : memref<8x4096xbf16, #tpu.memory_space<vmem>>, vector<8x256xbf16>,
      %c4_129 = arith.constant 4 : index
      %c0_130 = arith.constant 0 : index
      %c0_131 = arith.constant 0 : index
      %158 = vector.load %arg8[%c4_129, %c0_130, %c0_131] : memref<16x8x32xbf16, #tpu.memory_space<vmem>>, vector<1x8x32xbf16>
      %159 = vector.shape_cast %158 : vector<1x8x32xbf16> to vector<8x32xbf16>
      %cst_132 = arith.constant dense<0.000000e+00> : vector<8x256xf32>
      %160 = tpu.matmul %159, %137, %cst_132 {dimension_numbers = #tpu.dot_dimension_numbers<[1], [0], [0], [1], [0, 0, 1, 1], [], []>} : vector<8x32xbf16>, vector<32x256xbf16>, vector<8x256xf32> -> vector<8x256xf32>
      %161 = arith.truncf %160 : vector<8x256xf32> to vector<8x256xbf16>
      %c0_133 = arith.constant 0 : index
      %c1024_134 = arith.constant 1024 : index
      %162 = vector.load %arg20[%c0_133, %c1024_134] : memref<8x4096xbf16, #tpu.memory_space<vmem>>, vector<8x256xbf16>
      tpu.vector_store %arg20[%c0_133, %c1024_134], %161 {strides = array<i32>} : memref<8x4096xbf16, #tpu.memory_space<vmem>>, vector<8x256xbf16>,
      %c5_135 = arith.constant 5 : index
      %c0_136 = arith.constant 0 : index
      %c0_137 = arith.constant 0 : index
      %163 = vector.load %arg8[%c5_135, %c0_136, %c0_137] : memref<16x8x32xbf16, #tpu.memory_space<vmem>>, vector<1x8x32xbf16>
      %164 = vector.shape_cast %163 : vector<1x8x32xbf16> to vector<8x32xbf16>
      %cst_138 = arith.constant dense<0.000000e+00> : vector<8x256xf32>
      %165 = tpu.matmul %164, %137, %cst_138 {dimension_numbers = #tpu.dot_dimension_numbers<[1], [0], [0], [1], [0, 0, 1, 1], [], []>} : vector<8x32xbf16>, vector<32x256xbf16>, vector<8x256xf32> -> vector<8x256xf32>
      %166 = arith.truncf %165 : vector<8x256xf32> to vector<8x256xbf16>
      %c0_139 = arith.constant 0 : index
      %c1280_140 = arith.constant 1280 : index
      %167 = vector.load %arg20[%c0_139, %c1280_140] : memref<8x4096xbf16, #tpu.memory_space<vmem>>, vector<8x256xbf16>
      tpu.vector_store %arg20[%c0_139, %c1280_140], %166 {strides = array<i32>} : memref<8x4096xbf16, #tpu.memory_space<vmem>>, vector<8x256xbf16>,
      %c6_141 = arith.constant 6 : index
      %c0_142 = arith.constant 0 : index
      %c0_143 = arith.constant 0 : index
      %168 = vector.load %arg8[%c6_141, %c0_142, %c0_143] : memref<16x8x32xbf16, #tpu.memory_space<vmem>>, vector<1x8x32xbf16>
      %169 = vector.shape_cast %168 : vector<1x8x32xbf16> to vector<8x32xbf16>
      %cst_144 = arith.constant dense<0.000000e+00> : vector<8x256xf32>
      %170 = tpu.matmul %169, %137, %cst_144 {dimension_numbers = #tpu.dot_dimension_numbers<[1], [0], [0], [1], [0, 0, 1, 1], [], []>} : vector<8x32xbf16>, vector<32x256xbf16>, vector<8x256xf32> -> vector<8x256xf32>
      %171 = arith.truncf %170 : vector<8x256xf32> to vector<8x256xbf16>
      %c0_145 = arith.constant 0 : index
      %c1536_146 = arith.constant 1536 : index
      %172 = vector.load %arg20[%c0_145, %c1536_146] : memref<8x4096xbf16, #tpu.memory_space<vmem>>, vector<8x256xbf16>
      tpu.vector_store %arg20[%c0_145, %c1536_146], %171 {strides = array<i32>} : memref<8x4096xbf16, #tpu.memory_space<vmem>>, vector<8x256xbf16>,
      %c7_147 = arith.constant 7 : index
      %c0_148 = arith.constant 0 : index
      %c0_149 = arith.constant 0 : index
      %173 = vector.load %arg8[%c7_147, %c0_148, %c0_149] : memref<16x8x32xbf16, #tpu.memory_space<vmem>>, vector<1x8x32xbf16>
      %174 = vector.shape_cast %173 : vector<1x8x32xbf16> to vector<8x32xbf16>
      %cst_150 = arith.constant dense<0.000000e+00> : vector<8x256xf32>
      %175 = tpu.matmul %174, %137, %cst_150 {dimension_numbers = #tpu.dot_dimension_numbers<[1], [0], [0], [1], [0, 0, 1, 1], [], []>} : vector<8x32xbf16>, vector<32x256xbf16>, vector<8x256xf32> -> vector<8x256xf32>
      %176 = arith.truncf %175 : vector<8x256xf32> to vector<8x256xbf16>
      %c0_151 = arith.constant 0 : index
      %c1792_152 = arith.constant 1792 : index
      %177 = vector.load %arg20[%c0_151, %c1792_152] : memref<8x4096xbf16, #tpu.memory_space<vmem>>, vector<8x256xbf16>
      tpu.vector_store %arg20[%c0_151, %c1792_152], %176 {strides = array<i32>} : memref<8x4096xbf16, #tpu.memory_space<vmem>>, vector<8x256xbf16>,
      %c8_153 = arith.constant 8 : index
      %c0_154 = arith.constant 0 : index
      %c0_155 = arith.constant 0 : index
      %178 = vector.load %arg8[%c8_153, %c0_154, %c0_155] : memref<16x8x32xbf16, #tpu.memory_space<vmem>>, vector<1x8x32xbf16>
      %179 = vector.shape_cast %178 : vector<1x8x32xbf16> to vector<8x32xbf16>
      %cst_156 = arith.constant dense<0.000000e+00> : vector<8x256xf32>
      %180 = tpu.matmul %179, %137, %cst_156 {dimension_numbers = #tpu.dot_dimension_numbers<[1], [0], [0], [1], [0, 0, 1, 1], [], []>} : vector<8x32xbf16>, vector<32x256xbf16>, vector<8x256xf32> -> vector<8x256xf32>
      %181 = arith.truncf %180 : vector<8x256xf32> to vector<8x256xbf16>
      %c0_157 = arith.constant 0 : index
      %c2048_158 = arith.constant 2048 : index
      %182 = vector.load %arg20[%c0_157, %c2048_158] : memref<8x4096xbf16, #tpu.memory_space<vmem>>, vector<8x256xbf16>
      tpu.vector_store %arg20[%c0_157, %c2048_158], %181 {strides = array<i32>} : memref<8x4096xbf16, #tpu.memory_space<vmem>>, vector<8x256xbf16>,
      %c9_159 = arith.constant 9 : index
      %c0_160 = arith.constant 0 : index
      %c0_161 = arith.constant 0 : index
      %183 = vector.load %arg8[%c9_159, %c0_160, %c0_161] : memref<16x8x32xbf16, #tpu.memory_space<vmem>>, vector<1x8x32xbf16>
      %184 = vector.shape_cast %183 : vector<1x8x32xbf16> to vector<8x32xbf16>
      %cst_162 = arith.constant dense<0.000000e+00> : vector<8x256xf32>
      %185 = tpu.matmul %184, %137, %cst_162 {dimension_numbers = #tpu.dot_dimension_numbers<[1], [0], [0], [1], [0, 0, 1, 1], [], []>} : vector<8x32xbf16>, vector<32x256xbf16>, vector<8x256xf32> -> vector<8x256xf32>
      %186 = arith.truncf %185 : vector<8x256xf32> to vector<8x256xbf16>
      %c0_163 = arith.constant 0 : index
      %c2304_164 = arith.constant 2304 : index
      %187 = vector.load %arg20[%c0_163, %c2304_164] : memref<8x4096xbf16, #tpu.memory_space<vmem>>, vector<8x256xbf16>
      tpu.vector_store %arg20[%c0_163, %c2304_164], %186 {strides = array<i32>} : memref<8x4096xbf16, #tpu.memory_space<vmem>>, vector<8x256xbf16>,
      %c10_165 = arith.constant 10 : index
      %c0_166 = arith.constant 0 : index
      %c0_167 = arith.constant 0 : index
      %188 = vector.load %arg8[%c10_165, %c0_166, %c0_167] : memref<16x8x32xbf16, #tpu.memory_space<vmem>>, vector<1x8x32xbf16>
      %189 = vector.shape_cast %188 : vector<1x8x32xbf16> to vector<8x32xbf16>
      %cst_168 = arith.constant dense<0.000000e+00> : vector<8x256xf32>
      %190 = tpu.matmul %189, %137, %cst_168 {dimension_numbers = #tpu.dot_dimension_numbers<[1], [0], [0], [1], [0, 0, 1, 1], [], []>} : vector<8x32xbf16>, vector<32x256xbf16>, vector<8x256xf32> -> vector<8x256xf32>
      %191 = arith.truncf %190 : vector<8x256xf32> to vector<8x256xbf16>
      %c0_169 = arith.constant 0 : index
      %c2560_170 = arith.constant 2560 : index
      %192 = vector.load %arg20[%c0_169, %c2560_170] : memref<8x4096xbf16, #tpu.memory_space<vmem>>, vector<8x256xbf16>
      tpu.vector_store %arg20[%c0_169, %c2560_170], %191 {strides = array<i32>} : memref<8x4096xbf16, #tpu.memory_space<vmem>>, vector<8x256xbf16>,
      %c11_171 = arith.constant 11 : index
      %c0_172 = arith.constant 0 : index
      %c0_173 = arith.constant 0 : index
      %193 = vector.load %arg8[%c11_171, %c0_172, %c0_173] : memref<16x8x32xbf16, #tpu.memory_space<vmem>>, vector<1x8x32xbf16>
      %194 = vector.shape_cast %193 : vector<1x8x32xbf16> to vector<8x32xbf16>
      %cst_174 = arith.constant dense<0.000000e+00> : vector<8x256xf32>
      %195 = tpu.matmul %194, %137, %cst_174 {dimension_numbers = #tpu.dot_dimension_numbers<[1], [0], [0], [1], [0, 0, 1, 1], [], []>} : vector<8x32xbf16>, vector<32x256xbf16>, vector<8x256xf32> -> vector<8x256xf32>
      %196 = arith.truncf %195 : vector<8x256xf32> to vector<8x256xbf16>
      %c0_175 = arith.constant 0 : index
      %c2816_176 = arith.constant 2816 : index
      %197 = vector.load %arg20[%c0_175, %c2816_176] : memref<8x4096xbf16, #tpu.memory_space<vmem>>, vector<8x256xbf16>
      tpu.vector_store %arg20[%c0_175, %c2816_176], %196 {strides = array<i32>} : memref<8x4096xbf16, #tpu.memory_space<vmem>>, vector<8x256xbf16>,
      %c12_177 = arith.constant 12 : index
      %c0_178 = arith.constant 0 : index
      %c0_179 = arith.constant 0 : index
      %198 = vector.load %arg8[%c12_177, %c0_178, %c0_179] : memref<16x8x32xbf16, #tpu.memory_space<vmem>>, vector<1x8x32xbf16>
      %199 = vector.shape_cast %198 : vector<1x8x32xbf16> to vector<8x32xbf16>
      %cst_180 = arith.constant dense<0.000000e+00> : vector<8x256xf32>
      %200 = tpu.matmul %199, %137, %cst_180 {dimension_numbers = #tpu.dot_dimension_numbers<[1], [0], [0], [1], [0, 0, 1, 1], [], []>} : vector<8x32xbf16>, vector<32x256xbf16>, vector<8x256xf32> -> vector<8x256xf32>
      %201 = arith.truncf %200 : vector<8x256xf32> to vector<8x256xbf16>
      %c0_181 = arith.constant 0 : index
      %c3072_182 = arith.constant 3072 : index
      %202 = vector.load %arg20[%c0_181, %c3072_182] : memref<8x4096xbf16, #tpu.memory_space<vmem>>, vector<8x256xbf16>
      tpu.vector_store %arg20[%c0_181, %c3072_182], %201 {strides = array<i32>} : memref<8x4096xbf16, #tpu.memory_space<vmem>>, vector<8x256xbf16>,
      %c13_183 = arith.constant 13 : index
      %c0_184 = arith.constant 0 : index
      %c0_185 = arith.constant 0 : index
      %203 = vector.load %arg8[%c13_183, %c0_184, %c0_185] : memref<16x8x32xbf16, #tpu.memory_space<vmem>>, vector<1x8x32xbf16>
      %204 = vector.shape_cast %203 : vector<1x8x32xbf16> to vector<8x32xbf16>
      %cst_186 = arith.constant dense<0.000000e+00> : vector<8x256xf32>
      %205 = tpu.matmul %204, %137, %cst_186 {dimension_numbers = #tpu.dot_dimension_numbers<[1], [0], [0], [1], [0, 0, 1, 1], [], []>} : vector<8x32xbf16>, vector<32x256xbf16>, vector<8x256xf32> -> vector<8x256xf32>
      %206 = arith.truncf %205 : vector<8x256xf32> to vector<8x256xbf16>
      %c0_187 = arith.constant 0 : index
      %c3328_188 = arith.constant 3328 : index
      %207 = vector.load %arg20[%c0_187, %c3328_188] : memref<8x4096xbf16, #tpu.memory_space<vmem>>, vector<8x256xbf16>
      tpu.vector_store %arg20[%c0_187, %c3328_188], %206 {strides = array<i32>} : memref<8x4096xbf16, #tpu.memory_space<vmem>>, vector<8x256xbf16>,
      %c14_189 = arith.constant 14 : index
      %c0_190 = arith.constant 0 : index
      %c0_191 = arith.constant 0 : index
      %208 = vector.load %arg8[%c14_189, %c0_190, %c0_191] : memref<16x8x32xbf16, #tpu.memory_space<vmem>>, vector<1x8x32xbf16>
      %209 = vector.shape_cast %208 : vector<1x8x32xbf16> to vector<8x32xbf16>
      %cst_192 = arith.constant dense<0.000000e+00> : vector<8x256xf32>
      %210 = tpu.matmul %209, %137, %cst_192 {dimension_numbers = #tpu.dot_dimension_numbers<[1], [0], [0], [1], [0, 0, 1, 1], [], []>} : vector<8x32xbf16>, vector<32x256xbf16>, vector<8x256xf32> -> vector<8x256xf32>
      %211 = arith.truncf %210 : vector<8x256xf32> to vector<8x256xbf16>
      %c0_193 = arith.constant 0 : index
      %c3584_194 = arith.constant 3584 : index
      %212 = vector.load %arg20[%c0_193, %c3584_194] : memref<8x4096xbf16, #tpu.memory_space<vmem>>, vector<8x256xbf16>
      tpu.vector_store %arg20[%c0_193, %c3584_194], %211 {strides = array<i32>} : memref<8x4096xbf16, #tpu.memory_space<vmem>>, vector<8x256xbf16>,
      %c15_195 = arith.constant 15 : index
      %c0_196 = arith.constant 0 : index
      %c0_197 = arith.constant 0 : index
      %213 = vector.load %arg8[%c15_195, %c0_196, %c0_197] : memref<16x8x32xbf16, #tpu.memory_space<vmem>>, vector<1x8x32xbf16>
      %214 = vector.shape_cast %213 : vector<1x8x32xbf16> to vector<8x32xbf16>
      %cst_198 = arith.constant dense<0.000000e+00> : vector<8x256xf32>
      %215 = tpu.matmul %214, %137, %cst_198 {dimension_numbers = #tpu.dot_dimension_numbers<[1], [0], [0], [1], [0, 0, 1, 1], [], []>} : vector<8x32xbf16>, vector<32x256xbf16>, vector<8x256xf32> -> vector<8x256xf32>
      %216 = arith.truncf %215 : vector<8x256xf32> to vector<8x256xbf16>
      %c0_199 = arith.constant 0 : index
      %c3840_200 = arith.constant 3840 : index
      %217 = vector.load %arg20[%c0_199, %c3840_200] : memref<8x4096xbf16, #tpu.memory_space<vmem>>, vector<8x256xbf16>
      tpu.vector_store %arg20[%c0_199, %c3840_200], %216 {strides = array<i32>} : memref<8x4096xbf16, #tpu.memory_space<vmem>>, vector<8x256xbf16>,
      %c0_201 = arith.constant 0 : index
      %c0_202 = arith.constant 0 : index
      %218 = vector.load %arg20[%c0_201, %c0_202] : memref<8x4096xbf16, #tpu.memory_space<vmem>>, vector<8x4096xbf16>
      %c0_203 = arith.constant 0 : index
      %c0_204 = arith.constant 0 : index
      %219 = vector.load %arg9[%c0_203, %c0_204] : memref<4096x256xi8, #tpu.memory_space<vmem>>, vector<4096x256xi8>
      %220 = arith.sitofp %219 : vector<4096x256xi8> to vector<4096x256xbf16>
      %cst_205 = arith.constant dense<0.000000e+00> : vector<8x256xf32>
      %221 = tpu.matmul %218, %220, %cst_205 {dimension_numbers = #tpu.dot_dimension_numbers<[1], [0], [0], [1], [0, 0, 1, 1], [], []>} : vector<8x4096xbf16>, vector<4096x256xbf16>, vector<8x256xf32> -> vector<8x256xf32>
      %c0_206 = arith.constant 0 : index
      %c0_207 = arith.constant 0 : index
      %222 = vector.load %arg10[%c0_206, %c0_207] : memref<1x256xf32, #tpu.memory_space<vmem>>, vector<1x256xf32>
      %223 = vector.broadcast %222 : vector<1x256xf32> to vector<8x256xf32>
      %224 = arith.mulf %221, %223 : vector<8x256xf32>
      %c0_208 = arith.constant 0 : index
      %c0_209 = arith.constant 0 : index
      %225 = vector.load %arg11[%c0_208, %c0_209] : memref<1x256xf32, #tpu.memory_space<vmem>>, vector<1x256xf32>
      %226 = vector.broadcast %225 : vector<1x256xf32> to vector<8x256xf32>
      %227 = arith.addf %224, %226 : vector<8x256xf32>
      %cst_210 = arith.constant 0.000000e+00 : f32
      %228 = vector.broadcast %cst_210 : f32 to vector<8x256xf32>
      %229 = arith.maximumf %227, %228 : vector<8x256xf32>
      %230 = arith.truncf %229 : vector<8x256xf32> to vector<8x256xbf16>
      %c0_211 = arith.constant 0 : index
      %c0_212 = arith.constant 0 : index
      %231 = vector.load %arg18[%c0_211, %c0_212] : memref<8x256xbf16, #tpu.memory_space<vmem>>, vector<8x256xbf16>
      tpu.vector_store %arg18[%c0_211, %c0_212], %230 {strides = array<i32>} : memref<8x256xbf16, #tpu.memory_space<vmem>>, vector<8x256xbf16>,
      %cst_213 = arith.constant 0xFF800000 : f32
      %232 = vector.broadcast %cst_213 : f32 to vector<8x1xf32>
      %c0_214 = arith.constant 0 : index
      %c0_215 = arith.constant 0 : index
      %233 = vector.load %arg21[%c0_214, %c0_215] : memref<8x1xf32, #tpu.memory_space<vmem>>, vector<8x1xf32>
      tpu.vector_store %arg21[%c0_214, %c0_215], %232 {strides = array<i32>} : memref<8x1xf32, #tpu.memory_space<vmem>>, vector<8x1xf32>,
      %c0_i32_216 = arith.constant 0 : i32
      %234 = vector.broadcast %c0_i32_216 : i32 to vector<8x1xi32>
      %c0_217 = arith.constant 0 : index
      %c0_218 = arith.constant 0 : index
      %235 = vector.load %arg22[%c0_217, %c0_218] : memref<8x1xi32, #tpu.memory_space<vmem>>, vector<8x1xi32>
      tpu.vector_store %arg22[%c0_217, %c0_218], %234 {strides = array<i32>} : memref<8x1xi32, #tpu.memory_space<vmem>>, vector<8x1xi32>,
    } else {
    }
    %c0 = arith.constant 0 : index
    %c0_1 = arith.constant 0 : index
    %3 = vector.load %arg12[%c0, %c0_1] : memref<256x4096xi8, #tpu.memory_space<vmem>>, vector<256x4096xi8>
    %4 = arith.sitofp %3 : vector<256x4096xi8> to vector<256x4096xbf16>
    %c0_2 = arith.constant 0 : index
    %c0_3 = arith.constant 0 : index
    %5 = vector.load %arg18[%c0_2, %c0_3] : memref<8x256xbf16, #tpu.memory_space<vmem>>, vector<8x256xbf16>
    %cst = arith.constant dense<0.000000e+00> : vector<8x4096xf32>
    %6 = tpu.matmul %5, %4, %cst {dimension_numbers = #tpu.dot_dimension_numbers<[1], [0], [0], [1], [0, 0, 1, 1], [], []>} : vector<8x256xbf16>, vector<256x4096xbf16>, vector<8x4096xf32> -> vector<8x4096xf32>
    %c0_4 = arith.constant 0 : index
    %c0_5 = arith.constant 0 : index
    %7 = vector.load %arg13[%c0_4, %c0_5] : memref<1x4096xf32, #tpu.memory_space<vmem>>, vector<1x4096xf32>
    %8 = vector.broadcast %7 : vector<1x4096xf32> to vector<8x4096xf32>
    %9 = arith.mulf %6, %8 : vector<8x4096xf32>
    %c0_6 = arith.constant 0 : index
    %c0_7 = arith.constant 0 : index
    %10 = vector.load %arg14[%c0_6, %c0_7] : memref<1x4096xf32, #tpu.memory_space<vmem>>, vector<1x4096xf32>
    %11 = vector.broadcast %10 : vector<1x4096xf32> to vector<8x4096xf32>
    %12 = arith.addf %9, %11 : vector<8x4096xf32>
    %13 = tpu.iota {dimensions = array<i32: 1>} : vector<8x4096xi32>
    %c4096_i32 = arith.constant 4096 : i32
    %14 = arith.muli %arg0, %c4096_i32 : i32
    %15 = vector.broadcast %14 : i32 to vector<8x4096xi32>
    %16 = arith.addi %13, %15 : vector<8x4096xi32>
    %cst_8 = arith.constant dense<0xFF800000> : vector<8xf32>
    %17 = vector.multi_reduction <maximumf>, %12, %cst_8 [1] : vector<8x4096xf32> to vector<8xf32>
    %18 = vector.shape_cast %17 : vector<8xf32> to vector<8x1xf32>
    %19 = vector.broadcast %18 : vector<8x1xf32> to vector<8x4096xf32>
    %20 = arith.cmpf oeq, %12, %19 : vector<8x4096xf32>
    %c2147483647_i32 = arith.constant 2147483647 : i32
    %21 = vector.broadcast %c2147483647_i32 : i32 to vector<8x4096xi32>
    %22 = arith.select %20, %16, %21 : vector<8x4096xi1>, vector<8x4096xi32>
    %cst_9 = arith.constant dense<2147483647> : vector<8xi32>
    %23 = vector.multi_reduction <minsi>, %22, %cst_9 [1] : vector<8x4096xi32> to vector<8xi32>
    %24 = vector.shape_cast %23 : vector<8xi32> to vector<8x1xi32>
    %c0_10 = arith.constant 0 : index
    %c0_11 = arith.constant 0 : index
    %25 = vector.load %arg21[%c0_10, %c0_11] : memref<8x1xf32, #tpu.memory_space<vmem>>, vector<8x1xf32>
    %26 = arith.cmpf ogt, %18, %25 : vector<8x1xf32>
    %c0_12 = arith.constant 0 : index
    %c0_13 = arith.constant 0 : index
    %27 = vector.load %arg22[%c0_12, %c0_13] : memref<8x1xi32, #tpu.memory_space<vmem>>, vector<8x1xi32>
    %28 = arith.select %26, %24, %27 : vector<8x1xi1>, vector<8x1xi32>
    %c0_14 = arith.constant 0 : index
    %c0_15 = arith.constant 0 : index
    %29 = vector.load %arg22[%c0_14, %c0_15] : memref<8x1xi32, #tpu.memory_space<vmem>>, vector<8x1xi32>
    tpu.vector_store %arg22[%c0_14, %c0_15], %28 {strides = array<i32>} : memref<8x1xi32, #tpu.memory_space<vmem>>, vector<8x1xi32>,
    %c0_16 = arith.constant 0 : index
    %c0_17 = arith.constant 0 : index
    %30 = vector.load %arg21[%c0_16, %c0_17] : memref<8x1xf32, #tpu.memory_space<vmem>>, vector<8x1xf32>
    %31 = arith.maximumf %30, %18 : vector<8x1xf32>
    %c0_18 = arith.constant 0 : index
    %c0_19 = arith.constant 0 : index
    %32 = vector.load %arg21[%c0_18, %c0_19] : memref<8x1xf32, #tpu.memory_space<vmem>>, vector<8x1xf32>
    tpu.vector_store %arg21[%c0_18, %c0_19], %31 {strides = array<i32>} : memref<8x1xf32, #tpu.memory_space<vmem>>, vector<8x1xf32>,
    %c1_i32 = arith.constant 1 : i32
    %33 = arith.cmpi eq, %arg0, %c1_i32 : i32
    %34 = arith.extui %33 : i1 to i32
    %c0_i32_20 = arith.constant 0 : i32
    %35 = arith.cmpi ne, %34, %c0_i32_20 : i32
    scf.if %35 {
      %c0_21 = arith.constant 0 : index
      %c0_22 = arith.constant 0 : index
      %36 = vector.load %arg22[%c0_21, %c0_22] : memref<8x1xi32, #tpu.memory_space<vmem>>, vector<8x1xi32>
      %c0_23 = arith.constant 0 : index
      %c0_24 = arith.constant 0 : index
      %37 = vector.load %arg15[%c0_23, %c0_24] : memref<8x1xf32, #tpu.memory_space<vmem>>, vector<8x1xf32>
      %cst_25 = arith.constant 4.000000e-01 : f32
      %38 = vector.broadcast %cst_25 : f32 to vector<8x1xf32>
      %39 = arith.cmpf olt, %37, %38 : vector<8x1xf32>
      %40 = arith.extui %39 : vector<8x1xi1> to vector<8x1xi32>
      %41 = arith.sitofp %40 : vector<8x1xi32> to vector<8x1xf32>
      %c0_26 = arith.constant 0 : index
      %c0_27 = arith.constant 0 : index
      %42 = vector.load %arg17[%c0_26, %c0_27] : memref<8x1xf32, #tpu.memory_space<vmem>>, vector<8x1xf32>
      tpu.vector_store %arg17[%c0_26, %c0_27], %41 {strides = array<i32>} : memref<8x1xf32, #tpu.memory_space<vmem>>, vector<8x1xf32>,
      %c-100_i32 = arith.constant -100 : i32
      %43 = vector.broadcast %c-100_i32 : i32 to vector<8x1xi32>
      %44 = arith.select %39, %36, %43 : vector<8x1xi1>, vector<8x1xi32>
      %c0_28 = arith.constant 0 : index
      %c0_29 = arith.constant 0 : index
      %45 = vector.load %arg16[%c0_28, %c0_29] : memref<8x1xi32, #tpu.memory_space<vmem>>, vector<8x1xi32>
      tpu.vector_store %arg16[%c0_28, %c0_29], %44 {strides = array<i32>} : memref<8x1xi32, #tpu.memory_space<vmem>>, vector<8x1xi32>,
    } else {
    }
    return
  }
  func.func @transform_0(%arg0: i32) -> (i32, i32) {
    %c0_i32 = arith.constant 0 : i32
    %c0_i32_0 = arith.constant 0 : i32
    %c0_i32_1 = arith.constant 0 : i32
    return %c0_i32, %c0_i32_0 : i32, i32
  }
  func.func @transform_1(%arg0: i32) -> (i32, i32) {
    %c0_i32 = arith.constant 0 : i32
    %c0_i32_0 = arith.constant 0 : i32
    %c0_i32_1 = arith.constant 0 : i32
    return %c0_i32, %c0_i32_0 : i32, i32
  }
  func.func @transform_2(%arg0: i32) -> (i32, i32) {
    %c0_i32 = arith.constant 0 : i32
    %c0_i32_0 = arith.constant 0 : i32
    %c0_i32_1 = arith.constant 0 : i32
    return %c0_i32, %c0_i32_0 : i32, i32
  }
  func.func @transform_3(%arg0: i32) -> (i32, i32, i32) {
    %c0_i32 = arith.constant 0 : i32
    %c0_i32_0 = arith.constant 0 : i32
    %c0_i32_1 = arith.constant 0 : i32
    %c0_i32_2 = arith.constant 0 : i32
    return %c0_i32, %c0_i32_0, %c0_i32_1 : i32, i32, i32
  }
  func.func @transform_4(%arg0: i32) -> (i32, i32) {
    %c0_i32 = arith.constant 0 : i32
    %c0_i32_0 = arith.constant 0 : i32
    %c0_i32_1 = arith.constant 0 : i32
    return %c0_i32, %c0_i32_0 : i32, i32
  }
  func.func @transform_5(%arg0: i32) -> (i32, i32) {
    %c0_i32 = arith.constant 0 : i32
    %c0_i32_0 = arith.constant 0 : i32
    %c0_i32_1 = arith.constant 0 : i32
    return %c0_i32, %c0_i32_0 : i32, i32
  }
  func.func @transform_6(%arg0: i32) -> (i32, i32) {
    %c0_i32 = arith.constant 0 : i32
    %c0_i32_0 = arith.constant 0 : i32
    %c0_i32_1 = arith.constant 0 : i32
    return %c0_i32, %c0_i32_0 : i32, i32
  }
  func.func @transform_7(%arg0: i32) -> (i32, i32, i32) {
    %c0_i32 = arith.constant 0 : i32
    %c0_i32_0 = arith.constant 0 : i32
    %c0_i32_1 = arith.constant 0 : i32
    %c0_i32_2 = arith.constant 0 : i32
    return %c0_i32, %c0_i32_0, %c0_i32_1 : i32, i32, i32
  }
  func.func @transform_8(%arg0: i32) -> (i32, i32) {
    %c0_i32 = arith.constant 0 : i32
    %c0_i32_0 = arith.constant 0 : i32
    %c0_i32_1 = arith.constant 0 : i32
    return %c0_i32, %c0_i32_0 : i32, i32
  }
  func.func @transform_9(%arg0: i32) -> (i32, i32) {
    %c0_i32 = arith.constant 0 : i32
    %c0_i32_0 = arith.constant 0 : i32
    %c0_i32_1 = arith.constant 0 : i32
    return %c0_i32, %c0_i32_0 : i32, i32
  }
  func.func @transform_10(%arg0: i32) -> (i32, i32) {
    %c0_i32 = arith.constant 0 : i32
    %c0_i32_0 = arith.constant 0 : i32
    %c0_i32_1 = arith.constant 0 : i32
    return %c0_i32, %c0_i32_0 : i32, i32
  }
  func.func @transform_11(%arg0: i32) -> (i32, i32) {
    %c0_i32 = arith.constant 0 : i32
    %c0_i32_0 = arith.constant 0 : i32
    return %c0_i32, %arg0 : i32, i32
  }
  func.func @transform_12(%arg0: i32) -> (i32, i32) {
    %c0_i32 = arith.constant 0 : i32
    %c0_i32_0 = arith.constant 0 : i32
    return %c0_i32, %arg0 : i32, i32
  }
  func.func @transform_13(%arg0: i32) -> (i32, i32) {
    %c0_i32 = arith.constant 0 : i32
    %c0_i32_0 = arith.constant 0 : i32
    return %c0_i32, %arg0 : i32, i32
  }
  func.func @transform_14(%arg0: i32) -> (i32, i32) {
    %c0_i32 = arith.constant 0 : i32
    %c0_i32_0 = arith.constant 0 : i32
    %c0_i32_1 = arith.constant 0 : i32
    return %c0_i32, %c0_i32_0 : i32, i32
  }
  func.func @transform_15(%arg0: i32) -> (i32, i32) {
    %c0_i32 = arith.constant 0 : i32
    %c0_i32_0 = arith.constant 0 : i32
    %c0_i32_1 = arith.constant 0 : i32
    return %c0_i32, %c0_i32_0 : i32, i32
  }
  func.func @transform_16(%arg0: i32) -> (i32, i32) {
    %c0_i32 = arith.constant 0 : i32
    %c0_i32_0 = arith.constant 0 : i32
    %c0_i32_1 = arith.constant 0 : i32
    return %c0_i32, %c0_i32_0 : i32, i32
  }
}

</mosaic_0001>

<llo_original>
// kernel: mim_processor_forward.1
$region0: #{mim_processor_forward.1}
  #allocation0 [shape = 'u32[]', space=smem, size = 0x4, offset = 0x4, fixed_abs, tag = 'smem constant byte address 0x4 - core index']
  #allocation1 [shape = 'u32[144,128]{1,0:T(1,128)}', space=vmem, size = 0x12000, scoped, tag = 'internal scratch']
  #allocation2 [shape = 'bf16[8,256]{1,0:T(8,128)(2,1)}', space=vmem, size = 0x1000, scoped, tag = 'scratch operand']
  #allocation3 [shape = 'bf16[32,4096]{1,0:T(8,128)(2,1)}', space=vmem, size = 0x40000, scoped, tag = 'scratch operand']
  #allocation4 [shape = 'bf16[8,4096]{1,0:T(8,128)(2,1)}', space=vmem, size = 0x10000, scoped, tag = 'scratch operand']
  #allocation5 [shape = 'f32[8,1]{1,0:T(8,128)}', space=vmem, size = 0x1000, scoped, tag = 'scratch operand']
  #allocation6 [shape = 's32[8,1]{1,0:T(8,128)}', space=vmem, size = 0x1000, scoped, tag = 'scratch operand']
  %s0 = inlined_call_operand.vmem [shape: bf16[128,64], index: 0, kind: input, shape index: {}]
  %s1 = inlined_call_operand.hbm [shape: bf16[64,256], index: 1, kind: input, shape index: {}]
  %s2 = inlined_call_operand.hbm [shape: f32[1,256], index: 2, kind: input, shape index: {}]
  %s3 = inlined_call_operand.hbm [shape: bf16[16,32,128], index: 3, kind: input, shape index: {}]
  %s4 = inlined_call_operand.vmem [shape: s8[4096,256], index: 4, kind: input, shape index: {}]
  %s5 = inlined_call_operand.hbm [shape: f32[1,256], index: 5, kind: input, shape index: {}]
  %s6 = inlined_call_operand.hbm [shape: f32[1,256], index: 6, kind: input, shape index: {}]
  %s7 = inlined_call_operand.hbm [shape: bf16[16,8,32], index: 7, kind: input, shape index: {}]
  %s8 = inlined_call_operand.hbm [shape: s8[4096,256], index: 8, kind: input, shape index: {}]
  %s9 = inlined_call_operand.hbm [shape: f32[1,256], index: 9, kind: input, shape index: {}]
  %s10 = inlined_call_operand.hbm [shape: f32[1,256], index: 10, kind: input, shape index: {}]
  %s11 = inlined_call_operand.hbm [shape: s8[256,8192], index: 11, kind: input, shape index: {}]
  %s12 = inlined_call_operand.hbm [shape: f32[1,8192], index: 12, kind: input, shape index: {}]
  %s13 = inlined_call_operand.hbm [shape: f32[1,8192], index: 13, kind: input, shape index: {}]
  %s14 = inlined_call_operand.vmem [shape: f32[8,1], index: 14, kind: input, shape index: {}]
  %s15 = inlined_call_operand.vmem [shape: s32[8,1], index: 15, kind: output, shape index: {0}]
  %s16 = inlined_call_operand.vmem [shape: f32[8,1], index: 16, kind: output, shape index: {1}]
  %17 = xla_tuple %s15, %s16
  %s18 = sld [smem:[#allocation0]]
  $region157: #{mim_processor_forward.1} parent=0
    _
  %s20 = ssub.s32 1, %s18
  %s21 = scalar_select 0, %s20, %s18
  $region1: #{mim_processor_forward.1} parent=0
    #allocation7 [shape = 'u8[32768]{0}', space=vmem, size = 0x8000, scoped, tag = 'input window, operand 1, single buffered']
    #allocation8 [shape = 's32[2]{0}', space=sflag, size = 0x8, scoped, tag = 'scoped memory for mim_processor_forward.1']
    #allocation9 [shape = 'u8[1024]{0}', space=vmem, size = 0x400, scoped, tag = 'input window, operand 2, single buffered']
    #allocation10 [shape = 's32[1]{0}', space=sflag, size = 0x4, scoped, tag = 'scoped memory for mim_processor_forward.1']
    #allocation11 [shape = 'u8[131072]{0}', space=vmem, size = 0x20000, scoped, tag = 'input window, operand 3, single buffered']
    #allocation12 [shape = 'u8[1024]{0}', space=vmem, size = 0x400, scoped, tag = 'input window, operand 5, single buffered']
    #allocation13 [shape = 's32[1]{0}', space=sflag, size = 0x4, scoped, tag = 'scoped memory for mim_processor_forward.1']
    #allocation14 [shape = 'u8[1024]{0}', space=vmem, size = 0x400, scoped, tag = 'input window, operand 6, single buffered']
    #allocation15 [shape = 'u8[32768]{0}', space=vmem, size = 0x8000, scoped, tag = 'input window, operand 7, single buffered']
    #allocation16 [shape = 's32[1]{0}', space=sflag, size = 0x4, scoped, tag = 'scoped memory for mim_processor_forward.1']
    #allocation17 [shape = 'u8[1048576]{0}', space=vmem, size = 0x100000, scoped, tag = 'input window, operand 8, single buffered']
    #allocation18 [shape = 'u8[1024]{0}', space=vmem, size = 0x400, scoped, tag = 'input window, operand 9, single buffered']
    #allocation19 [shape = 's32[1]{0}', space=sflag, size = 0x4, scoped, tag = 'scoped memory for mim_processor_forward.1']
    #allocation20 [shape = 'u8[1024]{0}', space=vmem, size = 0x400, scoped, tag = 'input window, operand 10, single buffered']
    #allocation21 [shape = 'u8[2097152]{0}', space=vmem, size = 0x200000, scoped, tag = 'input window, operand 11']
    #allocation22 [shape = 's32[2]{0}', space=sflag, size = 0x8, scoped, tag = 'scoped memory for mim_processor_forward.1']
    #allocation23 [shape = 'u8[32768]{0}', space=vmem, size = 0x8000, scoped, tag = 'input window, operand 12']
    #allocation24 [shape = 'u8[32768]{0}', space=vmem, size = 0x8000, scoped, tag = 'input window, operand 13']
    #allocation25 [shape = 's32[2]{0}', space=sflag, size = 0x8, scoped, tag = 'scoped memory for mim_processor_forward.1']
    %22 = vsyncpa [#allocation8], 0
    %23 = vsyncpa [#allocation10], 0
    %24 = vsyncpa [#allocation13], 0
    %25 = vsyncpa [#allocation16], 0
    %26 = vsyncpa [#allocation19], 0
    %27 = vsyncpa [#allocation22], 0
    %s28 = scalar_lea.sflag [#allocation22], 1
    %29 = vsyncpa %s28, 0
    %30 = vsyncpa [#allocation25], 0
    %s31 = scalar_lea.sflag [#allocation25], 1
    %32 = vsyncpa %s31, 0
    loop: start=0, step=1, limit=4
    $region2: #{mim_processor_forward.1} parent=1 // loop_pre_header
      _
    $region3: #{mim_processor_forward.1} parent=1 // loop_header
      %s34 = sphi 0, %s38
      %p35 = scmp.ge.s32.totalorder %s34, 4
      %s42 = sphi 0, %s42
      %s44 = sphi 0, %s42
      %s45 = sphi 0, %s44
      %s59 = sphi 0, %s45
      %s63 = sphi 0, %s63
      %s65 = sphi 0, %s63
      %s66 = sphi 0, %s65
      %s80 = sphi 0, %s66
      %s84 = sphi 0, %s84
      %s86 = sphi 0, %s84
      %s87 = sphi 0, %s86
      %s101 = sphi 0, %s87
      %s105 = sphi 0, %s105
      %s107 = sphi 0, %s105
      %s108 = sphi 0, %s107
      %s122 = sphi 0, %s108
      %s126 = sphi 0, %s126
      %s128 = sphi 0, %s126
      %s129 = sphi 0, %s128
      %s143 = sphi 0, %s129
      %s147 = sphi 0, %s147
      %s149 = sphi 0, %s147
      %s150 = sphi 0, %s149
      %s164 = sphi 0, %s150
      %s168 = sphi 0, %s168
      %s170 = sphi 0, %s168
      %s171 = sphi 0, %s170
      %s185 = sphi 0, %s171
      %s189 = sphi 0, %s189
      %s191 = sphi 0, %s189
      %s192 = sphi 0, %s191
      %s206 = sphi 0, %s192
      %s210 = sphi 0, %s210
      %s212 = sphi 0, %s210
      %s213 = sphi 0, %s212
      %s227 = sphi 0, %s213
      %s231 = sphi 0, %s231
      %s233 = sphi 0, %s231
      %s234 = sphi 0, %s233
      %s248 = sphi 0, %s234
      %s252 = sphi 0, %s252
      %s254 = sphi 0, %s252
      %s255 = sphi 0, %s254
      %s269 = sphi 0, %s255
      %s275 = sphi 0, %s277
      %s278 = sphi 0, %s275
      %s279 = sphi 0, %s278
      %s295 = sphi 0, %s279
      %s301 = sphi 0, %s303
      %s304 = sphi 0, %s301
      %s305 = sphi 0, %s304
      %s321 = sphi 0, %s305
      %s327 = sphi 0, %s329
      %s330 = sphi 0, %s327
      %s331 = sphi 0, %s330
      %s347 = sphi 0, %s331
      %s351 = sphi 0, %s351
      %s353 = sphi 0, %s351
      %s354 = sphi 0, %s353
      %s368 = sphi 0, %s354
      %s372 = sphi 0, %s372
      %s374 = sphi 0, %s372
      %s375 = sphi 0, %s374
      %s389 = sphi 0, %s375
      %s393 = sphi 0, %s393
      %s395 = sphi 0, %s393
      %s396 = sphi 0, %s395
      %s410 = sphi 0, %s396
    $region4: #{mim_processor_forward.1} parent=1 // loop_header_branch
      %37 = sbr.rel (%p35) target = $region8
    $region5: #{mim_processor_forward.1} parent=1 // loop_body
      %s39 = ssub.s32 %s34, 1
      %s40 = ssub.s32 %s34, 2
      %s41 = sadd.s32 %s34, 1
      %s43 = sadd.s32 %s42, 1
      %p46 = scmp.eq.s32.totalorder %s34, 1
      %p47 = scmp.ne.s32.totalorder %s42, %s44
      %p48 = scmp.eq.s32.totalorder %s34, 0
      %p49 = por %p47, %p48
      %p50 = scmp.ne.s32.totalorder %s42, %s44
      %p51 = scmp.eq.s32.totalorder %s39, 1
      %p52 = por %p50, %p51
      %p53 = scmp.ne.s32.totalorder %s44, %s45
      %p54 = scmp.eq.s32.totalorder %s39, 0
      %p55 = por %p53, %p54
      %p56 = scmp.ne.s32.totalorder %s44, %s45
      %p57 = scmp.eq.s32.totalorder %s40, 1
      %p58 = por %p56, %p57
      %p60 = scmp.ne.s32.totalorder %s45, %s59
      %p61 = scmp.eq.s32.totalorder %s40, 0
      %p62 = por %p60, %p61
      %s64 = sadd.s32 %s63, 1
      %p67 = scmp.eq.s32.totalorder %s34, 1
      %p68 = scmp.ne.s32.totalorder %s63, %s65
      %p69 = scmp.eq.s32.totalorder %s34, 0
      %p70 = por %p68, %p69
      %p71 = scmp.ne.s32.totalorder %s63, %s65
      %p72 = scmp.eq.s32.totalorder %s39, 1
      %p73 = por %p71, %p72
      %p74 = scmp.ne.s32.totalorder %s65, %s66
      %p75 = scmp.eq.s32.totalorder %s39, 0
      %p76 = por %p74, %p75
      %p77 = scmp.ne.s32.totalorder %s65, %s66
      %p78 = scmp.eq.s32.totalorder %s40, 1
      %p79 = por %p77, %p78
      %p81 = scmp.ne.s32.totalorder %s66, %s80
      %p82 = scmp.eq.s32.totalorder %s40, 0
      %p83 = por %p81, %p82
      %s85 = sadd.s32 %s84, 1
      %p88 = scmp.eq.s32.totalorder %s34, 1
      %p89 = scmp.ne.s32.totalorder %s84, %s86
      %p90 = scmp.eq.s32.totalorder %s34, 0
      %p91 = por %p89, %p90
      %p92 = scmp.ne.s32.totalorder %s84, %s86
      %p93 = scmp.eq.s32.totalorder %s39, 1
      %p94 = por %p92, %p93
      %p95 = scmp.ne.s32.totalorder %s86, %s87
      %p96 = scmp.eq.s32.totalorder %s39, 0
      %p97 = por %p95, %p96
      %p98 = scmp.ne.s32.totalorder %s86, %s87
      %p99 = scmp.eq.s32.totalorder %s40, 1
      %p100 = por %p98, %p99
      %p102 = scmp.ne.s32.totalorder %s87, %s101
      %p103 = scmp.eq.s32.totalorder %s40, 0
      %p104 = por %p102, %p103
      %s106 = sadd.s32 %s105, 1
      %p109 = scmp.eq.s32.totalorder %s34, 1
      %p110 = scmp.ne.s32.totalorder %s105, %s107
      %p111 = scmp.eq.s32.totalorder %s34, 0
      %p112 = por %p110, %p111
      %p113 = scmp.ne.s32.totalorder %s105, %s107
      %p114 = scmp.eq.s32.totalorder %s39, 1
      %p115 = por %p113, %p114
      %p116 = scmp.ne.s32.totalorder %s107, %s108
      %p117 = scmp.eq.s32.totalorder %s39, 0
      %p118 = por %p116, %p117
      %p119 = scmp.ne.s32.totalorder %s107, %s108
      %p120 = scmp.eq.s32.totalorder %s40, 1
      %p121 = por %p119, %p120
      %p123 = scmp.ne.s32.totalorder %s108, %s122
      %p124 = scmp.eq.s32.totalorder %s40, 0
      %p125 = por %p123, %p124
      %s127 = sadd.s32 %s126, 1
      %p130 = scmp.eq.s32.totalorder %s34, 1
      %p131 = scmp.ne.s32.totalorder %s126, %s128
      %p132 = scmp.eq.s32.totalorder %s34, 0
      %p133 = por %p131, %p132
      %p134 = scmp.ne.s32.totalorder %s126, %s128
      %p135 = scmp.eq.s32.totalorder %s39, 1
      %p136 = por %p134, %p135
      %p137 = scmp.ne.s32.totalorder %s128, %s129
      %p138 = scmp.eq.s32.totalorder %s39, 0
      %p139 = por %p137, %p138
      %p140 = scmp.ne.s32.totalorder %s128, %s129
      %p141 = scmp.eq.s32.totalorder %s40, 1
      %p142 = por %p140, %p141
      %p144 = scmp.ne.s32.totalorder %s129, %s143
      %p145 = scmp.eq.s32.totalorder %s40, 0
      %p146 = por %p144, %p145
      %s148 = sadd.s32 %s147, 1
      %p151 = scmp.eq.s32.totalorder %s34, 1
      %p152 = scmp.ne.s32.totalorder %s147, %s149
      %p153 = scmp.eq.s32.totalorder %s34, 0
      %p154 = por %p152, %p153
      %p155 = scmp.ne.s32.totalorder %s147, %s149
      %p156 = scmp.eq.s32.totalorder %s39, 1
      %p157 = por %p155, %p156
      %p158 = scmp.ne.s32.totalorder %s149, %s150
      %p159 = scmp.eq.s32.totalorder %s39, 0
      %p160 = por %p158, %p159
      %p161 = scmp.ne.s32.totalorder %s149, %s150
      %p162 = scmp.eq.s32.totalorder %s40, 1
      %p163 = por %p161, %p162
      %p165 = scmp.ne.s32.totalorder %s150, %s164
      %p166 = scmp.eq.s32.totalorder %s40, 0
      %p167 = por %p165, %p166
      %s169 = sadd.s32 %s168, 1
      %p172 = scmp.eq.s32.totalorder %s34, 1
      %p173 = scmp.ne.s32.totalorder %s168, %s170
      %p174 = scmp.eq.s32.totalorder %s34, 0
      %p175 = por %p173, %p174
      %p176 = scmp.ne.s32.totalorder %s168, %s170
      %p177 = scmp.eq.s32.totalorder %s39, 1
      %p178 = por %p176, %p177
      %p179 = scmp.ne.s32.totalorder %s170, %s171
      %p180 = scmp.eq.s32.totalorder %s39, 0
      %p181 = por %p179, %p180
      %p182 = scmp.ne.s32.totalorder %s170, %s171
      %p183 = scmp.eq.s32.totalorder %s40, 1
      %p184 = por %p182, %p183
      %p186 = scmp.ne.s32.totalorder %s171, %s185
      %p187 = scmp.eq.s32.totalorder %s40, 0
      %p188 = por %p186, %p187
      %s190 = sadd.s32 %s189, 1
      %p193 = scmp.eq.s32.totalorder %s34, 1
      %p194 = scmp.ne.s32.totalorder %s189, %s191
      %p195 = scmp.eq.s32.totalorder %s34, 0
      %p196 = por %p194, %p195
      %p197 = scmp.ne.s32.totalorder %s189, %s191
      %p198 = scmp.eq.s32.totalorder %s39, 1
      %p199 = por %p197, %p198
      %p200 = scmp.ne.s32.totalorder %s191, %s192
      %p201 = scmp.eq.s32.totalorder %s39, 0
      %p202 = por %p200, %p201
      %p203 = scmp.ne.s32.totalorder %s191, %s192
      %p204 = scmp.eq.s32.totalorder %s40, 1
      %p205 = por %p203, %p204
      %p207 = scmp.ne.s32.totalorder %s192, %s206
      %p208 = scmp.eq.s32.totalorder %s40, 0
      %p209 = por %p207, %p208
      %s211 = sadd.s32 %s210, 1
      %p214 = scmp.eq.s32.totalorder %s34, 1
      %p215 = scmp.ne.s32.totalorder %s210, %s212
      %p216 = scmp.eq.s32.totalorder %s34, 0
      %p217 = por %p215, %p216
      %p218 = scmp.ne.s32.totalorder %s210, %s212
      %p219 = scmp.eq.s32.totalorder %s39, 1
      %p220 = por %p218, %p219
      %p221 = scmp.ne.s32.totalorder %s212, %s213
      %p222 = scmp.eq.s32.totalorder %s39, 0
      %p223 = por %p221, %p222
      %p224 = scmp.ne.s32.totalorder %s212, %s213
      %p225 = scmp.eq.s32.totalorder %s40, 1
      %p226 = por %p224, %p225
      %p228 = scmp.ne.s32.totalorder %s213, %s227
      %p229 = scmp.eq.s32.totalorder %s40, 0
      %p230 = por %p228, %p229
      %s232 = sadd.s32 %s231, 1
      %p235 = scmp.eq.s32.totalorder %s34, 1
      %p236 = scmp.ne.s32.totalorder %s231, %s233
      %p237 = scmp.eq.s32.totalorder %s34, 0
      %p238 = por %p236, %p237
      %p239 = scmp.ne.s32.totalorder %s231, %s233
      %p240 = scmp.eq.s32.totalorder %s39, 1
      %p241 = por %p239, %p240
      %p242 = scmp.ne.s32.totalorder %s233, %s234
      %p243 = scmp.eq.s32.totalorder %s39, 0
      %p244 = por %p242, %p243
      %p245 = scmp.ne.s32.totalorder %s233, %s234
      %p246 = scmp.eq.s32.totalorder %s40, 1
      %p247 = por %p245, %p246
      %p249 = scmp.ne.s32.totalorder %s234, %s248
      %p250 = scmp.eq.s32.totalorder %s40, 0
      %p251 = por %p249, %p250
      %s253 = sadd.s32 %s252, 1
      %p256 = scmp.eq.s32.totalorder %s34, 1
      %p257 = scmp.ne.s32.totalorder %s252, %s254
      %p258 = scmp.eq.s32.totalorder %s34, 0
      %p259 = por %p257, %p258
      %p260 = scmp.ne.s32.totalorder %s252, %s254
      %p261 = scmp.eq.s32.totalorder %s39, 1
      %p262 = por %p260, %p261
      %p263 = scmp.ne.s32.totalorder %s254, %s255
      %p264 = scmp.eq.s32.totalorder %s39, 0
      %p265 = por %p263, %p264
      %p266 = scmp.ne.s32.totalorder %s254, %s255
      %p267 = scmp.eq.s32.totalorder %s40, 1
      %p268 = por %p266, %p267
      %p270 = scmp.ne.s32.totalorder %s255, %s269
      %p271 = scmp.eq.s32.totalorder %s40, 0
      %p272 = por %p270, %p271
      %s273 = ssub.s32 %s34, %s41
      %p274 = scmp.eq.s32.totalorder %s273, 0
      %s276 = sadd.s32 %s275, 1
      %s277 = scalar_select %p274, %s275, %s276
      %p280 = pneg %p274
      %p281 = scmp.eq.s32.totalorder %s34, 1
      %p282 = por %p280, %p281
      %p283 = scmp.ne.s32.totalorder %s275, %s278
      %p284 = scmp.eq.s32.totalorder %s34, 0
      %p285 = por %p283, %p284
      %p286 = scmp.ne.s32.totalorder %s275, %s278
      %p287 = scmp.eq.s32.totalorder %s39, 1
      %p288 = por %p286, %p287
      %p289 = scmp.ne.s32.totalorder %s278, %s279
      %p290 = scmp.eq.s32.totalorder %s39, 0
      %p291 = por %p289, %p290
      %p292 = scmp.ne.s32.totalorder %s278, %s279
      %p293 = scmp.eq.s32.totalorder %s40, 1
      %p294 = por %p292, %p293
      %p296 = scmp.ne.s32.totalorder %s279, %s295
      %p297 = scmp.eq.s32.totalorder %s40, 0
      %p298 = por %p296, %p297
      %s299 = ssub.s32 %s34, %s41
      %p300 = scmp.eq.s32.totalorder %s299, 0
      %s302 = sadd.s32 %s301, 1
      %s303 = scalar_select %p300, %s301, %s302
      %p306 = pneg %p300
      %p307 = scmp.eq.s32.totalorder %s34, 1
      %p308 = por %p306, %p307
      %p309 = scmp.ne.s32.totalorder %s301, %s304
      %p310 = scmp.eq.s32.totalorder %s34, 0
      %p311 = por %p309, %p310
      %p312 = scmp.ne.s32.totalorder %s301, %s304
      %p313 = scmp.eq.s32.totalorder %s39, 1
      %p314 = por %p312, %p313
      %p315 = scmp.ne.s32.totalorder %s304, %s305
      %p316 = scmp.eq.s32.totalorder %s39, 0
      %p317 = por %p315, %p316
      %p318 = scmp.ne.s32.totalorder %s304, %s305
      %p319 = scmp.eq.s32.totalorder %s40, 1
      %p320 = por %p318, %p319
      %p322 = scmp.ne.s32.totalorder %s305, %s321
      %p323 = scmp.eq.s32.totalorder %s40, 0
      %p324 = por %p322, %p323
      %s325 = ssub.s32 %s34, %s41
      %p326 = scmp.eq.s32.totalorder %s325, 0
      %s328 = sadd.s32 %s327, 1
      %s329 = scalar_select %p326, %s327, %s328
      %p332 = pneg %p326
      %p333 = scmp.eq.s32.totalorder %s34, 1
      %p334 = por %p332, %p333
      %p335 = scmp.ne.s32.totalorder %s327, %s330
      %p336 = scmp.eq.s32.totalorder %s34, 0
      %p337 = por %p335, %p336
      %p338 = scmp.ne.s32.totalorder %s327, %s330
      %p339 = scmp.eq.s32.totalorder %s39, 1
      %p340 = por %p338, %p339
      %p341 = scmp.ne.s32.totalorder %s330, %s331
      %p342 = scmp.eq.s32.totalorder %s39, 0
      %p343 = por %p341, %p342
      %p344 = scmp.ne.s32.totalorder %s330, %s331
      %p345 = scmp.eq.s32.totalorder %s40, 1
      %p346 = por %p344, %p345
      %p348 = scmp.ne.s32.totalorder %s331, %s347
      %p349 = scmp.eq.s32.totalorder %s40, 0
      %p350 = por %p348, %p349
      %s352 = sadd.s32 %s351, 1
      %p355 = scmp.eq.s32.totalorder %s34, 1
      %p356 = scmp.ne.s32.totalorder %s351, %s353
      %p357 = scmp.eq.s32.totalorder %s34, 0
      %p358 = por %p356, %p357
      %p359 = scmp.ne.s32.totalorder %s351, %s353
      %p360 = scmp.eq.s32.totalorder %s39, 1
      %p361 = por %p359, %p360
      %p362 = scmp.ne.s32.totalorder %s353, %s354
      %p363 = scmp.eq.s32.totalorder %s39, 0
      %p364 = por %p362, %p363
      %p365 = scmp.ne.s32.totalorder %s353, %s354
      %p366 = scmp.eq.s32.totalorder %s40, 1
      %p367 = por %p365, %p366
      %p369 = scmp.ne.s32.totalorder %s354, %s368
      %p370 = scmp.eq.s32.totalorder %s40, 0
      %p371 = por %p369, %p370
      %s373 = sadd.s32 %s372, 1
      %p376 = scmp.eq.s32.totalorder %s34, 1
      %p377 = scmp.ne.s32.totalorder %s372, %s374
      %p378 = scmp.eq.s32.totalorder %s34, 0
      %p379 = por %p377, %p378
      %p380 = scmp.ne.s32.totalorder %s372, %s374
      %p381 = scmp.eq.s32.totalorder %s39, 1
      %p382 = por %p380, %p381
      %p383 = scmp.ne.s32.totalorder %s374, %s375
      %p384 = scmp.eq.s32.totalorder %s39, 0
      %p385 = por %p383, %p384
      %p386 = scmp.ne.s32.totalorder %s374, %s375
      %p387 = scmp.eq.s32.totalorder %s40, 1
      %p388 = por %p386, %p387
      %p390 = scmp.ne.s32.totalorder %s375, %s389
      %p391 = scmp.eq.s32.totalorder %s40, 0
      %p392 = por %p390, %p391
      %s394 = sadd.s32 %s393, 1
      %p397 = scmp.eq.s32.totalorder %s34, 1
      %p398 = scmp.ne.s32.totalorder %s393, %s395
      %p399 = scmp.eq.s32.totalorder %s34, 0
      %p400 = por %p398, %p399
      %p401 = scmp.ne.s32.totalorder %s393, %s395
      %p402 = scmp.eq.s32.totalorder %s39, 1
      %p403 = por %p401, %p402
      %p404 = scmp.ne.s32.totalorder %s395, %s396
      %p405 = scmp.eq.s32.totalorder %s39, 0
      %p406 = por %p404, %p405
      %p407 = scmp.ne.s32.totalorder %s395, %s396
      %p408 = scmp.eq.s32.totalorder %s40, 1
      %p409 = por %p407, %p408
      %p411 = scmp.ne.s32.totalorder %s396, %s410
      %p412 = scmp.eq.s32.totalorder %s40, 0
      %p413 = por %p411, %p412
      %p414 = scmp.le.s32.totalorder 1, %s34
      %p415 = scmp.lt.s32.totalorder %s34, 3
      %p416 = pnand %p414, %p415
      %p417 = pneg %p416
      // Predicated region
      $region9: #{mim_processor_forward.1} parent=5 // pred_check
        _
      $region10: #{mim_processor_forward.1} parent=5 // pred_check_branch
        %419 = sbr.rel (%p416) target = $region12
      $region11: #{mim_processor_forward.1} parent=5 // pred_region
        %s420 = ssub.s32 %s34, 1
        // Predicated region
        $region13: #{mim_processor_forward.1} parent=11 // pred_check
          %p421 = pneg %p55
        $region14: #{mim_processor_forward.1} parent=11 // pred_check_branch
          %423 = sbr.rel (%p421) target = $region16
        $region15: #{mim_processor_forward.1} parent=11 // pred_region
          _
        $region16: #{mim_processor_forward.1} parent=11 // pred_fallthru
          _
        // Predicated region
        $region17: #{mim_processor_forward.1} parent=11 // pred_check
          %p424 = pneg %p76
        $region18: #{mim_processor_forward.1} parent=11 // pred_check_branch
          %426 = sbr.rel (%p424) target = $region20
        $region19: #{mim_processor_forward.1} parent=11 // pred_region
          %s428 = ssub.s32 1024, 1024
          %429 = vsyncadd [#allocation8], %s428
          %s430 = sshll.u32 [#allocation7], 4
          %s431 = int_to_ptr.vmem [resolvable:$true] %s430
          %436 = dma.hbm_to_vmem [thread:$0]  %s1, 1024, %s431, [#allocation8], 128, 128, 8
        $region20: #{mim_processor_forward.1} parent=11 // pred_fallthru
          _
        // Predicated region
        $region21: #{mim_processor_forward.1} parent=11 // pred_check
          %p437 = pneg %p97
        $region22: #{mim_processor_forward.1} parent=11 // pred_check_branch
          %439 = sbr.rel (%p437) target = $region24
        $region23: #{mim_processor_forward.1} parent=11 // pred_region
          %s441 = ssub.s32 32, 32
          %442 = vsyncadd [#allocation10], %s441
          %s444 = sshll.u32 [#allocation9], 4
          %s445 = int_to_ptr.vmem [resolvable:$true] %s444
          %447 = dma.hbm_to_vmem [thread:$0]  %s2, 32, %s445, [#allocation10]
        $region24: #{mim_processor_forward.1} parent=11 // pred_fallthru
          _
        // Predicated region
        $region25: #{mim_processor_forward.1} parent=11 // pred_check
          %p448 = pneg %p118
        $region26: #{mim_processor_forward.1} parent=11 // pred_check_branch
          %450 = sbr.rel (%p448) target = $region28
        $region27: #{mim_processor_forward.1} parent=11 // pred_region
          %s452 = ssub.s32 4096, 4096
          %453 = vsyncadd [#allocation10], %s452
          %s454 = sshll.u32 [#allocation11], 4
          %s455 = int_to_ptr.vmem [resolvable:$true] %s454
          %460 = dma.hbm_to_vmem [thread:$0]  %s3, 4096, %s455, [#allocation10], 64, 64, 4
        $region28: #{mim_processor_forward.1} parent=11 // pred_fallthru
          _
        // Predicated region
        $region29: #{mim_processor_forward.1} parent=11 // pred_check
          %p461 = pneg %p139
        $region30: #{mim_processor_forward.1} parent=11 // pred_check_branch
          %463 = sbr.rel (%p461) target = $region32
        $region31: #{mim_processor_forward.1} parent=11 // pred_region
          _
        $region32: #{mim_processor_forward.1} parent=11 // pred_fallthru
          _
        // Predicated region
        $region33: #{mim_processor_forward.1} parent=11 // pred_check
          %p464 = pneg %p160
        $region34: #{mim_processor_forward.1} parent=11 // pred_check_branch
          %466 = sbr.rel (%p464) target = $region36
        $region35: #{mim_processor_forward.1} parent=11 // pred_region
          %s468 = ssub.s32 32, 32
          %469 = vsyncadd [#allocation13], %s468
          %s471 = sshll.u32 [#allocation12], 4
          %s472 = int_to_ptr.vmem [resolvable:$true] %s471
          %474 = dma.hbm_to_vmem [thread:$0]  %s5, 32, %s472, [#allocation13]
        $region36: #{mim_processor_forward.1} parent=11 // pred_fallthru
          _
        // Predicated region
        $region37: #{mim_processor_forward.1} parent=11 // pred_check
          %p475 = pneg %p181
        $region38: #{mim_processor_forward.1} parent=11 // pred_check_branch
          %477 = sbr.rel (%p475) target = $region40
        $region39: #{mim_processor_forward.1} parent=11 // pred_region
          %s479 = ssub.s32 32, 32
          %480 = vsyncadd [#allocation13], %s479
          %s482 = sshll.u32 [#allocation14], 4
          %s483 = int_to_ptr.vmem [resolvable:$true] %s482
          %485 = dma.hbm_to_vmem [thread:$0]  %s6, 32, %s483, [#allocation13]
        $region40: #{mim_processor_forward.1} parent=11 // pred_fallthru
          _
        // Predicated region
        $region41: #{mim_processor_forward.1} parent=11 // pred_check
          %p486 = pneg %p202
        $region42: #{mim_processor_forward.1} parent=11 // pred_check_branch
          %488 = sbr.rel (%p486) target = $region44
        $region43: #{mim_processor_forward.1} parent=11 // pred_region
          %s490 = ssub.s32 1024, 1024
          %491 = vsyncadd [#allocation16], %s490
          %s492 = sshll.u32 [#allocation15], 4
          %s493 = int_to_ptr.vmem [resolvable:$true] %s492
          %498 = dma.hbm_to_vmem [thread:$0]  %s7, 1024, %s493, [#allocation16], 64, 64, 4
        $region44: #{mim_processor_forward.1} parent=11 // pred_fallthru
          _
        // Predicated region
        $region45: #{mim_processor_forward.1} parent=11 // pred_check
          %p499 = pneg %p223
        $region46: #{mim_processor_forward.1} parent=11 // pred_check_branch
          %501 = sbr.rel (%p499) target = $region48
        $region47: #{mim_processor_forward.1} parent=11 // pred_region
          %s503 = ssub.s32 32768, 32768
          %504 = vsyncadd [#allocation16], %s503
          %s505 = sshll.u32 [#allocation17], 4
          %s506 = int_to_ptr.vmem [resolvable:$true] %s505
          %511 = dma.hbm_to_vmem [thread:$0]  %s8, 32768, %s506, [#allocation16], 256, 256, 16
        $region48: #{mim_processor_forward.1} parent=11 // pred_fallthru
          _
        // Predicated region
        $region49: #{mim_processor_forward.1} parent=11 // pred_check
          %p512 = pneg %p244
        $region50: #{mim_processor_forward.1} parent=11 // pred_check_branch
          %514 = sbr.rel (%p512) target = $region52
        $region51: #{mim_processor_forward.1} parent=11 // pred_region
          %s516 = ssub.s32 32, 32
          %517 = vsyncadd [#allocation19], %s516
          %s519 = sshll.u32 [#allocation18], 4
          %s520 = int_to_ptr.vmem [resolvable:$true] %s519
          %522 = dma.hbm_to_vmem [thread:$0]  %s9, 32, %s520, [#allocation19]
        $region52: #{mim_processor_forward.1} parent=11 // pred_fallthru
          _
        // Predicated region
        $region53: #{mim_processor_forward.1} parent=11 // pred_check
          %p523 = pneg %p265
        $region54: #{mim_processor_forward.1} parent=11 // pred_check_branch
          %525 = sbr.rel (%p523) target = $region56
        $region55: #{mim_processor_forward.1} parent=11 // pred_region
          %s527 = ssub.s32 32, 32
          %528 = vsyncadd [#allocation19], %s527
          %s530 = sshll.u32 [#allocation20], 4
          %s531 = int_to_ptr.vmem [resolvable:$true] %s530
          %533 = dma.hbm_to_vmem [thread:$0]  %s10, 32, %s531, [#allocation19]
        $region56: #{mim_processor_forward.1} parent=11 // pred_fallthru
          _
        // Predicated region
        $region57: #{mim_processor_forward.1} parent=11 // pred_check
          %p534 = pneg %p364
        $region58: #{mim_processor_forward.1} parent=11 // pred_check_branch
          %536 = sbr.rel (%p534) target = $region60
        $region59: #{mim_processor_forward.1} parent=11 // pred_region
          _
        $region60: #{mim_processor_forward.1} parent=11 // pred_fallthru
          _
      $region12: #{mim_processor_forward.1} parent=5 // pred_fallthru
        _
      %p537 = scmp.lt.s32.totalorder %s34, 2
      // Predicated region
      $region61: #{mim_processor_forward.1} parent=5 // pred_check
        %p538 = pneg %p537
      $region62: #{mim_processor_forward.1} parent=5 // pred_check_branch
        %540 = sbr.rel (%p538) target = $region64
      $region63: #{mim_processor_forward.1} parent=5 // pred_region
        // Predicated region
        $region65: #{mim_processor_forward.1} parent=63 // pred_check
          %p541 = pneg %p285
        $region66: #{mim_processor_forward.1} parent=63 // pred_check_branch
          %543 = sbr.rel (%p541) target = $region68
        $region67: #{mim_processor_forward.1} parent=63 // pred_region
          %s544 = sand.u32 %s34, 1
          %s545 = scalar_lea.sflag [#allocation22], %s544
          %s546 = sand.u32 %s275, 1
          %s547 = smul.addr %s546, 2048
          %s548 = scalar_lea.vmem [#allocation21], %s547
          %s549 = smul.u32 32, %s34
          %s551 = ssub.s32 32768, 32768
          %552 = vsyncadd %s545, %s551
          %s553 = smul.addr %s549, 128
          %s554 = scalar_lea.hbm %s11, %s553
          %s555 = sshll.u32 %s548, 4
          %s556 = int_to_ptr.vmem [resolvable:$true] %s555
          %561 = dma.hbm_to_vmem [thread:$0]  %s554, 32768, %s556, %s545, 8192, 4096, 256
        $region68: #{mim_processor_forward.1} parent=63 // pred_fallthru
          _
        // Predicated region
        $region69: #{mim_processor_forward.1} parent=63 // pred_check
          %p562 = pneg %p311
        $region70: #{mim_processor_forward.1} parent=63 // pred_check_branch
          %564 = sbr.rel (%p562) target = $region72
        $region71: #{mim_processor_forward.1} parent=63 // pred_region
          %s565 = sand.u32 %s34, 1
          %s566 = scalar_lea.sflag [#allocation22], %s565
          %s567 = sand.u32 %s301, 1
          %s568 = smul.addr %s567, 32
          %s569 = scalar_lea.vmem [#allocation23], %s568
          %s570 = smul.u32 32, %s34
          %s572 = ssub.s32 512, 512
          %573 = vsyncadd %s566, %s572
          %s574 = smul.addr %s570, 16
          %s575 = scalar_lea.hbm %s12, %s574
          %s577 = sshll.u32 %s569, 4
          %s578 = int_to_ptr.vmem [resolvable:$true] %s577
          %580 = dma.hbm_to_vmem [thread:$0]  %s575, 512, %s578, %s566
        $region72: #{mim_processor_forward.1} parent=63 // pred_fallthru
          _
        // Predicated region
        $region73: #{mim_processor_forward.1} parent=63 // pred_check
          %p581 = pneg %p337
        $region74: #{mim_processor_forward.1} parent=63 // pred_check_branch
          %583 = sbr.rel (%p581) target = $region76
        $region75: #{mim_processor_forward.1} parent=63 // pred_region
          %s584 = sand.u32 %s327, 1
          %s585 = scalar_lea.sflag [#allocation25], %s584
          %s586 = sand.u32 %s327, 1
          %s587 = smul.addr %s586, 32
          %s588 = scalar_lea.vmem [#allocation24], %s587
          %s589 = smul.u32 32, %s34
          %s591 = ssub.s32 512, 512
          %592 = vsyncadd %s585, %s591
          %s593 = smul.addr %s589, 16
          %s594 = scalar_lea.hbm %s13, %s593
          %s596 = sshll.u32 %s588, 4
          %s597 = int_to_ptr.vmem [resolvable:$true] %s596
          %599 = dma.hbm_to_vmem [thread:$0]  %s594, 512, %s597, %s585
        $region76: #{mim_processor_forward.1} parent=63 // pred_fallthru
          _
      $region64: #{mim_processor_forward.1} parent=5 // pred_fallthru
        _
      %p600 = scmp.le.s32.totalorder 1, %s34
      %p601 = scmp.lt.s32.totalorder %s34, 3
      %p602 = pnand %p600, %p601
      %p603 = pneg %p602
      // Predicated region
      $region77: #{mim_processor_forward.1} parent=5 // pred_check
        _
      $region78: #{mim_processor_forward.1} parent=5 // pred_check_branch
        %605 = sbr.rel (%p602) target = $region80
      $region79: #{mim_processor_forward.1} parent=5 // pred_region
        %s606 = ssub.s32 %s34, 1
        // Predicated region
        $region81: #{mim_processor_forward.1} parent=79 // pred_check
          %p607 = pneg %p76
        $region82: #{mim_processor_forward.1} parent=79 // pred_check_branch
          %609 = sbr.rel (%p607) target = $region84
        $region83: #{mim_processor_forward.1} parent=79 // pred_region
          %610 = dma.done [#allocation8], 1024
        $region84: #{mim_processor_forward.1} parent=79 // pred_fallthru
          _
        // Predicated region
        $region85: #{mim_processor_forward.1} parent=79 // pred_check
          %p611 = pneg %p97
        $region86: #{mim_processor_forward.1} parent=79 // pred_check_branch
          %613 = sbr.rel (%p611) target = $region88
        $region87: #{mim_processor_forward.1} parent=79 // pred_region
          %614 = dma.done [#allocation10], 32
        $region88: #{mim_processor_forward.1} parent=79 // pred_fallthru
          _
        // Predicated region
        $region89: #{mim_processor_forward.1} parent=79 // pred_check
          %p615 = pneg %p118
        $region90: #{mim_processor_forward.1} parent=79 // pred_check_branch
          %617 = sbr.rel (%p615) target = $region92
        $region91: #{mim_processor_forward.1} parent=79 // pred_region
          %618 = dma.done [#allocation10], 4096
        $region92: #{mim_processor_forward.1} parent=79 // pred_fallthru
          _
        // Predicated region
        $region93: #{mim_processor_forward.1} parent=79 // pred_check
          %p619 = pneg %p160
        $region94: #{mim_processor_forward.1} parent=79 // pred_check_branch
          %621 = sbr.rel (%p619) target = $region96
        $region95: #{mim_processor_forward.1} parent=79 // pred_region
          %622 = dma.done [#allocation13], 32
        $region96: #{mim_processor_forward.1} parent=79 // pred_fallthru
          _
        // Predicated region
        $region97: #{mim_processor_forward.1} parent=79 // pred_check
          %p623 = pneg %p181
        $region98: #{mim_processor_forward.1} parent=79 // pred_check_branch
          %625 = sbr.rel (%p623) target = $region100
        $region99: #{mim_processor_forward.1} parent=79 // pred_region
          %626 = dma.done [#allocation13], 32
        $region100: #{mim_processor_forward.1} parent=79 // pred_fallthru
          _
        // Predicated region
        $region101: #{mim_processor_forward.1} parent=79 // pred_check
          %p627 = pneg %p202
        $region102: #{mim_processor_forward.1} parent=79 // pred_check_branch
          %629 = sbr.rel (%p627) target = $region104
        $region103: #{mim_processor_forward.1} parent=79 // pred_region
          %630 = dma.done [#allocation16], 1024
        $region104: #{mim_processor_forward.1} parent=79 // pred_fallthru
          _
        // Predicated region
        $region105: #{mim_processor_forward.1} parent=79 // pred_check
          %p631 = pneg %p223
        $region106: #{mim_processor_forward.1} parent=79 // pred_check_branch
          %633 = sbr.rel (%p631) target = $region108
        $region107: #{mim_processor_forward.1} parent=79 // pred_region
          %634 = dma.done [#allocation16], 32768
        $region108: #{mim_processor_forward.1} parent=79 // pred_fallthru
          _
        // Predicated region
        $region109: #{mim_processor_forward.1} parent=79 // pred_check
          %p635 = pneg %p244
        $region110: #{mim_processor_forward.1} parent=79 // pred_check_branch
          %637 = sbr.rel (%p635) target = $region112
        $region111: #{mim_processor_forward.1} parent=79 // pred_region
          %638 = dma.done [#allocation19], 32
        $region112: #{mim_processor_forward.1} parent=79 // pred_fallthru
          _
        // Predicated region
        $region113: #{mim_processor_forward.1} parent=79 // pred_check
          %p639 = pneg %p265
        $region114: #{mim_processor_forward.1} parent=79 // pred_check_branch
          %641 = sbr.rel (%p639) target = $region116
        $region115: #{mim_processor_forward.1} parent=79 // pred_region
          %642 = dma.done [#allocation19], 32
        $region116: #{mim_processor_forward.1} parent=79 // pred_fallthru
          _
        %s643 = sand.u32 %s39, 1
        %s644 = scalar_lea.sflag [#allocation22], %s643
        %s645 = sand.u32 %s278, 1
        %s646 = smul.addr %s645, 2048
        %s647 = scalar_lea.vmem [#allocation21], %s646
        // Predicated region
        $region117: #{mim_processor_forward.1} parent=79 // pred_check
          %p648 = pneg %p291
        $region118: #{mim_processor_forward.1} parent=79 // pred_check_branch
          %650 = sbr.rel (%p648) target = $region120
        $region119: #{mim_processor_forward.1} parent=79 // pred_region
          %651 = dma.done %s644, 32768
        $region120: #{mim_processor_forward.1} parent=79 // pred_fallthru
          _
        %s652 = sand.u32 %s39, 1
        %s653 = scalar_lea.sflag [#allocation22], %s652
        %s654 = sand.u32 %s304, 1
        %s655 = smul.addr %s654, 32
        %s656 = scalar_lea.vmem [#allocation23], %s655
        // Predicated region
        $region121: #{mim_processor_forward.1} parent=79 // pred_check
          %p657 = pneg %p317
        $region122: #{mim_processor_forward.1} parent=79 // pred_check_branch
          %659 = sbr.rel (%p657) target = $region124
        $region123: #{mim_processor_forward.1} parent=79 // pred_region
          %660 = dma.done %s653, 512
        $region124: #{mim_processor_forward.1} parent=79 // pred_fallthru
          _
        %s661 = sand.u32 %s330, 1
        %s662 = scalar_lea.sflag [#allocation25], %s661
        %s663 = sand.u32 %s330, 1
        %s664 = smul.addr %s663, 32
        %s665 = scalar_lea.vmem [#allocation24], %s664
        // Predicated region
        $region125: #{mim_processor_forward.1} parent=79 // pred_check
          %p666 = pneg %p343
        $region126: #{mim_processor_forward.1} parent=79 // pred_check_branch
          %668 = sbr.rel (%p666) target = $region128
        $region127: #{mim_processor_forward.1} parent=79 // pred_region
          %669 = dma.done %s662, 512
        $region128: #{mim_processor_forward.1} parent=79 // pred_fallthru
          _
        %p670 = pneg %p55
        %p671 = pneg %p52
        %p672 = pneg %p76
        %p673 = pneg %p73
        %p674 = pneg %p97
        %p675 = pneg %p94
        %p676 = pneg %p118
        %p677 = pneg %p115
        %p678 = pneg %p139
        %p679 = pneg %p136
        %p680 = pneg %p160
        %p681 = pneg %p157
        %p682 = pneg %p181
        %p683 = pneg %p178
        %p684 = pneg %p202
        %p685 = pneg %p199
        %p686 = pneg %p223
        %p687 = pneg %p220
        %p688 = pneg %p244
        %p689 = pneg %p241
        %p690 = pneg %p265
        %p691 = pneg %p262
        %s692 = sand.u32 %s39, 1
        %s693 = scalar_lea.sflag [#allocation22], %s692
        %s694 = sand.u32 %s278, 1
        %s695 = smul.addr %s694, 2048
        %s696 = scalar_lea.vmem [#allocation21], %s695
        %p697 = pneg %p291
        %p698 = pneg %p288
        %s699 = sand.u32 %s39, 1
        %s700 = scalar_lea.sflag [#allocation22], %s699
        %s701 = sand.u32 %s304, 1
        %s702 = smul.addr %s701, 32
        %s703 = scalar_lea.vmem [#allocation23], %s702
        %p704 = pneg %p317
        %p705 = pneg %p314
        %s706 = sand.u32 %s330, 1
        %s707 = scalar_lea.sflag [#allocation25], %s706
        %s708 = sand.u32 %s330, 1
        %s709 = smul.addr %s708, 32
        %s710 = scalar_lea.vmem [#allocation24], %s709
        %p711 = pneg %p343
        %p712 = pneg %p340
        %p713 = pneg %p364
        %p714 = pneg %p361
        %p715 = pneg %p385
        %p716 = pneg %p382
        %p717 = pneg %p406
        %p718 = pneg %p403
        %s719 = smul.u32 32, %s39
        %s720 = smul.u32 32, %s39
        %s721 = smul.u32 32, %s39
        %p723 = scmp.eq.s32.totalorder %s39, 0
        // Predicated region
        $region129: #{mim_processor_forward.1} parent=79 // pred_check
          %p724 = pneg %p723
        $region130: #{mim_processor_forward.1} parent=79 // pred_check_branch
          %726 = sbr.rel (%p724) target = $region132
        $region131: #{mim_processor_forward.1} parent=79 // pred_region
          %v727 = vld [vmem:[%s0] sm:$0xf]
          %v728 = vld [vmem:[%s0 + $0x4] sm:$0xf]
          %v729 = vld [vmem:[%s0 + $0x8] sm:$0xf]
          %v730 = vld [vmem:[%s0 + $0xc] sm:$0xf]
          %v731 = vld [vmem:[%s0 + $0x10] sm:$0xf]
          %v732 = vld [vmem:[%s0 + $0x14] sm:$0xf]
          %v733 = vld [vmem:[%s0 + $0x18] sm:$0xf]
          %v734 = vld [vmem:[%s0 + $0x1c] sm:$0xf]
          %v735 = vld [vmem:[%s0 + $0x20] sm:$0xf]
          %v736 = vld [vmem:[%s0 + $0x24] sm:$0xf]
          %v737 = vld [vmem:[%s0 + $0x28] sm:$0xf]
          %v738 = vld [vmem:[%s0 + $0x2c] sm:$0xf]
          %v739 = vld [vmem:[%s0 + $0x30] sm:$0xf]
          %v740 = vld [vmem:[%s0 + $0x34] sm:$0xf]
          %v741 = vld [vmem:[%s0 + $0x38] sm:$0xf]
          %v742 = vld [vmem:[%s0 + $0x3c] sm:$0xf]
          %v743 = vld [vmem:[#allocation7] sm:$0xff]
          %v744 = vld [vmem:[#allocation7 + $0x8] sm:$0xff]
          %v745 = vld [vmem:[#allocation7 + $0x10] sm:$0xff]
          %v746 = vld [vmem:[#allocation7 + $0x18] sm:$0xff]
          %v747 = vld [vmem:[#allocation7 + $0x20] sm:$0xff]
          %v748 = vld [vmem:[#allocation7 + $0x28] sm:$0xff]
          %v749 = vld [vmem:[#allocation7 + $0x30] sm:$0xff]
          %v750 = vld [vmem:[#allocation7 + $0x38] sm:$0xff]
          %v751 = vld [vmem:[#allocation9] sm:$0x3]
          %v753 = vlaneseq
          %v754 = vshrl.u32 %v753, 7
          %v755 = vsub.s32 0, %v754
          %v756 = vrot.slane %v751, %v755
          %v757 = vlaneseq
          %v758 = vshrl.u32 %v757, 7
          %v759 = vsub.s32 1, %v758
          %v760 = vrot.slane %v751, %v759
          %v779 = vunpack.c.l.b16 %v727
          %v780 = vunpack.c.l.b16 %v728
          %v781 = vunpack.c.l.b16 %v729
          %v782 = vunpack.c.l.b16 %v730
          %v783 = vunpack.c.l.b16 %v731
          %v784 = vunpack.c.l.b16 %v732
          %v785 = vunpack.c.l.b16 %v733
          %v786 = vunpack.c.l.b16 %v734
          %v787 = vunpack.c.l.b16 %v735
          %v788 = vunpack.c.l.b16 %v736
          %v789 = vunpack.c.l.b16 %v737
          %v790 = vunpack.c.l.b16 %v738
          %v791 = vunpack.c.l.b16 %v739
          %v792 = vunpack.c.l.b16 %v740
          %v793 = vunpack.c.l.b16 %v741
          %v794 = vunpack.c.l.b16 %v742
          %v795 = vpack.c.b16 %v780, %v779
          %v796 = vpack.c.b16 %v782, %v781
          %v797 = vpack.c.b16 %v784, %v783
          %v798 = vpack.c.b16 %v786, %v785
          %v799 = vpack.c.b16 %v788, %v787
          %v800 = vpack.c.b16 %v790, %v789
          %v801 = vpack.c.b16 %v792, %v791
          %v802 = vpack.c.b16 %v794, %v793
          %v811 = vunpack.c.l.b16 %v743
          %v812 = vunpack.c.h.b16 %v743
          %v813 = vunpack.c.l.b16 %v744
          %v814 = vunpack.c.h.b16 %v744
          %v815 = vunpack.c.l.b16 %v745
          %v816 = vunpack.c.h.b16 %v745
          %v817 = vunpack.c.l.b16 %v746
          %v818 = vunpack.c.h.b16 %v746
          %v819 = vunpack.c.l.b16 %v747
          %v820 = vunpack.c.h.b16 %v747
          %v821 = vunpack.c.l.b16 %v748
          %v822 = vunpack.c.h.b16 %v748
          %v823 = vunpack.c.l.b16 %v749
          %v824 = vunpack.c.h.b16 %v749
          %v825 = vunpack.c.l.b16 %v750
          %v826 = vunpack.c.h.b16 %v750
          %v827 = vpack.c.b16 %v813, %v811
          %v828 = vpack.c.b16 %v814, %v812
          %v829 = vpack.c.b16 %v817, %v815
          %v830 = vpack.c.b16 %v818, %v816
          %v831 = vpack.c.b16 %v821, %v819
          %v832 = vpack.c.b16 %v822, %v820
          %v833 = vpack.c.b16 %v825, %v823
          %v834 = vpack.c.b16 %v826, %v824
          %vm843 = vcmask 523264
          %v845 = vsel %vm843, %v795, 0
          %v848 = vsel %vm843, %v796, 0
          %v851 = vsel %vm843, %v797, 0
          %v854 = vsel %vm843, %v798, 0
          %v857 = vsel %vm843, %v799, 0
          %v860 = vsel %vm843, %v800, 0
          %v863 = vsel %vm843, %v801, 0
          %v866 = vsel %vm843, %v802, 0
          %868 = vmatprep.subr.bf16.mxu0 0
          %869 = vmatpush1.bf16.msra.mxu0 0
          %870 = vmatprep.subr.bf16.mxu0 0
          %871 = vmatpush1.bf16.msra.mxu0 0
          %872 = vmatprep.subr.bf16.mxu0 0
          %873 = vmatpush1.bf16.msra.mxu0 0
          %874 = vmatprep.subr.bf16.mxu0 0
          %875 = vmatpush1.bf16.msra.mxu0 0
          %876 = vmatprep.subr.bf16.mxu0 %v834
          %877 = vmatpush1.bf16.msra.mxu0 %v833
          %878 = vmatprep.subr.bf16.mxu0 %v832
          %879 = vmatpush1.bf16.msra.mxu0 %v831
          %880 = vmatprep.subr.bf16.mxu0 %v830
          %881 = vmatpush1.bf16.msra.mxu0 %v829
          %882 = vmatprep.subr.bf16.mxu0 %v828
          %883 = vmatpush1.bf16.msra.mxu0 %v827
          %884 = vmatprep.subr.bf16.mxu0 0
          %885 = vmatpush2.bf16.msra.mxu0 0
          %886 = vmatprep.subr.bf16.mxu0 0
          %887 = vmatpush2.bf16.msra.mxu0 0
          %888 = vmatprep.subr.bf16.mxu0 0
          %889 = vmatpush2.bf16.msra.mxu0 0
          %890 = vmatprep.subr.bf16.mxu0 0
          %891 = vmatpush2.bf16.msra.mxu0 0
          %892 = vmatprep.subr.bf16.mxu0 0
          %893 = vmatpush2.bf16.msra.mxu0 0
          %894 = vmatprep.subr.bf16.mxu0 0
          %895 = vmatpush2.bf16.msra.mxu0 0
          %896 = vmatprep.subr.bf16.mxu0 0
          %897 = vmatpush2.bf16.msra.mxu0 0
          %898 = vmatprep.subr.bf16.mxu0 0
          %899 = vmatpush2.bf16.msra.mxu0 0
          %900 = vmatprep.mubr.bf16.mxu0 0
          %901 = vmatmul.mubr.bf16.gmra.mxu0 %v845
          %v902 = vpop.f32.mrf.mxu0
          %v903 = vadd.f32 %v756, %v902
          %v904 = vpop.f32.mrf.mxu0
          %v905 = vadd.f32 %v760, %v904
          %v906 = vpop.f32.mrf.mxu0
          %v907 = vadd.f32 %v756, %v906
          %v908 = vpop.f32.mrf.mxu0
          %v909 = vadd.f32 %v760, %v908
          %910 = vmatprep.mubr.bf16.mxu0 0
          %911 = vmatmul.mubr.bf16.gmra.mxu0 %v848
          %v912 = vpop.f32.mrf.mxu0
          %v913 = vadd.f32 %v756, %v912
          %v914 = vpop.f32.mrf.mxu0
          %v915 = vadd.f32 %v760, %v914
          %v916 = vpop.f32.mrf.mxu0
          %v917 = vadd.f32 %v756, %v916
          %v918 = vpop.f32.mrf.mxu0
          %v919 = vadd.f32 %v760, %v918
          %920 = vmatprep.mubr.bf16.mxu0 0
          %921 = vmatmul.mubr.bf16.gmra.mxu0 %v851
          %v922 = vpop.f32.mrf.mxu0
          %v923 = vadd.f32 %v756, %v922
          %v924 = vpop.f32.mrf.mxu0
          %v925 = vadd.f32 %v760, %v924
          %v926 = vpop.f32.mrf.mxu0
          %v927 = vadd.f32 %v756, %v926
          %v928 = vpop.f32.mrf.mxu0
          %v929 = vadd.f32 %v760, %v928
          %930 = vmatprep.mubr.bf16.mxu0 0
          %931 = vmatmul.mubr.bf16.gmra.mxu0 %v854
          %v932 = vpop.f32.mrf.mxu0
          %v933 = vadd.f32 %v756, %v932
          %v934 = vpop.f32.mrf.mxu0
          %v935 = vadd.f32 %v760, %v934
          %v936 = vpop.f32.mrf.mxu0
          %v937 = vadd.f32 %v756, %v936
          %v938 = vpop.f32.mrf.mxu0
          %v939 = vadd.f32 %v760, %v938
          %940 = vmatprep.mubr.bf16.mxu0 0
          %941 = vmatmul.mubr.bf16.gmra.mxu0 %v857
          %v942 = vpop.f32.mrf.mxu0
          %v943 = vadd.f32 %v756, %v942
          %v944 = vpop.f32.mrf.mxu0
          %v945 = vadd.f32 %v760, %v944
          %v946 = vpop.f32.mrf.mxu0
          %v947 = vadd.f32 %v756, %v946
          %v948 = vpop.f32.mrf.mxu0
          %v949 = vadd.f32 %v760, %v948
          %950 = vmatprep.mubr.bf16.mxu0 0
          %951 = vmatmul.mubr.bf16.gmra.mxu0 %v860
          %v952 = vpop.f32.mrf.mxu0
          %v953 = vadd.f32 %v756, %v952
          %v954 = vpop.f32.mrf.mxu0
          %v955 = vadd.f32 %v760, %v954
          %v956 = vpop.f32.mrf.mxu0
          %v957 = vadd.f32 %v756, %v956
          %v958 = vpop.f32.mrf.mxu0
          %v959 = vadd.f32 %v760, %v958
          %960 = vmatprep.mubr.bf16.mxu0 0
          %961 = vmatmul.mubr.bf16.gmra.mxu0 %v863
          %v962 = vpop.f32.mrf.mxu0
          %v963 = vadd.f32 %v756, %v962
          %v964 = vpop.f32.mrf.mxu0
          %v965 = vadd.f32 %v760, %v964
          %v966 = vpop.f32.mrf.mxu0
          %v967 = vadd.f32 %v756, %v966
          %v968 = vpop.f32.mrf.mxu0
          %v969 = vadd.f32 %v760, %v968
          %970 = vmatprep.mubr.bf16.mxu0 0
          %971 = vmatmul.mubr.bf16.gmra.mxu0 %v866
          %v972 = vpop.f32.mrf.mxu0
          %v973 = vadd.f32 %v756, %v972
          %v974 = vpop.f32.mrf.mxu0
          %v975 = vadd.f32 %v760, %v974
          %v976 = vpop.f32.mrf.mxu0
          %v977 = vadd.f32 %v756, %v976
          %v978 = vpop.f32.mrf.mxu0
          %v979 = vadd.f32 %v760, %v978
          %980 = vdwg.mxu0
          %v981 = vmax.f32 %v903, 0.0
          %v982 = vmax.f32 %v905, 0.0
          %v983 = vmax.f32 %v907, 0.0
          %v984 = vmax.f32 %v909, 0.0
          %v985 = vmax.f32 %v913, 0.0
          %v986 = vmax.f32 %v915, 0.0
          %v987 = vmax.f32 %v917, 0.0
          %v988 = vmax.f32 %v919, 0.0
          %v989 = vmax.f32 %v923, 0.0
          %v990 = vmax.f32 %v925, 0.0
          %v991 = vmax.f32 %v927, 0.0
          %v992 = vmax.f32 %v929, 0.0
          %v993 = vmax.f32 %v933, 0.0
          %v994 = vmax.f32 %v935, 0.0
          %v995 = vmax.f32 %v937, 0.0
          %v996 = vmax.f32 %v939, 0.0
          %v997 = vmax.f32 %v943, 0.0
          %v998 = vmax.f32 %v945, 0.0
          %v999 = vmax.f32 %v947, 0.0
          %v1000 = vmax.f32 %v949, 0.0
          %v1001 = vmax.f32 %v953, 0.0
          %v1002 = vmax.f32 %v955, 0.0
          %v1003 = vmax.f32 %v957, 0.0
          %v1004 = vmax.f32 %v959, 0.0
          %v1005 = vmax.f32 %v963, 0.0
          %v1006 = vmax.f32 %v965, 0.0
          %v1007 = vmax.f32 %v967, 0.0
          %v1008 = vmax.f32 %v969, 0.0
          %v1009 = vmax.f32 %v973, 0.0
          %v1010 = vmax.f32 %v975, 0.0
          %v1011 = vmax.f32 %v977, 0.0
          %v1012 = vmax.f32 %v979, 0.0
          %v1013 = vpack.c.bf16 %v983, %v981
          %v1014 = vpack.c.bf16 %v984, %v982
          %v1015 = vpack.c.bf16 %v987, %v985
          %v1016 = vpack.c.bf16 %v988, %v986
          %v1017 = vpack.c.bf16 %v991, %v989
          %v1018 = vpack.c.bf16 %v992, %v990
          %v1019 = vpack.c.bf16 %v995, %v993
          %v1020 = vpack.c.bf16 %v996, %v994
          %v1021 = vpack.c.bf16 %v999, %v997
          %v1022 = vpack.c.bf16 %v1000, %v998
          %v1023 = vpack.c.bf16 %v1003, %v1001
          %v1024 = vpack.c.bf16 %v1004, %v1002
          %v1025 = vpack.c.bf16 %v1007, %v1005
          %v1026 = vpack.c.bf16 %v1008, %v1006
          %v1027 = vpack.c.bf16 %v1011, %v1009
          %v1028 = vpack.c.bf16 %v1012, %v1010
          %v1029 = vld [vmem:[#allocation11] sm:$0xf]
          %v1030 = vld [vmem:[#allocation11 + $0x4] sm:$0xf]
          %v1031 = vld [vmem:[#allocation11 + $0x8] sm:$0xf]
          %v1032 = vld [vmem:[#allocation11 + $0xc] sm:$0xf]
          %v1037 = vunpack.c.l.b16 %v1029
          %v1038 = vunpack.c.l.b16 %v1030
          %v1039 = vunpack.c.l.b16 %v1031
          %v1040 = vunpack.c.l.b16 %v1032
          %v1041 = vpack.c.b16 %v1038, %v1037
          %v1042 = vpack.c.b16 %v1040, %v1039
          %1045 = vmatprep.subr.bf16.mxu0 %v1028
          %1046 = vmatpush1.bf16.msra.mxu0 %v1027
          %1047 = vmatprep.subr.bf16.mxu0 %v1026
          %1048 = vmatpush1.bf16.msra.mxu0 %v1025
          %1049 = vmatprep.subr.bf16.mxu0 %v1024
          %1050 = vmatpush1.bf16.msra.mxu0 %v1023
          %1051 = vmatprep.subr.bf16.mxu0 %v1022
          %1052 = vmatpush1.bf16.msra.mxu0 %v1021
          %1053 = vmatprep.subr.bf16.mxu0 %v1020
          %1054 = vmatpush1.bf16.msra.mxu0 %v1019
          %1055 = vmatprep.subr.bf16.mxu0 %v1018
          %1056 = vmatpush1.bf16.msra.mxu0 %v1017
          %1057 = vmatprep.subr.bf16.mxu0 %v1016
          %1058 = vmatpush1.bf16.msra.mxu0 %v1015
          %1059 = vmatprep.subr.bf16.mxu0 %v1014
          %1060 = vmatpush1.bf16.msra.mxu0 %v1013
          %1061 = vmatprep.subr.bf16.mxu0 0
          %1062 = vmatpush2.bf16.msra.mxu0 0
          %1063 = vmatprep.subr.bf16.mxu0 0
          %1064 = vmatpush2.bf16.msra.mxu0 0
          %1065 = vmatprep.subr.bf16.mxu0 0
          %1066 = vmatpush2.bf16.msra.mxu0 0
          %1067 = vmatprep.subr.bf16.mxu0 0
          %1068 = vmatpush2.bf16.msra.mxu0 0
          %1069 = vmatprep.subr.bf16.mxu0 0
          %1070 = vmatpush2.bf16.msra.mxu0 0
          %1071 = vmatprep.subr.bf16.mxu0 0
          %1072 = vmatpush2.bf16.msra.mxu0 0
          %1073 = vmatprep.subr.bf16.mxu0 0
          %1074 = vmatpush2.bf16.msra.mxu0 0
          %1075 = vmatprep.subr.bf16.mxu0 0
          %1076 = vmatpush2.bf16.msra.mxu0 0
          %1077 = vmatprep.mubr.bf16.mxu0 0
          %1078 = vmatmul.mubr.bf16.gmra.mxu0 %v1041
          %v1079 = vpop.f32.mrf.mxu0
          %v1080 = vadd.f32 0.0, %v1079
          %v1081 = vpop.f32.mrf.mxu0
          %v1082 = vadd.f32 0.0, %v1081
          %v1083 = vpop.f32.mrf.mxu0
          %v1084 = vadd.f32 0.0, %v1083
          %v1085 = vpop.f32.mrf.mxu0
          %v1086 = vadd.f32 0.0, %v1085
          %1087 = vmatprep.mubr.bf16.mxu0 0
          %1088 = vmatmul.mubr.bf16.gmra.mxu0 %v1042
          %v1089 = vpop.f32.mrf.mxu0
          %v1090 = vadd.f32 0.0, %v1089
          %v1091 = vpop.f32.mrf.mxu0
          %v1092 = vadd.f32 0.0, %v1091
          %v1093 = vpop.f32.mrf.mxu0
          %v1094 = vadd.f32 0.0, %v1093
          %v1095 = vpop.f32.mrf.mxu0
          %v1096 = vadd.f32 0.0, %v1095
          %1097 = vdwg.mxu0
          %v1098 = vpack.c.bf16 %v1084, %v1080
          %v1099 = vpack.c.bf16 %v1086, %v1082
          %v1100 = vpack.c.bf16 %v1094, %v1090
          %v1101 = vpack.c.bf16 %v1096, %v1092
          %v1106 = vunpack.c.l.b16 %v1098
          %v1107 = vunpack.c.l.b16 %v1099
          %v1108 = vunpack.c.h.b16 %v1098
          %v1109 = vunpack.c.h.b16 %v1099
          %v1110 = vunpack.c.l.b16 %v1100
          %v1111 = vunpack.c.l.b16 %v1101
          %v1112 = vunpack.c.h.b16 %v1100
          %v1113 = vunpack.c.h.b16 %v1101
          %v1114 = vpack.c.b16 %v1107, %v1106
          %v1115 = vpack.c.b16 %v1109, %v1108
          %v1116 = vpack.c.b16 %v1111, %v1110
          %v1117 = vpack.c.b16 %v1113, %v1112
          %1122 = vst [vmem:[#allocation3] sm:$0xff] %v1114
          %1123 = vst [vmem:[#allocation3 + $0x80] sm:$0xff] %v1115
          %1124 = vst [vmem:[#allocation3 + $0x100] sm:$0xff] %v1116
          %1125 = vst [vmem:[#allocation3 + $0x180] sm:$0xff] %v1117
          %s1126 = scalar_lea.vmem [#allocation11], 16
          %v1127 = vld [vmem:[%s1126] sm:$0xf]
          %v1128 = vld [vmem:[%s1126 + $0x4] sm:$0xf]
          %v1129 = vld [vmem:[%s1126 + $0x8] sm:$0xf]
          %v1130 = vld [vmem:[%s1126 + $0xc] sm:$0xf]
          %v1135 = vunpack.c.l.b16 %v1127
          %v1136 = vunpack.c.l.b16 %v1128
          %v1137 = vunpack.c.l.b16 %v1129
          %v1138 = vunpack.c.l.b16 %v1130
          %v1139 = vpack.c.b16 %v1136, %v1135
          %v1140 = vpack.c.b16 %v1138, %v1137
          %1143 = vmatprep.subr.bf16.mxu0 %v1028
          %1144 = vmatpush1.bf16.msra.mxu0 %v1027
          %1145 = vmatprep.subr.bf16.mxu0 %v1026
          %1146 = vmatpush1.bf16.msra.mxu0 %v1025
          %1147 = vmatprep.subr.bf16.mxu0 %v1024
          %1148 = vmatpush1.bf16.msra.mxu0 %v1023
          %1149 = vmatprep.subr.bf16.mxu0 %v1022
          %1150 = vmatpush1.bf16.msra.mxu0 %v1021
          %1151 = vmatprep.subr.bf16.mxu0 %v1020
          %1152 = vmatpush1.bf16.msra.mxu0 %v1019
          %1153 = vmatprep.subr.bf16.mxu0 %v1018
          %1154 = vmatpush1.bf16.msra.mxu0 %v1017
          %1155 = vmatprep.subr.bf16.mxu0 %v1016
          %1156 = vmatpush1.bf16.msra.mxu0 %v1015
          %1157 = vmatprep.subr.bf16.mxu0 %v1014
          %1158 = vmatpush1.bf16.msra.mxu0 %v1013
          %1159 = vmatprep.subr.bf16.mxu0 0
          %1160 = vmatpush2.bf16.msra.mxu0 0
          %1161 = vmatprep.subr.bf16.mxu0 0
          %1162 = vmatpush2.bf16.msra.mxu0 0
          %1163 = vmatprep.subr.bf16.mxu0 0
          %1164 = vmatpush2.bf16.msra.mxu0 0
          %1165 = vmatprep.subr.bf16.mxu0 0
          %1166 = vmatpush2.bf16.msra.mxu0 0
          %1167 = vmatprep.subr.bf16.mxu0 0
          %1168 = vmatpush2.bf16.msra.mxu0 0
          %1169 = vmatprep.subr.bf16.mxu0 0
          %1170 = vmatpush2.bf16.msra.mxu0 0
          %1171 = vmatprep.subr.bf16.mxu0 0
          %1172 = vmatpush2.bf16.msra.mxu0 0
          %1173 = vmatprep.subr.bf16.mxu0 0
          %1174 = vmatpush2.bf16.msra.mxu0 0
          %1175 = vmatprep.mubr.bf16.mxu0 0
          %1176 = vmatmul.mubr.bf16.gmra.mxu0 %v1139
          %v1177 = vpop.f32.mrf.mxu0
          %v1178 = vadd.f32 0.0, %v1177
          %v1179 = vpop.f32.mrf.mxu0
          %v1180 = vadd.f32 0.0, %v1179
          %v1181 = vpop.f32.mrf.mxu0
          %v1182 = vadd.f32 0.0, %v1181
          %v1183 = vpop.f32.mrf.mxu0
          %v1184 = vadd.f32 0.0, %v1183
          %1185 = vmatprep.mubr.bf16.mxu0 0
          %1186 = vmatmul.mubr.bf16.gmra.mxu0 %v1140
          %v1187 = vpop.f32.mrf.mxu0
          %v1188 = vadd.f32 0.0, %v1187
          %v1189 = vpop.f32.mrf.mxu0
          %v1190 = vadd.f32 0.0, %v1189
          %v1191 = vpop.f32.mrf.mxu0
          %v1192 = vadd.f32 0.0, %v1191
          %v1193 = vpop.f32.mrf.mxu0
          %v1194 = vadd.f32 0.0, %v1193
          %1195 = vdwg.mxu0
          %v1196 = vpack.c.bf16 %v1182, %v1178
          %v1197 = vpack.c.bf16 %v1184, %v1180
          %v1198 = vpack.c.bf16 %v1192, %v1188
          %v1199 = vpack.c.bf16 %v1194, %v1190
          %v1204 = vunpack.c.l.b16 %v1196
          %v1205 = vunpack.c.l.b16 %v1197
          %v1206 = vunpack.c.h.b16 %v1196
          %v1207 = vunpack.c.h.b16 %v1197
          %v1208 = vunpack.c.l.b16 %v1198
          %v1209 = vunpack.c.l.b16 %v1199
          %v1210 = vunpack.c.h.b16 %v1198
          %v1211 = vunpack.c.h.b16 %v1199
          %v1212 = vpack.c.b16 %v1205, %v1204
          %v1213 = vpack.c.b16 %v1207, %v1206
          %v1214 = vpack.c.b16 %v1209, %v1208
          %v1215 = vpack.c.b16 %v1211, %v1210
          %1220 = vst [vmem:[#allocation3 + $0x8] sm:$0xff] %v1212
          %1221 = vst [vmem:[#allocation3 + $0x88] sm:$0xff] %v1213
          %1222 = vst [vmem:[#allocation3 + $0x108] sm:$0xff] %v1214
          %1223 = vst [vmem:[#allocation3 + $0x188] sm:$0xff] %v1215
          %s1224 = scalar_lea.vmem [#allocation11], 32
          %v1225 = vld [vmem:[%s1224] sm:$0xf]
          %v1226 = vld [vmem:[%s1224 + $0x4] sm:$0xf]
          %v1227 = vld [vmem:[%s1224 + $0x8] sm:$0xf]
          %v1228 = vld [vmem:[%s1224 + $0xc] sm:$0xf]
          %v1233 = vunpack.c.l.b16 %v1225
          %v1234 = vunpack.c.l.b16 %v1226
          %v1235 = vunpack.c.l.b16 %v1227
          %v1236 = vunpack.c.l.b16 %v1228
          %v1237 = vpack.c.b16 %v1234, %v1233
          %v1238 = vpack.c.b16 %v1236, %v1235
          %1241 = vmatprep.subr.bf16.mxu0 %v1028
          %1242 = vmatpush1.bf16.msra.mxu0 %v1027
          %1243 = vmatprep.subr.bf16.mxu0 %v1026
          %1244 = vmatpush1.bf16.msra.mxu0 %v1025
          %1245 = vmatprep.subr.bf16.mxu0 %v1024
          %1246 = vmatpush1.bf16.msra.mxu0 %v1023
          %1247 = vmatprep.subr.bf16.mxu0 %v1022
          %1248 = vmatpush1.bf16.msra.mxu0 %v1021
          %1249 = vmatprep.subr.bf16.mxu0 %v1020
          %1250 = vmatpush1.bf16.msra.mxu0 %v1019
          %1251 = vmatprep.subr.bf16.mxu0 %v1018
          %1252 = vmatpush1.bf16.msra.mxu0 %v1017
          %1253 = vmatprep.subr.bf16.mxu0 %v1016
          %1254 = vmatpush1.bf16.msra.mxu0 %v1015
          %1255 = vmatprep.subr.bf16.mxu0 %v1014
          %1256 = vmatpush1.bf16.msra.mxu0 %v1013
          %1257 = vmatprep.subr.bf16.mxu0 0
          %1258 = vmatpush2.bf16.msra.mxu0 0
          %1259 = vmatprep.subr.bf16.mxu0 0
          %1260 = vmatpush2.bf16.msra.mxu0 0
          %1261 = vmatprep.subr.bf16.mxu0 0
          %1262 = vmatpush2.bf16.msra.mxu0 0
          %1263 = vmatprep.subr.bf16.mxu0 0
          %1264 = vmatpush2.bf16.msra.mxu0 0
          %1265 = vmatprep.subr.bf16.mxu0 0
          %1266 = vmatpush2.bf16.msra.mxu0 0
          %1267 = vmatprep.subr.bf16.mxu0 0
          %1268 = vmatpush2.bf16.msra.mxu0 0
          %1269 = vmatprep.subr.bf16.mxu0 0
          %1270 = vmatpush2.bf16.msra.mxu0 0
          %1271 = vmatprep.subr.bf16.mxu0 0
          %1272 = vmatpush2.bf16.msra.mxu0 0
          %1273 = vmatprep.mubr.bf16.mxu0 0
          %1274 = vmatmul.mubr.bf16.gmra.mxu0 %v1237
          %v1275 = vpop.f32.mrf.mxu0
          %v1276 = vadd.f32 0.0, %v1275
          %v1277 = vpop.f32.mrf.mxu0
          %v1278 = vadd.f32 0.0, %v1277
          %v1279 = vpop.f32.mrf.mxu0
          %v1280 = vadd.f32 0.0, %v1279
          %v1281 = vpop.f32.mrf.mxu0
          %v1282 = vadd.f32 0.0, %v1281
          %1283 = vmatprep.mubr.bf16.mxu0 0
          %1284 = vmatmul.mubr.bf16.gmra.mxu0 %v1238
          %v1285 = vpop.f32.mrf.mxu0
          %v1286 = vadd.f32 0.0, %v1285
          %v1287 = vpop.f32.mrf.mxu0
          %v1288 = vadd.f32 0.0, %v1287
          %v1289 = vpop.f32.mrf.mxu0
          %v1290 = vadd.f32 0.0, %v1289
          %v1291 = vpop.f32.mrf.mxu0
          %v1292 = vadd.f32 0.0, %v1291
          %1293 = vdwg.mxu0
          %v1294 = vpack.c.bf16 %v1280, %v1276
          %v1295 = vpack.c.bf16 %v1282, %v1278
          %v1296 = vpack.c.bf16 %v1290, %v1286
          %v1297 = vpack.c.bf16 %v1292, %v1288
          %v1302 = vunpack.c.l.b16 %v1294
          %v1303 = vunpack.c.l.b16 %v1295
          %v1304 = vunpack.c.h.b16 %v1294
          %v1305 = vunpack.c.h.b16 %v1295
          %v1306 = vunpack.c.l.b16 %v1296
          %v1307 = vunpack.c.l.b16 %v1297
          %v1308 = vunpack.c.h.b16 %v1296
          %v1309 = vunpack.c.h.b16 %v1297
          %v1310 = vpack.c.b16 %v1303, %v1302
          %v1311 = vpack.c.b16 %v1305, %v1304
          %v1312 = vpack.c.b16 %v1307, %v1306
          %v1313 = vpack.c.b16 %v1309, %v1308
          %1318 = vst [vmem:[#allocation3 + $0x10] sm:$0xff] %v1310
          %1319 = vst [vmem:[#allocation3 + $0x90] sm:$0xff] %v1311
          %1320 = vst [vmem:[#allocation3 + $0x110] sm:$0xff] %v1312
          %1321 = vst [vmem:[#allocation3 + $0x190] sm:$0xff] %v1313
          %s1322 = scalar_lea.vmem [#allocation11], 48
          %v1323 = vld [vmem:[%s1322] sm:$0xf]
          %v1324 = vld [vmem:[%s1322 + $0x4] sm:$0xf]
          %v1325 = vld [vmem:[%s1322 + $0x8] sm:$0xf]
          %v1326 = vld [vmem:[%s1322 + $0xc] sm:$0xf]
          %v1331 = vunpack.c.l.b16 %v1323
          %v1332 = vunpack.c.l.b16 %v1324
          %v1333 = vunpack.c.l.b16 %v1325
          %v1334 = vunpack.c.l.b16 %v1326
          %v1335 = vpack.c.b16 %v1332, %v1331
          %v1336 = vpack.c.b16 %v1334, %v1333
          %1339 = vmatprep.subr.bf16.mxu0 %v1028
          %1340 = vmatpush1.bf16.msra.mxu0 %v1027
          %1341 = vmatprep.subr.bf16.mxu0 %v1026
          %1342 = vmatpush1.bf16.msra.mxu0 %v1025
          %1343 = vmatprep.subr.bf16.mxu0 %v1024
          %1344 = vmatpush1.bf16.msra.mxu0 %v1023
          %1345 = vmatprep.subr.bf16.mxu0 %v1022
          %1346 = vmatpush1.bf16.msra.mxu0 %v1021
          %1347 = vmatprep.subr.bf16.mxu0 %v1020
          %1348 = vmatpush1.bf16.msra.mxu0 %v1019
          %1349 = vmatprep.subr.bf16.mxu0 %v1018
          %1350 = vmatpush1.bf16.msra.mxu0 %v1017
          %1351 = vmatprep.subr.bf16.mxu0 %v1016
          %1352 = vmatpush1.bf16.msra.mxu0 %v1015
          %1353 = vmatprep.subr.bf16.mxu0 %v1014
          %1354 = vmatpush1.bf16.msra.mxu0 %v1013
          %1355 = vmatprep.subr.bf16.mxu0 0
          %1356 = vmatpush2.bf16.msra.mxu0 0
          %1357 = vmatprep.subr.bf16.mxu0 0
          %1358 = vmatpush2.bf16.msra.mxu0 0
          %1359 = vmatprep.subr.bf16.mxu0 0
          %1360 = vmatpush2.bf16.msra.mxu0 0
          %1361 = vmatprep.subr.bf16.mxu0 0
          %1362 = vmatpush2.bf16.msra.mxu0 0
          %1363 = vmatprep.subr.bf16.mxu0 0
          %1364 = vmatpush2.bf16.msra.mxu0 0
          %1365 = vmatprep.subr.bf16.mxu0 0
          %1366 = vmatpush2.bf16.msra.mxu0 0
          %1367 = vmatprep.subr.bf16.mxu0 0
          %1368 = vmatpush2.bf16.msra.mxu0 0
          %1369 = vmatprep.subr.bf16.mxu0 0
          %1370 = vmatpush2.bf16.msra.mxu0 0
          %1371 = vmatprep.mubr.bf16.mxu0 0
          %1372 = vmatmul.mubr.bf16.gmra.mxu0 %v1335
          %v1373 = vpop.f32.mrf.mxu0
          %v1374 = vadd.f32 0.0, %v1373
          %v1375 = vpop.f32.mrf.mxu0
          %v1376 = vadd.f32 0.0, %v1375
          %v1377 = vpop.f32.mrf.mxu0
          %v1378 = vadd.f32 0.0, %v1377
          %v1379 = vpop.f32.mrf.mxu0
          %v1380 = vadd.f32 0.0, %v1379
          %1381 = vmatprep.mubr.bf16.mxu0 0
          %1382 = vmatmul.mubr.bf16.gmra.mxu0 %v1336
          %v1383 = vpop.f32.mrf.mxu0
          %v1384 = vadd.f32 0.0, %v1383
          %v1385 = vpop.f32.mrf.mxu0
          %v1386 = vadd.f32 0.0, %v1385
          %v1387 = vpop.f32.mrf.mxu0
          %v1388 = vadd.f32 0.0, %v1387
          %v1389 = vpop.f32.mrf.mxu0
          %v1390 = vadd.f32 0.0, %v1389
          %1391 = vdwg.mxu0
          %v1392 = vpack.c.bf16 %v1378, %v1374
          %v1393 = vpack.c.bf16 %v1380, %v1376
          %v1394 = vpack.c.bf16 %v1388, %v1384
          %v1395 = vpack.c.bf16 %v1390, %v1386
          %v1400 = vunpack.c.l.b16 %v1392
          %v1401 = vunpack.c.l.b16 %v1393
          %v1402 = vunpack.c.h.b16 %v1392
          %v1403 = vunpack.c.h.b16 %v1393
          %v1404 = vunpack.c.l.b16 %v1394
          %v1405 = vunpack.c.l.b16 %v1395
          %v1406 = vunpack.c.h.b16 %v1394
          %v1407 = vunpack.c.h.b16 %v1395
          %v1408 = vpack.c.b16 %v1401, %v1400
          %v1409 = vpack.c.b16 %v1403, %v1402
          %v1410 = vpack.c.b16 %v1405, %v1404
          %v1411 = vpack.c.b16 %v1407, %v1406
          %1416 = vst [vmem:[#allocation3 + $0x18] sm:$0xff] %v1408
          %1417 = vst [vmem:[#allocation3 + $0x98] sm:$0xff] %v1409
          %1418 = vst [vmem:[#allocation3 + $0x118] sm:$0xff] %v1410
          %1419 = vst [vmem:[#allocation3 + $0x198] sm:$0xff] %v1411
          %s1420 = scalar_lea.vmem [#allocation11], 64
          %v1421 = vld [vmem:[%s1420] sm:$0xf]
          %v1422 = vld [vmem:[%s1420 + $0x4] sm:$0xf]
          %v1423 = vld [vmem:[%s1420 + $0x8] sm:$0xf]
          %v1424 = vld [vmem:[%s1420 + $0xc] sm:$0xf]
          %v1429 = vunpack.c.l.b16 %v1421
          %v1430 = vunpack.c.l.b16 %v1422
          %v1431 = vunpack.c.l.b16 %v1423
          %v1432 = vunpack.c.l.b16 %v1424
          %v1433 = vpack.c.b16 %v1430, %v1429
          %v1434 = vpack.c.b16 %v1432, %v1431
          %1437 = vmatprep.subr.bf16.mxu0 %v1028
          %1438 = vmatpush1.bf16.msra.mxu0 %v1027
          %1439 = vmatprep.subr.bf16.mxu0 %v1026
          %1440 = vmatpush1.bf16.msra.mxu0 %v1025
          %1441 = vmatprep.subr.bf16.mxu0 %v1024
          %1442 = vmatpush1.bf16.msra.mxu0 %v1023
          %1443 = vmatprep.subr.bf16.mxu0 %v1022
          %1444 = vmatpush1.bf16.msra.mxu0 %v1021
          %1445 = vmatprep.subr.bf16.mxu0 %v1020
          %1446 = vmatpush1.bf16.msra.mxu0 %v1019
          %1447 = vmatprep.subr.bf16.mxu0 %v1018
          %1448 = vmatpush1.bf16.msra.mxu0 %v1017
          %1449 = vmatprep.subr.bf16.mxu0 %v1016
          %1450 = vmatpush1.bf16.msra.mxu0 %v1015
          %1451 = vmatprep.subr.bf16.mxu0 %v1014
          %1452 = vmatpush1.bf16.msra.mxu0 %v1013
          %1453 = vmatprep.subr.bf16.mxu0 0
          %1454 = vmatpush2.bf16.msra.mxu0 0
          %1455 = vmatprep.subr.bf16.mxu0 0
          %1456 = vmatpush2.bf16.msra.mxu0 0
          %1457 = vmatprep.subr.bf16.mxu0 0
          %1458 = vmatpush2.bf16.msra.mxu0 0
          %1459 = vmatprep.subr.bf16.mxu0 0
          %1460 = vmatpush2.bf16.msra.mxu0 0
          %1461 = vmatprep.subr.bf16.mxu0 0
          %1462 = vmatpush2.bf16.msra.mxu0 0
          %1463 = vmatprep.subr.bf16.mxu0 0
          %1464 = vmatpush2.bf16.msra.mxu0 0
          %1465 = vmatprep.subr.bf16.mxu0 0
          %1466 = vmatpush2.bf16.msra.mxu0 0
          %1467 = vmatprep.subr.bf16.mxu0 0
          %1468 = vmatpush2.bf16.msra.mxu0 0
          %1469 = vmatprep.mubr.bf16.mxu0 0
          %1470 = vmatmul.mubr.bf16.gmra.mxu0 %v1433
          %v1471 = vpop.f32.mrf.mxu0
          %v1472 = vadd.f32 0.0, %v1471
          %v1473 = vpop.f32.mrf.mxu0
          %v1474 = vadd.f32 0.0, %v1473
          %v1475 = vpop.f32.mrf.mxu0
          %v1476 = vadd.f32 0.0, %v1475
          %v1477 = vpop.f32.mrf.mxu0
          %v1478 = vadd.f32 0.0, %v1477
          %1479 = vmatprep.mubr.bf16.mxu0 0
          %1480 = vmatmul.mubr.bf16.gmra.mxu0 %v1434
          %v1481 = vpop.f32.mrf.mxu0
          %v1482 = vadd.f32 0.0, %v1481
          %v1483 = vpop.f32.mrf.mxu0
          %v1484 = vadd.f32 0.0, %v1483
          %v1485 = vpop.f32.mrf.mxu0
          %v1486 = vadd.f32 0.0, %v1485
          %v1487 = vpop.f32.mrf.mxu0
          %v1488 = vadd.f32 0.0, %v1487
          %1489 = vdwg.mxu0
          %v1490 = vpack.c.bf16 %v1476, %v1472
          %v1491 = vpack.c.bf16 %v1478, %v1474
          %v1492 = vpack.c.bf16 %v1486, %v1482
          %v1493 = vpack.c.bf16 %v1488, %v1484
          %v1498 = vunpack.c.l.b16 %v1490
          %v1499 = vunpack.c.l.b16 %v1491
          %v1500 = vunpack.c.h.b16 %v1490
          %v1501 = vunpack.c.h.b16 %v1491
          %v1502 = vunpack.c.l.b16 %v1492
          %v1503 = vunpack.c.l.b16 %v1493
          %v1504 = vunpack.c.h.b16 %v1492
          %v1505 = vunpack.c.h.b16 %v1493
          %v1506 = vpack.c.b16 %v1499, %v1498
          %v1507 = vpack.c.b16 %v1501, %v1500
          %v1508 = vpack.c.b16 %v1503, %v1502
          %v1509 = vpack.c.b16 %v1505, %v1504
          %1514 = vst [vmem:[#allocation3 + $0x20] sm:$0xff] %v1506
          %1515 = vst [vmem:[#allocation3 + $0xa0] sm:$0xff] %v1507
          %1516 = vst [vmem:[#allocation3 + $0x120] sm:$0xff] %v1508
          %1517 = vst [vmem:[#allocation3 + $0x1a0] sm:$0xff] %v1509
          %s1518 = scalar_lea.vmem [#allocation11], 80
          %v1519 = vld [vmem:[%s1518] sm:$0xf]
          %v1520 = vld [vmem:[%s1518 + $0x4] sm:$0xf]
          %v1521 = vld [vmem:[%s1518 + $0x8] sm:$0xf]
          %v1522 = vld [vmem:[%s1518 + $0xc] sm:$0xf]
          %v1527 = vunpack.c.l.b16 %v1519
          %v1528 = vunpack.c.l.b16 %v1520
          %v1529 = vunpack.c.l.b16 %v1521
          %v1530 = vunpack.c.l.b16 %v1522
          %v1531 = vpack.c.b16 %v1528, %v1527
          %v1532 = vpack.c.b16 %v1530, %v1529
          %1535 = vmatprep.subr.bf16.mxu0 %v1028
          %1536 = vmatpush1.bf16.msra.mxu0 %v1027
          %1537 = vmatprep.subr.bf16.mxu0 %v1026
          %1538 = vmatpush1.bf16.msra.mxu0 %v1025
          %1539 = vmatprep.subr.bf16.mxu0 %v1024
          %1540 = vmatpush1.bf16.msra.mxu0 %v1023
          %1541 = vmatprep.subr.bf16.mxu0 %v1022
          %1542 = vmatpush1.bf16.msra.mxu0 %v1021
          %1543 = vmatprep.subr.bf16.mxu0 %v1020
          %1544 = vmatpush1.bf16.msra.mxu0 %v1019
          %1545 = vmatprep.subr.bf16.mxu0 %v1018
          %1546 = vmatpush1.bf16.msra.mxu0 %v1017
          %1547 = vmatprep.subr.bf16.mxu0 %v1016
          %1548 = vmatpush1.bf16.msra.mxu0 %v1015
          %1549 = vmatprep.subr.bf16.mxu0 %v1014
          %1550 = vmatpush1.bf16.msra.mxu0 %v1013
          %1551 = vmatprep.subr.bf16.mxu0 0
          %1552 = vmatpush2.bf16.msra.mxu0 0
          %1553 = vmatprep.subr.bf16.mxu0 0
          %1554 = vmatpush2.bf16.msra.mxu0 0
          %1555 = vmatprep.subr.bf16.mxu0 0
          %1556 = vmatpush2.bf16.msra.mxu0 0
          %1557 = vmatprep.subr.bf16.mxu0 0
          %1558 = vmatpush2.bf16.msra.mxu0 0
          %1559 = vmatprep.subr.bf16.mxu0 0
          %1560 = vmatpush2.bf16.msra.mxu0 0
          %1561 = vmatprep.subr.bf16.mxu0 0
          %1562 = vmatpush2.bf16.msra.mxu0 0
          %1563 = vmatprep.subr.bf16.mxu0 0
          %1564 = vmatpush2.bf16.msra.mxu0 0
          %1565 = vmatprep.subr.bf16.mxu0 0
          %1566 = vmatpush2.bf16.msra.mxu0 0
          %1567 = vmatprep.mubr.bf16.mxu0 0
          %1568 = vmatmul.mubr.bf16.gmra.mxu0 %v1531
          %v1569 = vpop.f32.mrf.mxu0
          %v1570 = vadd.f32 0.0, %v1569
          %v1571 = vpop.f32.mrf.mxu0
          %v1572 = vadd.f32 0.0, %v1571
          %v1573 = vpop.f32.mrf.mxu0
          %v1574 = vadd.f32 0.0, %v1573
          %v1575 = vpop.f32.mrf.mxu0
          %v1576 = vadd.f32 0.0, %v1575
          %1577 = vmatprep.mubr.bf16.mxu0 0
          %1578 = vmatmul.mubr.bf16.gmra.mxu0 %v1532
          %v1579 = vpop.f32.mrf.mxu0
          %v1580 = vadd.f32 0.0, %v1579
          %v1581 = vpop.f32.mrf.mxu0
          %v1582 = vadd.f32 0.0, %v1581
          %v1583 = vpop.f32.mrf.mxu0
          %v1584 = vadd.f32 0.0, %v1583
          %v1585 = vpop.f32.mrf.mxu0
          %v1586 = vadd.f32 0.0, %v1585
          %1587 = vdwg.mxu0
          %v1588 = vpack.c.bf16 %v1574, %v1570
          %v1589 = vpack.c.bf16 %v1576, %v1572
          %v1590 = vpack.c.bf16 %v1584, %v1580
          %v1591 = vpack.c.bf16 %v1586, %v1582
          %v1596 = vunpack.c.l.b16 %v1588
          %v1597 = vunpack.c.l.b16 %v1589
          %v1598 = vunpack.c.h.b16 %v1588
          %v1599 = vunpack.c.h.b16 %v1589
          %v1600 = vunpack.c.l.b16 %v1590
          %v1601 = vunpack.c.l.b16 %v1591
          %v1602 = vunpack.c.h.b16 %v1590
          %v1603 = vunpack.c.h.b16 %v1591
          %v1604 = vpack.c.b16 %v1597, %v1596
          %v1605 = vpack.c.b16 %v1599, %v1598
          %v1606 = vpack.c.b16 %v1601, %v1600
          %v1607 = vpack.c.b16 %v1603, %v1602
          %1612 = vst [vmem:[#allocation3 + $0x28] sm:$0xff] %v1604
          %1613 = vst [vmem:[#allocation3 + $0xa8] sm:$0xff] %v1605
          %1614 = vst [vmem:[#allocation3 + $0x128] sm:$0xff] %v1606
          %1615 = vst [vmem:[#allocation3 + $0x1a8] sm:$0xff] %v1607
          %s1616 = scalar_lea.vmem [#allocation11], 96
          %v1617 = vld [vmem:[%s1616] sm:$0xf]
          %v1618 = vld [vmem:[%s1616 + $0x4] sm:$0xf]
          %v1619 = vld [vmem:[%s1616 + $0x8] sm:$0xf]
          %v1620 = vld [vmem:[%s1616 + $0xc] sm:$0xf]
          %v1625 = vunpack.c.l.b16 %v1617
          %v1626 = vunpack.c.l.b16 %v1618
          %v1627 = vunpack.c.l.b16 %v1619
          %v1628 = vunpack.c.l.b16 %v1620
          %v1629 = vpack.c.b16 %v1626, %v1625
          %v1630 = vpack.c.b16 %v1628, %v1627
          %1633 = vmatprep.subr.bf16.mxu0 %v1028
          %1634 = vmatpush1.bf16.msra.mxu0 %v1027
          %1635 = vmatprep.subr.bf16.mxu0 %v1026
          %1636 = vmatpush1.bf16.msra.mxu0 %v1025
          %1637 = vmatprep.subr.bf16.mxu0 %v1024
          %1638 = vmatpush1.bf16.msra.mxu0 %v1023
          %1639 = vmatprep.subr.bf16.mxu0 %v1022
          %1640 = vmatpush1.bf16.msra.mxu0 %v1021
          %1641 = vmatprep.subr.bf16.mxu0 %v1020
          %1642 = vmatpush1.bf16.msra.mxu0 %v1019
          %1643 = vmatprep.subr.bf16.mxu0 %v1018
          %1644 = vmatpush1.bf16.msra.mxu0 %v1017
          %1645 = vmatprep.subr.bf16.mxu0 %v1016
          %1646 = vmatpush1.bf16.msra.mxu0 %v1015
          %1647 = vmatprep.subr.bf16.mxu0 %v1014
          %1648 = vmatpush1.bf16.msra.mxu0 %v1013
          %1649 = vmatprep.subr.bf16.mxu0 0
          %1650 = vmatpush2.bf16.msra.mxu0 0
          %1651 = vmatprep.subr.bf16.mxu0 0
          %1652 = vmatpush2.bf16.msra.mxu0 0
          %1653 = vmatprep.subr.bf16.mxu0 0
          %1654 = vmatpush2.bf16.msra.mxu0 0
          %1655 = vmatprep.subr.bf16.mxu0 0
          %1656 = vmatpush2.bf16.msra.mxu0 0
          %1657 = vmatprep.subr.bf16.mxu0 0
          %1658 = vmatpush2.bf16.msra.mxu0 0
          %1659 = vmatprep.subr.bf16.mxu0 0
          %1660 = vmatpush2.bf16.msra.mxu0 0
          %1661 = vmatprep.subr.bf16.mxu0 0
          %1662 = vmatpush2.bf16.msra.mxu0 0
          %1663 = vmatprep.subr.bf16.mxu0 0
          %1664 = vmatpush2.bf16.msra.mxu0 0
          %1665 = vmatprep.mubr.bf16.mxu0 0
          %1666 = vmatmul.mubr.bf16.gmra.mxu0 %v1629
          %v1667 = vpop.f32.mrf.mxu0
          %v1668 = vadd.f32 0.0, %v1667
          %v1669 = vpop.f32.mrf.mxu0
          %v1670 = vadd.f32 0.0, %v1669
          %v1671 = vpop.f32.mrf.mxu0
          %v1672 = vadd.f32 0.0, %v1671
          %v1673 = vpop.f32.mrf.mxu0
          %v1674 = vadd.f32 0.0, %v1673
          %1675 = vmatprep.mubr.bf16.mxu0 0
          %1676 = vmatmul.mubr.bf16.gmra.mxu0 %v1630
          %v1677 = vpop.f32.mrf.mxu0
          %v1678 = vadd.f32 0.0, %v1677
          %v1679 = vpop.f32.mrf.mxu0
          %v1680 = vadd.f32 0.0, %v1679
          %v1681 = vpop.f32.mrf.mxu0
          %v1682 = vadd.f32 0.0, %v1681
          %v1683 = vpop.f32.mrf.mxu0
          %v1684 = vadd.f32 0.0, %v1683
          %1685 = vdwg.mxu0
          %v1686 = vpack.c.bf16 %v1672, %v1668
          %v1687 = vpack.c.bf16 %v1674, %v1670
          %v1688 = vpack.c.bf16 %v1682, %v1678
          %v1689 = vpack.c.bf16 %v1684, %v1680
          %v1694 = vunpack.c.l.b16 %v1686
          %v1695 = vunpack.c.l.b16 %v1687
          %v1696 = vunpack.c.h.b16 %v1686
          %v1697 = vunpack.c.h.b16 %v1687
          %v1698 = vunpack.c.l.b16 %v1688
          %v1699 = vunpack.c.l.b16 %v1689
          %v1700 = vunpack.c.h.b16 %v1688
          %v1701 = vunpack.c.h.b16 %v1689
          %v1702 = vpack.c.b16 %v1695, %v1694
          %v1703 = vpack.c.b16 %v1697, %v1696
          %v1704 = vpack.c.b16 %v1699, %v1698
          %v1705 = vpack.c.b16 %v1701, %v1700
          %1710 = vst [vmem:[#allocation3 + $0x30] sm:$0xff] %v1702
          %1711 = vst [vmem:[#allocation3 + $0xb0] sm:$0xff] %v1703
          %1712 = vst [vmem:[#allocation3 + $0x130] sm:$0xff] %v1704
          %1713 = vst [vmem:[#allocation3 + $0x1b0] sm:$0xff] %v1705
          %s1714 = scalar_lea.vmem [#allocation11], 112
          %v1715 = vld [vmem:[%s1714] sm:$0xf]
          %v1716 = vld [vmem:[%s1714 + $0x4] sm:$0xf]
          %v1717 = vld [vmem:[%s1714 + $0x8] sm:$0xf]
          %v1718 = vld [vmem:[%s1714 + $0xc] sm:$0xf]
          %v1723 = vunpack.c.l.b16 %v1715
          %v1724 = vunpack.c.l.b16 %v1716
          %v1725 = vunpack.c.l.b16 %v1717
          %v1726 = vunpack.c.l.b16 %v1718
          %v1727 = vpack.c.b16 %v1724, %v1723
          %v1728 = vpack.c.b16 %v1726, %v1725
          %1731 = vmatprep.subr.bf16.mxu0 %v1028
          %1732 = vmatpush1.bf16.msra.mxu0 %v1027
          %1733 = vmatprep.subr.bf16.mxu0 %v1026
          %1734 = vmatpush1.bf16.msra.mxu0 %v1025
          %1735 = vmatprep.subr.bf16.mxu0 %v1024
          %1736 = vmatpush1.bf16.msra.mxu0 %v1023
          %1737 = vmatprep.subr.bf16.mxu0 %v1022
          %1738 = vmatpush1.bf16.msra.mxu0 %v1021
          %1739 = vmatprep.subr.bf16.mxu0 %v1020
          %1740 = vmatpush1.bf16.msra.mxu0 %v1019
          %1741 = vmatprep.subr.bf16.mxu0 %v1018
          %1742 = vmatpush1.bf16.msra.mxu0 %v1017
          %1743 = vmatprep.subr.bf16.mxu0 %v1016
          %1744 = vmatpush1.bf16.msra.mxu0 %v1015
          %1745 = vmatprep.subr.bf16.mxu0 %v1014
          %1746 = vmatpush1.bf16.msra.mxu0 %v1013
          %1747 = vmatprep.subr.bf16.mxu0 0
          %1748 = vmatpush2.bf16.msra.mxu0 0
          %1749 = vmatprep.subr.bf16.mxu0 0
          %1750 = vmatpush2.bf16.msra.mxu0 0
          %1751 = vmatprep.subr.bf16.mxu0 0
          %1752 = vmatpush2.bf16.msra.mxu0 0
          %1753 = vmatprep.subr.bf16.mxu0 0
          %1754 = vmatpush2.bf16.msra.mxu0 0
          %1755 = vmatprep.subr.bf16.mxu0 0
          %1756 = vmatpush2.bf16.msra.mxu0 0
          %1757 = vmatprep.subr.bf16.mxu0 0
          %1758 = vmatpush2.bf16.msra.mxu0 0
          %1759 = vmatprep.subr.bf16.mxu0 0
          %1760 = vmatpush2.bf16.msra.mxu0 0
          %1761 = vmatprep.subr.bf16.mxu0 0
          %1762 = vmatpush2.bf16.msra.mxu0 0
          %1763 = vmatprep.mubr.bf16.mxu0 0
          %1764 = vmatmul.mubr.bf16.gmra.mxu0 %v1727
          %v1765 = vpop.f32.mrf.mxu0
          %v1766 = vadd.f32 0.0, %v1765
          %v1767 = vpop.f32.mrf.mxu0
          %v1768 = vadd.f32 0.0, %v1767
          %v1769 = vpop.f32.mrf.mxu0
          %v1770 = vadd.f32 0.0, %v1769
          %v1771 = vpop.f32.mrf.mxu0
          %v1772 = vadd.f32 0.0, %v1771
          %1773 = vmatprep.mubr.bf16.mxu0 0
          %1774 = vmatmul.mubr.bf16.gmra.mxu0 %v1728
          %v1775 = vpop.f32.mrf.mxu0
          %v1776 = vadd.f32 0.0, %v1775
          %v1777 = vpop.f32.mrf.mxu0
          %v1778 = vadd.f32 0.0, %v1777
          %v1779 = vpop.f32.mrf.mxu0
          %v1780 = vadd.f32 0.0, %v1779
          %v1781 = vpop.f32.mrf.mxu0
          %v1782 = vadd.f32 0.0, %v1781
          %1783 = vdwg.mxu0
          %v1784 = vpack.c.bf16 %v1770, %v1766
          %v1785 = vpack.c.bf16 %v1772, %v1768
          %v1786 = vpack.c.bf16 %v1780, %v1776
          %v1787 = vpack.c.bf16 %v1782, %v1778
          %v1792 = vunpack.c.l.b16 %v1784
          %v1793 = vunpack.c.l.b16 %v1785
          %v1794 = vunpack.c.h.b16 %v1784
          %v1795 = vunpack.c.h.b16 %v1785
          %v1796 = vunpack.c.l.b16 %v1786
          %v1797 = vunpack.c.l.b16 %v1787
          %v1798 = vunpack.c.h.b16 %v1786
          %v1799 = vunpack.c.h.b16 %v1787
          %v1800 = vpack.c.b16 %v1793, %v1792
          %v1801 = vpack.c.b16 %v1795, %v1794
          %v1802 = vpack.c.b16 %v1797, %v1796
          %v1803 = vpack.c.b16 %v1799, %v1798
          %1808 = vst [vmem:[#allocation3 + $0x38] sm:$0xff] %v1800
          %1809 = vst [vmem:[#allocation3 + $0xb8] sm:$0xff] %v1801
          %1810 = vst [vmem:[#allocation3 + $0x138] sm:$0xff] %v1802
          %1811 = vst [vmem:[#allocation3 + $0x1b8] sm:$0xff] %v1803
          %s1812 = scalar_lea.vmem [#allocation11], 128
          %v1813 = vld [vmem:[%s1812] sm:$0xf]
          %v1814 = vld [vmem:[%s1812 + $0x4] sm:$0xf]
          %v1815 = vld [vmem:[%s1812 + $0x8] sm:$0xf]
          %v1816 = vld [vmem:[%s1812 + $0xc] sm:$0xf]
          %v1821 = vunpack.c.l.b16 %v1813
          %v1822 = vunpack.c.l.b16 %v1814
          %v1823 = vunpack.c.l.b16 %v1815
          %v1824 = vunpack.c.l.b16 %v1816
          %v1825 = vpack.c.b16 %v1822, %v1821
          %v1826 = vpack.c.b16 %v1824, %v1823
          %1829 = vmatprep.subr.bf16.mxu0 %v1028
          %1830 = vmatpush1.bf16.msra.mxu0 %v1027
          %1831 = vmatprep.subr.bf16.mxu0 %v1026
          %1832 = vmatpush1.bf16.msra.mxu0 %v1025
          %1833 = vmatprep.subr.bf16.mxu0 %v1024
          %1834 = vmatpush1.bf16.msra.mxu0 %v1023
          %1835 = vmatprep.subr.bf16.mxu0 %v1022
          %1836 = vmatpush1.bf16.msra.mxu0 %v1021
          %1837 = vmatprep.subr.bf16.mxu0 %v1020
          %1838 = vmatpush1.bf16.msra.mxu0 %v1019
          %1839 = vmatprep.subr.bf16.mxu0 %v1018
          %1840 = vmatpush1.bf16.msra.mxu0 %v1017
          %1841 = vmatprep.subr.bf16.mxu0 %v1016
          %1842 = vmatpush1.bf16.msra.mxu0 %v1015
          %1843 = vmatprep.subr.bf16.mxu0 %v1014
          %1844 = vmatpush1.bf16.msra.mxu0 %v1013
          %1845 = vmatprep.subr.bf16.mxu0 0
          %1846 = vmatpush2.bf16.msra.mxu0 0
          %1847 = vmatprep.subr.bf16.mxu0 0
          %1848 = vmatpush2.bf16.msra.mxu0 0
          %1849 = vmatprep.subr.bf16.mxu0 0
          %1850 = vmatpush2.bf16.msra.mxu0 0
          %1851 = vmatprep.subr.bf16.mxu0 0
          %1852 = vmatpush2.bf16.msra.mxu0 0
          %1853 = vmatprep.subr.bf16.mxu0 0
          %1854 = vmatpush2.bf16.msra.mxu0 0
          %1855 = vmatprep.subr.bf16.mxu0 0
          %1856 = vmatpush2.bf16.msra.mxu0 0
          %1857 = vmatprep.subr.bf16.mxu0 0
          %1858 = vmatpush2.bf16.msra.mxu0 0
          %1859 = vmatprep.subr.bf16.mxu0 0
          %1860 = vmatpush2.bf16.msra.mxu0 0
          %1861 = vmatprep.mubr.bf16.mxu0 0
          %1862 = vmatmul.mubr.bf16.gmra.mxu0 %v1825
          %v1863 = vpop.f32.mrf.mxu0
          %v1864 = vadd.f32 0.0, %v1863
          %v1865 = vpop.f32.mrf.mxu0
          %v1866 = vadd.f32 0.0, %v1865
          %v1867 = vpop.f32.mrf.mxu0
          %v1868 = vadd.f32 0.0, %v1867
          %v1869 = vpop.f32.mrf.mxu0
          %v1870 = vadd.f32 0.0, %v1869
          %1871 = vmatprep.mubr.bf16.mxu0 0
          %1872 = vmatmul.mubr.bf16.gmra.mxu0 %v1826
          %v1873 = vpop.f32.mrf.mxu0
          %v1874 = vadd.f32 0.0, %v1873
          %v1875 = vpop.f32.mrf.mxu0
          %v1876 = vadd.f32 0.0, %v1875
          %v1877 = vpop.f32.mrf.mxu0
          %v1878 = vadd.f32 0.0, %v1877
          %v1879 = vpop.f32.mrf.mxu0
          %v1880 = vadd.f32 0.0, %v1879
          %1881 = vdwg.mxu0
          %v1882 = vpack.c.bf16 %v1868, %v1864
          %v1883 = vpack.c.bf16 %v1870, %v1866
          %v1884 = vpack.c.bf16 %v1878, %v1874
          %v1885 = vpack.c.bf16 %v1880, %v1876
          %v1890 = vunpack.c.l.b16 %v1882
          %v1891 = vunpack.c.l.b16 %v1883
          %v1892 = vunpack.c.h.b16 %v1882
          %v1893 = vunpack.c.h.b16 %v1883
          %v1894 = vunpack.c.l.b16 %v1884
          %v1895 = vunpack.c.l.b16 %v1885
          %v1896 = vunpack.c.h.b16 %v1884
          %v1897 = vunpack.c.h.b16 %v1885
          %v1898 = vpack.c.b16 %v1891, %v1890
          %v1899 = vpack.c.b16 %v1893, %v1892
          %v1900 = vpack.c.b16 %v1895, %v1894
          %v1901 = vpack.c.b16 %v1897, %v1896
          %1906 = vst [vmem:[#allocation3 + $0x40] sm:$0xff] %v1898
          %1907 = vst [vmem:[#allocation3 + $0xc0] sm:$0xff] %v1899
          %1908 = vst [vmem:[#allocation3 + $0x140] sm:$0xff] %v1900
          %1909 = vst [vmem:[#allocation3 + $0x1c0] sm:$0xff] %v1901
          %s1910 = scalar_lea.vmem [#allocation11], 144
          %v1911 = vld [vmem:[%s1910] sm:$0xf]
          %v1912 = vld [vmem:[%s1910 + $0x4] sm:$0xf]
          %v1913 = vld [vmem:[%s1910 + $0x8] sm:$0xf]
          %v1914 = vld [vmem:[%s1910 + $0xc] sm:$0xf]
          %v1919 = vunpack.c.l.b16 %v1911
          %v1920 = vunpack.c.l.b16 %v1912
          %v1921 = vunpack.c.l.b16 %v1913
          %v1922 = vunpack.c.l.b16 %v1914
          %v1923 = vpack.c.b16 %v1920, %v1919
          %v1924 = vpack.c.b16 %v1922, %v1921
          %1927 = vmatprep.subr.bf16.mxu0 %v1028
          %1928 = vmatpush1.bf16.msra.mxu0 %v1027
          %1929 = vmatprep.subr.bf16.mxu0 %v1026
          %1930 = vmatpush1.bf16.msra.mxu0 %v1025
          %1931 = vmatprep.subr.bf16.mxu0 %v1024
          %1932 = vmatpush1.bf16.msra.mxu0 %v1023
          %1933 = vmatprep.subr.bf16.mxu0 %v1022
          %1934 = vmatpush1.bf16.msra.mxu0 %v1021
          %1935 = vmatprep.subr.bf16.mxu0 %v1020
          %1936 = vmatpush1.bf16.msra.mxu0 %v1019
          %1937 = vmatprep.subr.bf16.mxu0 %v1018
          %1938 = vmatpush1.bf16.msra.mxu0 %v1017
          %1939 = vmatprep.subr.bf16.mxu0 %v1016
          %1940 = vmatpush1.bf16.msra.mxu0 %v1015
          %1941 = vmatprep.subr.bf16.mxu0 %v1014
          %1942 = vmatpush1.bf16.msra.mxu0 %v1013
          %1943 = vmatprep.subr.bf16.mxu0 0
          %1944 = vmatpush2.bf16.msra.mxu0 0
          %1945 = vmatprep.subr.bf16.mxu0 0
          %1946 = vmatpush2.bf16.msra.mxu0 0
          %1947 = vmatprep.subr.bf16.mxu0 0
          %1948 = vmatpush2.bf16.msra.mxu0 0
          %1949 = vmatprep.subr.bf16.mxu0 0
          %1950 = vmatpush2.bf16.msra.mxu0 0
          %1951 = vmatprep.subr.bf16.mxu0 0
          %1952 = vmatpush2.bf16.msra.mxu0 0
          %1953 = vmatprep.subr.bf16.mxu0 0
          %1954 = vmatpush2.bf16.msra.mxu0 0
          %1955 = vmatprep.subr.bf16.mxu0 0
          %1956 = vmatpush2.bf16.msra.mxu0 0
          %1957 = vmatprep.subr.bf16.mxu0 0
          %1958 = vmatpush2.bf16.msra.mxu0 0
          %1959 = vmatprep.mubr.bf16.mxu0 0
          %1960 = vmatmul.mubr.bf16.gmra.mxu0 %v1923
          %v1961 = vpop.f32.mrf.mxu0
          %v1962 = vadd.f32 0.0, %v1961
          %v1963 = vpop.f32.mrf.mxu0
          %v1964 = vadd.f32 0.0, %v1963
          %v1965 = vpop.f32.mrf.mxu0
          %v1966 = vadd.f32 0.0, %v1965
          %v1967 = vpop.f32.mrf.mxu0
          %v1968 = vadd.f32 0.0, %v1967
          %1969 = vmatprep.mubr.bf16.mxu0 0
          %1970 = vmatmul.mubr.bf16.gmra.mxu0 %v1924
          %v1971 = vpop.f32.mrf.mxu0
          %v1972 = vadd.f32 0.0, %v1971
          %v1973 = vpop.f32.mrf.mxu0
          %v1974 = vadd.f32 0.0, %v1973
          %v1975 = vpop.f32.mrf.mxu0
          %v1976 = vadd.f32 0.0, %v1975
          %v1977 = vpop.f32.mrf.mxu0
          %v1978 = vadd.f32 0.0, %v1977
          %1979 = vdwg.mxu0
          %v1980 = vpack.c.bf16 %v1966, %v1962
          %v1981 = vpack.c.bf16 %v1968, %v1964
          %v1982 = vpack.c.bf16 %v1976, %v1972
          %v1983 = vpack.c.bf16 %v1978, %v1974
          %v1988 = vunpack.c.l.b16 %v1980
          %v1989 = vunpack.c.l.b16 %v1981
          %v1990 = vunpack.c.h.b16 %v1980
          %v1991 = vunpack.c.h.b16 %v1981
          %v1992 = vunpack.c.l.b16 %v1982
          %v1993 = vunpack.c.l.b16 %v1983
          %v1994 = vunpack.c.h.b16 %v1982
          %v1995 = vunpack.c.h.b16 %v1983
          %v1996 = vpack.c.b16 %v1989, %v1988
          %v1997 = vpack.c.b16 %v1991, %v1990
          %v1998 = vpack.c.b16 %v1993, %v1992
          %v1999 = vpack.c.b16 %v1995, %v1994
          %2004 = vst [vmem:[#allocation3 + $0x48] sm:$0xff] %v1996
          %2005 = vst [vmem:[#allocation3 + $0xc8] sm:$0xff] %v1997
          %2006 = vst [vmem:[#allocation3 + $0x148] sm:$0xff] %v1998
          %2007 = vst [vmem:[#allocation3 + $0x1c8] sm:$0xff] %v1999
          %s2008 = scalar_lea.vmem [#allocation11], 160
          %v2009 = vld [vmem:[%s2008] sm:$0xf]
          %v2010 = vld [vmem:[%s2008 + $0x4] sm:$0xf]
          %v2011 = vld [vmem:[%s2008 + $0x8] sm:$0xf]
          %v2012 = vld [vmem:[%s2008 + $0xc] sm:$0xf]
          %v2017 = vunpack.c.l.b16 %v2009
          %v2018 = vunpack.c.l.b16 %v2010
          %v2019 = vunpack.c.l.b16 %v2011
          %v2020 = vunpack.c.l.b16 %v2012
          %v2021 = vpack.c.b16 %v2018, %v2017
          %v2022 = vpack.c.b16 %v2020, %v2019
          %2025 = vmatprep.subr.bf16.mxu0 %v1028
          %2026 = vmatpush1.bf16.msra.mxu0 %v1027
          %2027 = vmatprep.subr.bf16.mxu0 %v1026
          %2028 = vmatpush1.bf16.msra.mxu0 %v1025
          %2029 = vmatprep.subr.bf16.mxu0 %v1024
          %2030 = vmatpush1.bf16.msra.mxu0 %v1023
          %2031 = vmatprep.subr.bf16.mxu0 %v1022
          %2032 = vmatpush1.bf16.msra.mxu0 %v1021
          %2033 = vmatprep.subr.bf16.mxu0 %v1020
          %2034 = vmatpush1.bf16.msra.mxu0 %v1019
          %2035 = vmatprep.subr.bf16.mxu0 %v1018
          %2036 = vmatpush1.bf16.msra.mxu0 %v1017
          %2037 = vmatprep.subr.bf16.mxu0 %v1016
          %2038 = vmatpush1.bf16.msra.mxu0 %v1015
          %2039 = vmatprep.subr.bf16.mxu0 %v1014
          %2040 = vmatpush1.bf16.msra.mxu0 %v1013
          %2041 = vmatprep.subr.bf16.mxu0 0
          %2042 = vmatpush2.bf16.msra.mxu0 0
          %2043 = vmatprep.subr.bf16.mxu0 0
          %2044 = vmatpush2.bf16.msra.mxu0 0
          %2045 = vmatprep.subr.bf16.mxu0 0
          %2046 = vmatpush2.bf16.msra.mxu0 0
          %2047 = vmatprep.subr.bf16.mxu0 0
          %2048 = vmatpush2.bf16.msra.mxu0 0
          %2049 = vmatprep.subr.bf16.mxu0 0
          %2050 = vmatpush2.bf16.msra.mxu0 0
          %2051 = vmatprep.subr.bf16.mxu0 0
          %2052 = vmatpush2.bf16.msra.mxu0 0
          %2053 = vmatprep.subr.bf16.mxu0 0
          %2054 = vmatpush2.bf16.msra.mxu0 0
          %2055 = vmatprep.subr.bf16.mxu0 0
          %2056 = vmatpush2.bf16.msra.mxu0 0
          %2057 = vmatprep.mubr.bf16.mxu0 0
          %2058 = vmatmul.mubr.bf16.gmra.mxu0 %v2021
          %v2059 = vpop.f32.mrf.mxu0
          %v2060 = vadd.f32 0.0, %v2059
          %v2061 = vpop.f32.mrf.mxu0
          %v2062 = vadd.f32 0.0, %v2061
          %v2063 = vpop.f32.mrf.mxu0
          %v2064 = vadd.f32 0.0, %v2063
          %v2065 = vpop.f32.mrf.mxu0
          %v2066 = vadd.f32 0.0, %v2065
          %2067 = vmatprep.mubr.bf16.mxu0 0
          %2068 = vmatmul.mubr.bf16.gmra.mxu0 %v2022
          %v2069 = vpop.f32.mrf.mxu0
          %v2070 = vadd.f32 0.0, %v2069
          %v2071 = vpop.f32.mrf.mxu0
          %v2072 = vadd.f32 0.0, %v2071
          %v2073 = vpop.f32.mrf.mxu0
          %v2074 = vadd.f32 0.0, %v2073
          %v2075 = vpop.f32.mrf.mxu0
          %v2076 = vadd.f32 0.0, %v2075
          %2077 = vdwg.mxu0
          %v2078 = vpack.c.bf16 %v2064, %v2060
          %v2079 = vpack.c.bf16 %v2066, %v2062
          %v2080 = vpack.c.bf16 %v2074, %v2070
          %v2081 = vpack.c.bf16 %v2076, %v2072
          %v2086 = vunpack.c.l.b16 %v2078
          %v2087 = vunpack.c.l.b16 %v2079
          %v2088 = vunpack.c.h.b16 %v2078
          %v2089 = vunpack.c.h.b16 %v2079
          %v2090 = vunpack.c.l.b16 %v2080
          %v2091 = vunpack.c.l.b16 %v2081
          %v2092 = vunpack.c.h.b16 %v2080
          %v2093 = vunpack.c.h.b16 %v2081
          %v2094 = vpack.c.b16 %v2087, %v2086
          %v2095 = vpack.c.b16 %v2089, %v2088
          %v2096 = vpack.c.b16 %v2091, %v2090
          %v2097 = vpack.c.b16 %v2093, %v2092
          %2102 = vst [vmem:[#allocation3 + $0x50] sm:$0xff] %v2094
          %2103 = vst [vmem:[#allocation3 + $0xd0] sm:$0xff] %v2095
          %2104 = vst [vmem:[#allocation3 + $0x150] sm:$0xff] %v2096
          %2105 = vst [vmem:[#allocation3 + $0x1d0] sm:$0xff] %v2097
          %s2106 = scalar_lea.vmem [#allocation11], 176
          %v2107 = vld [vmem:[%s2106] sm:$0xf]
          %v2108 = vld [vmem:[%s2106 + $0x4] sm:$0xf]
          %v2109 = vld [vmem:[%s2106 + $0x8] sm:$0xf]
          %v2110 = vld [vmem:[%s2106 + $0xc] sm:$0xf]
          %v2115 = vunpack.c.l.b16 %v2107
          %v2116 = vunpack.c.l.b16 %v2108
          %v2117 = vunpack.c.l.b16 %v2109
          %v2118 = vunpack.c.l.b16 %v2110
          %v2119 = vpack.c.b16 %v2116, %v2115
          %v2120 = vpack.c.b16 %v2118, %v2117
          %2123 = vmatprep.subr.bf16.mxu0 %v1028
          %2124 = vmatpush1.bf16.msra.mxu0 %v1027
          %2125 = vmatprep.subr.bf16.mxu0 %v1026
          %2126 = vmatpush1.bf16.msra.mxu0 %v1025
          %2127 = vmatprep.subr.bf16.mxu0 %v1024
          %2128 = vmatpush1.bf16.msra.mxu0 %v1023
          %2129 = vmatprep.subr.bf16.mxu0 %v1022
          %2130 = vmatpush1.bf16.msra.mxu0 %v1021
          %2131 = vmatprep.subr.bf16.mxu0 %v1020
          %2132 = vmatpush1.bf16.msra.mxu0 %v1019
          %2133 = vmatprep.subr.bf16.mxu0 %v1018
          %2134 = vmatpush1.bf16.msra.mxu0 %v1017
          %2135 = vmatprep.subr.bf16.mxu0 %v1016
          %2136 = vmatpush1.bf16.msra.mxu0 %v1015
          %2137 = vmatprep.subr.bf16.mxu0 %v1014
          %2138 = vmatpush1.bf16.msra.mxu0 %v1013
          %2139 = vmatprep.subr.bf16.mxu0 0
          %2140 = vmatpush2.bf16.msra.mxu0 0
          %2141 = vmatprep.subr.bf16.mxu0 0
          %2142 = vmatpush2.bf16.msra.mxu0 0
          %2143 = vmatprep.subr.bf16.mxu0 0
          %2144 = vmatpush2.bf16.msra.mxu0 0
          %2145 = vmatprep.subr.bf16.mxu0 0
          %2146 = vmatpush2.bf16.msra.mxu0 0
          %2147 = vmatprep.subr.bf16.mxu0 0
          %2148 = vmatpush2.bf16.msra.mxu0 0
          %2149 = vmatprep.subr.bf16.mxu0 0
          %2150 = vmatpush2.bf16.msra.mxu0 0
          %2151 = vmatprep.subr.bf16.mxu0 0
          %2152 = vmatpush2.bf16.msra.mxu0 0
          %2153 = vmatprep.subr.bf16.mxu0 0
          %2154 = vmatpush2.bf16.msra.mxu0 0
          %2155 = vmatprep.mubr.bf16.mxu0 0
          %2156 = vmatmul.mubr.bf16.gmra.mxu0 %v2119
          %v2157 = vpop.f32.mrf.mxu0
          %v2158 = vadd.f32 0.0, %v2157
          %v2159 = vpop.f32.mrf.mxu0
          %v2160 = vadd.f32 0.0, %v2159
          %v2161 = vpop.f32.mrf.mxu0
          %v2162 = vadd.f32 0.0, %v2161
          %v2163 = vpop.f32.mrf.mxu0
          %v2164 = vadd.f32 0.0, %v2163
          %2165 = vmatprep.mubr.bf16.mxu0 0
          %2166 = vmatmul.mubr.bf16.gmra.mxu0 %v2120
          %v2167 = vpop.f32.mrf.mxu0
          %v2168 = vadd.f32 0.0, %v2167
          %v2169 = vpop.f32.mrf.mxu0
          %v2170 = vadd.f32 0.0, %v2169
          %v2171 = vpop.f32.mrf.mxu0
          %v2172 = vadd.f32 0.0, %v2171
          %v2173 = vpop.f32.mrf.mxu0
          %v2174 = vadd.f32 0.0, %v2173
          %2175 = vdwg.mxu0
          %v2176 = vpack.c.bf16 %v2162, %v2158
          %v2177 = vpack.c.bf16 %v2164, %v2160
          %v2178 = vpack.c.bf16 %v2172, %v2168
          %v2179 = vpack.c.bf16 %v2174, %v2170
          %v2184 = vunpack.c.l.b16 %v2176
          %v2185 = vunpack.c.l.b16 %v2177
          %v2186 = vunpack.c.h.b16 %v2176
          %v2187 = vunpack.c.h.b16 %v2177
          %v2188 = vunpack.c.l.b16 %v2178
          %v2189 = vunpack.c.l.b16 %v2179
          %v2190 = vunpack.c.h.b16 %v2178
          %v2191 = vunpack.c.h.b16 %v2179
          %v2192 = vpack.c.b16 %v2185, %v2184
          %v2193 = vpack.c.b16 %v2187, %v2186
          %v2194 = vpack.c.b16 %v2189, %v2188
          %v2195 = vpack.c.b16 %v2191, %v2190
          %2200 = vst [vmem:[#allocation3 + $0x58] sm:$0xff] %v2192
          %2201 = vst [vmem:[#allocation3 + $0xd8] sm:$0xff] %v2193
          %2202 = vst [vmem:[#allocation3 + $0x158] sm:$0xff] %v2194
          %2203 = vst [vmem:[#allocation3 + $0x1d8] sm:$0xff] %v2195
          %s2204 = scalar_lea.vmem [#allocation11], 192
          %v2205 = vld [vmem:[%s2204] sm:$0xf]
          %v2206 = vld [vmem:[%s2204 + $0x4] sm:$0xf]
          %v2207 = vld [vmem:[%s2204 + $0x8] sm:$0xf]
          %v2208 = vld [vmem:[%s2204 + $0xc] sm:$0xf]
          %v2213 = vunpack.c.l.b16 %v2205
          %v2214 = vunpack.c.l.b16 %v2206
          %v2215 = vunpack.c.l.b16 %v2207
          %v2216 = vunpack.c.l.b16 %v2208
          %v2217 = vpack.c.b16 %v2214, %v2213
          %v2218 = vpack.c.b16 %v2216, %v2215
          %2221 = vmatprep.subr.bf16.mxu0 %v1028
          %2222 = vmatpush1.bf16.msra.mxu0 %v1027
          %2223 = vmatprep.subr.bf16.mxu0 %v1026
          %2224 = vmatpush1.bf16.msra.mxu0 %v1025
          %2225 = vmatprep.subr.bf16.mxu0 %v1024
          %2226 = vmatpush1.bf16.msra.mxu0 %v1023
          %2227 = vmatprep.subr.bf16.mxu0 %v1022
          %2228 = vmatpush1.bf16.msra.mxu0 %v1021
          %2229 = vmatprep.subr.bf16.mxu0 %v1020
          %2230 = vmatpush1.bf16.msra.mxu0 %v1019
          %2231 = vmatprep.subr.bf16.mxu0 %v1018
          %2232 = vmatpush1.bf16.msra.mxu0 %v1017
          %2233 = vmatprep.subr.bf16.mxu0 %v1016
          %2234 = vmatpush1.bf16.msra.mxu0 %v1015
          %2235 = vmatprep.subr.bf16.mxu0 %v1014
          %2236 = vmatpush1.bf16.msra.mxu0 %v1013
          %2237 = vmatprep.subr.bf16.mxu0 0
          %2238 = vmatpush2.bf16.msra.mxu0 0
          %2239 = vmatprep.subr.bf16.mxu0 0
          %2240 = vmatpush2.bf16.msra.mxu0 0
          %2241 = vmatprep.subr.bf16.mxu0 0
          %2242 = vmatpush2.bf16.msra.mxu0 0
          %2243 = vmatprep.subr.bf16.mxu0 0
          %2244 = vmatpush2.bf16.msra.mxu0 0
          %2245 = vmatprep.subr.bf16.mxu0 0
          %2246 = vmatpush2.bf16.msra.mxu0 0
          %2247 = vmatprep.subr.bf16.mxu0 0
          %2248 = vmatpush2.bf16.msra.mxu0 0
          %2249 = vmatprep.subr.bf16.mxu0 0
          %2250 = vmatpush2.bf16.msra.mxu0 0
          %2251 = vmatprep.subr.bf16.mxu0 0
          %2252 = vmatpush2.bf16.msra.mxu0 0
          %2253 = vmatprep.mubr.bf16.mxu0 0
          %2254 = vmatmul.mubr.bf16.gmra.mxu0 %v2217
          %v2255 = vpop.f32.mrf.mxu0
          %v2256 = vadd.f32 0.0, %v2255
          %v2257 = vpop.f32.mrf.mxu0
          %v2258 = vadd.f32 0.0, %v2257
          %v2259 = vpop.f32.mrf.mxu0
          %v2260 = vadd.f32 0.0, %v2259
          %v2261 = vpop.f32.mrf.mxu0
          %v2262 = vadd.f32 0.0, %v2261
          %2263 = vmatprep.mubr.bf16.mxu0 0
          %2264 = vmatmul.mubr.bf16.gmra.mxu0 %v2218
          %v2265 = vpop.f32.mrf.mxu0
          %v2266 = vadd.f32 0.0, %v2265
          %v2267 = vpop.f32.mrf.mxu0
          %v2268 = vadd.f32 0.0, %v2267
          %v2269 = vpop.f32.mrf.mxu0
          %v2270 = vadd.f32 0.0, %v2269
          %v2271 = vpop.f32.mrf.mxu0
          %v2272 = vadd.f32 0.0, %v2271
          %2273 = vdwg.mxu0
          %v2274 = vpack.c.bf16 %v2260, %v2256
          %v2275 = vpack.c.bf16 %v2262, %v2258
          %v2276 = vpack.c.bf16 %v2270, %v2266
          %v2277 = vpack.c.bf16 %v2272, %v2268
          %v2282 = vunpack.c.l.b16 %v2274
          %v2283 = vunpack.c.l.b16 %v2275
          %v2284 = vunpack.c.h.b16 %v2274
          %v2285 = vunpack.c.h.b16 %v2275
          %v2286 = vunpack.c.l.b16 %v2276
          %v2287 = vunpack.c.l.b16 %v2277
          %v2288 = vunpack.c.h.b16 %v2276
          %v2289 = vunpack.c.h.b16 %v2277
          %v2290 = vpack.c.b16 %v2283, %v2282
          %v2291 = vpack.c.b16 %v2285, %v2284
          %v2292 = vpack.c.b16 %v2287, %v2286
          %v2293 = vpack.c.b16 %v2289, %v2288
          %2298 = vst [vmem:[#allocation3 + $0x60] sm:$0xff] %v2290
          %2299 = vst [vmem:[#allocation3 + $0xe0] sm:$0xff] %v2291
          %2300 = vst [vmem:[#allocation3 + $0x160] sm:$0xff] %v2292
          %2301 = vst [vmem:[#allocation3 + $0x1e0] sm:$0xff] %v2293
          %s2302 = scalar_lea.vmem [#allocation11], 208
          %v2303 = vld [vmem:[%s2302] sm:$0xf]
          %v2304 = vld [vmem:[%s2302 + $0x4] sm:$0xf]
          %v2305 = vld [vmem:[%s2302 + $0x8] sm:$0xf]
          %v2306 = vld [vmem:[%s2302 + $0xc] sm:$0xf]
          %v2311 = vunpack.c.l.b16 %v2303
          %v2312 = vunpack.c.l.b16 %v2304
          %v2313 = vunpack.c.l.b16 %v2305
          %v2314 = vunpack.c.l.b16 %v2306
          %v2315 = vpack.c.b16 %v2312, %v2311
          %v2316 = vpack.c.b16 %v2314, %v2313
          %2319 = vmatprep.subr.bf16.mxu0 %v1028
          %2320 = vmatpush1.bf16.msra.mxu0 %v1027
          %2321 = vmatprep.subr.bf16.mxu0 %v1026
          %2322 = vmatpush1.bf16.msra.mxu0 %v1025
          %2323 = vmatprep.subr.bf16.mxu0 %v1024
          %2324 = vmatpush1.bf16.msra.mxu0 %v1023
          %2325 = vmatprep.subr.bf16.mxu0 %v1022
          %2326 = vmatpush1.bf16.msra.mxu0 %v1021
          %2327 = vmatprep.subr.bf16.mxu0 %v1020
          %2328 = vmatpush1.bf16.msra.mxu0 %v1019
          %2329 = vmatprep.subr.bf16.mxu0 %v1018
          %2330 = vmatpush1.bf16.msra.mxu0 %v1017
          %2331 = vmatprep.subr.bf16.mxu0 %v1016
          %2332 = vmatpush1.bf16.msra.mxu0 %v1015
          %2333 = vmatprep.subr.bf16.mxu0 %v1014
          %2334 = vmatpush1.bf16.msra.mxu0 %v1013
          %2335 = vmatprep.subr.bf16.mxu0 0
          %2336 = vmatpush2.bf16.msra.mxu0 0
          %2337 = vmatprep.subr.bf16.mxu0 0
          %2338 = vmatpush2.bf16.msra.mxu0 0
          %2339 = vmatprep.subr.bf16.mxu0 0
          %2340 = vmatpush2.bf16.msra.mxu0 0
          %2341 = vmatprep.subr.bf16.mxu0 0
          %2342 = vmatpush2.bf16.msra.mxu0 0
          %2343 = vmatprep.subr.bf16.mxu0 0
          %2344 = vmatpush2.bf16.msra.mxu0 0
          %2345 = vmatprep.subr.bf16.mxu0 0
          %2346 = vmatpush2.bf16.msra.mxu0 0
          %2347 = vmatprep.subr.bf16.mxu0 0
          %2348 = vmatpush2.bf16.msra.mxu0 0
          %2349 = vmatprep.subr.bf16.mxu0 0
          %2350 = vmatpush2.bf16.msra.mxu0 0
          %2351 = vmatprep.mubr.bf16.mxu0 0
          %2352 = vmatmul.mubr.bf16.gmra.mxu0 %v2315
          %v2353 = vpop.f32.mrf.mxu0
          %v2354 = vadd.f32 0.0, %v2353
          %v2355 = vpop.f32.mrf.mxu0
          %v2356 = vadd.f32 0.0, %v2355
          %v2357 = vpop.f32.mrf.mxu0
          %v2358 = vadd.f32 0.0, %v2357
          %v2359 = vpop.f32.mrf.mxu0
          %v2360 = vadd.f32 0.0, %v2359
          %2361 = vmatprep.mubr.bf16.mxu0 0
          %2362 = vmatmul.mubr.bf16.gmra.mxu0 %v2316
          %v2363 = vpop.f32.mrf.mxu0
          %v2364 = vadd.f32 0.0, %v2363
          %v2365 = vpop.f32.mrf.mxu0
          %v2366 = vadd.f32 0.0, %v2365
          %v2367 = vpop.f32.mrf.mxu0
          %v2368 = vadd.f32 0.0, %v2367
          %v2369 = vpop.f32.mrf.mxu0
          %v2370 = vadd.f32 0.0, %v2369
          %2371 = vdwg.mxu0
          %v2372 = vpack.c.bf16 %v2358, %v2354
          %v2373 = vpack.c.bf16 %v2360, %v2356
          %v2374 = vpack.c.bf16 %v2368, %v2364
          %v2375 = vpack.c.bf16 %v2370, %v2366
          %v2380 = vunpack.c.l.b16 %v2372
          %v2381 = vunpack.c.l.b16 %v2373
          %v2382 = vunpack.c.h.b16 %v2372
          %v2383 = vunpack.c.h.b16 %v2373
          %v2384 = vunpack.c.l.b16 %v2374
          %v2385 = vunpack.c.l.b16 %v2375
          %v2386 = vunpack.c.h.b16 %v2374
          %v2387 = vunpack.c.h.b16 %v2375
          %v2388 = vpack.c.b16 %v2381, %v2380
          %v2389 = vpack.c.b16 %v2383, %v2382
          %v2390 = vpack.c.b16 %v2385, %v2384
          %v2391 = vpack.c.b16 %v2387, %v2386
          %2396 = vst [vmem:[#allocation3 + $0x68] sm:$0xff] %v2388
          %2397 = vst [vmem:[#allocation3 + $0xe8] sm:$0xff] %v2389
          %2398 = vst [vmem:[#allocation3 + $0x168] sm:$0xff] %v2390
          %2399 = vst [vmem:[#allocation3 + $0x1e8] sm:$0xff] %v2391
          %s2400 = scalar_lea.vmem [#allocation11], 224
          %v2401 = vld [vmem:[%s2400] sm:$0xf]
          %v2402 = vld [vmem:[%s2400 + $0x4] sm:$0xf]
          %v2403 = vld [vmem:[%s2400 + $0x8] sm:$0xf]
          %v2404 = vld [vmem:[%s2400 + $0xc] sm:$0xf]
          %v2409 = vunpack.c.l.b16 %v2401
          %v2410 = vunpack.c.l.b16 %v2402
          %v2411 = vunpack.c.l.b16 %v2403
          %v2412 = vunpack.c.l.b16 %v2404
          %v2413 = vpack.c.b16 %v2410, %v2409
          %v2414 = vpack.c.b16 %v2412, %v2411
          %2417 = vmatprep.subr.bf16.mxu0 %v1028
          %2418 = vmatpush1.bf16.msra.mxu0 %v1027
          %2419 = vmatprep.subr.bf16.mxu0 %v1026
          %2420 = vmatpush1.bf16.msra.mxu0 %v1025
          %2421 = vmatprep.subr.bf16.mxu0 %v1024
          %2422 = vmatpush1.bf16.msra.mxu0 %v1023
          %2423 = vmatprep.subr.bf16.mxu0 %v1022
          %2424 = vmatpush1.bf16.msra.mxu0 %v1021
          %2425 = vmatprep.subr.bf16.mxu0 %v1020
          %2426 = vmatpush1.bf16.msra.mxu0 %v1019
          %2427 = vmatprep.subr.bf16.mxu0 %v1018
          %2428 = vmatpush1.bf16.msra.mxu0 %v1017
          %2429 = vmatprep.subr.bf16.mxu0 %v1016
          %2430 = vmatpush1.bf16.msra.mxu0 %v1015
          %2431 = vmatprep.subr.bf16.mxu0 %v1014
          %2432 = vmatpush1.bf16.msra.mxu0 %v1013
          %2433 = vmatprep.subr.bf16.mxu0 0
          %2434 = vmatpush2.bf16.msra.mxu0 0
          %2435 = vmatprep.subr.bf16.mxu0 0
          %2436 = vmatpush2.bf16.msra.mxu0 0
          %2437 = vmatprep.subr.bf16.mxu0 0
          %2438 = vmatpush2.bf16.msra.mxu0 0
          %2439 = vmatprep.subr.bf16.mxu0 0
          %2440 = vmatpush2.bf16.msra.mxu0 0
          %2441 = vmatprep.subr.bf16.mxu0 0
          %2442 = vmatpush2.bf16.msra.mxu0 0
          %2443 = vmatprep.subr.bf16.mxu0 0
          %2444 = vmatpush2.bf16.msra.mxu0 0
          %2445 = vmatprep.subr.bf16.mxu0 0
          %2446 = vmatpush2.bf16.msra.mxu0 0
          %2447 = vmatprep.subr.bf16.mxu0 0
          %2448 = vmatpush2.bf16.msra.mxu0 0
          %2449 = vmatprep.mubr.bf16.mxu0 0
          %2450 = vmatmul.mubr.bf16.gmra.mxu0 %v2413
          %v2451 = vpop.f32.mrf.mxu0
          %v2452 = vadd.f32 0.0, %v2451
          %v2453 = vpop.f32.mrf.mxu0
          %v2454 = vadd.f32 0.0, %v2453
          %v2455 = vpop.f32.mrf.mxu0
          %v2456 = vadd.f32 0.0, %v2455
          %v2457 = vpop.f32.mrf.mxu0
          %v2458 = vadd.f32 0.0, %v2457
          %2459 = vmatprep.mubr.bf16.mxu0 0
          %2460 = vmatmul.mubr.bf16.gmra.mxu0 %v2414
          %v2461 = vpop.f32.mrf.mxu0
          %v2462 = vadd.f32 0.0, %v2461
          %v2463 = vpop.f32.mrf.mxu0
          %v2464 = vadd.f32 0.0, %v2463
          %v2465 = vpop.f32.mrf.mxu0
          %v2466 = vadd.f32 0.0, %v2465
          %v2467 = vpop.f32.mrf.mxu0
          %v2468 = vadd.f32 0.0, %v2467
          %2469 = vdwg.mxu0
          %v2470 = vpack.c.bf16 %v2456, %v2452
          %v2471 = vpack.c.bf16 %v2458, %v2454
          %v2472 = vpack.c.bf16 %v2466, %v2462
          %v2473 = vpack.c.bf16 %v2468, %v2464
          %v2478 = vunpack.c.l.b16 %v2470
          %v2479 = vunpack.c.l.b16 %v2471
          %v2480 = vunpack.c.h.b16 %v2470
          %v2481 = vunpack.c.h.b16 %v2471
          %v2482 = vunpack.c.l.b16 %v2472
          %v2483 = vunpack.c.l.b16 %v2473
          %v2484 = vunpack.c.h.b16 %v2472
          %v2485 = vunpack.c.h.b16 %v2473
          %v2486 = vpack.c.b16 %v2479, %v2478
          %v2487 = vpack.c.b16 %v2481, %v2480
          %v2488 = vpack.c.b16 %v2483, %v2482
          %v2489 = vpack.c.b16 %v2485, %v2484
          %2494 = vst [vmem:[#allocation3 + $0x70] sm:$0xff] %v2486
          %2495 = vst [vmem:[#allocation3 + $0xf0] sm:$0xff] %v2487
          %2496 = vst [vmem:[#allocation3 + $0x170] sm:$0xff] %v2488
          %2497 = vst [vmem:[#allocation3 + $0x1f0] sm:$0xff] %v2489
          %s2498 = scalar_lea.vmem [#allocation11], 240
          %v2499 = vld [vmem:[%s2498] sm:$0xf]
          %v2500 = vld [vmem:[%s2498 + $0x4] sm:$0xf]
          %v2501 = vld [vmem:[%s2498 + $0x8] sm:$0xf]
          %v2502 = vld [vmem:[%s2498 + $0xc] sm:$0xf]
          %v2507 = vunpack.c.l.b16 %v2499
          %v2508 = vunpack.c.l.b16 %v2500
          %v2509 = vunpack.c.l.b16 %v2501
          %v2510 = vunpack.c.l.b16 %v2502
          %v2511 = vpack.c.b16 %v2508, %v2507
          %v2512 = vpack.c.b16 %v2510, %v2509
          %2515 = vmatprep.subr.bf16.mxu0 %v1028
          %2516 = vmatpush1.bf16.msra.mxu0 %v1027
          %2517 = vmatprep.subr.bf16.mxu0 %v1026
          %2518 = vmatpush1.bf16.msra.mxu0 %v1025
          %2519 = vmatprep.subr.bf16.mxu0 %v1024
          %2520 = vmatpush1.bf16.msra.mxu0 %v1023
          %2521 = vmatprep.subr.bf16.mxu0 %v1022
          %2522 = vmatpush1.bf16.msra.mxu0 %v1021
          %2523 = vmatprep.subr.bf16.mxu0 %v1020
          %2524 = vmatpush1.bf16.msra.mxu0 %v1019
          %2525 = vmatprep.subr.bf16.mxu0 %v1018
          %2526 = vmatpush1.bf16.msra.mxu0 %v1017
          %2527 = vmatprep.subr.bf16.mxu0 %v1016
          %2528 = vmatpush1.bf16.msra.mxu0 %v1015
          %2529 = vmatprep.subr.bf16.mxu0 %v1014
          %2530 = vmatpush1.bf16.msra.mxu0 %v1013
          %2531 = vmatprep.subr.bf16.mxu0 0
          %2532 = vmatpush2.bf16.msra.mxu0 0
          %2533 = vmatprep.subr.bf16.mxu0 0
          %2534 = vmatpush2.bf16.msra.mxu0 0
          %2535 = vmatprep.subr.bf16.mxu0 0
          %2536 = vmatpush2.bf16.msra.mxu0 0
          %2537 = vmatprep.subr.bf16.mxu0 0
          %2538 = vmatpush2.bf16.msra.mxu0 0
          %2539 = vmatprep.subr.bf16.mxu0 0
          %2540 = vmatpush2.bf16.msra.mxu0 0
          %2541 = vmatprep.subr.bf16.mxu0 0
          %2542 = vmatpush2.bf16.msra.mxu0 0
          %2543 = vmatprep.subr.bf16.mxu0 0
          %2544 = vmatpush2.bf16.msra.mxu0 0
          %2545 = vmatprep.subr.bf16.mxu0 0
          %2546 = vmatpush2.bf16.msra.mxu0 0
          %2547 = vmatprep.mubr.bf16.mxu0 0
          %2548 = vmatmul.mubr.bf16.gmra.mxu0 %v2511
          %v2549 = vpop.f32.mrf.mxu0
          %v2550 = vadd.f32 0.0, %v2549
          %v2551 = vpop.f32.mrf.mxu0
          %v2552 = vadd.f32 0.0, %v2551
          %v2553 = vpop.f32.mrf.mxu0
          %v2554 = vadd.f32 0.0, %v2553
          %v2555 = vpop.f32.mrf.mxu0
          %v2556 = vadd.f32 0.0, %v2555
          %2557 = vmatprep.mubr.bf16.mxu0 0
          %2558 = vmatmul.mubr.bf16.gmra.mxu0 %v2512
          %v2559 = vpop.f32.mrf.mxu0
          %v2560 = vadd.f32 0.0, %v2559
          %v2561 = vpop.f32.mrf.mxu0
          %v2562 = vadd.f32 0.0, %v2561
          %v2563 = vpop.f32.mrf.mxu0
          %v2564 = vadd.f32 0.0, %v2563
          %v2565 = vpop.f32.mrf.mxu0
          %v2566 = vadd.f32 0.0, %v2565
          %2567 = vdwg.mxu0
          %v2568 = vpack.c.bf16 %v2554, %v2550
          %v2569 = vpack.c.bf16 %v2556, %v2552
          %v2570 = vpack.c.bf16 %v2564, %v2560
          %v2571 = vpack.c.bf16 %v2566, %v2562
          %v2576 = vunpack.c.l.b16 %v2568
          %v2577 = vunpack.c.l.b16 %v2569
          %v2578 = vunpack.c.h.b16 %v2568
          %v2579 = vunpack.c.h.b16 %v2569
          %v2580 = vunpack.c.l.b16 %v2570
          %v2581 = vunpack.c.l.b16 %v2571
          %v2582 = vunpack.c.h.b16 %v2570
          %v2583 = vunpack.c.h.b16 %v2571
          %v2584 = vpack.c.b16 %v2577, %v2576
          %v2585 = vpack.c.b16 %v2579, %v2578
          %v2586 = vpack.c.b16 %v2581, %v2580
          %v2587 = vpack.c.b16 %v2583, %v2582
          %2592 = vst [vmem:[#allocation3 + $0x78] sm:$0xff] %v2584
          %2593 = vst [vmem:[#allocation3 + $0xf8] sm:$0xff] %v2585
          %2594 = vst [vmem:[#allocation3 + $0x178] sm:$0xff] %v2586
          %2595 = vst [vmem:[#allocation3 + $0x1f8] sm:$0xff] %v2587
          %v2596 = vld [vmem:[#allocation3] sm:$0xff]
          %v2597 = vld [vmem:[#allocation3 + $0x8] sm:$0xff]
          %v2598 = vld [vmem:[#allocation3 + $0x10] sm:$0xff]
          %v2599 = vld [vmem:[#allocation3 + $0x18] sm:$0xff]
          %v2600 = vld [vmem:[#allocation3 + $0x20] sm:$0xff]
          %v2601 = vld [vmem:[#allocation3 + $0x28] sm:$0xff]
          %v2602 = vld [vmem:[#allocation3 + $0x30] sm:$0xff]
          %v2603 = vld [vmem:[#allocation3 + $0x38] sm:$0xff]
          %v2604 = vld [vmem:[#allocation3 + $0x40] sm:$0xff]
          %v2605 = vld [vmem:[#allocation3 + $0x48] sm:$0xff]
          %v2606 = vld [vmem:[#allocation3 + $0x50] sm:$0xff]
          %v2607 = vld [vmem:[#allocation3 + $0x58] sm:$0xff]
          %v2608 = vld [vmem:[#allocation3 + $0x60] sm:$0xff]
          %v2609 = vld [vmem:[#allocation3 + $0x68] sm:$0xff]
          %v2610 = vld [vmem:[#allocation3 + $0x70] sm:$0xff]
          %v2611 = vld [vmem:[#allocation3 + $0x78] sm:$0xff]
          %v2612 = vld [vmem:[#allocation3 + $0x80] sm:$0xff]
          %v2613 = vld [vmem:[#allocation3 + $0x88] sm:$0xff]
          %v2614 = vld [vmem:[#allocation3 + $0x90] sm:$0xff]
          %v2615 = vld [vmem:[#allocation3 + $0x98] sm:$0xff]
          %v2616 = vld [vmem:[#allocation3 + $0xa0] sm:$0xff]
          %v2617 = vld [vmem:[#allocation3 + $0xa8] sm:$0xff]
          %v2618 = vld [vmem:[#allocation3 + $0xb0] sm:$0xff]
          %v2619 = vld [vmem:[#allocation3 + $0xb8] sm:$0xff]
          %v2620 = vld [vmem:[#allocation3 + $0xc0] sm:$0xff]
          %v2621 = vld [vmem:[#allocation3 + $0xc8] sm:$0xff]
          %v2622 = vld [vmem:[#allocation3 + $0xd0] sm:$0xff]
          %v2623 = vld [vmem:[#allocation3 + $0xd8] sm:$0xff]
          %v2624 = vld [vmem:[#allocation3 + $0xe0] sm:$0xff]
          %v2625 = vld [vmem:[#allocation3 + $0xe8] sm:$0xff]
          %v2626 = vld [vmem:[#allocation3 + $0xf0] sm:$0xff]
          %v2627 = vld [vmem:[#allocation3 + $0xf8] sm:$0xff]
          %v2628 = vld [vmem:[#allocation3 + $0x100] sm:$0xff]
          %v2629 = vld [vmem:[#allocation3 + $0x108] sm:$0xff]
          %v2630 = vld [vmem:[#allocation3 + $0x110] sm:$0xff]
          %v2631 = vld [vmem:[#allocation3 + $0x118] sm:$0xff]
          %v2632 = vld [vmem:[#allocation3 + $0x120] sm:$0xff]
          %v2633 = vld [vmem:[#allocation3 + $0x128] sm:$0xff]
          %v2634 = vld [vmem:[#allocation3 + $0x130] sm:$0xff]
          %v2635 = vld [vmem:[#allocation3 + $0x138] sm:$0xff]
          %v2636 = vld [vmem:[#allocation3 + $0x140] sm:$0xff]
          %v2637 = vld [vmem:[#allocation3 + $0x148] sm:$0xff]
          %v2638 = vld [vmem:[#allocation3 + $0x150] sm:$0xff]
          %v2639 = vld [vmem:[#allocation3 + $0x158] sm:$0xff]
          %v2640 = vld [vmem:[#allocation3 + $0x160] sm:$0xff]
          %v2641 = vld [vmem:[#allocation3 + $0x168] sm:$0xff]
          %v2642 = vld [vmem:[#allocation3 + $0x170] sm:$0xff]
          %v2643 = vld [vmem:[#allocation3 + $0x178] sm:$0xff]
          %v2644 = vld [vmem:[#allocation3 + $0x180] sm:$0xff]
          %v2645 = vld [vmem:[#allocation3 + $0x188] sm:$0xff]
          %v2646 = vld [vmem:[#allocation3 + $0x190] sm:$0xff]
          %v2647 = vld [vmem:[#allocation3 + $0x198] sm:$0xff]
          %v2648 = vld [vmem:[#allocation3 + $0x1a0] sm:$0xff]
          %v2649 = vld [vmem:[#allocation3 + $0x1a8] sm:$0xff]
          %v2650 = vld [vmem:[#allocation3 + $0x1b0] sm:$0xff]
          %v2651 = vld [vmem:[#allocation3 + $0x1b8] sm:$0xff]
          %v2652 = vld [vmem:[#allocation3 + $0x1c0] sm:$0xff]
          %v2653 = vld [vmem:[#allocation3 + $0x1c8] sm:$0xff]
          %v2654 = vld [vmem:[#allocation3 + $0x1d0] sm:$0xff]
          %v2655 = vld [vmem:[#allocation3 + $0x1d8] sm:$0xff]
          %v2656 = vld [vmem:[#allocation3 + $0x1e0] sm:$0xff]
          %v2657 = vld [vmem:[#allocation3 + $0x1e8] sm:$0xff]
          %v2658 = vld [vmem:[#allocation3 + $0x1f0] sm:$0xff]
          %v2659 = vld [vmem:[#allocation3 + $0x1f8] sm:$0xff]
          %v2660 = vld [vmem:[%s4] sm:$0xff]
          %v2661 = vld [vmem:[%s4 + $0x8] sm:$0xff]
          %v2662 = vld [vmem:[%s4 + $0x10] sm:$0xff]
          %v2663 = vld [vmem:[%s4 + $0x18] sm:$0xff]
          %v2664 = vld [vmem:[%s4 + $0x20] sm:$0xff]
          %v2665 = vld [vmem:[%s4 + $0x28] sm:$0xff]
          %v2666 = vld [vmem:[%s4 + $0x30] sm:$0xff]
          %v2667 = vld [vmem:[%s4 + $0x38] sm:$0xff]
          %v2668 = vld [vmem:[%s4 + $0x40] sm:$0xff]
          %v2669 = vld [vmem:[%s4 + $0x48] sm:$0xff]
          %v2670 = vld [vmem:[%s4 + $0x50] sm:$0xff]
          %v2671 = vld [vmem:[%s4 + $0x58] sm:$0xff]
          %v2672 = vld [vmem:[%s4 + $0x60] sm:$0xff]
          %v2673 = vld [vmem:[%s4 + $0x68] sm:$0xff]
          %v2674 = vld [vmem:[%s4 + $0x70] sm:$0xff]
          %v2675 = vld [vmem:[%s4 + $0x78] sm:$0xff]
          %v2676 = vld [vmem:[%s4 + $0x80] sm:$0xff]
          %v2677 = vld [vmem:[%s4 + $0x88] sm:$0xff]
          %v2678 = vld [vmem:[%s4 + $0x90] sm:$0xff]
          %v2679 = vld [vmem:[%s4 + $0x98] sm:$0xff]
          %v2680 = vld [vmem:[%s4 + $0xa0] sm:$0xff]
          %v2681 = vld [vmem:[%s4 + $0xa8] sm:$0xff]
          %v2682 = vld [vmem:[%s4 + $0xb0] sm:$0xff]
          %v2683 = vld [vmem:[%s4 + $0xb8] sm:$0xff]
          %v2684 = vld [vmem:[%s4 + $0xc0] sm:$0xff]
          %v2685 = vld [vmem:[%s4 + $0xc8] sm:$0xff]
          %v2686 = vld [vmem:[%s4 + $0xd0] sm:$0xff]
          %v2687 = vld [vmem:[%s4 + $0xd8] sm:$0xff]
          %v2688 = vld [vmem:[%s4 + $0xe0] sm:$0xff]
          %v2689 = vld [vmem:[%s4 + $0xe8] sm:$0xff]
          %v2690 = vld [vmem:[%s4 + $0xf0] sm:$0xff]
          %v2691 = vld [vmem:[%s4 + $0xf8] sm:$0xff]
          %v2692 = vld [vmem:[%s4 + $0x100] sm:$0xff]
          %v2693 = vld [vmem:[%s4 + $0x108] sm:$0xff]
          %v2694 = vld [vmem:[%s4 + $0x110] sm:$0xff]
          %v2695 = vld [vmem:[%s4 + $0x118] sm:$0xff]
          %v2696 = vld [vmem:[%s4 + $0x120] sm:$0xff]
          %v2697 = vld [vmem:[%s4 + $0x128] sm:$0xff]
          %v2698 = vld [vmem:[%s4 + $0x130] sm:$0xff]
          %v2699 = vld [vmem:[%s4 + $0x138] sm:$0xff]
          %v2700 = vld [vmem:[%s4 + $0x140] sm:$0xff]
          %v2701 = vld [vmem:[%s4 + $0x148] sm:$0xff]
          %v2702 = vld [vmem:[%s4 + $0x150] sm:$0xff]
          %v2703 = vld [vmem:[%s4 + $0x158] sm:$0xff]
          %v2704 = vld [vmem:[%s4 + $0x160] sm:$0xff]
          %v2705 = vld [vmem:[%s4 + $0x168] sm:$0xff]
          %v2706 = vld [vmem:[%s4 + $0x170] sm:$0xff]
          %v2707 = vld [vmem:[%s4 + $0x178] sm:$0xff]
          %v2708 = vld [vmem:[%s4 + $0x180] sm:$0xff]
          %v2709 = vld [vmem:[%s4 + $0x188] sm:$0xff]
          %v2710 = vld [vmem:[%s4 + $0x190] sm:$0xff]
          %v2711 = vld [vmem:[%s4 + $0x198] sm:$0xff]
          %v2712 = vld [vmem:[%s4 + $0x1a0] sm:$0xff]
          %v2713 = vld [vmem:[%s4 + $0x1a8] sm:$0xff]
          %v2714 = vld [vmem:[%s4 + $0x1b0] sm:$0xff]
          %v2715 = vld [vmem:[%s4 + $0x1b8] sm:$0xff]
          %v2716 = vld [vmem:[%s4 + $0x1c0] sm:$0xff]
          %v2717 = vld [vmem:[%s4 + $0x1c8] sm:$0xff]
          %v2718 = vld [vmem:[%s4 + $0x1d0] sm:$0xff]
          %v2719 = vld [vmem:[%s4 + $0x1d8] sm:$0xff]
          %v2720 = vld [vmem:[%s4 + $0x1e0] sm:$0xff]
          %v2721 = vld [vmem:[%s4 + $0x1e8] sm:$0xff]
          %v2722 = vld [vmem:[%s4 + $0x1f0] sm:$0xff]
          %v2723 = vld [vmem:[%s4 + $0x1f8] sm:$0xff]
          %v2724 = vld [vmem:[%s4 + $0x200] sm:$0xff]
          %v2725 = vld [vmem:[%s4 + $0x208] sm:$0xff]
          %v2726 = vld [vmem:[%s4 + $0x210] sm:$0xff]
          %v2727 = vld [vmem:[%s4 + $0x218] sm:$0xff]
          %v2728 = vld [vmem:[%s4 + $0x220] sm:$0xff]
          %v2729 = vld [vmem:[%s4 + $0x228] sm:$0xff]
          %v2730 = vld [vmem:[%s4 + $0x230] sm:$0xff]
          %v2731 = vld [vmem:[%s4 + $0x238] sm:$0xff]
          %v2732 = vld [vmem:[%s4 + $0x240] sm:$0xff]
          %v2733 = vld [vmem:[%s4 + $0x248] sm:$0xff]
          %v2734 = vld [vmem:[%s4 + $0x250] sm:$0xff]
          %v2735 = vld [vmem:[%s4 + $0x258] sm:$0xff]
          %v2736 = vld [vmem:[%s4 + $0x260] sm:$0xff]
          %v2737 = vld [vmem:[%s4 + $0x268] sm:$0xff]
          %v2738 = vld [vmem:[%s4 + $0x270] sm:$0xff]
          %v2739 = vld [vmem:[%s4 + $0x278] sm:$0xff]
          %v2740 = vld [vmem:[%s4 + $0x280] sm:$0xff]
          %v2741 = vld [vmem:[%s4 + $0x288] sm:$0xff]
          %v2742 = vld [vmem:[%s4 + $0x290] sm:$0xff]
          %v2743 = vld [vmem:[%s4 + $0x298] sm:$0xff]
          %v2744 = vld [vmem:[%s4 + $0x2a0] sm:$0xff]
          %v2745 = vld [vmem:[%s4 + $0x2a8] sm:$0xff]
          %v2746 = vld [vmem:[%s4 + $0x2b0] sm:$0xff]
          %v2747 = vld [vmem:[%s4 + $0x2b8] sm:$0xff]
          %v2748 = vld [vmem:[%s4 + $0x2c0] sm:$0xff]
          %v2749 = vld [vmem:[%s4 + $0x2c8] sm:$0xff]
          %v2750 = vld [vmem:[%s4 + $0x2d0] sm:$0xff]
          %v2751 = vld [vmem:[%s4 + $0x2d8] sm:$0xff]
          %v2752 = vld [vmem:[%s4 + $0x2e0] sm:$0xff]
          %v2753 = vld [vmem:[%s4 + $0x2e8] sm:$0xff]
          %v2754 = vld [vmem:[%s4 + $0x2f0] sm:$0xff]
          %v2755 = vld [vmem:[%s4 + $0x2f8] sm:$0xff]
          %v2756 = vld [vmem:[%s4 + $0x300] sm:$0xff]
          %v2757 = vld [vmem:[%s4 + $0x308] sm:$0xff]
          %v2758 = vld [vmem:[%s4 + $0x310] sm:$0xff]
          %v2759 = vld [vmem:[%s4 + $0x318] sm:$0xff]
          %v2760 = vld [vmem:[%s4 + $0x320] sm:$0xff]
          %v2761 = vld [vmem:[%s4 + $0x328] sm:$0xff]
          %v2762 = vld [vmem:[%s4 + $0x330] sm:$0xff]
          %v2763 = vld [vmem:[%s4 + $0x338] sm:$0xff]
          %v2764 = vld [vmem:[%s4 + $0x340] sm:$0xff]
          %v2765 = vld [vmem:[%s4 + $0x348] sm:$0xff]
          %v2766 = vld [vmem:[%s4 + $0x350] sm:$0xff]
          %v2767 = vld [vmem:[%s4 + $0x358] sm:$0xff]
          %v2768 = vld [vmem:[%s4 + $0x360] sm:$0xff]
          %v2769 = vld [vmem:[%s4 + $0x368] sm:$0xff]
          %v2770 = vld [vmem:[%s4 + $0x370] sm:$0xff]
          %v2771 = vld [vmem:[%s4 + $0x378] sm:$0xff]
          %v2772 = vld [vmem:[%s4 + $0x380] sm:$0xff]
          %v2773 = vld [vmem:[%s4 + $0x388] sm:$0xff]
          %v2774 = vld [vmem:[%s4 + $0x390] sm:$0xff]
          %v2775 = vld [vmem:[%s4 + $0x398] sm:$0xff]
          %v2776 = vld [vmem:[%s4 + $0x3a0] sm:$0xff]
          %v2777 = vld [vmem:[%s4 + $0x3a8] sm:$0xff]
          %v2778 = vld [vmem:[%s4 + $0x3b0] sm:$0xff]
          %v2779 = vld [vmem:[%s4 + $0x3b8] sm:$0xff]
          %v2780 = vld [vmem:[%s4 + $0x3c0] sm:$0xff]
          %v2781 = vld [vmem:[%s4 + $0x3c8] sm:$0xff]
          %v2782 = vld [vmem:[%s4 + $0x3d0] sm:$0xff]
          %v2783 = vld [vmem:[%s4 + $0x3d8] sm:$0xff]
          %v2784 = vld [vmem:[%s4 + $0x3e0] sm:$0xff]
          %v2785 = vld [vmem:[%s4 + $0x3e8] sm:$0xff]
          %v2786 = vld [vmem:[%s4 + $0x3f0] sm:$0xff]
          %v2787 = vld [vmem:[%s4 + $0x3f8] sm:$0xff]
          %v2788 = vld [vmem:[%s4 + $0x400] sm:$0xff]
          %v2789 = vld [vmem:[%s4 + $0x408] sm:$0xff]
          %v2790 = vld [vmem:[%s4 + $0x410] sm:$0xff]
          %v2791 = vld [vmem:[%s4 + $0x418] sm:$0xff]
          %v2792 = vld [vmem:[%s4 + $0x420] sm:$0xff]
          %v2793 = vld [vmem:[%s4 + $0x428] sm:$0xff]
          %v2794 = vld [vmem:[%s4 + $0x430] sm:$0xff]
          %v2795 = vld [vmem:[%s4 + $0x438] sm:$0xff]
          %v2796 = vld [vmem:[%s4 + $0x440] sm:$0xff]
          %v2797 = vld [vmem:[%s4 + $0x448] sm:$0xff]
          %v2798 = vld [vmem:[%s4 + $0x450] sm:$0xff]
          %v2799 = vld [vmem:[%s4 + $0x458] sm:$0xff]
          %v2800 = vld [vmem:[%s4 + $0x460] sm:$0xff]
          %v2801 = vld [vmem:[%s4 + $0x468] sm:$0xff]
          %v2802 = vld [vmem:[%s4 + $0x470] sm:$0xff]
          %v2803 = vld [vmem:[%s4 + $0x478] sm:$0xff]
          %v2804 = vld [vmem:[%s4 + $0x480] sm:$0xff]
          %v2805 = vld [vmem:[%s4 + $0x488] sm:$0xff]
          %v2806 = vld [vmem:[%s4 + $0x490] sm:$0xff]
          %v2807 = vld [vmem:[%s4 + $0x498] sm:$0xff]
          %v2808 = vld [vmem:[%s4 + $0x4a0] sm:$0xff]
          %v2809 = vld [vmem:[%s4 + $0x4a8] sm:$0xff]
          %v2810 = vld [vmem:[%s4 + $0x4b0] sm:$0xff]
          %v2811 = vld [vmem:[%s4 + $0x4b8] sm:$0xff]
          %v2812 = vld [vmem:[%s4 + $0x4c0] sm:$0xff]
          %v2813 = vld [vmem:[%s4 + $0x4c8] sm:$0xff]
          %v2814 = vld [vmem:[%s4 + $0x4d0] sm:$0xff]
          %v2815 = vld [vmem:[%s4 + $0x4d8] sm:$0xff]
          %v2816 = vld [vmem:[%s4 + $0x4e0] sm:$0xff]
          %v2817 = vld [vmem:[%s4 + $0x4e8] sm:$0xff]
          %v2818 = vld [vmem:[%s4 + $0x4f0] sm:$0xff]
          %v2819 = vld [vmem:[%s4 + $0x4f8] sm:$0xff]
          %v2820 = vld [vmem:[%s4 + $0x500] sm:$0xff]
          %v2821 = vld [vmem:[%s4 + $0x508] sm:$0xff]
          %v2822 = vld [vmem:[%s4 + $0x510] sm:$0xff]
          %v2823 = vld [vmem:[%s4 + $0x518] sm:$0xff]
          %v2824 = vld [vmem:[%s4 + $0x520] sm:$0xff]
          %v2825 = vld [vmem:[%s4 + $0x528] sm:$0xff]
          %v2826 = vld [vmem:[%s4 + $0x530] sm:$0xff]
          %v2827 = vld [vmem:[%s4 + $0x538] sm:$0xff]
          %v2828 = vld [vmem:[%s4 + $0x540] sm:$0xff]
          %v2829 = vld [vmem:[%s4 + $0x548] sm:$0xff]
          %v2830 = vld [vmem:[%s4 + $0x550] sm:$0xff]
          %v2831 = vld [vmem:[%s4 + $0x558] sm:$0xff]
          %v2832 = vld [vmem:[%s4 + $0x560] sm:$0xff]
          %v2833 = vld [vmem:[%s4 + $0x568] sm:$0xff]
          %v2834 = vld [vmem:[%s4 + $0x570] sm:$0xff]
          %v2835 = vld [vmem:[%s4 + $0x578] sm:$0xff]
          %v2836 = vld [vmem:[%s4 + $0x580] sm:$0xff]
          %v2837 = vld [vmem:[%s4 + $0x588] sm:$0xff]
          %v2838 = vld [vmem:[%s4 + $0x590] sm:$0xff]
          %v2839 = vld [vmem:[%s4 + $0x598] sm:$0xff]
          %v2840 = vld [vmem:[%s4 + $0x5a0] sm:$0xff]
          %v2841 = vld [vmem:[%s4 + $0x5a8] sm:$0xff]
          %v2842 = vld [vmem:[%s4 + $0x5b0] sm:$0xff]
          %v2843 = vld [vmem:[%s4 + $0x5b8] sm:$0xff]
          %v2844 = vld [vmem:[%s4 + $0x5c0] sm:$0xff]
          %v2845 = vld [vmem:[%s4 + $0x5c8] sm:$0xff]
          %v2846 = vld [vmem:[%s4 + $0x5d0] sm:$0xff]
          %v2847 = vld [vmem:[%s4 + $0x5d8] sm:$0xff]
          %v2848 = vld [vmem:[%s4 + $0x5e0] sm:$0xff]
          %v2849 = vld [vmem:[%s4 + $0x5e8] sm:$0xff]
          %v2850 = vld [vmem:[%s4 + $0x5f0] sm:$0xff]
          %v2851 = vld [vmem:[%s4 + $0x5f8] sm:$0xff]
          %v2852 = vld [vmem:[%s4 + $0x600] sm:$0xff]
          %v2853 = vld [vmem:[%s4 + $0x608] sm:$0xff]
          %v2854 = vld [vmem:[%s4 + $0x610] sm:$0xff]
          %v2855 = vld [vmem:[%s4 + $0x618] sm:$0xff]
          %v2856 = vld [vmem:[%s4 + $0x620] sm:$0xff]
          %v2857 = vld [vmem:[%s4 + $0x628] sm:$0xff]
          %v2858 = vld [vmem:[%s4 + $0x630] sm:$0xff]
          %v2859 = vld [vmem:[%s4 + $0x638] sm:$0xff]
          %v2860 = vld [vmem:[%s4 + $0x640] sm:$0xff]
          %v2861 = vld [vmem:[%s4 + $0x648] sm:$0xff]
          %v2862 = vld [vmem:[%s4 + $0x650] sm:$0xff]
          %v2863 = vld [vmem:[%s4 + $0x658] sm:$0xff]
          %v2864 = vld [vmem:[%s4 + $0x660] sm:$0xff]
          %v2865 = vld [vmem:[%s4 + $0x668] sm:$0xff]
          %v2866 = vld [vmem:[%s4 + $0x670] sm:$0xff]
          %v2867 = vld [vmem:[%s4 + $0x678] sm:$0xff]
          %v2868 = vld [vmem:[%s4 + $0x680] sm:$0xff]
          %v2869 = vld [vmem:[%s4 + $0x688] sm:$0xff]
          %v2870 = vld [vmem:[%s4 + $0x690] sm:$0xff]
          %v2871 = vld [vmem:[%s4 + $0x698] sm:$0xff]
          %v2872 = vld [vmem:[%s4 + $0x6a0] sm:$0xff]
          %v2873 = vld [vmem:[%s4 + $0x6a8] sm:$0xff]
          %v2874 = vld [vmem:[%s4 + $0x6b0] sm:$0xff]
          %v2875 = vld [vmem:[%s4 + $0x6b8] sm:$0xff]
          %v2876 = vld [vmem:[%s4 + $0x6c0] sm:$0xff]
          %v2877 = vld [vmem:[%s4 + $0x6c8] sm:$0xff]
          %v2878 = vld [vmem:[%s4 + $0x6d0] sm:$0xff]
          %v2879 = vld [vmem:[%s4 + $0x6d8] sm:$0xff]
          %v2880 = vld [vmem:[%s4 + $0x6e0] sm:$0xff]
          %v2881 = vld [vmem:[%s4 + $0x6e8] sm:$0xff]
          %v2882 = vld [vmem:[%s4 + $0x6f0] sm:$0xff]
          %v2883 = vld [vmem:[%s4 + $0x6f8] sm:$0xff]
          %v2884 = vld [vmem:[%s4 + $0x700] sm:$0xff]
          %v2885 = vld [vmem:[%s4 + $0x708] sm:$0xff]
          %v2886 = vld [vmem:[%s4 + $0x710] sm:$0xff]
          %v2887 = vld [vmem:[%s4 + $0x718] sm:$0xff]
          %v2888 = vld [vmem:[%s4 + $0x720] sm:$0xff]
          %v2889 = vld [vmem:[%s4 + $0x728] sm:$0xff]
          %v2890 = vld [vmem:[%s4 + $0x730] sm:$0xff]
          %v2891 = vld [vmem:[%s4 + $0x738] sm:$0xff]
          %v2892 = vld [vmem:[%s4 + $0x740] sm:$0xff]
          %v2893 = vld [vmem:[%s4 + $0x748] sm:$0xff]
          %v2894 = vld [vmem:[%s4 + $0x750] sm:$0xff]
          %v2895 = vld [vmem:[%s4 + $0x758] sm:$0xff]
          %v2896 = vld [vmem:[%s4 + $0x760] sm:$0xff]
          %v2897 = vld [vmem:[%s4 + $0x768] sm:$0xff]
          %v2898 = vld [vmem:[%s4 + $0x770] sm:$0xff]
          %v2899 = vld [vmem:[%s4 + $0x778] sm:$0xff]
          %v2900 = vld [vmem:[%s4 + $0x780] sm:$0xff]
          %v2901 = vld [vmem:[%s4 + $0x788] sm:$0xff]
          %v2902 = vld [vmem:[%s4 + $0x790] sm:$0xff]
          %v2903 = vld [vmem:[%s4 + $0x798] sm:$0xff]
          %v2904 = vld [vmem:[%s4 + $0x7a0] sm:$0xff]
          %v2905 = vld [vmem:[%s4 + $0x7a8] sm:$0xff]
          %v2906 = vld [vmem:[%s4 + $0x7b0] sm:$0xff]
          %v2907 = vld [vmem:[%s4 + $0x7b8] sm:$0xff]
          %v2908 = vld [vmem:[%s4 + $0x7c0] sm:$0xff]
          %v2909 = vld [vmem:[%s4 + $0x7c8] sm:$0xff]
          %v2910 = vld [vmem:[%s4 + $0x7d0] sm:$0xff]
          %v2911 = vld [vmem:[%s4 + $0x7d8] sm:$0xff]
          %v2912 = vld [vmem:[%s4 + $0x7e0] sm:$0xff]
          %v2913 = vld [vmem:[%s4 + $0x7e8] sm:$0xff]
          %v2914 = vld [vmem:[%s4 + $0x7f0] sm:$0xff]
          %v2915 = vld [vmem:[%s4 + $0x7f8] sm:$0xff]
          %v2916 = vunpack.c.l.s8.bf16 %v2660
          %v2917 = vunpack.c.l.s8.bf16 %v2661
          %v2918 = vunpack.c.h.s8.bf16 %v2660
          %v2919 = vunpack.c.h.s8.bf16 %v2661
          %v2920 = vunpack.c.l.s8.bf16 %v2662
          %v2921 = vunpack.c.l.s8.bf16 %v2663
          %v2922 = vunpack.c.h.s8.bf16 %v2662
          %v2923 = vunpack.c.h.s8.bf16 %v2663
          %v2924 = vunpack.c.l.s8.bf16 %v2664
          %v2925 = vunpack.c.l.s8.bf16 %v2665
          %v2926 = vunpack.c.h.s8.bf16 %v2664
          %v2927 = vunpack.c.h.s8.bf16 %v2665
          %v2928 = vunpack.c.l.s8.bf16 %v2666
          %v2929 = vunpack.c.l.s8.bf16 %v2667
          %v2930 = vunpack.c.h.s8.bf16 %v2666
          %v2931 = vunpack.c.h.s8.bf16 %v2667
          %v2932 = vunpack.c.l.s8.bf16 %v2668
          %v2933 = vunpack.c.l.s8.bf16 %v2669
          %v2934 = vunpack.c.h.s8.bf16 %v2668
          %v2935 = vunpack.c.h.s8.bf16 %v2669
          %v2936 = vunpack.c.l.s8.bf16 %v2670
          %v2937 = vunpack.c.l.s8.bf16 %v2671
          %v2938 = vunpack.c.h.s8.bf16 %v2670
          %v2939 = vunpack.c.h.s8.bf16 %v2671
          %v2940 = vunpack.c.l.s8.bf16 %v2672
          %v2941 = vunpack.c.l.s8.bf16 %v2673
          %v2942 = vunpack.c.h.s8.bf16 %v2672
          %v2943 = vunpack.c.h.s8.bf16 %v2673
          %v2944 = vunpack.c.l.s8.bf16 %v2674
          %v2945 = vunpack.c.l.s8.bf16 %v2675
          %v2946 = vunpack.c.h.s8.bf16 %v2674
          %v2947 = vunpack.c.h.s8.bf16 %v2675
          %v2948 = vunpack.c.l.s8.bf16 %v2676
          %v2949 = vunpack.c.l.s8.bf16 %v2677
          %v2950 = vunpack.c.h.s8.bf16 %v2676
          %v2951 = vunpack.c.h.s8.bf16 %v2677
          %v2952 = vunpack.c.l.s8.bf16 %v2678
          %v2953 = vunpack.c.l.s8.bf16 %v2679
          %v2954 = vunpack.c.h.s8.bf16 %v2678
          %v2955 = vunpack.c.h.s8.bf16 %v2679
          %v2956 = vunpack.c.l.s8.bf16 %v2680
          %v2957 = vunpack.c.l.s8.bf16 %v2681
          %v2958 = vunpack.c.h.s8.bf16 %v2680
          %v2959 = vunpack.c.h.s8.bf16 %v2681
          %v2960 = vunpack.c.l.s8.bf16 %v2682
          %v2961 = vunpack.c.l.s8.bf16 %v2683
          %v2962 = vunpack.c.h.s8.bf16 %v2682
          %v2963 = vunpack.c.h.s8.bf16 %v2683
          %v2964 = vunpack.c.l.s8.bf16 %v2684
          %v2965 = vunpack.c.l.s8.bf16 %v2685
          %v2966 = vunpack.c.h.s8.bf16 %v2684
          %v2967 = vunpack.c.h.s8.bf16 %v2685
          %v2968 = vunpack.c.l.s8.bf16 %v2686
          %v2969 = vunpack.c.l.s8.bf16 %v2687
          %v2970 = vunpack.c.h.s8.bf16 %v2686
          %v2971 = vunpack.c.h.s8.bf16 %v2687
          %v2972 = vunpack.c.l.s8.bf16 %v2688
          %v2973 = vunpack.c.l.s8.bf16 %v2689
          %v2974 = vunpack.c.h.s8.bf16 %v2688
          %v2975 = vunpack.c.h.s8.bf16 %v2689
          %v2976 = vunpack.c.l.s8.bf16 %v2690
          %v2977 = vunpack.c.l.s8.bf16 %v2691
          %v2978 = vunpack.c.h.s8.bf16 %v2690
          %v2979 = vunpack.c.h.s8.bf16 %v2691
          %v2980 = vunpack.c.l.s8.bf16 %v2692
          %v2981 = vunpack.c.l.s8.bf16 %v2693
          %v2982 = vunpack.c.h.s8.bf16 %v2692
          %v2983 = vunpack.c.h.s8.bf16 %v2693
          %v2984 = vunpack.c.l.s8.bf16 %v2694
          %v2985 = vunpack.c.l.s8.bf16 %v2695
          %v2986 = vunpack.c.h.s8.bf16 %v2694
          %v2987 = vunpack.c.h.s8.bf16 %v2695
          %v2988 = vunpack.c.l.s8.bf16 %v2696
          %v2989 = vunpack.c.l.s8.bf16 %v2697
          %v2990 = vunpack.c.h.s8.bf16 %v2696
          %v2991 = vunpack.c.h.s8.bf16 %v2697
          %v2992 = vunpack.c.l.s8.bf16 %v2698
          %v2993 = vunpack.c.l.s8.bf16 %v2699
          %v2994 = vunpack.c.h.s8.bf16 %v2698
          %v2995 = vunpack.c.h.s8.bf16 %v2699
          %v2996 = vunpack.c.l.s8.bf16 %v2700
          %v2997 = vunpack.c.l.s8.bf16 %v2701
          %v2998 = vunpack.c.h.s8.bf16 %v2700
          %v2999 = vunpack.c.h.s8.bf16 %v2701
          %v3000 = vunpack.c.l.s8.bf16 %v2702
          %v3001 = vunpack.c.l.s8.bf16 %v2703
          %v3002 = vunpack.c.h.s8.bf16 %v2702
          %v3003 = vunpack.c.h.s8.bf16 %v2703
          %v3004 = vunpack.c.l.s8.bf16 %v2704
          %v3005 = vunpack.c.l.s8.bf16 %v2705
          %v3006 = vunpack.c.h.s8.bf16 %v2704
          %v3007 = vunpack.c.h.s8.bf16 %v2705
          %v3008 = vunpack.c.l.s8.bf16 %v2706
          %v3009 = vunpack.c.l.s8.bf16 %v2707
          %v3010 = vunpack.c.h.s8.bf16 %v2706
          %v3011 = vunpack.c.h.s8.bf16 %v2707
          %v3012 = vunpack.c.l.s8.bf16 %v2708
          %v3013 = vunpack.c.l.s8.bf16 %v2709
          %v3014 = vunpack.c.h.s8.bf16 %v2708
          %v3015 = vunpack.c.h.s8.bf16 %v2709
          %v3016 = vunpack.c.l.s8.bf16 %v2710
          %v3017 = vunpack.c.l.s8.bf16 %v2711
          %v3018 = vunpack.c.h.s8.bf16 %v2710
          %v3019 = vunpack.c.h.s8.bf16 %v2711
          %v3020 = vunpack.c.l.s8.bf16 %v2712
          %v3021 = vunpack.c.l.s8.bf16 %v2713
          %v3022 = vunpack.c.h.s8.bf16 %v2712
          %v3023 = vunpack.c.h.s8.bf16 %v2713
          %v3024 = vunpack.c.l.s8.bf16 %v2714
          %v3025 = vunpack.c.l.s8.bf16 %v2715
          %v3026 = vunpack.c.h.s8.bf16 %v2714
          %v3027 = vunpack.c.h.s8.bf16 %v2715
          %v3028 = vunpack.c.l.s8.bf16 %v2716
          %v3029 = vunpack.c.l.s8.bf16 %v2717
          %v3030 = vunpack.c.h.s8.bf16 %v2716
          %v3031 = vunpack.c.h.s8.bf16 %v2717
          %v3032 = vunpack.c.l.s8.bf16 %v2718
          %v3033 = vunpack.c.l.s8.bf16 %v2719
          %v3034 = vunpack.c.h.s8.bf16 %v2718
          %v3035 = vunpack.c.h.s8.bf16 %v2719
          %v3036 = vunpack.c.l.s8.bf16 %v2720
          %v3037 = vunpack.c.l.s8.bf16 %v2721
          %v3038 = vunpack.c.h.s8.bf16 %v2720
          %v3039 = vunpack.c.h.s8.bf16 %v2721
          %v3040 = vunpack.c.l.s8.bf16 %v2722
          %v3041 = vunpack.c.l.s8.bf16 %v2723
          %v3042 = vunpack.c.h.s8.bf16 %v2722
          %v3043 = vunpack.c.h.s8.bf16 %v2723
          %v3044 = vunpack.c.l.s8.bf16 %v2724
          %v3045 = vunpack.c.l.s8.bf16 %v2725
          %v3046 = vunpack.c.h.s8.bf16 %v2724
          %v3047 = vunpack.c.h.s8.bf16 %v2725
          %v3048 = vunpack.c.l.s8.bf16 %v2726
          %v3049 = vunpack.c.l.s8.bf16 %v2727
          %v3050 = vunpack.c.h.s8.bf16 %v2726
          %v3051 = vunpack.c.h.s8.bf16 %v2727
          %v3052 = vunpack.c.l.s8.bf16 %v2728
          %v3053 = vunpack.c.l.s8.bf16 %v2729
          %v3054 = vunpack.c.h.s8.bf16 %v2728
          %v3055 = vunpack.c.h.s8.bf16 %v2729
          %v3056 = vunpack.c.l.s8.bf16 %v2730
          %v3057 = vunpack.c.l.s8.bf16 %v2731
          %v3058 = vunpack.c.h.s8.bf16 %v2730
          %v3059 = vunpack.c.h.s8.bf16 %v2731
          %v3060 = vunpack.c.l.s8.bf16 %v2732
          %v3061 = vunpack.c.l.s8.bf16 %v2733
          %v3062 = vunpack.c.h.s8.bf16 %v2732
          %v3063 = vunpack.c.h.s8.bf16 %v2733
          %v3064 = vunpack.c.l.s8.bf16 %v2734
          %v3065 = vunpack.c.l.s8.bf16 %v2735
          %v3066 = vunpack.c.h.s8.bf16 %v2734
          %v3067 = vunpack.c.h.s8.bf16 %v2735
          %v3068 = vunpack.c.l.s8.bf16 %v2736
          %v3069 = vunpack.c.l.s8.bf16 %v2737
          %v3070 = vunpack.c.h.s8.bf16 %v2736
          %v3071 = vunpack.c.h.s8.bf16 %v2737
          %v3072 = vunpack.c.l.s8.bf16 %v2738
          %v3073 = vunpack.c.l.s8.bf16 %v2739
          %v3074 = vunpack.c.h.s8.bf16 %v2738
          %v3075 = vunpack.c.h.s8.bf16 %v2739
          %v3076 = vunpack.c.l.s8.bf16 %v2740
          %v3077 = vunpack.c.l.s8.bf16 %v2741
          %v3078 = vunpack.c.h.s8.bf16 %v2740
          %v3079 = vunpack.c.h.s8.bf16 %v2741
          %v3080 = vunpack.c.l.s8.bf16 %v2742
          %v3081 = vunpack.c.l.s8.bf16 %v2743
          %v3082 = vunpack.c.h.s8.bf16 %v2742
          %v3083 = vunpack.c.h.s8.bf16 %v2743
          %v3084 = vunpack.c.l.s8.bf16 %v2744
          %v3085 = vunpack.c.l.s8.bf16 %v2745
          %v3086 = vunpack.c.h.s8.bf16 %v2744
          %v3087 = vunpack.c.h.s8.bf16 %v2745
          %v3088 = vunpack.c.l.s8.bf16 %v2746
          %v3089 = vunpack.c.l.s8.bf16 %v2747
          %v3090 = vunpack.c.h.s8.bf16 %v2746
          %v3091 = vunpack.c.h.s8.bf16 %v2747
          %v3092 = vunpack.c.l.s8.bf16 %v2748
          %v3093 = vunpack.c.l.s8.bf16 %v2749
          %v3094 = vunpack.c.h.s8.bf16 %v2748
          %v3095 = vunpack.c.h.s8.bf16 %v2749
          %v3096 = vunpack.c.l.s8.bf16 %v2750
          %v3097 = vunpack.c.l.s8.bf16 %v2751
          %v3098 = vunpack.c.h.s8.bf16 %v2750
          %v3099 = vunpack.c.h.s8.bf16 %v2751
          %v3100 = vunpack.c.l.s8.bf16 %v2752
          %v3101 = vunpack.c.l.s8.bf16 %v2753
          %v3102 = vunpack.c.h.s8.bf16 %v2752
          %v3103 = vunpack.c.h.s8.bf16 %v2753
          %v3104 = vunpack.c.l.s8.bf16 %v2754
          %v3105 = vunpack.c.l.s8.bf16 %v2755
          %v3106 = vunpack.c.h.s8.bf16 %v2754
          %v3107 = vunpack.c.h.s8.bf16 %v2755
          %v3108 = vunpack.c.l.s8.bf16 %v2756
          %v3109 = vunpack.c.l.s8.bf16 %v2757
          %v3110 = vunpack.c.h.s8.bf16 %v2756
          %v3111 = vunpack.c.h.s8.bf16 %v2757
          %v3112 = vunpack.c.l.s8.bf16 %v2758
          %v3113 = vunpack.c.l.s8.bf16 %v2759
          %v3114 = vunpack.c.h.s8.bf16 %v2758
          %v3115 = vunpack.c.h.s8.bf16 %v2759
          %v3116 = vunpack.c.l.s8.bf16 %v2760
          %v3117 = vunpack.c.l.s8.bf16 %v2761
          %v3118 = vunpack.c.h.s8.bf16 %v2760
          %v3119 = vunpack.c.h.s8.bf16 %v2761
          %v3120 = vunpack.c.l.s8.bf16 %v2762
          %v3121 = vunpack.c.l.s8.bf16 %v2763
          %v3122 = vunpack.c.h.s8.bf16 %v2762
          %v3123 = vunpack.c.h.s8.bf16 %v2763
          %v3124 = vunpack.c.l.s8.bf16 %v2764
          %v3125 = vunpack.c.l.s8.bf16 %v2765
          %v3126 = vunpack.c.h.s8.bf16 %v2764
          %v3127 = vunpack.c.h.s8.bf16 %v2765
          %v3128 = vunpack.c.l.s8.bf16 %v2766
          %v3129 = vunpack.c.l.s8.bf16 %v2767
          %v3130 = vunpack.c.h.s8.bf16 %v2766
          %v3131 = vunpack.c.h.s8.bf16 %v2767
          %v3132 = vunpack.c.l.s8.bf16 %v2768
          %v3133 = vunpack.c.l.s8.bf16 %v2769
          %v3134 = vunpack.c.h.s8.bf16 %v2768
          %v3135 = vunpack.c.h.s8.bf16 %v2769
          %v3136 = vunpack.c.l.s8.bf16 %v2770
          %v3137 = vunpack.c.l.s8.bf16 %v2771
          %v3138 = vunpack.c.h.s8.bf16 %v2770
          %v3139 = vunpack.c.h.s8.bf16 %v2771
          %v3140 = vunpack.c.l.s8.bf16 %v2772
          %v3141 = vunpack.c.l.s8.bf16 %v2773
          %v3142 = vunpack.c.h.s8.bf16 %v2772
          %v3143 = vunpack.c.h.s8.bf16 %v2773
          %v3144 = vunpack.c.l.s8.bf16 %v2774
          %v3145 = vunpack.c.l.s8.bf16 %v2775
          %v3146 = vunpack.c.h.s8.bf16 %v2774
          %v3147 = vunpack.c.h.s8.bf16 %v2775
          %v3148 = vunpack.c.l.s8.bf16 %v2776
          %v3149 = vunpack.c.l.s8.bf16 %v2777
          %v3150 = vunpack.c.h.s8.bf16 %v2776
          %v3151 = vunpack.c.h.s8.bf16 %v2777
          %v3152 = vunpack.c.l.s8.bf16 %v2778
          %v3153 = vunpack.c.l.s8.bf16 %v2779
          %v3154 = vunpack.c.h.s8.bf16 %v2778
          %v3155 = vunpack.c.h.s8.bf16 %v2779
          %v3156 = vunpack.c.l.s8.bf16 %v2780
          %v3157 = vunpack.c.l.s8.bf16 %v2781
          %v3158 = vunpack.c.h.s8.bf16 %v2780
          %v3159 = vunpack.c.h.s8.bf16 %v2781
          %v3160 = vunpack.c.l.s8.bf16 %v2782
          %v3161 = vunpack.c.l.s8.bf16 %v2783
          %v3162 = vunpack.c.h.s8.bf16 %v2782
          %v3163 = vunpack.c.h.s8.bf16 %v2783
          %v3164 = vunpack.c.l.s8.bf16 %v2784
          %v3165 = vunpack.c.l.s8.bf16 %v2785
          %v3166 = vunpack.c.h.s8.bf16 %v2784
          %v3167 = vunpack.c.h.s8.bf16 %v2785
          %v3168 = vunpack.c.l.s8.bf16 %v2786
          %v3169 = vunpack.c.l.s8.bf16 %v2787
          %v3170 = vunpack.c.h.s8.bf16 %v2786
          %v3171 = vunpack.c.h.s8.bf16 %v2787
          %v3172 = vunpack.c.l.s8.bf16 %v2788
          %v3173 = vunpack.c.l.s8.bf16 %v2789
          %v3174 = vunpack.c.h.s8.bf16 %v2788
          %v3175 = vunpack.c.h.s8.bf16 %v2789
          %v3176 = vunpack.c.l.s8.bf16 %v2790
          %v3177 = vunpack.c.l.s8.bf16 %v2791
          %v3178 = vunpack.c.h.s8.bf16 %v2790
          %v3179 = vunpack.c.h.s8.bf16 %v2791
          %v3180 = vunpack.c.l.s8.bf16 %v2792
          %v3181 = vunpack.c.l.s8.bf16 %v2793
          %v3182 = vunpack.c.h.s8.bf16 %v2792
          %v3183 = vunpack.c.h.s8.bf16 %v2793
          %v3184 = vunpack.c.l.s8.bf16 %v2794
          %v3185 = vunpack.c.l.s8.bf16 %v2795
          %v3186 = vunpack.c.h.s8.bf16 %v2794
          %v3187 = vunpack.c.h.s8.bf16 %v2795
          %v3188 = vunpack.c.l.s8.bf16 %v2796
          %v3189 = vunpack.c.l.s8.bf16 %v2797
          %v3190 = vunpack.c.h.s8.bf16 %v2796
          %v3191 = vunpack.c.h.s8.bf16 %v2797
          %v3192 = vunpack.c.l.s8.bf16 %v2798
          %v3193 = vunpack.c.l.s8.bf16 %v2799
          %v3194 = vunpack.c.h.s8.bf16 %v2798
          %v3195 = vunpack.c.h.s8.bf16 %v2799
          %v3196 = vunpack.c.l.s8.bf16 %v2800
          %v3197 = vunpack.c.l.s8.bf16 %v2801
          %v3198 = vunpack.c.h.s8.bf16 %v2800
          %v3199 = vunpack.c.h.s8.bf16 %v2801
          %v3200 = vunpack.c.l.s8.bf16 %v2802
          %v3201 = vunpack.c.l.s8.bf16 %v2803
          %v3202 = vunpack.c.h.s8.bf16 %v2802
          %v3203 = vunpack.c.h.s8.bf16 %v2803
          %v3204 = vunpack.c.l.s8.bf16 %v2804
          %v3205 = vunpack.c.l.s8.bf16 %v2805
          %v3206 = vunpack.c.h.s8.bf16 %v2804
          %v3207 = vunpack.c.h.s8.bf16 %v2805
          %v3208 = vunpack.c.l.s8.bf16 %v2806
          %v3209 = vunpack.c.l.s8.bf16 %v2807
          %v3210 = vunpack.c.h.s8.bf16 %v2806
          %v3211 = vunpack.c.h.s8.bf16 %v2807
          %v3212 = vunpack.c.l.s8.bf16 %v2808
          %v3213 = vunpack.c.l.s8.bf16 %v2809
          %v3214 = vunpack.c.h.s8.bf16 %v2808
          %v3215 = vunpack.c.h.s8.bf16 %v2809
          %v3216 = vunpack.c.l.s8.bf16 %v2810
          %v3217 = vunpack.c.l.s8.bf16 %v2811
          %v3218 = vunpack.c.h.s8.bf16 %v2810
          %v3219 = vunpack.c.h.s8.bf16 %v2811
          %v3220 = vunpack.c.l.s8.bf16 %v2812
          %v3221 = vunpack.c.l.s8.bf16 %v2813
          %v3222 = vunpack.c.h.s8.bf16 %v2812
          %v3223 = vunpack.c.h.s8.bf16 %v2813
          %v3224 = vunpack.c.l.s8.bf16 %v2814
          %v3225 = vunpack.c.l.s8.bf16 %v2815
          %v3226 = vunpack.c.h.s8.bf16 %v2814
          %v3227 = vunpack.c.h.s8.bf16 %v2815
          %v3228 = vunpack.c.l.s8.bf16 %v2816
          %v3229 = vunpack.c.l.s8.bf16 %v2817
          %v3230 = vunpack.c.h.s8.bf16 %v2816
          %v3231 = vunpack.c.h.s8.bf16 %v2817
          %v3232 = vunpack.c.l.s8.bf16 %v2818
          %v3233 = vunpack.c.l.s8.bf16 %v2819
          %v3234 = vunpack.c.h.s8.bf16 %v2818
          %v3235 = vunpack.c.h.s8.bf16 %v2819
          %v3236 = vunpack.c.l.s8.bf16 %v2820
          %v3237 = vunpack.c.l.s8.bf16 %v2821
          %v3238 = vunpack.c.h.s8.bf16 %v2820
          %v3239 = vunpack.c.h.s8.bf16 %v2821
          %v3240 = vunpack.c.l.s8.bf16 %v2822
          %v3241 = vunpack.c.l.s8.bf16 %v2823
          %v3242 = vunpack.c.h.s8.bf16 %v2822
          %v3243 = vunpack.c.h.s8.bf16 %v2823
          %v3244 = vunpack.c.l.s8.bf16 %v2824
          %v3245 = vunpack.c.l.s8.bf16 %v2825
          %v3246 = vunpack.c.h.s8.bf16 %v2824
          %v3247 = vunpack.c.h.s8.bf16 %v2825
          %v3248 = vunpack.c.l.s8.bf16 %v2826
          %v3249 = vunpack.c.l.s8.bf16 %v2827
          %v3250 = vunpack.c.h.s8.bf16 %v2826
          %v3251 = vunpack.c.h.s8.bf16 %v2827
          %v3252 = vunpack.c.l.s8.bf16 %v2828
          %v3253 = vunpack.c.l.s8.bf16 %v2829
          %v3254 = vunpack.c.h.s8.bf16 %v2828
          %v3255 = vunpack.c.h.s8.bf16 %v2829
          %v3256 = vunpack.c.l.s8.bf16 %v2830
          %v3257 = vunpack.c.l.s8.bf16 %v2831
          %v3258 = vunpack.c.h.s8.bf16 %v2830
          %v3259 = vunpack.c.h.s8.bf16 %v2831
          %v3260 = vunpack.c.l.s8.bf16 %v2832
          %v3261 = vunpack.c.l.s8.bf16 %v2833
          %v3262 = vunpack.c.h.s8.bf16 %v2832
          %v3263 = vunpack.c.h.s8.bf16 %v2833
          %v3264 = vunpack.c.l.s8.bf16 %v2834
          %v3265 = vunpack.c.l.s8.bf16 %v2835
          %v3266 = vunpack.c.h.s8.bf16 %v2834
          %v3267 = vunpack.c.h.s8.bf16 %v2835
          %v3268 = vunpack.c.l.s8.bf16 %v2836
          %v3269 = vunpack.c.l.s8.bf16 %v2837
          %v3270 = vunpack.c.h.s8.bf16 %v2836
          %v3271 = vunpack.c.h.s8.bf16 %v2837
          %v3272 = vunpack.c.l.s8.bf16 %v2838
          %v3273 = vunpack.c.l.s8.bf16 %v2839
          %v3274 = vunpack.c.h.s8.bf16 %v2838
          %v3275 = vunpack.c.h.s8.bf16 %v2839
          %v3276 = vunpack.c.l.s8.bf16 %v2840
          %v3277 = vunpack.c.l.s8.bf16 %v2841
          %v3278 = vunpack.c.h.s8.bf16 %v2840
          %v3279 = vunpack.c.h.s8.bf16 %v2841
          %v3280 = vunpack.c.l.s8.bf16 %v2842
          %v3281 = vunpack.c.l.s8.bf16 %v2843
          %v3282 = vunpack.c.h.s8.bf16 %v2842
          %v3283 = vunpack.c.h.s8.bf16 %v2843
          %v3284 = vunpack.c.l.s8.bf16 %v2844
          %v3285 = vunpack.c.l.s8.bf16 %v2845
          %v3286 = vunpack.c.h.s8.bf16 %v2844
          %v3287 = vunpack.c.h.s8.bf16 %v2845
          %v3288 = vunpack.c.l.s8.bf16 %v2846
          %v3289 = vunpack.c.l.s8.bf16 %v2847
          %v3290 = vunpack.c.h.s8.bf16 %v2846
          %v3291 = vunpack.c.h.s8.bf16 %v2847
          %v3292 = vunpack.c.l.s8.bf16 %v2848
          %v3293 = vunpack.c.l.s8.bf16 %v2849
          %v3294 = vunpack.c.h.s8.bf16 %v2848
          %v3295 = vunpack.c.h.s8.bf16 %v2849
          %v3296 = vunpack.c.l.s8.bf16 %v2850
          %v3297 = vunpack.c.l.s8.bf16 %v2851
          %v3298 = vunpack.c.h.s8.bf16 %v2850
          %v3299 = vunpack.c.h.s8.bf16 %v2851
          %v3300 = vunpack.c.l.s8.bf16 %v2852
          %v3301 = vunpack.c.l.s8.bf16 %v2853
          %v3302 = vunpack.c.h.s8.bf16 %v2852
          %v3303 = vunpack.c.h.s8.bf16 %v2853
          %v3304 = vunpack.c.l.s8.bf16 %v2854
          %v3305 = vunpack.c.l.s8.bf16 %v2855
          %v3306 = vunpack.c.h.s8.bf16 %v2854
          %v3307 = vunpack.c.h.s8.bf16 %v2855
          %v3308 = vunpack.c.l.s8.bf16 %v2856
          %v3309 = vunpack.c.l.s8.bf16 %v2857
          %v3310 = vunpack.c.h.s8.bf16 %v2856
          %v3311 = vunpack.c.h.s8.bf16 %v2857
          %v3312 = vunpack.c.l.s8.bf16 %v2858
          %v3313 = vunpack.c.l.s8.bf16 %v2859
          %v3314 = vunpack.c.h.s8.bf16 %v2858
          %v3315 = vunpack.c.h.s8.bf16 %v2859
          %v3316 = vunpack.c.l.s8.bf16 %v2860
          %v3317 = vunpack.c.l.s8.bf16 %v2861
          %v3318 = vunpack.c.h.s8.bf16 %v2860
          %v3319 = vunpack.c.h.s8.bf16 %v2861
          %v3320 = vunpack.c.l.s8.bf16 %v2862
          %v3321 = vunpack.c.l.s8.bf16 %v2863
          %v3322 = vunpack.c.h.s8.bf16 %v2862
          %v3323 = vunpack.c.h.s8.bf16 %v2863
          %v3324 = vunpack.c.l.s8.bf16 %v2864
          %v3325 = vunpack.c.l.s8.bf16 %v2865
          %v3326 = vunpack.c.h.s8.bf16 %v2864
          %v3327 = vunpack.c.h.s8.bf16 %v2865
          %v3328 = vunpack.c.l.s8.bf16 %v2866
          %v3329 = vunpack.c.l.s8.bf16 %v2867
          %v3330 = vunpack.c.h.s8.bf16 %v2866
          %v3331 = vunpack.c.h.s8.bf16 %v2867
          %v3332 = vunpack.c.l.s8.bf16 %v2868
          %v3333 = vunpack.c.l.s8.bf16 %v2869
          %v3334 = vunpack.c.h.s8.bf16 %v2868
          %v3335 = vunpack.c.h.s8.bf16 %v2869
          %v3336 = vunpack.c.l.s8.bf16 %v2870
          %v3337 = vunpack.c.l.s8.bf16 %v2871
          %v3338 = vunpack.c.h.s8.bf16 %v2870
          %v3339 = vunpack.c.h.s8.bf16 %v2871
          %v3340 = vunpack.c.l.s8.bf16 %v2872
          %v3341 = vunpack.c.l.s8.bf16 %v2873
          %v3342 = vunpack.c.h.s8.bf16 %v2872
          %v3343 = vunpack.c.h.s8.bf16 %v2873
          %v3344 = vunpack.c.l.s8.bf16 %v2874
          %v3345 = vunpack.c.l.s8.bf16 %v2875
          %v3346 = vunpack.c.h.s8.bf16 %v2874
          %v3347 = vunpack.c.h.s8.bf16 %v2875
          %v3348 = vunpack.c.l.s8.bf16 %v2876
          %v3349 = vunpack.c.l.s8.bf16 %v2877
          %v3350 = vunpack.c.h.s8.bf16 %v2876
          %v3351 = vunpack.c.h.s8.bf16 %v2877
          %v3352 = vunpack.c.l.s8.bf16 %v2878
          %v3353 = vunpack.c.l.s8.bf16 %v2879
          %v3354 = vunpack.c.h.s8.bf16 %v2878
          %v3355 = vunpack.c.h.s8.bf16 %v2879
          %v3356 = vunpack.c.l.s8.bf16 %v2880
          %v3357 = vunpack.c.l.s8.bf16 %v2881
          %v3358 = vunpack.c.h.s8.bf16 %v2880
          %v3359 = vunpack.c.h.s8.bf16 %v2881
          %v3360 = vunpack.c.l.s8.bf16 %v2882
          %v3361 = vunpack.c.l.s8.bf16 %v2883
          %v3362 = vunpack.c.h.s8.bf16 %v2882
          %v3363 = vunpack.c.h.s8.bf16 %v2883
          %v3364 = vunpack.c.l.s8.bf16 %v2884
          %v3365 = vunpack.c.l.s8.bf16 %v2885
          %v3366 = vunpack.c.h.s8.bf16 %v2884
          %v3367 = vunpack.c.h.s8.bf16 %v2885
          %v3368 = vunpack.c.l.s8.bf16 %v2886
          %v3369 = vunpack.c.l.s8.bf16 %v2887
          %v3370 = vunpack.c.h.s8.bf16 %v2886
          %v3371 = vunpack.c.h.s8.bf16 %v2887
          %v3372 = vunpack.c.l.s8.bf16 %v2888
          %v3373 = vunpack.c.l.s8.bf16 %v2889
          %v3374 = vunpack.c.h.s8.bf16 %v2888
          %v3375 = vunpack.c.h.s8.bf16 %v2889
          %v3376 = vunpack.c.l.s8.bf16 %v2890
          %v3377 = vunpack.c.l.s8.bf16 %v2891
          %v3378 = vunpack.c.h.s8.bf16 %v2890
          %v3379 = vunpack.c.h.s8.bf16 %v2891
          %v3380 = vunpack.c.l.s8.bf16 %v2892
          %v3381 = vunpack.c.l.s8.bf16 %v2893
          %v3382 = vunpack.c.h.s8.bf16 %v2892
          %v3383 = vunpack.c.h.s8.bf16 %v2893
          %v3384 = vunpack.c.l.s8.bf16 %v2894
          %v3385 = vunpack.c.l.s8.bf16 %v2895
          %v3386 = vunpack.c.h.s8.bf16 %v2894
          %v3387 = vunpack.c.h.s8.bf16 %v2895
          %v3388 = vunpack.c.l.s8.bf16 %v2896
          %v3389 = vunpack.c.l.s8.bf16 %v2897
          %v3390 = vunpack.c.h.s8.bf16 %v2896
          %v3391 = vunpack.c.h.s8.bf16 %v2897
          %v3392 = vunpack.c.l.s8.bf16 %v2898
          %v3393 = vunpack.c.l.s8.bf16 %v2899
          %v3394 = vunpack.c.h.s8.bf16 %v2898
          %v3395 = vunpack.c.h.s8.bf16 %v2899
          %v3396 = vunpack.c.l.s8.bf16 %v2900
          %v3397 = vunpack.c.l.s8.bf16 %v2901
          %v3398 = vunpack.c.h.s8.bf16 %v2900
          %v3399 = vunpack.c.h.s8.bf16 %v2901
          %v3400 = vunpack.c.l.s8.bf16 %v2902
          %v3401 = vunpack.c.l.s8.bf16 %v2903
          %v3402 = vunpack.c.h.s8.bf16 %v2902
          %v3403 = vunpack.c.h.s8.bf16 %v2903
          %v3404 = vunpack.c.l.s8.bf16 %v2904
          %v3405 = vunpack.c.l.s8.bf16 %v2905
          %v3406 = vunpack.c.h.s8.bf16 %v2904
          %v3407 = vunpack.c.h.s8.bf16 %v2905
          %v3408 = vunpack.c.l.s8.bf16 %v2906
          %v3409 = vunpack.c.l.s8.bf16 %v2907
          %v3410 = vunpack.c.h.s8.bf16 %v2906
          %v3411 = vunpack.c.h.s8.bf16 %v2907
          %v3412 = vunpack.c.l.s8.bf16 %v2908
          %v3413 = vunpack.c.l.s8.bf16 %v2909
          %v3414 = vunpack.c.h.s8.bf16 %v2908
          %v3415 = vunpack.c.h.s8.bf16 %v2909
          %v3416 = vunpack.c.l.s8.bf16 %v2910
          %v3417 = vunpack.c.l.s8.bf16 %v2911
          %v3418 = vunpack.c.h.s8.bf16 %v2910
          %v3419 = vunpack.c.h.s8.bf16 %v2911
          %v3420 = vunpack.c.l.s8.bf16 %v2912
          %v3421 = vunpack.c.l.s8.bf16 %v2913
          %v3422 = vunpack.c.h.s8.bf16 %v2912
          %v3423 = vunpack.c.h.s8.bf16 %v2913
          %v3424 = vunpack.c.l.s8.bf16 %v2914
          %v3425 = vunpack.c.l.s8.bf16 %v2915
          %v3426 = vunpack.c.h.s8.bf16 %v2914
          %v3427 = vunpack.c.h.s8.bf16 %v2915
          %v3492 = vunpack.c.l.b16 %v2596
          %v3493 = vunpack.c.h.b16 %v2596
          %v3494 = vunpack.c.l.b16 %v2597
          %v3495 = vunpack.c.h.b16 %v2597
          %v3496 = vunpack.c.l.b16 %v2598
          %v3497 = vunpack.c.h.b16 %v2598
          %v3498 = vunpack.c.l.b16 %v2599
          %v3499 = vunpack.c.h.b16 %v2599
          %v3500 = vunpack.c.l.b16 %v2600
          %v3501 = vunpack.c.h.b16 %v2600
          %v3502 = vunpack.c.l.b16 %v2601
          %v3503 = vunpack.c.h.b16 %v2601
          %v3504 = vunpack.c.l.b16 %v2602
          %v3505 = vunpack.c.h.b16 %v2602
          %v3506 = vunpack.c.l.b16 %v2603
          %v3507 = vunpack.c.h.b16 %v2603
          %v3508 = vunpack.c.l.b16 %v2604
          %v3509 = vunpack.c.h.b16 %v2604
          %v3510 = vunpack.c.l.b16 %v2605
          %v3511 = vunpack.c.h.b16 %v2605
          %v3512 = vunpack.c.l.b16 %v2606
          %v3513 = vunpack.c.h.b16 %v2606
          %v3514 = vunpack.c.l.b16 %v2607
          %v3515 = vunpack.c.h.b16 %v2607
          %v3516 = vunpack.c.l.b16 %v2608
          %v3517 = vunpack.c.h.b16 %v2608
          %v3518 = vunpack.c.l.b16 %v2609
          %v3519 = vunpack.c.h.b16 %v2609
          %v3520 = vunpack.c.l.b16 %v2610
          %v3521 = vunpack.c.h.b16 %v2610
          %v3522 = vunpack.c.l.b16 %v2611
          %v3523 = vunpack.c.h.b16 %v2611
          %v3524 = vunpack.c.l.b16 %v2612
          %v3525 = vunpack.c.h.b16 %v2612
          %v3526 = vunpack.c.l.b16 %v2613
          %v3527 = vunpack.c.h.b16 %v2613
          %v3528 = vunpack.c.l.b16 %v2614
          %v3529 = vunpack.c.h.b16 %v2614
          %v3530 = vunpack.c.l.b16 %v2615
          %v3531 = vunpack.c.h.b16 %v2615
          %v3532 = vunpack.c.l.b16 %v2616
          %v3533 = vunpack.c.h.b16 %v2616
          %v3534 = vunpack.c.l.b16 %v2617
          %v3535 = vunpack.c.h.b16 %v2617
          %v3536 = vunpack.c.l.b16 %v2618
          %v3537 = vunpack.c.h.b16 %v2618
          %v3538 = vunpack.c.l.b16 %v2619
          %v3539 = vunpack.c.h.b16 %v2619
          %v3540 = vunpack.c.l.b16 %v2620
          %v3541 = vunpack.c.h.b16 %v2620
          %v3542 = vunpack.c.l.b16 %v2621
          %v3543 = vunpack.c.h.b16 %v2621
          %v3544 = vunpack.c.l.b16 %v2622
          %v3545 = vunpack.c.h.b16 %v2622
          %v3546 = vunpack.c.l.b16 %v2623
          %v3547 = vunpack.c.h.b16 %v2623
          %v3548 = vunpack.c.l.b16 %v2624
          %v3549 = vunpack.c.h.b16 %v2624
          %v3550 = vunpack.c.l.b16 %v2625
          %v3551 = vunpack.c.h.b16 %v2625
          %v3552 = vunpack.c.l.b16 %v2626
          %v3553 = vunpack.c.h.b16 %v2626
          %v3554 = vunpack.c.l.b16 %v2627
          %v3555 = vunpack.c.h.b16 %v2627
          %v3556 = vunpack.c.l.b16 %v2628
          %v3557 = vunpack.c.h.b16 %v2628
          %v3558 = vunpack.c.l.b16 %v2629
          %v3559 = vunpack.c.h.b16 %v2629
          %v3560 = vunpack.c.l.b16 %v2630
          %v3561 = vunpack.c.h.b16 %v2630
          %v3562 = vunpack.c.l.b16 %v2631
          %v3563 = vunpack.c.h.b16 %v2631
          %v3564 = vunpack.c.l.b16 %v2632
          %v3565 = vunpack.c.h.b16 %v2632
          %v3566 = vunpack.c.l.b16 %v2633
          %v3567 = vunpack.c.h.b16 %v2633
          %v3568 = vunpack.c.l.b16 %v2634
          %v3569 = vunpack.c.h.b16 %v2634
          %v3570 = vunpack.c.l.b16 %v2635
          %v3571 = vunpack.c.h.b16 %v2635
          %v3572 = vunpack.c.l.b16 %v2636
          %v3573 = vunpack.c.h.b16 %v2636
          %v3574 = vunpack.c.l.b16 %v2637
          %v3575 = vunpack.c.h.b16 %v2637
          %v3576 = vunpack.c.l.b16 %v2638
          %v3577 = vunpack.c.h.b16 %v2638
          %v3578 = vunpack.c.l.b16 %v2639
          %v3579 = vunpack.c.h.b16 %v2639
          %v3580 = vunpack.c.l.b16 %v2640
          %v3581 = vunpack.c.h.b16 %v2640
          %v3582 = vunpack.c.l.b16 %v2641
          %v3583 = vunpack.c.h.b16 %v2641
          %v3584 = vunpack.c.l.b16 %v2642
          %v3585 = vunpack.c.h.b16 %v2642
          %v3586 = vunpack.c.l.b16 %v2643
          %v3587 = vunpack.c.h.b16 %v2643
          %v3588 = vunpack.c.l.b16 %v2644
          %v3589 = vunpack.c.h.b16 %v2644
          %v3590 = vunpack.c.l.b16 %v2645
          %v3591 = vunpack.c.h.b16 %v2645
          %v3592 = vunpack.c.l.b16 %v2646
          %v3593 = vunpack.c.h.b16 %v2646
          %v3594 = vunpack.c.l.b16 %v2647
          %v3595 = vunpack.c.h.b16 %v2647
          %v3596 = vunpack.c.l.b16 %v2648
          %v3597 = vunpack.c.h.b16 %v2648
          %v3598 = vunpack.c.l.b16 %v2649
          %v3599 = vunpack.c.h.b16 %v2649
          %v3600 = vunpack.c.l.b16 %v2650
          %v3601 = vunpack.c.h.b16 %v2650
          %v3602 = vunpack.c.l.b16 %v2651
          %v3603 = vunpack.c.h.b16 %v2651
          %v3604 = vunpack.c.l.b16 %v2652
          %v3605 = vunpack.c.h.b16 %v2652
          %v3606 = vunpack.c.l.b16 %v2653
          %v3607 = vunpack.c.h.b16 %v2653
          %v3608 = vunpack.c.l.b16 %v2654
          %v3609 = vunpack.c.h.b16 %v2654
          %v3610 = vunpack.c.l.b16 %v2655
          %v3611 = vunpack.c.h.b16 %v2655
          %v3612 = vunpack.c.l.b16 %v2656
          %v3613 = vunpack.c.h.b16 %v2656
          %v3614 = vunpack.c.l.b16 %v2657
          %v3615 = vunpack.c.h.b16 %v2657
          %v3616 = vunpack.c.l.b16 %v2658
          %v3617 = vunpack.c.h.b16 %v2658
          %v3618 = vunpack.c.l.b16 %v2659
          %v3619 = vunpack.c.h.b16 %v2659
          %v3620 = vpack.c.b16 %v3524, %v3492
          %v3621 = vpack.c.b16 %v3525, %v3493
          %v3622 = vpack.c.b16 %v3526, %v3494
          %v3623 = vpack.c.b16 %v3527, %v3495
          %v3624 = vpack.c.b16 %v3528, %v3496
          %v3625 = vpack.c.b16 %v3529, %v3497
          %v3626 = vpack.c.b16 %v3530, %v3498
          %v3627 = vpack.c.b16 %v3531, %v3499
          %v3628 = vpack.c.b16 %v3532, %v3500
          %v3629 = vpack.c.b16 %v3533, %v3501
          %v3630 = vpack.c.b16 %v3534, %v3502
          %v3631 = vpack.c.b16 %v3535, %v3503
          %v3632 = vpack.c.b16 %v3536, %v3504
          %v3633 = vpack.c.b16 %v3537, %v3505
          %v3634 = vpack.c.b16 %v3538, %v3506
          %v3635 = vpack.c.b16 %v3539, %v3507
          %v3636 = vpack.c.b16 %v3540, %v3508
          %v3637 = vpack.c.b16 %v3541, %v3509
          %v3638 = vpack.c.b16 %v3542, %v3510
          %v3639 = vpack.c.b16 %v3543, %v3511
          %v3640 = vpack.c.b16 %v3544, %v3512
          %v3641 = vpack.c.b16 %v3545, %v3513
          %v3642 = vpack.c.b16 %v3546, %v3514
          %v3643 = vpack.c.b16 %v3547, %v3515
          %v3644 = vpack.c.b16 %v3548, %v3516
          %v3645 = vpack.c.b16 %v3549, %v3517
          %v3646 = vpack.c.b16 %v3550, %v3518
          %v3647 = vpack.c.b16 %v3551, %v3519
          %v3648 = vpack.c.b16 %v3552, %v3520
          %v3649 = vpack.c.b16 %v3553, %v3521
          %v3650 = vpack.c.b16 %v3554, %v3522
          %v3651 = vpack.c.b16 %v3555, %v3523
          %v3652 = vpack.c.b16 %v3588, %v3556
          %v3653 = vpack.c.b16 %v3589, %v3557
          %v3654 = vpack.c.b16 %v3590, %v3558
          %v3655 = vpack.c.b16 %v3591, %v3559
          %v3656 = vpack.c.b16 %v3592, %v3560
          %v3657 = vpack.c.b16 %v3593, %v3561
          %v3658 = vpack.c.b16 %v3594, %v3562
          %v3659 = vpack.c.b16 %v3595, %v3563
          %v3660 = vpack.c.b16 %v3596, %v3564
          %v3661 = vpack.c.b16 %v3597, %v3565
          %v3662 = vpack.c.b16 %v3598, %v3566
          %v3663 = vpack.c.b16 %v3599, %v3567
          %v3664 = vpack.c.b16 %v3600, %v3568
          %v3665 = vpack.c.b16 %v3601, %v3569
          %v3666 = vpack.c.b16 %v3602, %v3570
          %v3667 = vpack.c.b16 %v3603, %v3571
          %v3668 = vpack.c.b16 %v3604, %v3572
          %v3669 = vpack.c.b16 %v3605, %v3573
          %v3670 = vpack.c.b16 %v3606, %v3574
          %v3671 = vpack.c.b16 %v3607, %v3575
          %v3672 = vpack.c.b16 %v3608, %v3576
          %v3673 = vpack.c.b16 %v3609, %v3577
          %v3674 = vpack.c.b16 %v3610, %v3578
          %v3675 = vpack.c.b16 %v3611, %v3579
          %v3676 = vpack.c.b16 %v3612, %v3580
          %v3677 = vpack.c.b16 %v3613, %v3581
          %v3678 = vpack.c.b16 %v3614, %v3582
          %v3679 = vpack.c.b16 %v3615, %v3583
          %v3680 = vpack.c.b16 %v3616, %v3584
          %v3681 = vpack.c.b16 %v3617, %v3585
          %v3682 = vpack.c.b16 %v3618, %v3586
          %v3683 = vpack.c.b16 %v3619, %v3587
          %3748 = vmatprep.subr.bf16.mxu0 %v2931
          %3749 = vmatpush1.bf16.msra.mxu0 %v2930
          %3750 = vmatprep.subr.bf16.mxu0 %v2929
          %3751 = vmatpush1.bf16.msra.mxu0 %v2928
          %3752 = vmatprep.subr.bf16.mxu0 %v2927
          %3753 = vmatpush1.bf16.msra.mxu0 %v2926
          %3754 = vmatprep.subr.bf16.mxu0 %v2925
          %3755 = vmatpush1.bf16.msra.mxu0 %v2924
          %3756 = vmatprep.subr.bf16.mxu0 %v2923
          %3757 = vmatpush1.bf16.msra.mxu0 %v2922
          %3758 = vmatprep.subr.bf16.mxu0 %v2921
          %3759 = vmatpush1.bf16.msra.mxu0 %v2920
          %3760 = vmatprep.subr.bf16.mxu0 %v2919
          %3761 = vmatpush1.bf16.msra.mxu0 %v2918
          %3762 = vmatprep.subr.bf16.mxu0 %v2917
          %3763 = vmatpush1.bf16.msra.mxu0 %v2916
          %3764 = vmatprep.subr.bf16.mxu0 %v2947
          %3765 = vmatpush2.bf16.msra.mxu0 %v2946
          %3766 = vmatprep.subr.bf16.mxu0 %v2945
          %3767 = vmatpush2.bf16.msra.mxu0 %v2944
          %3768 = vmatprep.subr.bf16.mxu0 %v2943
          %3769 = vmatpush2.bf16.msra.mxu0 %v2942
          %3770 = vmatprep.subr.bf16.mxu0 %v2941
          %3771 = vmatpush2.bf16.msra.mxu0 %v2940
          %3772 = vmatprep.subr.bf16.mxu0 %v2939
          %3773 = vmatpush2.bf16.msra.mxu0 %v2938
          %3774 = vmatprep.subr.bf16.mxu0 %v2937
          %3775 = vmatpush2.bf16.msra.mxu0 %v2936
          %3776 = vmatprep.subr.bf16.mxu0 %v2935
          %3777 = vmatpush2.bf16.msra.mxu0 %v2934
          %3778 = vmatprep.subr.bf16.mxu0 %v2933
          %3779 = vmatpush2.bf16.msra.mxu0 %v2932
          %3780 = vmatprep.mubr.bf16.mxu0 %v3621
          %3781 = vmatmul.mubr.bf16.gmra.mxu0 %v3620
          %v3782 = vpop.f32.mrf.mxu0
          %v3783 = vadd.f32 0.0, %v3782
          %v3784 = vpop.f32.mrf.mxu0
          %v3785 = vadd.f32 0.0, %v3784
          %v3786 = vpop.f32.mrf.mxu0
          %v3787 = vadd.f32 0.0, %v3786
          %v3788 = vpop.f32.mrf.mxu0
          %v3789 = vadd.f32 0.0, %v3788
          %3790 = vmatprep.mubr.bf16.mxu0 %v3653
          %3791 = vmatmul.mubr.bf16.gmra.mxu0 %v3652
          %v3792 = vpop.f32.mrf.mxu0
          %v3793 = vadd.f32 0.0, %v3792
          %v3794 = vpop.f32.mrf.mxu0
          %v3795 = vadd.f32 0.0, %v3794
          %v3796 = vpop.f32.mrf.mxu0
          %v3797 = vadd.f32 0.0, %v3796
          %v3798 = vpop.f32.mrf.mxu0
          %v3799 = vadd.f32 0.0, %v3798
          %3800 = vdwg.mxu0
          %3801 = vmatprep.subr.bf16.mxu0 %v2963
          %3802 = vmatpush1.bf16.msra.mxu0 %v2962
          %3803 = vmatprep.subr.bf16.mxu0 %v2961
          %3804 = vmatpush1.bf16.msra.mxu0 %v2960
          %3805 = vmatprep.subr.bf16.mxu0 %v2959
          %3806 = vmatpush1.bf16.msra.mxu0 %v2958
          %3807 = vmatprep.subr.bf16.mxu0 %v2957
          %3808 = vmatpush1.bf16.msra.mxu0 %v2956
          %3809 = vmatprep.subr.bf16.mxu0 %v2955
          %3810 = vmatpush1.bf16.msra.mxu0 %v2954
          %3811 = vmatprep.subr.bf16.mxu0 %v2953
          %3812 = vmatpush1.bf16.msra.mxu0 %v2952
          %3813 = vmatprep.subr.bf16.mxu0 %v2951
          %3814 = vmatpush1.bf16.msra.mxu0 %v2950
          %3815 = vmatprep.subr.bf16.mxu0 %v2949
          %3816 = vmatpush1.bf16.msra.mxu0 %v2948
          %3817 = vmatprep.subr.bf16.mxu0 %v2979
          %3818 = vmatpush2.bf16.msra.mxu0 %v2978
          %3819 = vmatprep.subr.bf16.mxu0 %v2977
          %3820 = vmatpush2.bf16.msra.mxu0 %v2976
          %3821 = vmatprep.subr.bf16.mxu0 %v2975
          %3822 = vmatpush2.bf16.msra.mxu0 %v2974
          %3823 = vmatprep.subr.bf16.mxu0 %v2973
          %3824 = vmatpush2.bf16.msra.mxu0 %v2972
          %3825 = vmatprep.subr.bf16.mxu0 %v2971
          %3826 = vmatpush2.bf16.msra.mxu0 %v2970
          %3827 = vmatprep.subr.bf16.mxu0 %v2969
          %3828 = vmatpush2.bf16.msra.mxu0 %v2968
          %3829 = vmatprep.subr.bf16.mxu0 %v2967
          %3830 = vmatpush2.bf16.msra.mxu0 %v2966
          %3831 = vmatprep.subr.bf16.mxu0 %v2965
          %3832 = vmatpush2.bf16.msra.mxu0 %v2964
          %3833 = vmatprep.mubr.bf16.mxu0 %v3623
          %3834 = vmatmul.mubr.bf16.gmra.mxu0 %v3622
          %v3835 = vpop.f32.mrf.mxu0
          %v3836 = vadd.f32 %v3783, %v3835
          %v3837 = vpop.f32.mrf.mxu0
          %v3838 = vadd.f32 %v3785, %v3837
          %v3839 = vpop.f32.mrf.mxu0
          %v3840 = vadd.f32 %v3787, %v3839
          %v3841 = vpop.f32.mrf.mxu0
          %v3842 = vadd.f32 %v3789, %v3841
          %3843 = vmatprep.mubr.bf16.mxu0 %v3655
          %3844 = vmatmul.mubr.bf16.gmra.mxu0 %v3654
          %v3845 = vpop.f32.mrf.mxu0
          %v3846 = vadd.f32 %v3793, %v3845
          %v3847 = vpop.f32.mrf.mxu0
          %v3848 = vadd.f32 %v3795, %v3847
          %v3849 = vpop.f32.mrf.mxu0
          %v3850 = vadd.f32 %v3797, %v3849
          %v3851 = vpop.f32.mrf.mxu0
          %v3852 = vadd.f32 %v3799, %v3851
          %3853 = vdwg.mxu0
          %3854 = vmatprep.subr.bf16.mxu0 %v2995
          %3855 = vmatpush1.bf16.msra.mxu0 %v2994
          %3856 = vmatprep.subr.bf16.mxu0 %v2993
          %3857 = vmatpush1.bf16.msra.mxu0 %v2992
          %3858 = vmatprep.subr.bf16.mxu0 %v2991
          %3859 = vmatpush1.bf16.msra.mxu0 %v2990
          %3860 = vmatprep.subr.bf16.mxu0 %v2989
          %3861 = vmatpush1.bf16.msra.mxu0 %v2988
          %3862 = vmatprep.subr.bf16.mxu0 %v2987
          %3863 = vmatpush1.bf16.msra.mxu0 %v2986
          %3864 = vmatprep.subr.bf16.mxu0 %v2985
          %3865 = vmatpush1.bf16.msra.mxu0 %v2984
          %3866 = vmatprep.subr.bf16.mxu0 %v2983
          %3867 = vmatpush1.bf16.msra.mxu0 %v2982
          %3868 = vmatprep.subr.bf16.mxu0 %v2981
          %3869 = vmatpush1.bf16.msra.mxu0 %v2980
          %3870 = vmatprep.subr.bf16.mxu0 %v3011
          %3871 = vmatpush2.bf16.msra.mxu0 %v3010
          %3872 = vmatprep.subr.bf16.mxu0 %v3009
          %3873 = vmatpush2.bf16.msra.mxu0 %v3008
          %3874 = vmatprep.subr.bf16.mxu0 %v3007
          %3875 = vmatpush2.bf16.msra.mxu0 %v3006
          %3876 = vmatprep.subr.bf16.mxu0 %v3005
          %3877 = vmatpush2.bf16.msra.mxu0 %v3004
          %3878 = vmatprep.subr.bf16.mxu0 %v3003
          %3879 = vmatpush2.bf16.msra.mxu0 %v3002
          %3880 = vmatprep.subr.bf16.mxu0 %v3001
          %3881 = vmatpush2.bf16.msra.mxu0 %v3000
          %3882 = vmatprep.subr.bf16.mxu0 %v2999
          %3883 = vmatpush2.bf16.msra.mxu0 %v2998
          %3884 = vmatprep.subr.bf16.mxu0 %v2997
          %3885 = vmatpush2.bf16.msra.mxu0 %v2996
          %3886 = vmatprep.mubr.bf16.mxu0 %v3625
          %3887 = vmatmul.mubr.bf16.gmra.mxu0 %v3624
          %v3888 = vpop.f32.mrf.mxu0
          %v3889 = vadd.f32 %v3836, %v3888
          %v3890 = vpop.f32.mrf.mxu0
          %v3891 = vadd.f32 %v3838, %v3890
          %v3892 = vpop.f32.mrf.mxu0
          %v3893 = vadd.f32 %v3840, %v3892
          %v3894 = vpop.f32.mrf.mxu0
          %v3895 = vadd.f32 %v3842, %v3894
          %3896 = vmatprep.mubr.bf16.mxu0 %v3657
          %3897 = vmatmul.mubr.bf16.gmra.mxu0 %v3656
          %v3898 = vpop.f32.mrf.mxu0
          %v3899 = vadd.f32 %v3846, %v3898
          %v3900 = vpop.f32.mrf.mxu0
          %v3901 = vadd.f32 %v3848, %v3900
          %v3902 = vpop.f32.mrf.mxu0
          %v3903 = vadd.f32 %v3850, %v3902
          %v3904 = vpop.f32.mrf.mxu0
          %v3905 = vadd.f32 %v3852, %v3904
          %3906 = vdwg.mxu0
          %3907 = vmatprep.subr.bf16.mxu0 %v3027
          %3908 = vmatpush1.bf16.msra.mxu0 %v3026
          %3909 = vmatprep.subr.bf16.mxu0 %v3025
          %3910 = vmatpush1.bf16.msra.mxu0 %v3024
          %3911 = vmatprep.subr.bf16.mxu0 %v3023
          %3912 = vmatpush1.bf16.msra.mxu0 %v3022
          %3913 = vmatprep.subr.bf16.mxu0 %v3021
          %3914 = vmatpush1.bf16.msra.mxu0 %v3020
          %3915 = vmatprep.subr.bf16.mxu0 %v3019
          %3916 = vmatpush1.bf16.msra.mxu0 %v3018
          %3917 = vmatprep.subr.bf16.mxu0 %v3017
          %3918 = vmatpush1.bf16.msra.mxu0 %v3016
          %3919 = vmatprep.subr.bf16.mxu0 %v3015
          %3920 = vmatpush1.bf16.msra.mxu0 %v3014
          %3921 = vmatprep.subr.bf16.mxu0 %v3013
          %3922 = vmatpush1.bf16.msra.mxu0 %v3012
          %3923 = vmatprep.subr.bf16.mxu0 %v3043
          %3924 = vmatpush2.bf16.msra.mxu0 %v3042
          %3925 = vmatprep.subr.bf16.mxu0 %v3041
          %3926 = vmatpush2.bf16.msra.mxu0 %v3040
          %3927 = vmatprep.subr.bf16.mxu0 %v3039
          %3928 = vmatpush2.bf16.msra.mxu0 %v3038
          %3929 = vmatprep.subr.bf16.mxu0 %v3037
          %3930 = vmatpush2.bf16.msra.mxu0 %v3036
          %3931 = vmatprep.subr.bf16.mxu0 %v3035
          %3932 = vmatpush2.bf16.msra.mxu0 %v3034
          %3933 = vmatprep.subr.bf16.mxu0 %v3033
          %3934 = vmatpush2.bf16.msra.mxu0 %v3032
          %3935 = vmatprep.subr.bf16.mxu0 %v3031
          %3936 = vmatpush2.bf16.msra.mxu0 %v3030
          %3937 = vmatprep.subr.bf16.mxu0 %v3029
          %3938 = vmatpush2.bf16.msra.mxu0 %v3028
          %3939 = vmatprep.mubr.bf16.mxu0 %v3627
          %3940 = vmatmul.mubr.bf16.gmra.mxu0 %v3626
          %v3941 = vpop.f32.mrf.mxu0
          %v3942 = vadd.f32 %v3889, %v3941
          %v3943 = vpop.f32.mrf.mxu0
          %v3944 = vadd.f32 %v3891, %v3943
          %v3945 = vpop.f32.mrf.mxu0
          %v3946 = vadd.f32 %v3893, %v3945
          %v3947 = vpop.f32.mrf.mxu0
          %v3948 = vadd.f32 %v3895, %v3947
          %3949 = vmatprep.mubr.bf16.mxu0 %v3659
          %3950 = vmatmul.mubr.bf16.gmra.mxu0 %v3658
          %v3951 = vpop.f32.mrf.mxu0
          %v3952 = vadd.f32 %v3899, %v3951
          %v3953 = vpop.f32.mrf.mxu0
          %v3954 = vadd.f32 %v3901, %v3953
          %v3955 = vpop.f32.mrf.mxu0
          %v3956 = vadd.f32 %v3903, %v3955
          %v3957 = vpop.f32.mrf.mxu0
          %v3958 = vadd.f32 %v3905, %v3957
          %3959 = vdwg.mxu0
          %3960 = vmatprep.subr.bf16.mxu0 %v3059
          %3961 = vmatpush1.bf16.msra.mxu0 %v3058
          %3962 = vmatprep.subr.bf16.mxu0 %v3057
          %3963 = vmatpush1.bf16.msra.mxu0 %v3056
          %3964 = vmatprep.subr.bf16.mxu0 %v3055
          %3965 = vmatpush1.bf16.msra.mxu0 %v3054
          %3966 = vmatprep.subr.bf16.mxu0 %v3053
          %3967 = vmatpush1.bf16.msra.mxu0 %v3052
          %3968 = vmatprep.subr.bf16.mxu0 %v3051
          %3969 = vmatpush1.bf16.msra.mxu0 %v3050
          %3970 = vmatprep.subr.bf16.mxu0 %v3049
          %3971 = vmatpush1.bf16.msra.mxu0 %v3048
          %3972 = vmatprep.subr.bf16.mxu0 %v3047
          %3973 = vmatpush1.bf16.msra.mxu0 %v3046
          %3974 = vmatprep.subr.bf16.mxu0 %v3045
          %3975 = vmatpush1.bf16.msra.mxu0 %v3044
          %3976 = vmatprep.subr.bf16.mxu0 %v3075
          %3977 = vmatpush2.bf16.msra.mxu0 %v3074
          %3978 = vmatprep.subr.bf16.mxu0 %v3073
          %3979 = vmatpush2.bf16.msra.mxu0 %v3072
          %3980 = vmatprep.subr.bf16.mxu0 %v3071
          %3981 = vmatpush2.bf16.msra.mxu0 %v3070
          %3982 = vmatprep.subr.bf16.mxu0 %v3069
          %3983 = vmatpush2.bf16.msra.mxu0 %v3068
          %3984 = vmatprep.subr.bf16.mxu0 %v3067
          %3985 = vmatpush2.bf16.msra.mxu0 %v3066
          %3986 = vmatprep.subr.bf16.mxu0 %v3065
          %3987 = vmatpush2.bf16.msra.mxu0 %v3064
          %3988 = vmatprep.subr.bf16.mxu0 %v3063
          %3989 = vmatpush2.bf16.msra.mxu0 %v3062
          %3990 = vmatprep.subr.bf16.mxu0 %v3061
          %3991 = vmatpush2.bf16.msra.mxu0 %v3060
          %3992 = vmatprep.mubr.bf16.mxu0 %v3629
          %3993 = vmatmul.mubr.bf16.gmra.mxu0 %v3628
          %v3994 = vpop.f32.mrf.mxu0
          %v3995 = vadd.f32 %v3942, %v3994
          %v3996 = vpop.f32.mrf.mxu0
          %v3997 = vadd.f32 %v3944, %v3996
          %v3998 = vpop.f32.mrf.mxu0
          %v3999 = vadd.f32 %v3946, %v3998
          %v4000 = vpop.f32.mrf.mxu0
          %v4001 = vadd.f32 %v3948, %v4000
          %4002 = vmatprep.mubr.bf16.mxu0 %v3661
          %4003 = vmatmul.mubr.bf16.gmra.mxu0 %v3660
          %v4004 = vpop.f32.mrf.mxu0
          %v4005 = vadd.f32 %v3952, %v4004
          %v4006 = vpop.f32.mrf.mxu0
          %v4007 = vadd.f32 %v3954, %v4006
          %v4008 = vpop.f32.mrf.mxu0
          %v4009 = vadd.f32 %v3956, %v4008
          %v4010 = vpop.f32.mrf.mxu0
          %v4011 = vadd.f32 %v3958, %v4010
          %4012 = vdwg.mxu0
          %4013 = vmatprep.subr.bf16.mxu0 %v3091
          %4014 = vmatpush1.bf16.msra.mxu0 %v3090
          %4015 = vmatprep.subr.bf16.mxu0 %v3089
          %4016 = vmatpush1.bf16.msra.mxu0 %v3088
          %4017 = vmatprep.subr.bf16.mxu0 %v3087
          %4018 = vmatpush1.bf16.msra.mxu0 %v3086
          %4019 = vmatprep.subr.bf16.mxu0 %v3085
          %4020 = vmatpush1.bf16.msra.mxu0 %v3084
          %4021 = vmatprep.subr.bf16.mxu0 %v3083
          %4022 = vmatpush1.bf16.msra.mxu0 %v3082
          %4023 = vmatprep.subr.bf16.mxu0 %v3081
          %4024 = vmatpush1.bf16.msra.mxu0 %v3080
          %4025 = vmatprep.subr.bf16.mxu0 %v3079
          %4026 = vmatpush1.bf16.msra.mxu0 %v3078
          %4027 = vmatprep.subr.bf16.mxu0 %v3077
          %4028 = vmatpush1.bf16.msra.mxu0 %v3076
          %4029 = vmatprep.subr.bf16.mxu0 %v3107
          %4030 = vmatpush2.bf16.msra.mxu0 %v3106
          %4031 = vmatprep.subr.bf16.mxu0 %v3105
          %4032 = vmatpush2.bf16.msra.mxu0 %v3104
          %4033 = vmatprep.subr.bf16.mxu0 %v3103
          %4034 = vmatpush2.bf16.msra.mxu0 %v3102
          %4035 = vmatprep.subr.bf16.mxu0 %v3101
          %4036 = vmatpush2.bf16.msra.mxu0 %v3100
          %4037 = vmatprep.subr.bf16.mxu0 %v3099
          %4038 = vmatpush2.bf16.msra.mxu0 %v3098
          %4039 = vmatprep.subr.bf16.mxu0 %v3097
          %4040 = vmatpush2.bf16.msra.mxu0 %v3096
          %4041 = vmatprep.subr.bf16.mxu0 %v3095
          %4042 = vmatpush2.bf16.msra.mxu0 %v3094
          %4043 = vmatprep.subr.bf16.mxu0 %v3093
          %4044 = vmatpush2.bf16.msra.mxu0 %v3092
          %4045 = vmatprep.mubr.bf16.mxu0 %v3631
          %4046 = vmatmul.mubr.bf16.gmra.mxu0 %v3630
          %v4047 = vpop.f32.mrf.mxu0
          %v4048 = vadd.f32 %v3995, %v4047
          %v4049 = vpop.f32.mrf.mxu0
          %v4050 = vadd.f32 %v3997, %v4049
          %v4051 = vpop.f32.mrf.mxu0
          %v4052 = vadd.f32 %v3999, %v4051
          %v4053 = vpop.f32.mrf.mxu0
          %v4054 = vadd.f32 %v4001, %v4053
          %4055 = vmatprep.mubr.bf16.mxu0 %v3663
          %4056 = vmatmul.mubr.bf16.gmra.mxu0 %v3662
          %v4057 = vpop.f32.mrf.mxu0
          %v4058 = vadd.f32 %v4005, %v4057
          %v4059 = vpop.f32.mrf.mxu0
          %v4060 = vadd.f32 %v4007, %v4059
          %v4061 = vpop.f32.mrf.mxu0
          %v4062 = vadd.f32 %v4009, %v4061
          %v4063 = vpop.f32.mrf.mxu0
          %v4064 = vadd.f32 %v4011, %v4063
          %4065 = vdwg.mxu0
          %4066 = vmatprep.subr.bf16.mxu0 %v3123
          %4067 = vmatpush1.bf16.msra.mxu0 %v3122
          %4068 = vmatprep.subr.bf16.mxu0 %v3121
          %4069 = vmatpush1.bf16.msra.mxu0 %v3120
          %4070 = vmatprep.subr.bf16.mxu0 %v3119
          %4071 = vmatpush1.bf16.msra.mxu0 %v3118
          %4072 = vmatprep.subr.bf16.mxu0 %v3117
          %4073 = vmatpush1.bf16.msra.mxu0 %v3116
          %4074 = vmatprep.subr.bf16.mxu0 %v3115
          %4075 = vmatpush1.bf16.msra.mxu0 %v3114
          %4076 = vmatprep.subr.bf16.mxu0 %v3113
          %4077 = vmatpush1.bf16.msra.mxu0 %v3112
          %4078 = vmatprep.subr.bf16.mxu0 %v3111
          %4079 = vmatpush1.bf16.msra.mxu0 %v3110
          %4080 = vmatprep.subr.bf16.mxu0 %v3109
          %4081 = vmatpush1.bf16.msra.mxu0 %v3108
          %4082 = vmatprep.subr.bf16.mxu0 %v3139
          %4083 = vmatpush2.bf16.msra.mxu0 %v3138
          %4084 = vmatprep.subr.bf16.mxu0 %v3137
          %4085 = vmatpush2.bf16.msra.mxu0 %v3136
          %4086 = vmatprep.subr.bf16.mxu0 %v3135
          %4087 = vmatpush2.bf16.msra.mxu0 %v3134
          %4088 = vmatprep.subr.bf16.mxu0 %v3133
          %4089 = vmatpush2.bf16.msra.mxu0 %v3132
          %4090 = vmatprep.subr.bf16.mxu0 %v3131
          %4091 = vmatpush2.bf16.msra.mxu0 %v3130
          %4092 = vmatprep.subr.bf16.mxu0 %v3129
          %4093 = vmatpush2.bf16.msra.mxu0 %v3128
          %4094 = vmatprep.subr.bf16.mxu0 %v3127
          %4095 = vmatpush2.bf16.msra.mxu0 %v3126
          %4096 = vmatprep.subr.bf16.mxu0 %v3125
          %4097 = vmatpush2.bf16.msra.mxu0 %v3124
          %4098 = vmatprep.mubr.bf16.mxu0 %v3633
          %4099 = vmatmul.mubr.bf16.gmra.mxu0 %v3632
          %v4100 = vpop.f32.mrf.mxu0
          %v4101 = vadd.f32 %v4048, %v4100
          %v4102 = vpop.f32.mrf.mxu0
          %v4103 = vadd.f32 %v4050, %v4102
          %v4104 = vpop.f32.mrf.mxu0
          %v4105 = vadd.f32 %v4052, %v4104
          %v4106 = vpop.f32.mrf.mxu0
          %v4107 = vadd.f32 %v4054, %v4106
          %4108 = vmatprep.mubr.bf16.mxu0 %v3665
          %4109 = vmatmul.mubr.bf16.gmra.mxu0 %v3664
          %v4110 = vpop.f32.mrf.mxu0
          %v4111 = vadd.f32 %v4058, %v4110
          %v4112 = vpop.f32.mrf.mxu0
          %v4113 = vadd.f32 %v4060, %v4112
          %v4114 = vpop.f32.mrf.mxu0
          %v4115 = vadd.f32 %v4062, %v4114
          %v4116 = vpop.f32.mrf.mxu0
          %v4117 = vadd.f32 %v4064, %v4116
          %4118 = vdwg.mxu0
          %4119 = vmatprep.subr.bf16.mxu0 %v3155
          %4120 = vmatpush1.bf16.msra.mxu0 %v3154
          %4121 = vmatprep.subr.bf16.mxu0 %v3153
          %4122 = vmatpush1.bf16.msra.mxu0 %v3152
          %4123 = vmatprep.subr.bf16.mxu0 %v3151
          %4124 = vmatpush1.bf16.msra.mxu0 %v3150
          %4125 = vmatprep.subr.bf16.mxu0 %v3149
          %4126 = vmatpush1.bf16.msra.mxu0 %v3148
          %4127 = vmatprep.subr.bf16.mxu0 %v3147
          %4128 = vmatpush1.bf16.msra.mxu0 %v3146
          %4129 = vmatprep.subr.bf16.mxu0 %v3145
          %4130 = vmatpush1.bf16.msra.mxu0 %v3144
          %4131 = vmatprep.subr.bf16.mxu0 %v3143
          %4132 = vmatpush1.bf16.msra.mxu0 %v3142
          %4133 = vmatprep.subr.bf16.mxu0 %v3141
          %4134 = vmatpush1.bf16.msra.mxu0 %v3140
          %4135 = vmatprep.subr.bf16.mxu0 %v3171
          %4136 = vmatpush2.bf16.msra.mxu0 %v3170
          %4137 = vmatprep.subr.bf16.mxu0 %v3169
          %4138 = vmatpush2.bf16.msra.mxu0 %v3168
          %4139 = vmatprep.subr.bf16.mxu0 %v3167
          %4140 = vmatpush2.bf16.msra.mxu0 %v3166
          %4141 = vmatprep.subr.bf16.mxu0 %v3165
          %4142 = vmatpush2.bf16.msra.mxu0 %v3164
          %4143 = vmatprep.subr.bf16.mxu0 %v3163
          %4144 = vmatpush2.bf16.msra.mxu0 %v3162
          %4145 = vmatprep.subr.bf16.mxu0 %v3161
          %4146 = vmatpush2.bf16.msra.mxu0 %v3160
          %4147 = vmatprep.subr.bf16.mxu0 %v3159
          %4148 = vmatpush2.bf16.msra.mxu0 %v3158
          %4149 = vmatprep.subr.bf16.mxu0 %v3157
          %4150 = vmatpush2.bf16.msra.mxu0 %v3156
          %4151 = vmatprep.mubr.bf16.mxu0 %v3635
          %4152 = vmatmul.mubr.bf16.gmra.mxu0 %v3634
          %v4153 = vpop.f32.mrf.mxu0
          %v4154 = vadd.f32 %v4101, %v4153
          %v4155 = vpop.f32.mrf.mxu0
          %v4156 = vadd.f32 %v4103, %v4155
          %v4157 = vpop.f32.mrf.mxu0
          %v4158 = vadd.f32 %v4105, %v4157
          %v4159 = vpop.f32.mrf.mxu0
          %v4160 = vadd.f32 %v4107, %v4159
          %4161 = vmatprep.mubr.bf16.mxu0 %v3667
          %4162 = vmatmul.mubr.bf16.gmra.mxu0 %v3666
          %v4163 = vpop.f32.mrf.mxu0
          %v4164 = vadd.f32 %v4111, %v4163
          %v4165 = vpop.f32.mrf.mxu0
          %v4166 = vadd.f32 %v4113, %v4165
          %v4167 = vpop.f32.mrf.mxu0
          %v4168 = vadd.f32 %v4115, %v4167
          %v4169 = vpop.f32.mrf.mxu0
          %v4170 = vadd.f32 %v4117, %v4169
          %4171 = vdwg.mxu0
          %4172 = vmatprep.subr.bf16.mxu0 %v3187
          %4173 = vmatpush1.bf16.msra.mxu0 %v3186
          %4174 = vmatprep.subr.bf16.mxu0 %v3185
          %4175 = vmatpush1.bf16.msra.mxu0 %v3184
          %4176 = vmatprep.subr.bf16.mxu0 %v3183
          %4177 = vmatpush1.bf16.msra.mxu0 %v3182
          %4178 = vmatprep.subr.bf16.mxu0 %v3181
          %4179 = vmatpush1.bf16.msra.mxu0 %v3180
          %4180 = vmatprep.subr.bf16.mxu0 %v3179
          %4181 = vmatpush1.bf16.msra.mxu0 %v3178
          %4182 = vmatprep.subr.bf16.mxu0 %v3177
          %4183 = vmatpush1.bf16.msra.mxu0 %v3176
          %4184 = vmatprep.subr.bf16.mxu0 %v3175
          %4185 = vmatpush1.bf16.msra.mxu0 %v3174
          %4186 = vmatprep.subr.bf16.mxu0 %v3173
          %4187 = vmatpush1.bf16.msra.mxu0 %v3172
          %4188 = vmatprep.subr.bf16.mxu0 %v3203
          %4189 = vmatpush2.bf16.msra.mxu0 %v3202
          %4190 = vmatprep.subr.bf16.mxu0 %v3201
          %4191 = vmatpush2.bf16.msra.mxu0 %v3200
          %4192 = vmatprep.subr.bf16.mxu0 %v3199
          %4193 = vmatpush2.bf16.msra.mxu0 %v3198
          %4194 = vmatprep.subr.bf16.mxu0 %v3197
          %4195 = vmatpush2.bf16.msra.mxu0 %v3196
          %4196 = vmatprep.subr.bf16.mxu0 %v3195
          %4197 = vmatpush2.bf16.msra.mxu0 %v3194
          %4198 = vmatprep.subr.bf16.mxu0 %v3193
          %4199 = vmatpush2.bf16.msra.mxu0 %v3192
          %4200 = vmatprep.subr.bf16.mxu0 %v3191
          %4201 = vmatpush2.bf16.msra.mxu0 %v3190
          %4202 = vmatprep.subr.bf16.mxu0 %v3189
          %4203 = vmatpush2.bf16.msra.mxu0 %v3188
          %4204 = vmatprep.mubr.bf16.mxu0 %v3637
          %4205 = vmatmul.mubr.bf16.gmra.mxu0 %v3636
          %v4206 = vpop.f32.mrf.mxu0
          %v4207 = vadd.f32 %v4154, %v4206
          %v4208 = vpop.f32.mrf.mxu0
          %v4209 = vadd.f32 %v4156, %v4208
          %v4210 = vpop.f32.mrf.mxu0
          %v4211 = vadd.f32 %v4158, %v4210
          %v4212 = vpop.f32.mrf.mxu0
          %v4213 = vadd.f32 %v4160, %v4212
          %4214 = vmatprep.mubr.bf16.mxu0 %v3669
          %4215 = vmatmul.mubr.bf16.gmra.mxu0 %v3668
          %v4216 = vpop.f32.mrf.mxu0
          %v4217 = vadd.f32 %v4164, %v4216
          %v4218 = vpop.f32.mrf.mxu0
          %v4219 = vadd.f32 %v4166, %v4218
          %v4220 = vpop.f32.mrf.mxu0
          %v4221 = vadd.f32 %v4168, %v4220
          %v4222 = vpop.f32.mrf.mxu0
          %v4223 = vadd.f32 %v4170, %v4222
          %4224 = vdwg.mxu0
          %4225 = vmatprep.subr.bf16.mxu0 %v3219
          %4226 = vmatpush1.bf16.msra.mxu0 %v3218
          %4227 = vmatprep.subr.bf16.mxu0 %v3217
          %4228 = vmatpush1.bf16.msra.mxu0 %v3216
          %4229 = vmatprep.subr.bf16.mxu0 %v3215
          %4230 = vmatpush1.bf16.msra.mxu0 %v3214
          %4231 = vmatprep.subr.bf16.mxu0 %v3213
          %4232 = vmatpush1.bf16.msra.mxu0 %v3212
          %4233 = vmatprep.subr.bf16.mxu0 %v3211
          %4234 = vmatpush1.bf16.msra.mxu0 %v3210
          %4235 = vmatprep.subr.bf16.mxu0 %v3209
          %4236 = vmatpush1.bf16.msra.mxu0 %v3208
          %4237 = vmatprep.subr.bf16.mxu0 %v3207
          %4238 = vmatpush1.bf16.msra.mxu0 %v3206
          %4239 = vmatprep.subr.bf16.mxu0 %v3205
          %4240 = vmatpush1.bf16.msra.mxu0 %v3204
          %4241 = vmatprep.subr.bf16.mxu0 %v3235
          %4242 = vmatpush2.bf16.msra.mxu0 %v3234
          %4243 = vmatprep.subr.bf16.mxu0 %v3233
          %4244 = vmatpush2.bf16.msra.mxu0 %v3232
          %4245 = vmatprep.subr.bf16.mxu0 %v3231
          %4246 = vmatpush2.bf16.msra.mxu0 %v3230
          %4247 = vmatprep.subr.bf16.mxu0 %v3229
          %4248 = vmatpush2.bf16.msra.mxu0 %v3228
          %4249 = vmatprep.subr.bf16.mxu0 %v3227
          %4250 = vmatpush2.bf16.msra.mxu0 %v3226
          %4251 = vmatprep.subr.bf16.mxu0 %v3225
          %4252 = vmatpush2.bf16.msra.mxu0 %v3224
          %4253 = vmatprep.subr.bf16.mxu0 %v3223
          %4254 = vmatpush2.bf16.msra.mxu0 %v3222
          %4255 = vmatprep.subr.bf16.mxu0 %v3221
          %4256 = vmatpush2.bf16.msra.mxu0 %v3220
          %4257 = vmatprep.mubr.bf16.mxu0 %v3639
          %4258 = vmatmul.mubr.bf16.gmra.mxu0 %v3638
          %v4259 = vpop.f32.mrf.mxu0
          %v4260 = vadd.f32 %v4207, %v4259
          %v4261 = vpop.f32.mrf.mxu0
          %v4262 = vadd.f32 %v4209, %v4261
          %v4263 = vpop.f32.mrf.mxu0
          %v4264 = vadd.f32 %v4211, %v4263
          %v4265 = vpop.f32.mrf.mxu0
          %v4266 = vadd.f32 %v4213, %v4265
          %4267 = vmatprep.mubr.bf16.mxu0 %v3671
          %4268 = vmatmul.mubr.bf16.gmra.mxu0 %v3670
          %v4269 = vpop.f32.mrf.mxu0
          %v4270 = vadd.f32 %v4217, %v4269
          %v4271 = vpop.f32.mrf.mxu0
          %v4272 = vadd.f32 %v4219, %v4271
          %v4273 = vpop.f32.mrf.mxu0
          %v4274 = vadd.f32 %v4221, %v4273
          %v4275 = vpop.f32.mrf.mxu0
          %v4276 = vadd.f32 %v4223, %v4275
          %4277 = vdwg.mxu0
          %4278 = vmatprep.subr.bf16.mxu0 %v3251
          %4279 = vmatpush1.bf16.msra.mxu0 %v3250
          %4280 = vmatprep.subr.bf16.mxu0 %v3249
          %4281 = vmatpush1.bf16.msra.mxu0 %v3248
          %4282 = vmatprep.subr.bf16.mxu0 %v3247
          %4283 = vmatpush1.bf16.msra.mxu0 %v3246
          %4284 = vmatprep.subr.bf16.mxu0 %v3245
          %4285 = vmatpush1.bf16.msra.mxu0 %v3244
          %4286 = vmatprep.subr.bf16.mxu0 %v3243
          %4287 = vmatpush1.bf16.msra.mxu0 %v3242
          %4288 = vmatprep.subr.bf16.mxu0 %v3241
          %4289 = vmatpush1.bf16.msra.mxu0 %v3240
          %4290 = vmatprep.subr.bf16.mxu0 %v3239
          %4291 = vmatpush1.bf16.msra.mxu0 %v3238
          %4292 = vmatprep.subr.bf16.mxu0 %v3237
          %4293 = vmatpush1.bf16.msra.mxu0 %v3236
          %4294 = vmatprep.subr.bf16.mxu0 %v3267
          %4295 = vmatpush2.bf16.msra.mxu0 %v3266
          %4296 = vmatprep.subr.bf16.mxu0 %v3265
          %4297 = vmatpush2.bf16.msra.mxu0 %v3264
          %4298 = vmatprep.subr.bf16.mxu0 %v3263
          %4299 = vmatpush2.bf16.msra.mxu0 %v3262
          %4300 = vmatprep.subr.bf16.mxu0 %v3261
          %4301 = vmatpush2.bf16.msra.mxu0 %v3260
          %4302 = vmatprep.subr.bf16.mxu0 %v3259
          %4303 = vmatpush2.bf16.msra.mxu0 %v3258
          %4304 = vmatprep.subr.bf16.mxu0 %v3257
          %4305 = vmatpush2.bf16.msra.mxu0 %v3256
          %4306 = vmatprep.subr.bf16.mxu0 %v3255
          %4307 = vmatpush2.bf16.msra.mxu0 %v3254
          %4308 = vmatprep.subr.bf16.mxu0 %v3253
          %4309 = vmatpush2.bf16.msra.mxu0 %v3252
          %4310 = vmatprep.mubr.bf16.mxu0 %v3641
          %4311 = vmatmul.mubr.bf16.gmra.mxu0 %v3640
          %v4312 = vpop.f32.mrf.mxu0
          %v4313 = vadd.f32 %v4260, %v4312
          %v4314 = vpop.f32.mrf.mxu0
          %v4315 = vadd.f32 %v4262, %v4314
          %v4316 = vpop.f32.mrf.mxu0
          %v4317 = vadd.f32 %v4264, %v4316
          %v4318 = vpop.f32.mrf.mxu0
          %v4319 = vadd.f32 %v4266, %v4318
          %4320 = vmatprep.mubr.bf16.mxu0 %v3673
          %4321 = vmatmul.mubr.bf16.gmra.mxu0 %v3672
          %v4322 = vpop.f32.mrf.mxu0
          %v4323 = vadd.f32 %v4270, %v4322
          %v4324 = vpop.f32.mrf.mxu0
          %v4325 = vadd.f32 %v4272, %v4324
          %v4326 = vpop.f32.mrf.mxu0
          %v4327 = vadd.f32 %v4274, %v4326
          %v4328 = vpop.f32.mrf.mxu0
          %v4329 = vadd.f32 %v4276, %v4328
          %4330 = vdwg.mxu0
          %4331 = vmatprep.subr.bf16.mxu0 %v3283
          %4332 = vmatpush1.bf16.msra.mxu0 %v3282
          %4333 = vmatprep.subr.bf16.mxu0 %v3281
          %4334 = vmatpush1.bf16.msra.mxu0 %v3280
          %4335 = vmatprep.subr.bf16.mxu0 %v3279
          %4336 = vmatpush1.bf16.msra.mxu0 %v3278
          %4337 = vmatprep.subr.bf16.mxu0 %v3277
          %4338 = vmatpush1.bf16.msra.mxu0 %v3276
          %4339 = vmatprep.subr.bf16.mxu0 %v3275
          %4340 = vmatpush1.bf16.msra.mxu0 %v3274
          %4341 = vmatprep.subr.bf16.mxu0 %v3273
          %4342 = vmatpush1.bf16.msra.mxu0 %v3272
          %4343 = vmatprep.subr.bf16.mxu0 %v3271
          %4344 = vmatpush1.bf16.msra.mxu0 %v3270
          %4345 = vmatprep.subr.bf16.mxu0 %v3269
          %4346 = vmatpush1.bf16.msra.mxu0 %v3268
          %4347 = vmatprep.subr.bf16.mxu0 %v3299
          %4348 = vmatpush2.bf16.msra.mxu0 %v3298
          %4349 = vmatprep.subr.bf16.mxu0 %v3297
          %4350 = vmatpush2.bf16.msra.mxu0 %v3296
          %4351 = vmatprep.subr.bf16.mxu0 %v3295
          %4352 = vmatpush2.bf16.msra.mxu0 %v3294
          %4353 = vmatprep.subr.bf16.mxu0 %v3293
          %4354 = vmatpush2.bf16.msra.mxu0 %v3292
          %4355 = vmatprep.subr.bf16.mxu0 %v3291
          %4356 = vmatpush2.bf16.msra.mxu0 %v3290
          %4357 = vmatprep.subr.bf16.mxu0 %v3289
          %4358 = vmatpush2.bf16.msra.mxu0 %v3288
          %4359 = vmatprep.subr.bf16.mxu0 %v3287
          %4360 = vmatpush2.bf16.msra.mxu0 %v3286
          %4361 = vmatprep.subr.bf16.mxu0 %v3285
          %4362 = vmatpush2.bf16.msra.mxu0 %v3284
          %4363 = vmatprep.mubr.bf16.mxu0 %v3643
          %4364 = vmatmul.mubr.bf16.gmra.mxu0 %v3642
          %v4365 = vpop.f32.mrf.mxu0
          %v4366 = vadd.f32 %v4313, %v4365
          %v4367 = vpop.f32.mrf.mxu0
          %v4368 = vadd.f32 %v4315, %v4367
          %v4369 = vpop.f32.mrf.mxu0
          %v4370 = vadd.f32 %v4317, %v4369
          %v4371 = vpop.f32.mrf.mxu0
          %v4372 = vadd.f32 %v4319, %v4371
          %4373 = vmatprep.mubr.bf16.mxu0 %v3675
          %4374 = vmatmul.mubr.bf16.gmra.mxu0 %v3674
          %v4375 = vpop.f32.mrf.mxu0
          %v4376 = vadd.f32 %v4323, %v4375
          %v4377 = vpop.f32.mrf.mxu0
          %v4378 = vadd.f32 %v4325, %v4377
          %v4379 = vpop.f32.mrf.mxu0
          %v4380 = vadd.f32 %v4327, %v4379
          %v4381 = vpop.f32.mrf.mxu0
          %v4382 = vadd.f32 %v4329, %v4381
          %4383 = vdwg.mxu0
          %4384 = vmatprep.subr.bf16.mxu0 %v3315
          %4385 = vmatpush1.bf16.msra.mxu0 %v3314
          %4386 = vmatprep.subr.bf16.mxu0 %v3313
          %4387 = vmatpush1.bf16.msra.mxu0 %v3312
          %4388 = vmatprep.subr.bf16.mxu0 %v3311
          %4389 = vmatpush1.bf16.msra.mxu0 %v3310
          %4390 = vmatprep.subr.bf16.mxu0 %v3309
          %4391 = vmatpush1.bf16.msra.mxu0 %v3308
          %4392 = vmatprep.subr.bf16.mxu0 %v3307
          %4393 = vmatpush1.bf16.msra.mxu0 %v3306
          %4394 = vmatprep.subr.bf16.mxu0 %v3305
          %4395 = vmatpush1.bf16.msra.mxu0 %v3304
          %4396 = vmatprep.subr.bf16.mxu0 %v3303
          %4397 = vmatpush1.bf16.msra.mxu0 %v3302
          %4398 = vmatprep.subr.bf16.mxu0 %v3301
          %4399 = vmatpush1.bf16.msra.mxu0 %v3300
          %4400 = vmatprep.subr.bf16.mxu0 %v3331
          %4401 = vmatpush2.bf16.msra.mxu0 %v3330
          %4402 = vmatprep.subr.bf16.mxu0 %v3329
          %4403 = vmatpush2.bf16.msra.mxu0 %v3328
          %4404 = vmatprep.subr.bf16.mxu0 %v3327
          %4405 = vmatpush2.bf16.msra.mxu0 %v3326
          %4406 = vmatprep.subr.bf16.mxu0 %v3325
          %4407 = vmatpush2.bf16.msra.mxu0 %v3324
          %4408 = vmatprep.subr.bf16.mxu0 %v3323
          %4409 = vmatpush2.bf16.msra.mxu0 %v3322
          %4410 = vmatprep.subr.bf16.mxu0 %v3321
          %4411 = vmatpush2.bf16.msra.mxu0 %v3320
          %4412 = vmatprep.subr.bf16.mxu0 %v3319
          %4413 = vmatpush2.bf16.msra.mxu0 %v3318
          %4414 = vmatprep.subr.bf16.mxu0 %v3317
          %4415 = vmatpush2.bf16.msra.mxu0 %v3316
          %4416 = vmatprep.mubr.bf16.mxu0 %v3645
          %4417 = vmatmul.mubr.bf16.gmra.mxu0 %v3644
          %v4418 = vpop.f32.mrf.mxu0
          %v4419 = vadd.f32 %v4366, %v4418
          %v4420 = vpop.f32.mrf.mxu0
          %v4421 = vadd.f32 %v4368, %v4420
          %v4422 = vpop.f32.mrf.mxu0
          %v4423 = vadd.f32 %v4370, %v4422
          %v4424 = vpop.f32.mrf.mxu0
          %v4425 = vadd.f32 %v4372, %v4424
          %4426 = vmatprep.mubr.bf16.mxu0 %v3677
          %4427 = vmatmul.mubr.bf16.gmra.mxu0 %v3676
          %v4428 = vpop.f32.mrf.mxu0
          %v4429 = vadd.f32 %v4376, %v4428
          %v4430 = vpop.f32.mrf.mxu0
          %v4431 = vadd.f32 %v4378, %v4430
          %v4432 = vpop.f32.mrf.mxu0
          %v4433 = vadd.f32 %v4380, %v4432
          %v4434 = vpop.f32.mrf.mxu0
          %v4435 = vadd.f32 %v4382, %v4434
          %4436 = vdwg.mxu0
          %4437 = vmatprep.subr.bf16.mxu0 %v3347
          %4438 = vmatpush1.bf16.msra.mxu0 %v3346
          %4439 = vmatprep.subr.bf16.mxu0 %v3345
          %4440 = vmatpush1.bf16.msra.mxu0 %v3344
          %4441 = vmatprep.subr.bf16.mxu0 %v3343
          %4442 = vmatpush1.bf16.msra.mxu0 %v3342
          %4443 = vmatprep.subr.bf16.mxu0 %v3341
          %4444 = vmatpush1.bf16.msra.mxu0 %v3340
          %4445 = vmatprep.subr.bf16.mxu0 %v3339
          %4446 = vmatpush1.bf16.msra.mxu0 %v3338
          %4447 = vmatprep.subr.bf16.mxu0 %v3337
          %4448 = vmatpush1.bf16.msra.mxu0 %v3336
          %4449 = vmatprep.subr.bf16.mxu0 %v3335
          %4450 = vmatpush1.bf16.msra.mxu0 %v3334
          %4451 = vmatprep.subr.bf16.mxu0 %v3333
          %4452 = vmatpush1.bf16.msra.mxu0 %v3332
          %4453 = vmatprep.subr.bf16.mxu0 %v3363
          %4454 = vmatpush2.bf16.msra.mxu0 %v3362
          %4455 = vmatprep.subr.bf16.mxu0 %v3361
          %4456 = vmatpush2.bf16.msra.mxu0 %v3360
          %4457 = vmatprep.subr.bf16.mxu0 %v3359
          %4458 = vmatpush2.bf16.msra.mxu0 %v3358
          %4459 = vmatprep.subr.bf16.mxu0 %v3357
          %4460 = vmatpush2.bf16.msra.mxu0 %v3356
          %4461 = vmatprep.subr.bf16.mxu0 %v3355
          %4462 = vmatpush2.bf16.msra.mxu0 %v3354
          %4463 = vmatprep.subr.bf16.mxu0 %v3353
          %4464 = vmatpush2.bf16.msra.mxu0 %v3352
          %4465 = vmatprep.subr.bf16.mxu0 %v3351
          %4466 = vmatpush2.bf16.msra.mxu0 %v3350
          %4467 = vmatprep.subr.bf16.mxu0 %v3349
          %4468 = vmatpush2.bf16.msra.mxu0 %v3348
          %4469 = vmatprep.mubr.bf16.mxu0 %v3647
          %4470 = vmatmul.mubr.bf16.gmra.mxu0 %v3646
          %v4471 = vpop.f32.mrf.mxu0
          %v4472 = vadd.f32 %v4419, %v4471
          %v4473 = vpop.f32.mrf.mxu0
          %v4474 = vadd.f32 %v4421, %v4473
          %v4475 = vpop.f32.mrf.mxu0
          %v4476 = vadd.f32 %v4423, %v4475
          %v4477 = vpop.f32.mrf.mxu0
          %v4478 = vadd.f32 %v4425, %v4477
          %4479 = vmatprep.mubr.bf16.mxu0 %v3679
          %4480 = vmatmul.mubr.bf16.gmra.mxu0 %v3678
          %v4481 = vpop.f32.mrf.mxu0
          %v4482 = vadd.f32 %v4429, %v4481
          %v4483 = vpop.f32.mrf.mxu0
          %v4484 = vadd.f32 %v4431, %v4483
          %v4485 = vpop.f32.mrf.mxu0
          %v4486 = vadd.f32 %v4433, %v4485
          %v4487 = vpop.f32.mrf.mxu0
          %v4488 = vadd.f32 %v4435, %v4487
          %4489 = vdwg.mxu0
          %4490 = vmatprep.subr.bf16.mxu0 %v3379
          %4491 = vmatpush1.bf16.msra.mxu0 %v3378
          %4492 = vmatprep.subr.bf16.mxu0 %v3377
          %4493 = vmatpush1.bf16.msra.mxu0 %v3376
          %4494 = vmatprep.subr.bf16.mxu0 %v3375
          %4495 = vmatpush1.bf16.msra.mxu0 %v3374
          %4496 = vmatprep.subr.bf16.mxu0 %v3373
          %4497 = vmatpush1.bf16.msra.mxu0 %v3372
          %4498 = vmatprep.subr.bf16.mxu0 %v3371
          %4499 = vmatpush1.bf16.msra.mxu0 %v3370
          %4500 = vmatprep.subr.bf16.mxu0 %v3369
          %4501 = vmatpush1.bf16.msra.mxu0 %v3368
          %4502 = vmatprep.subr.bf16.mxu0 %v3367
          %4503 = vmatpush1.bf16.msra.mxu0 %v3366
          %4504 = vmatprep.subr.bf16.mxu0 %v3365
          %4505 = vmatpush1.bf16.msra.mxu0 %v3364
          %4506 = vmatprep.subr.bf16.mxu0 %v3395
          %4507 = vmatpush2.bf16.msra.mxu0 %v3394
          %4508 = vmatprep.subr.bf16.mxu0 %v3393
          %4509 = vmatpush2.bf16.msra.mxu0 %v3392
          %4510 = vmatprep.subr.bf16.mxu0 %v3391
          %4511 = vmatpush2.bf16.msra.mxu0 %v3390
          %4512 = vmatprep.subr.bf16.mxu0 %v3389
          %4513 = vmatpush2.bf16.msra.mxu0 %v3388
          %4514 = vmatprep.subr.bf16.mxu0 %v3387
          %4515 = vmatpush2.bf16.msra.mxu0 %v3386
          %4516 = vmatprep.subr.bf16.mxu0 %v3385
          %4517 = vmatpush2.bf16.msra.mxu0 %v3384
          %4518 = vmatprep.subr.bf16.mxu0 %v3383
          %4519 = vmatpush2.bf16.msra.mxu0 %v3382
          %4520 = vmatprep.subr.bf16.mxu0 %v3381
          %4521 = vmatpush2.bf16.msra.mxu0 %v3380
          %4522 = vmatprep.mubr.bf16.mxu0 %v3649
          %4523 = vmatmul.mubr.bf16.gmra.mxu0 %v3648
          %v4524 = vpop.f32.mrf.mxu0
          %v4525 = vadd.f32 %v4472, %v4524
          %v4526 = vpop.f32.mrf.mxu0
          %v4527 = vadd.f32 %v4474, %v4526
          %v4528 = vpop.f32.mrf.mxu0
          %v4529 = vadd.f32 %v4476, %v4528
          %v4530 = vpop.f32.mrf.mxu0
          %v4531 = vadd.f32 %v4478, %v4530
          %4532 = vmatprep.mubr.bf16.mxu0 %v3681
          %4533 = vmatmul.mubr.bf16.gmra.mxu0 %v3680
          %v4534 = vpop.f32.mrf.mxu0
          %v4535 = vadd.f32 %v4482, %v4534
          %v4536 = vpop.f32.mrf.mxu0
          %v4537 = vadd.f32 %v4484, %v4536
          %v4538 = vpop.f32.mrf.mxu0
          %v4539 = vadd.f32 %v4486, %v4538
          %v4540 = vpop.f32.mrf.mxu0
          %v4541 = vadd.f32 %v4488, %v4540
          %4542 = vdwg.mxu0
          %4543 = vmatprep.subr.bf16.mxu0 %v3411
          %4544 = vmatpush1.bf16.msra.mxu0 %v3410
          %4545 = vmatprep.subr.bf16.mxu0 %v3409
          %4546 = vmatpush1.bf16.msra.mxu0 %v3408
          %4547 = vmatprep.subr.bf16.mxu0 %v3407
          %4548 = vmatpush1.bf16.msra.mxu0 %v3406
          %4549 = vmatprep.subr.bf16.mxu0 %v3405
          %4550 = vmatpush1.bf16.msra.mxu0 %v3404
          %4551 = vmatprep.subr.bf16.mxu0 %v3403
          %4552 = vmatpush1.bf16.msra.mxu0 %v3402
          %4553 = vmatprep.subr.bf16.mxu0 %v3401
          %4554 = vmatpush1.bf16.msra.mxu0 %v3400
          %4555 = vmatprep.subr.bf16.mxu0 %v3399
          %4556 = vmatpush1.bf16.msra.mxu0 %v3398
          %4557 = vmatprep.subr.bf16.mxu0 %v3397
          %4558 = vmatpush1.bf16.msra.mxu0 %v3396
          %4559 = vmatprep.subr.bf16.mxu0 %v3427
          %4560 = vmatpush2.bf16.msra.mxu0 %v3426
          %4561 = vmatprep.subr.bf16.mxu0 %v3425
          %4562 = vmatpush2.bf16.msra.mxu0 %v3424
          %4563 = vmatprep.subr.bf16.mxu0 %v3423
          %4564 = vmatpush2.bf16.msra.mxu0 %v3422
          %4565 = vmatprep.subr.bf16.mxu0 %v3421
          %4566 = vmatpush2.bf16.msra.mxu0 %v3420
          %4567 = vmatprep.subr.bf16.mxu0 %v3419
          %4568 = vmatpush2.bf16.msra.mxu0 %v3418
          %4569 = vmatprep.subr.bf16.mxu0 %v3417
          %4570 = vmatpush2.bf16.msra.mxu0 %v3416
          %4571 = vmatprep.subr.bf16.mxu0 %v3415
          %4572 = vmatpush2.bf16.msra.mxu0 %v3414
          %4573 = vmatprep.subr.bf16.mxu0 %v3413
          %4574 = vmatpush2.bf16.msra.mxu0 %v3412
          %4575 = vmatprep.mubr.bf16.mxu0 %v3651
          %4576 = vmatmul.mubr.bf16.gmra.mxu0 %v3650
          %v4577 = vpop.f32.mrf.mxu0
          %v4578 = vadd.f32 %v4525, %v4577
          %v4579 = vpop.f32.mrf.mxu0
          %v4580 = vadd.f32 %v4527, %v4579
          %v4581 = vpop.f32.mrf.mxu0
          %v4582 = vadd.f32 %v4529, %v4581
          %v4583 = vpop.f32.mrf.mxu0
          %v4584 = vadd.f32 %v4531, %v4583
          %4585 = vmatprep.mubr.bf16.mxu0 %v3683
          %4586 = vmatmul.mubr.bf16.gmra.mxu0 %v3682
          %v4587 = vpop.f32.mrf.mxu0
          %v4588 = vadd.f32 %v4535, %v4587
          %v4589 = vpop.f32.mrf.mxu0
          %v4590 = vadd.f32 %v4537, %v4589
          %v4591 = vpop.f32.mrf.mxu0
          %v4592 = vadd.f32 %v4539, %v4591
          %v4593 = vpop.f32.mrf.mxu0
          %v4594 = vadd.f32 %v4541, %v4593
          %4595 = vdwg.mxu0
          %v4596 = vld [vmem:[#allocation12] sm:$0x3]
          %v4598 = vlaneseq
          %v4599 = vshrl.u32 %v4598, 7
          %v4600 = vsub.s32 0, %v4599
          %v4601 = vrot.slane %v4596, %v4600
          %v4602 = vlaneseq
          %v4603 = vshrl.u32 %v4602, 7
          %v4604 = vsub.s32 1, %v4603
          %v4605 = vrot.slane %v4596, %v4604
          %v4608 = vmul.f32 %v4578, %v4601
          %v4609 = vmul.f32 %v4580, %v4605
          %v4610 = vmul.f32 %v4582, %v4601
          %v4611 = vmul.f32 %v4584, %v4605
          %v4612 = vmul.f32 %v4588, %v4601
          %v4613 = vmul.f32 %v4590, %v4605
          %v4614 = vmul.f32 %v4592, %v4601
          %v4615 = vmul.f32 %v4594, %v4605
          %v4616 = vld [vmem:[#allocation14] sm:$0x3]
          %v4618 = vlaneseq
          %v4619 = vshrl.u32 %v4618, 7
          %v4620 = vsub.s32 0, %v4619
          %v4621 = vrot.slane %v4616, %v4620
          %v4622 = vlaneseq
          %v4623 = vshrl.u32 %v4622, 7
          %v4624 = vsub.s32 1, %v4623
          %v4625 = vrot.slane %v4616, %v4624
          %v4628 = vadd.f32 %v4608, %v4621
          %v4629 = vadd.f32 %v4609, %v4625
          %v4630 = vadd.f32 %v4610, %v4621
          %v4631 = vadd.f32 %v4611, %v4625
          %v4632 = vadd.f32 %v4612, %v4621
          %v4633 = vadd.f32 %v4613, %v4625
          %v4634 = vadd.f32 %v4614, %v4621
          %v4635 = vadd.f32 %v4615, %v4625
          %v4636 = vmax.f32 %v4628, 0.0
          %v4637 = vmax.f32 %v4629, 0.0
          %v4638 = vmax.f32 %v4630, 0.0
          %v4639 = vmax.f32 %v4631, 0.0
          %v4640 = vmax.f32 %v4632, 0.0
          %v4641 = vmax.f32 %v4633, 0.0
          %v4642 = vmax.f32 %v4634, 0.0
          %v4643 = vmax.f32 %v4635, 0.0
          %v4644 = vpack.c.bf16 %v4638, %v4636
          %v4645 = vpack.c.bf16 %v4639, %v4637
          %v4646 = vpack.c.bf16 %v4642, %v4640
          %v4647 = vpack.c.bf16 %v4643, %v4641
          %v4648 = vld [vmem:[#allocation15] sm:$0xf]
          %vm4649 = vcmask 261120
          %v4651 = vsel %vm4649, %v4648, 0
          %4653 = vmatprep.subr.bf16.mxu0 0
          %4654 = vmatpush1.bf16.msra.mxu0 0
          %4655 = vmatprep.subr.bf16.mxu0 0
          %4656 = vmatpush1.bf16.msra.mxu0 0
          %4657 = vmatprep.subr.bf16.mxu0 0
          %4658 = vmatpush1.bf16.msra.mxu0 0
          %4659 = vmatprep.subr.bf16.mxu0 0
          %4660 = vmatpush1.bf16.msra.mxu0 0
          %4661 = vmatprep.subr.bf16.mxu0 0
          %4662 = vmatpush1.bf16.msra.mxu0 0
          %4663 = vmatprep.subr.bf16.mxu0 0
          %4664 = vmatpush1.bf16.msra.mxu0 0
          %4665 = vmatprep.subr.bf16.mxu0 %v4647
          %4666 = vmatpush1.bf16.msra.mxu0 %v4646
          %4667 = vmatprep.subr.bf16.mxu0 %v4645
          %4668 = vmatpush1.bf16.msra.mxu0 %v4644
          %4669 = vmatprep.subr.bf16.mxu0 0
          %4670 = vmatpush2.bf16.msra.mxu0 0
          %4671 = vmatprep.subr.bf16.mxu0 0
          %4672 = vmatpush2.bf16.msra.mxu0 0
          %4673 = vmatprep.subr.bf16.mxu0 0
          %4674 = vmatpush2.bf16.msra.mxu0 0
          %4675 = vmatprep.subr.bf16.mxu0 0
          %4676 = vmatpush2.bf16.msra.mxu0 0
          %4677 = vmatprep.subr.bf16.mxu0 0
          %4678 = vmatpush2.bf16.msra.mxu0 0
          %4679 = vmatprep.subr.bf16.mxu0 0
          %4680 = vmatpush2.bf16.msra.mxu0 0
          %4681 = vmatprep.subr.bf16.mxu0 0
          %4682 = vmatpush2.bf16.msra.mxu0 0
          %4683 = vmatprep.subr.bf16.mxu0 0
          %4684 = vmatpush2.bf16.msra.mxu0 0
          %4685 = vmatprep.mubr.bf16.mxu0 0
          %4686 = vmatmul.mubr.bf16.gmra.mxu0 %v4651
          %v4687 = vpop.f32.mrf.mxu0
          %v4688 = vadd.f32 0.0, %v4687
          %v4689 = vpop.f32.mrf.mxu0
          %v4690 = vadd.f32 0.0, %v4689
          %v4691 = vpop.f32.mrf.mxu0
          %v4692 = vpop.f32.mrf.mxu0
          %4693 = vdwg.mxu0
          %v4694 = vpack.c.bf16 %v4688, %v4688
          %v4695 = vpack.c.bf16 %v4690, %v4690
          %v4698 = vunpack.c.l.b16 %v4694
          %v4699 = vunpack.c.l.b16 %v4695
          %v4700 = vpack.c.b16 %v4699, %v4698
          %4702 = vst [vmem:[#allocation4] sm:$0xff] %v4700
          %s4703 = scalar_lea.vmem [#allocation15], 4
          %v4704 = vld [vmem:[%s4703] sm:$0xf]
          %v4706 = vsel %vm4649, %v4704, 0
          %4708 = vmatprep.subr.bf16.mxu0 0
          %4709 = vmatpush1.bf16.msra.mxu0 0
          %4710 = vmatprep.subr.bf16.mxu0 0
          %4711 = vmatpush1.bf16.msra.mxu0 0
          %4712 = vmatprep.subr.bf16.mxu0 0
          %4713 = vmatpush1.bf16.msra.mxu0 0
          %4714 = vmatprep.subr.bf16.mxu0 0
          %4715 = vmatpush1.bf16.msra.mxu0 0
          %4716 = vmatprep.subr.bf16.mxu0 0
          %4717 = vmatpush1.bf16.msra.mxu0 0
          %4718 = vmatprep.subr.bf16.mxu0 0
          %4719 = vmatpush1.bf16.msra.mxu0 0
          %4720 = vmatprep.subr.bf16.mxu0 %v4647
          %4721 = vmatpush1.bf16.msra.mxu0 %v4646
          %4722 = vmatprep.subr.bf16.mxu0 %v4645
          %4723 = vmatpush1.bf16.msra.mxu0 %v4644
          %4724 = vmatprep.subr.bf16.mxu0 0
          %4725 = vmatpush2.bf16.msra.mxu0 0
          %4726 = vmatprep.subr.bf16.mxu0 0
          %4727 = vmatpush2.bf16.msra.mxu0 0
          %4728 = vmatprep.subr.bf16.mxu0 0
          %4729 = vmatpush2.bf16.msra.mxu0 0
          %4730 = vmatprep.subr.bf16.mxu0 0
          %4731 = vmatpush2.bf16.msra.mxu0 0
          %4732 = vmatprep.subr.bf16.mxu0 0
          %4733 = vmatpush2.bf16.msra.mxu0 0
          %4734 = vmatprep.subr.bf16.mxu0 0
          %4735 = vmatpush2.bf16.msra.mxu0 0
          %4736 = vmatprep.subr.bf16.mxu0 0
          %4737 = vmatpush2.bf16.msra.mxu0 0
          %4738 = vmatprep.subr.bf16.mxu0 0
          %4739 = vmatpush2.bf16.msra.mxu0 0
          %4740 = vmatprep.mubr.bf16.mxu0 0
          %4741 = vmatmul.mubr.bf16.gmra.mxu0 %v4706
          %v4742 = vpop.f32.mrf.mxu0
          %v4743 = vadd.f32 0.0, %v4742
          %v4744 = vpop.f32.mrf.mxu0
          %v4745 = vadd.f32 0.0, %v4744
          %v4746 = vpop.f32.mrf.mxu0
          %v4747 = vpop.f32.mrf.mxu0
          %4748 = vdwg.mxu0
          %v4749 = vpack.c.bf16 %v4743, %v4743
          %v4750 = vpack.c.bf16 %v4745, %v4745
          %v4753 = vunpack.c.l.b16 %v4749
          %v4754 = vunpack.c.l.b16 %v4750
          %v4755 = vpack.c.b16 %v4754, %v4753
          %4757 = vst [vmem:[#allocation4 + $0x8] sm:$0xff] %v4755
          %s4758 = scalar_lea.vmem [#allocation15], 8
          %v4759 = vld [vmem:[%s4758] sm:$0xf]
          %v4761 = vsel %vm4649, %v4759, 0
          %4763 = vmatprep.subr.bf16.mxu0 0
          %4764 = vmatpush1.bf16.msra.mxu0 0
          %4765 = vmatprep.subr.bf16.mxu0 0
          %4766 = vmatpush1.bf16.msra.mxu0 0
          %4767 = vmatprep.subr.bf16.mxu0 0
          %4768 = vmatpush1.bf16.msra.mxu0 0
          %4769 = vmatprep.subr.bf16.mxu0 0
          %4770 = vmatpush1.bf16.msra.mxu0 0
          %4771 = vmatprep.subr.bf16.mxu0 0
          %4772 = vmatpush1.bf16.msra.mxu0 0
          %4773 = vmatprep.subr.bf16.mxu0 0
          %4774 = vmatpush1.bf16.msra.mxu0 0
          %4775 = vmatprep.subr.bf16.mxu0 %v4647
          %4776 = vmatpush1.bf16.msra.mxu0 %v4646
          %4777 = vmatprep.subr.bf16.mxu0 %v4645
          %4778 = vmatpush1.bf16.msra.mxu0 %v4644
          %4779 = vmatprep.subr.bf16.mxu0 0
          %4780 = vmatpush2.bf16.msra.mxu0 0
          %4781 = vmatprep.subr.bf16.mxu0 0
          %4782 = vmatpush2.bf16.msra.mxu0 0
          %4783 = vmatprep.subr.bf16.mxu0 0
          %4784 = vmatpush2.bf16.msra.mxu0 0
          %4785 = vmatprep.subr.bf16.mxu0 0
          %4786 = vmatpush2.bf16.msra.mxu0 0
          %4787 = vmatprep.subr.bf16.mxu0 0
          %4788 = vmatpush2.bf16.msra.mxu0 0
          %4789 = vmatprep.subr.bf16.mxu0 0
          %4790 = vmatpush2.bf16.msra.mxu0 0
          %4791 = vmatprep.subr.bf16.mxu0 0
          %4792 = vmatpush2.bf16.msra.mxu0 0
          %4793 = vmatprep.subr.bf16.mxu0 0
          %4794 = vmatpush2.bf16.msra.mxu0 0
          %4795 = vmatprep.mubr.bf16.mxu0 0
          %4796 = vmatmul.mubr.bf16.gmra.mxu0 %v4761
          %v4797 = vpop.f32.mrf.mxu0
          %v4798 = vadd.f32 0.0, %v4797
          %v4799 = vpop.f32.mrf.mxu0
          %v4800 = vadd.f32 0.0, %v4799
          %v4801 = vpop.f32.mrf.mxu0
          %v4802 = vpop.f32.mrf.mxu0
          %4803 = vdwg.mxu0
          %v4804 = vpack.c.bf16 %v4798, %v4798
          %v4805 = vpack.c.bf16 %v4800, %v4800
          %v4808 = vunpack.c.l.b16 %v4804
          %v4809 = vunpack.c.l.b16 %v4805
          %v4810 = vpack.c.b16 %v4809, %v4808
          %4812 = vst [vmem:[#allocation4 + $0x10] sm:$0xff] %v4810
          %s4813 = scalar_lea.vmem [#allocation15], 12
          %v4814 = vld [vmem:[%s4813] sm:$0xf]
          %v4816 = vsel %vm4649, %v4814, 0
          %4818 = vmatprep.subr.bf16.mxu0 0
          %4819 = vmatpush1.bf16.msra.mxu0 0
          %4820 = vmatprep.subr.bf16.mxu0 0
          %4821 = vmatpush1.bf16.msra.mxu0 0
          %4822 = vmatprep.subr.bf16.mxu0 0
          %4823 = vmatpush1.bf16.msra.mxu0 0
          %4824 = vmatprep.subr.bf16.mxu0 0
          %4825 = vmatpush1.bf16.msra.mxu0 0
          %4826 = vmatprep.subr.bf16.mxu0 0
          %4827 = vmatpush1.bf16.msra.mxu0 0
          %4828 = vmatprep.subr.bf16.mxu0 0
          %4829 = vmatpush1.bf16.msra.mxu0 0
          %4830 = vmatprep.subr.bf16.mxu0 %v4647
          %4831 = vmatpush1.bf16.msra.mxu0 %v4646
          %4832 = vmatprep.subr.bf16.mxu0 %v4645
          %4833 = vmatpush1.bf16.msra.mxu0 %v4644
          %4834 = vmatprep.subr.bf16.mxu0 0
          %4835 = vmatpush2.bf16.msra.mxu0 0
          %4836 = vmatprep.subr.bf16.mxu0 0
          %4837 = vmatpush2.bf16.msra.mxu0 0
          %4838 = vmatprep.subr.bf16.mxu0 0
          %4839 = vmatpush2.bf16.msra.mxu0 0
          %4840 = vmatprep.subr.bf16.mxu0 0
          %4841 = vmatpush2.bf16.msra.mxu0 0
          %4842 = vmatprep.subr.bf16.mxu0 0
          %4843 = vmatpush2.bf16.msra.mxu0 0
          %4844 = vmatprep.subr.bf16.mxu0 0
          %4845 = vmatpush2.bf16.msra.mxu0 0
          %4846 = vmatprep.subr.bf16.mxu0 0
          %4847 = vmatpush2.bf16.msra.mxu0 0
          %4848 = vmatprep.subr.bf16.mxu0 0
          %4849 = vmatpush2.bf16.msra.mxu0 0
          %4850 = vmatprep.mubr.bf16.mxu0 0
          %4851 = vmatmul.mubr.bf16.gmra.mxu0 %v4816
          %v4852 = vpop.f32.mrf.mxu0
          %v4853 = vadd.f32 0.0, %v4852
          %v4854 = vpop.f32.mrf.mxu0
          %v4855 = vadd.f32 0.0, %v4854
          %v4856 = vpop.f32.mrf.mxu0
          %v4857 = vpop.f32.mrf.mxu0
          %4858 = vdwg.mxu0
          %v4859 = vpack.c.bf16 %v4853, %v4853
          %v4860 = vpack.c.bf16 %v4855, %v4855
          %v4863 = vunpack.c.l.b16 %v4859
          %v4864 = vunpack.c.l.b16 %v4860
          %v4865 = vpack.c.b16 %v4864, %v4863
          %4867 = vst [vmem:[#allocation4 + $0x18] sm:$0xff] %v4865
          %s4868 = scalar_lea.vmem [#allocation15], 16
          %v4869 = vld [vmem:[%s4868] sm:$0xf]
          %v4871 = vsel %vm4649, %v4869, 0
          %4873 = vmatprep.subr.bf16.mxu0 0
          %4874 = vmatpush1.bf16.msra.mxu0 0
          %4875 = vmatprep.subr.bf16.mxu0 0
          %4876 = vmatpush1.bf16.msra.mxu0 0
          %4877 = vmatprep.subr.bf16.mxu0 0
          %4878 = vmatpush1.bf16.msra.mxu0 0
          %4879 = vmatprep.subr.bf16.mxu0 0
          %4880 = vmatpush1.bf16.msra.mxu0 0
          %4881 = vmatprep.subr.bf16.mxu0 0
          %4882 = vmatpush1.bf16.msra.mxu0 0
          %4883 = vmatprep.subr.bf16.mxu0 0
          %4884 = vmatpush1.bf16.msra.mxu0 0
          %4885 = vmatprep.subr.bf16.mxu0 %v4647
          %4886 = vmatpush1.bf16.msra.mxu0 %v4646
          %4887 = vmatprep.subr.bf16.mxu0 %v4645
          %4888 = vmatpush1.bf16.msra.mxu0 %v4644
          %4889 = vmatprep.subr.bf16.mxu0 0
          %4890 = vmatpush2.bf16.msra.mxu0 0
          %4891 = vmatprep.subr.bf16.mxu0 0
          %4892 = vmatpush2.bf16.msra.mxu0 0
          %4893 = vmatprep.subr.bf16.mxu0 0
          %4894 = vmatpush2.bf16.msra.mxu0 0
          %4895 = vmatprep.subr.bf16.mxu0 0
          %4896 = vmatpush2.bf16.msra.mxu0 0
          %4897 = vmatprep.subr.bf16.mxu0 0
          %4898 = vmatpush2.bf16.msra.mxu0 0
          %4899 = vmatprep.subr.bf16.mxu0 0
          %4900 = vmatpush2.bf16.msra.mxu0 0
          %4901 = vmatprep.subr.bf16.mxu0 0
          %4902 = vmatpush2.bf16.msra.mxu0 0
          %4903 = vmatprep.subr.bf16.mxu0 0
          %4904 = vmatpush2.bf16.msra.mxu0 0
          %4905 = vmatprep.mubr.bf16.mxu0 0
          %4906 = vmatmul.mubr.bf16.gmra.mxu0 %v4871
          %v4907 = vpop.f32.mrf.mxu0
          %v4908 = vadd.f32 0.0, %v4907
          %v4909 = vpop.f32.mrf.mxu0
          %v4910 = vadd.f32 0.0, %v4909
          %v4911 = vpop.f32.mrf.mxu0
          %v4912 = vpop.f32.mrf.mxu0
          %4913 = vdwg.mxu0
          %v4914 = vpack.c.bf16 %v4908, %v4908
          %v4915 = vpack.c.bf16 %v4910, %v4910
          %v4918 = vunpack.c.l.b16 %v4914
          %v4919 = vunpack.c.l.b16 %v4915
          %v4920 = vpack.c.b16 %v4919, %v4918
          %4922 = vst [vmem:[#allocation4 + $0x20] sm:$0xff] %v4920
          %s4923 = scalar_lea.vmem [#allocation15], 20
          %v4924 = vld [vmem:[%s4923] sm:$0xf]
          %v4926 = vsel %vm4649, %v4924, 0
          %4928 = vmatprep.subr.bf16.mxu0 0
          %4929 = vmatpush1.bf16.msra.mxu0 0
          %4930 = vmatprep.subr.bf16.mxu0 0
          %4931 = vmatpush1.bf16.msra.mxu0 0
          %4932 = vmatprep.subr.bf16.mxu0 0
          %4933 = vmatpush1.bf16.msra.mxu0 0
          %4934 = vmatprep.subr.bf16.mxu0 0
          %4935 = vmatpush1.bf16.msra.mxu0 0
          %4936 = vmatprep.subr.bf16.mxu0 0
          %4937 = vmatpush1.bf16.msra.mxu0 0
          %4938 = vmatprep.subr.bf16.mxu0 0
          %4939 = vmatpush1.bf16.msra.mxu0 0
          %4940 = vmatprep.subr.bf16.mxu0 %v4647
          %4941 = vmatpush1.bf16.msra.mxu0 %v4646
          %4942 = vmatprep.subr.bf16.mxu0 %v4645
          %4943 = vmatpush1.bf16.msra.mxu0 %v4644
          %4944 = vmatprep.subr.bf16.mxu0 0
          %4945 = vmatpush2.bf16.msra.mxu0 0
          %4946 = vmatprep.subr.bf16.mxu0 0
          %4947 = vmatpush2.bf16.msra.mxu0 0
          %4948 = vmatprep.subr.bf16.mxu0 0
          %4949 = vmatpush2.bf16.msra.mxu0 0
          %4950 = vmatprep.subr.bf16.mxu0 0
          %4951 = vmatpush2.bf16.msra.mxu0 0
          %4952 = vmatprep.subr.bf16.mxu0 0
          %4953 = vmatpush2.bf16.msra.mxu0 0
          %4954 = vmatprep.subr.bf16.mxu0 0
          %4955 = vmatpush2.bf16.msra.mxu0 0
          %4956 = vmatprep.subr.bf16.mxu0 0
          %4957 = vmatpush2.bf16.msra.mxu0 0
          %4958 = vmatprep.subr.bf16.mxu0 0
          %4959 = vmatpush2.bf16.msra.mxu0 0
          %4960 = vmatprep.mubr.bf16.mxu0 0
          %4961 = vmatmul.mubr.bf16.gmra.mxu0 %v4926
          %v4962 = vpop.f32.mrf.mxu0
          %v4963 = vadd.f32 0.0, %v4962
          %v4964 = vpop.f32.mrf.mxu0
          %v4965 = vadd.f32 0.0, %v4964
          %v4966 = vpop.f32.mrf.mxu0
          %v4967 = vpop.f32.mrf.mxu0
          %4968 = vdwg.mxu0
          %v4969 = vpack.c.bf16 %v4963, %v4963
          %v4970 = vpack.c.bf16 %v4965, %v4965
          %v4973 = vunpack.c.l.b16 %v4969
          %v4974 = vunpack.c.l.b16 %v4970
          %v4975 = vpack.c.b16 %v4974, %v4973
          %4977 = vst [vmem:[#allocation4 + $0x28] sm:$0xff] %v4975
          %s4978 = scalar_lea.vmem [#allocation15], 24
          %v4979 = vld [vmem:[%s4978] sm:$0xf]
          %v4981 = vsel %vm4649, %v4979, 0
          %4983 = vmatprep.subr.bf16.mxu0 0
          %4984 = vmatpush1.bf16.msra.mxu0 0
          %4985 = vmatprep.subr.bf16.mxu0 0
          %4986 = vmatpush1.bf16.msra.mxu0 0
          %4987 = vmatprep.subr.bf16.mxu0 0
          %4988 = vmatpush1.bf16.msra.mxu0 0
          %4989 = vmatprep.subr.bf16.mxu0 0
          %4990 = vmatpush1.bf16.msra.mxu0 0
          %4991 = vmatprep.subr.bf16.mxu0 0
          %4992 = vmatpush1.bf16.msra.mxu0 0
          %4993 = vmatprep.subr.bf16.mxu0 0
          %4994 = vmatpush1.bf16.msra.mxu0 0
          %4995 = vmatprep.subr.bf16.mxu0 %v4647
          %4996 = vmatpush1.bf16.msra.mxu0 %v4646
          %4997 = vmatprep.subr.bf16.mxu0 %v4645
          %4998 = vmatpush1.bf16.msra.mxu0 %v4644
          %4999 = vmatprep.subr.bf16.mxu0 0
          %5000 = vmatpush2.bf16.msra.mxu0 0
          %5001 = vmatprep.subr.bf16.mxu0 0
          %5002 = vmatpush2.bf16.msra.mxu0 0
          %5003 = vmatprep.subr.bf16.mxu0 0
          %5004 = vmatpush2.bf16.msra.mxu0 0
          %5005 = vmatprep.subr.bf16.mxu0 0
          %5006 = vmatpush2.bf16.msra.mxu0 0
          %5007 = vmatprep.subr.bf16.mxu0 0
          %5008 = vmatpush2.bf16.msra.mxu0 0
          %5009 = vmatprep.subr.bf16.mxu0 0
          %5010 = vmatpush2.bf16.msra.mxu0 0
          %5011 = vmatprep.subr.bf16.mxu0 0
          %5012 = vmatpush2.bf16.msra.mxu0 0
          %5013 = vmatprep.subr.bf16.mxu0 0
          %5014 = vmatpush2.bf16.msra.mxu0 0
          %5015 = vmatprep.mubr.bf16.mxu0 0
          %5016 = vmatmul.mubr.bf16.gmra.mxu0 %v4981
          %v5017 = vpop.f32.mrf.mxu0
          %v5018 = vadd.f32 0.0, %v5017
          %v5019 = vpop.f32.mrf.mxu0
          %v5020 = vadd.f32 0.0, %v5019
          %v5021 = vpop.f32.mrf.mxu0
          %v5022 = vpop.f32.mrf.mxu0
          %5023 = vdwg.mxu0
          %v5024 = vpack.c.bf16 %v5018, %v5018
          %v5025 = vpack.c.bf16 %v5020, %v5020
          %v5028 = vunpack.c.l.b16 %v5024
          %v5029 = vunpack.c.l.b16 %v5025
          %v5030 = vpack.c.b16 %v5029, %v5028
          %5032 = vst [vmem:[#allocation4 + $0x30] sm:$0xff] %v5030
          %s5033 = scalar_lea.vmem [#allocation15], 28
          %v5034 = vld [vmem:[%s5033] sm:$0xf]
          %v5036 = vsel %vm4649, %v5034, 0
          %5038 = vmatprep.subr.bf16.mxu0 0
          %5039 = vmatpush1.bf16.msra.mxu0 0
          %5040 = vmatprep.subr.bf16.mxu0 0
          %5041 = vmatpush1.bf16.msra.mxu0 0
          %5042 = vmatprep.subr.bf16.mxu0 0
          %5043 = vmatpush1.bf16.msra.mxu0 0
          %5044 = vmatprep.subr.bf16.mxu0 0
          %5045 = vmatpush1.bf16.msra.mxu0 0
          %5046 = vmatprep.subr.bf16.mxu0 0
          %5047 = vmatpush1.bf16.msra.mxu0 0
          %5048 = vmatprep.subr.bf16.mxu0 0
          %5049 = vmatpush1.bf16.msra.mxu0 0
          %5050 = vmatprep.subr.bf16.mxu0 %v4647
          %5051 = vmatpush1.bf16.msra.mxu0 %v4646
          %5052 = vmatprep.subr.bf16.mxu0 %v4645
          %5053 = vmatpush1.bf16.msra.mxu0 %v4644
          %5054 = vmatprep.subr.bf16.mxu0 0
          %5055 = vmatpush2.bf16.msra.mxu0 0
          %5056 = vmatprep.subr.bf16.mxu0 0
          %5057 = vmatpush2.bf16.msra.mxu0 0
          %5058 = vmatprep.subr.bf16.mxu0 0
          %5059 = vmatpush2.bf16.msra.mxu0 0
          %5060 = vmatprep.subr.bf16.mxu0 0
          %5061 = vmatpush2.bf16.msra.mxu0 0
          %5062 = vmatprep.subr.bf16.mxu0 0
          %5063 = vmatpush2.bf16.msra.mxu0 0
          %5064 = vmatprep.subr.bf16.mxu0 0
          %5065 = vmatpush2.bf16.msra.mxu0 0
          %5066 = vmatprep.subr.bf16.mxu0 0
          %5067 = vmatpush2.bf16.msra.mxu0 0
          %5068 = vmatprep.subr.bf16.mxu0 0
          %5069 = vmatpush2.bf16.msra.mxu0 0
          %5070 = vmatprep.mubr.bf16.mxu0 0
          %5071 = vmatmul.mubr.bf16.gmra.mxu0 %v5036
          %v5072 = vpop.f32.mrf.mxu0
          %v5073 = vadd.f32 0.0, %v5072
          %v5074 = vpop.f32.mrf.mxu0
          %v5075 = vadd.f32 0.0, %v5074
          %v5076 = vpop.f32.mrf.mxu0
          %v5077 = vpop.f32.mrf.mxu0
          %5078 = vdwg.mxu0
          %v5079 = vpack.c.bf16 %v5073, %v5073
          %v5080 = vpack.c.bf16 %v5075, %v5075
          %v5083 = vunpack.c.l.b16 %v5079
          %v5084 = vunpack.c.l.b16 %v5080
          %v5085 = vpack.c.b16 %v5084, %v5083
          %5087 = vst [vmem:[#allocation4 + $0x38] sm:$0xff] %v5085
          %s5088 = scalar_lea.vmem [#allocation15], 32
          %v5089 = vld [vmem:[%s5088] sm:$0xf]
          %v5091 = vsel %vm4649, %v5089, 0
          %5093 = vmatprep.subr.bf16.mxu0 0
          %5094 = vmatpush1.bf16.msra.mxu0 0
          %5095 = vmatprep.subr.bf16.mxu0 0
          %5096 = vmatpush1.bf16.msra.mxu0 0
          %5097 = vmatprep.subr.bf16.mxu0 0
          %5098 = vmatpush1.bf16.msra.mxu0 0
          %5099 = vmatprep.subr.bf16.mxu0 0
          %5100 = vmatpush1.bf16.msra.mxu0 0
          %5101 = vmatprep.subr.bf16.mxu0 0
          %5102 = vmatpush1.bf16.msra.mxu0 0
          %5103 = vmatprep.subr.bf16.mxu0 0
          %5104 = vmatpush1.bf16.msra.mxu0 0
          %5105 = vmatprep.subr.bf16.mxu0 %v4647
          %5106 = vmatpush1.bf16.msra.mxu0 %v4646
          %5107 = vmatprep.subr.bf16.mxu0 %v4645
          %5108 = vmatpush1.bf16.msra.mxu0 %v4644
          %5109 = vmatprep.subr.bf16.mxu0 0
          %5110 = vmatpush2.bf16.msra.mxu0 0
          %5111 = vmatprep.subr.bf16.mxu0 0
          %5112 = vmatpush2.bf16.msra.mxu0 0
          %5113 = vmatprep.subr.bf16.mxu0 0
          %5114 = vmatpush2.bf16.msra.mxu0 0
          %5115 = vmatprep.subr.bf16.mxu0 0
          %5116 = vmatpush2.bf16.msra.mxu0 0
          %5117 = vmatprep.subr.bf16.mxu0 0
          %5118 = vmatpush2.bf16.msra.mxu0 0
          %5119 = vmatprep.subr.bf16.mxu0 0
          %5120 = vmatpush2.bf16.msra.mxu0 0
          %5121 = vmatprep.subr.bf16.mxu0 0
          %5122 = vmatpush2.bf16.msra.mxu0 0
          %5123 = vmatprep.subr.bf16.mxu0 0
          %5124 = vmatpush2.bf16.msra.mxu0 0
          %5125 = vmatprep.mubr.bf16.mxu0 0
          %5126 = vmatmul.mubr.bf16.gmra.mxu0 %v5091
          %v5127 = vpop.f32.mrf.mxu0
          %v5128 = vadd.f32 0.0, %v5127
          %v5129 = vpop.f32.mrf.mxu0
          %v5130 = vadd.f32 0.0, %v5129
          %v5131 = vpop.f32.mrf.mxu0
          %v5132 = vpop.f32.mrf.mxu0
          %5133 = vdwg.mxu0
          %v5134 = vpack.c.bf16 %v5128, %v5128
          %v5135 = vpack.c.bf16 %v5130, %v5130
          %v5138 = vunpack.c.l.b16 %v5134
          %v5139 = vunpack.c.l.b16 %v5135
          %v5140 = vpack.c.b16 %v5139, %v5138
          %5142 = vst [vmem:[#allocation4 + $0x40] sm:$0xff] %v5140
          %s5143 = scalar_lea.vmem [#allocation15], 36
          %v5144 = vld [vmem:[%s5143] sm:$0xf]
          %v5146 = vsel %vm4649, %v5144, 0
          %5148 = vmatprep.subr.bf16.mxu0 0
          %5149 = vmatpush1.bf16.msra.mxu0 0
          %5150 = vmatprep.subr.bf16.mxu0 0
          %5151 = vmatpush1.bf16.msra.mxu0 0
          %5152 = vmatprep.subr.bf16.mxu0 0
          %5153 = vmatpush1.bf16.msra.mxu0 0
          %5154 = vmatprep.subr.bf16.mxu0 0
          %5155 = vmatpush1.bf16.msra.mxu0 0
          %5156 = vmatprep.subr.bf16.mxu0 0
          %5157 = vmatpush1.bf16.msra.mxu0 0
          %5158 = vmatprep.subr.bf16.mxu0 0
          %5159 = vmatpush1.bf16.msra.mxu0 0
          %5160 = vmatprep.subr.bf16.mxu0 %v4647
          %5161 = vmatpush1.bf16.msra.mxu0 %v4646
          %5162 = vmatprep.subr.bf16.mxu0 %v4645
          %5163 = vmatpush1.bf16.msra.mxu0 %v4644
          %5164 = vmatprep.subr.bf16.mxu0 0
          %5165 = vmatpush2.bf16.msra.mxu0 0
          %5166 = vmatprep.subr.bf16.mxu0 0
          %5167 = vmatpush2.bf16.msra.mxu0 0
          %5168 = vmatprep.subr.bf16.mxu0 0
          %5169 = vmatpush2.bf16.msra.mxu0 0
          %5170 = vmatprep.subr.bf16.mxu0 0
          %5171 = vmatpush2.bf16.msra.mxu0 0
          %5172 = vmatprep.subr.bf16.mxu0 0
          %5173 = vmatpush2.bf16.msra.mxu0 0
          %5174 = vmatprep.subr.bf16.mxu0 0
          %5175 = vmatpush2.bf16.msra.mxu0 0
          %5176 = vmatprep.subr.bf16.mxu0 0
          %5177 = vmatpush2.bf16.msra.mxu0 0
          %5178 = vmatprep.subr.bf16.mxu0 0
          %5179 = vmatpush2.bf16.msra.mxu0 0
          %5180 = vmatprep.mubr.bf16.mxu0 0
          %5181 = vmatmul.mubr.bf16.gmra.mxu0 %v5146
          %v5182 = vpop.f32.mrf.mxu0
          %v5183 = vadd.f32 0.0, %v5182
          %v5184 = vpop.f32.mrf.mxu0
          %v5185 = vadd.f32 0.0, %v5184
          %v5186 = vpop.f32.mrf.mxu0
          %v5187 = vpop.f32.mrf.mxu0
          %5188 = vdwg.mxu0
          %v5189 = vpack.c.bf16 %v5183, %v5183
          %v5190 = vpack.c.bf16 %v5185, %v5185
          %v5193 = vunpack.c.l.b16 %v5189
          %v5194 = vunpack.c.l.b16 %v5190
          %v5195 = vpack.c.b16 %v5194, %v5193
          %5197 = vst [vmem:[#allocation4 + $0x48] sm:$0xff] %v5195
          %s5198 = scalar_lea.vmem [#allocation15], 40
          %v5199 = vld [vmem:[%s5198] sm:$0xf]
          %v5201 = vsel %vm4649, %v5199, 0
          %5203 = vmatprep.subr.bf16.mxu0 0
          %5204 = vmatpush1.bf16.msra.mxu0 0
          %5205 = vmatprep.subr.bf16.mxu0 0
          %5206 = vmatpush1.bf16.msra.mxu0 0
          %5207 = vmatprep.subr.bf16.mxu0 0
          %5208 = vmatpush1.bf16.msra.mxu0 0
          %5209 = vmatprep.subr.bf16.mxu0 0
          %5210 = vmatpush1.bf16.msra.mxu0 0
          %5211 = vmatprep.subr.bf16.mxu0 0
          %5212 = vmatpush1.bf16.msra.mxu0 0
          %5213 = vmatprep.subr.bf16.mxu0 0
          %5214 = vmatpush1.bf16.msra.mxu0 0
          %5215 = vmatprep.subr.bf16.mxu0 %v4647
          %5216 = vmatpush1.bf16.msra.mxu0 %v4646
          %5217 = vmatprep.subr.bf16.mxu0 %v4645
          %5218 = vmatpush1.bf16.msra.mxu0 %v4644
          %5219 = vmatprep.subr.bf16.mxu0 0
          %5220 = vmatpush2.bf16.msra.mxu0 0
          %5221 = vmatprep.subr.bf16.mxu0 0
          %5222 = vmatpush2.bf16.msra.mxu0 0
          %5223 = vmatprep.subr.bf16.mxu0 0
          %5224 = vmatpush2.bf16.msra.mxu0 0
          %5225 = vmatprep.subr.bf16.mxu0 0
          %5226 = vmatpush2.bf16.msra.mxu0 0
          %5227 = vmatprep.subr.bf16.mxu0 0
          %5228 = vmatpush2.bf16.msra.mxu0 0
          %5229 = vmatprep.subr.bf16.mxu0 0
          %5230 = vmatpush2.bf16.msra.mxu0 0
          %5231 = vmatprep.subr.bf16.mxu0 0
          %5232 = vmatpush2.bf16.msra.mxu0 0
          %5233 = vmatprep.subr.bf16.mxu0 0
          %5234 = vmatpush2.bf16.msra.mxu0 0
          %5235 = vmatprep.mubr.bf16.mxu0 0
          %5236 = vmatmul.mubr.bf16.gmra.mxu0 %v5201
          %v5237 = vpop.f32.mrf.mxu0
          %v5238 = vadd.f32 0.0, %v5237
          %v5239 = vpop.f32.mrf.mxu0
          %v5240 = vadd.f32 0.0, %v5239
          %v5241 = vpop.f32.mrf.mxu0
          %v5242 = vpop.f32.mrf.mxu0
          %5243 = vdwg.mxu0
          %v5244 = vpack.c.bf16 %v5238, %v5238
          %v5245 = vpack.c.bf16 %v5240, %v5240
          %v5248 = vunpack.c.l.b16 %v5244
          %v5249 = vunpack.c.l.b16 %v5245
          %v5250 = vpack.c.b16 %v5249, %v5248
          %5252 = vst [vmem:[#allocation4 + $0x50] sm:$0xff] %v5250
          %s5253 = scalar_lea.vmem [#allocation15], 44
          %v5254 = vld [vmem:[%s5253] sm:$0xf]
          %v5256 = vsel %vm4649, %v5254, 0
          %5258 = vmatprep.subr.bf16.mxu0 0
          %5259 = vmatpush1.bf16.msra.mxu0 0
          %5260 = vmatprep.subr.bf16.mxu0 0
          %5261 = vmatpush1.bf16.msra.mxu0 0
          %5262 = vmatprep.subr.bf16.mxu0 0
          %5263 = vmatpush1.bf16.msra.mxu0 0
          %5264 = vmatprep.subr.bf16.mxu0 0
          %5265 = vmatpush1.bf16.msra.mxu0 0
          %5266 = vmatprep.subr.bf16.mxu0 0
          %5267 = vmatpush1.bf16.msra.mxu0 0
          %5268 = vmatprep.subr.bf16.mxu0 0
          %5269 = vmatpush1.bf16.msra.mxu0 0
          %5270 = vmatprep.subr.bf16.mxu0 %v4647
          %5271 = vmatpush1.bf16.msra.mxu0 %v4646
          %5272 = vmatprep.subr.bf16.mxu0 %v4645
          %5273 = vmatpush1.bf16.msra.mxu0 %v4644
          %5274 = vmatprep.subr.bf16.mxu0 0
          %5275 = vmatpush2.bf16.msra.mxu0 0
          %5276 = vmatprep.subr.bf16.mxu0 0
          %5277 = vmatpush2.bf16.msra.mxu0 0
          %5278 = vmatprep.subr.bf16.mxu0 0
          %5279 = vmatpush2.bf16.msra.mxu0 0
          %5280 = vmatprep.subr.bf16.mxu0 0
          %5281 = vmatpush2.bf16.msra.mxu0 0
          %5282 = vmatprep.subr.bf16.mxu0 0
          %5283 = vmatpush2.bf16.msra.mxu0 0
          %5284 = vmatprep.subr.bf16.mxu0 0
          %5285 = vmatpush2.bf16.msra.mxu0 0
          %5286 = vmatprep.subr.bf16.mxu0 0
          %5287 = vmatpush2.bf16.msra.mxu0 0
          %5288 = vmatprep.subr.bf16.mxu0 0
          %5289 = vmatpush2.bf16.msra.mxu0 0
          %5290 = vmatprep.mubr.bf16.mxu0 0
          %5291 = vmatmul.mubr.bf16.gmra.mxu0 %v5256
          %v5292 = vpop.f32.mrf.mxu0
          %v5293 = vadd.f32 0.0, %v5292
          %v5294 = vpop.f32.mrf.mxu0
          %v5295 = vadd.f32 0.0, %v5294
          %v5296 = vpop.f32.mrf.mxu0
          %v5297 = vpop.f32.mrf.mxu0
          %5298 = vdwg.mxu0
          %v5299 = vpack.c.bf16 %v5293, %v5293
          %v5300 = vpack.c.bf16 %v5295, %v5295
          %v5303 = vunpack.c.l.b16 %v5299
          %v5304 = vunpack.c.l.b16 %v5300
          %v5305 = vpack.c.b16 %v5304, %v5303
          %5307 = vst [vmem:[#allocation4 + $0x58] sm:$0xff] %v5305
          %s5308 = scalar_lea.vmem [#allocation15], 48
          %v5309 = vld [vmem:[%s5308] sm:$0xf]
          %v5311 = vsel %vm4649, %v5309, 0
          %5313 = vmatprep.subr.bf16.mxu0 0
          %5314 = vmatpush1.bf16.msra.mxu0 0
          %5315 = vmatprep.subr.bf16.mxu0 0
          %5316 = vmatpush1.bf16.msra.mxu0 0
          %5317 = vmatprep.subr.bf16.mxu0 0
          %5318 = vmatpush1.bf16.msra.mxu0 0
          %5319 = vmatprep.subr.bf16.mxu0 0
          %5320 = vmatpush1.bf16.msra.mxu0 0
          %5321 = vmatprep.subr.bf16.mxu0 0
          %5322 = vmatpush1.bf16.msra.mxu0 0
          %5323 = vmatprep.subr.bf16.mxu0 0
          %5324 = vmatpush1.bf16.msra.mxu0 0
          %5325 = vmatprep.subr.bf16.mxu0 %v4647
          %5326 = vmatpush1.bf16.msra.mxu0 %v4646
          %5327 = vmatprep.subr.bf16.mxu0 %v4645
          %5328 = vmatpush1.bf16.msra.mxu0 %v4644
          %5329 = vmatprep.subr.bf16.mxu0 0
          %5330 = vmatpush2.bf16.msra.mxu0 0
          %5331 = vmatprep.subr.bf16.mxu0 0
          %5332 = vmatpush2.bf16.msra.mxu0 0
          %5333 = vmatprep.subr.bf16.mxu0 0
          %5334 = vmatpush2.bf16.msra.mxu0 0
          %5335 = vmatprep.subr.bf16.mxu0 0
          %5336 = vmatpush2.bf16.msra.mxu0 0
          %5337 = vmatprep.subr.bf16.mxu0 0
          %5338 = vmatpush2.bf16.msra.mxu0 0
          %5339 = vmatprep.subr.bf16.mxu0 0
          %5340 = vmatpush2.bf16.msra.mxu0 0
          %5341 = vmatprep.subr.bf16.mxu0 0
          %5342 = vmatpush2.bf16.msra.mxu0 0
          %5343 = vmatprep.subr.bf16.mxu0 0
          %5344 = vmatpush2.bf16.msra.mxu0 0
          %5345 = vmatprep.mubr.bf16.mxu0 0
          %5346 = vmatmul.mubr.bf16.gmra.mxu0 %v5311
          %v5347 = vpop.f32.mrf.mxu0
          %v5348 = vadd.f32 0.0, %v5347
          %v5349 = vpop.f32.mrf.mxu0
          %v5350 = vadd.f32 0.0, %v5349
          %v5351 = vpop.f32.mrf.mxu0
          %v5352 = vpop.f32.mrf.mxu0
          %5353 = vdwg.mxu0
          %v5354 = vpack.c.bf16 %v5348, %v5348
          %v5355 = vpack.c.bf16 %v5350, %v5350
          %v5358 = vunpack.c.l.b16 %v5354
          %v5359 = vunpack.c.l.b16 %v5355
          %v5360 = vpack.c.b16 %v5359, %v5358
          %5362 = vst [vmem:[#allocation4 + $0x60] sm:$0xff] %v5360
          %s5363 = scalar_lea.vmem [#allocation15], 52
          %v5364 = vld [vmem:[%s5363] sm:$0xf]
          %v5366 = vsel %vm4649, %v5364, 0
          %5368 = vmatprep.subr.bf16.mxu0 0
          %5369 = vmatpush1.bf16.msra.mxu0 0
          %5370 = vmatprep.subr.bf16.mxu0 0
          %5371 = vmatpush1.bf16.msra.mxu0 0
          %5372 = vmatprep.subr.bf16.mxu0 0
          %5373 = vmatpush1.bf16.msra.mxu0 0
          %5374 = vmatprep.subr.bf16.mxu0 0
          %5375 = vmatpush1.bf16.msra.mxu0 0
          %5376 = vmatprep.subr.bf16.mxu0 0
          %5377 = vmatpush1.bf16.msra.mxu0 0
          %5378 = vmatprep.subr.bf16.mxu0 0
          %5379 = vmatpush1.bf16.msra.mxu0 0
          %5380 = vmatprep.subr.bf16.mxu0 %v4647
          %5381 = vmatpush1.bf16.msra.mxu0 %v4646
          %5382 = vmatprep.subr.bf16.mxu0 %v4645
          %5383 = vmatpush1.bf16.msra.mxu0 %v4644
          %5384 = vmatprep.subr.bf16.mxu0 0
          %5385 = vmatpush2.bf16.msra.mxu0 0
          %5386 = vmatprep.subr.bf16.mxu0 0
          %5387 = vmatpush2.bf16.msra.mxu0 0
          %5388 = vmatprep.subr.bf16.mxu0 0
          %5389 = vmatpush2.bf16.msra.mxu0 0
          %5390 = vmatprep.subr.bf16.mxu0 0
          %5391 = vmatpush2.bf16.msra.mxu0 0
          %5392 = vmatprep.subr.bf16.mxu0 0
          %5393 = vmatpush2.bf16.msra.mxu0 0
          %5394 = vmatprep.subr.bf16.mxu0 0
          %5395 = vmatpush2.bf16.msra.mxu0 0
          %5396 = vmatprep.subr.bf16.mxu0 0
          %5397 = vmatpush2.bf16.msra.mxu0 0
          %5398 = vmatprep.subr.bf16.mxu0 0
          %5399 = vmatpush2.bf16.msra.mxu0 0
          %5400 = vmatprep.mubr.bf16.mxu0 0
          %5401 = vmatmul.mubr.bf16.gmra.mxu0 %v5366
          %v5402 = vpop.f32.mrf.mxu0
          %v5403 = vadd.f32 0.0, %v5402
          %v5404 = vpop.f32.mrf.mxu0
          %v5405 = vadd.f32 0.0, %v5404
          %v5406 = vpop.f32.mrf.mxu0
          %v5407 = vpop.f32.mrf.mxu0
          %5408 = vdwg.mxu0
          %v5409 = vpack.c.bf16 %v5403, %v5403
          %v5410 = vpack.c.bf16 %v5405, %v5405
          %v5413 = vunpack.c.l.b16 %v5409
          %v5414 = vunpack.c.l.b16 %v5410
          %v5415 = vpack.c.b16 %v5414, %v5413
          %5417 = vst [vmem:[#allocation4 + $0x68] sm:$0xff] %v5415
          %s5418 = scalar_lea.vmem [#allocation15], 56
          %v5419 = vld [vmem:[%s5418] sm:$0xf]
          %v5421 = vsel %vm4649, %v5419, 0
          %5423 = vmatprep.subr.bf16.mxu0 0
          %5424 = vmatpush1.bf16.msra.mxu0 0
          %5425 = vmatprep.subr.bf16.mxu0 0
          %5426 = vmatpush1.bf16.msra.mxu0 0
          %5427 = vmatprep.subr.bf16.mxu0 0
          %5428 = vmatpush1.bf16.msra.mxu0 0
          %5429 = vmatprep.subr.bf16.mxu0 0
          %5430 = vmatpush1.bf16.msra.mxu0 0
          %5431 = vmatprep.subr.bf16.mxu0 0
          %5432 = vmatpush1.bf16.msra.mxu0 0
          %5433 = vmatprep.subr.bf16.mxu0 0
          %5434 = vmatpush1.bf16.msra.mxu0 0
          %5435 = vmatprep.subr.bf16.mxu0 %v4647
          %5436 = vmatpush1.bf16.msra.mxu0 %v4646
          %5437 = vmatprep.subr.bf16.mxu0 %v4645
          %5438 = vmatpush1.bf16.msra.mxu0 %v4644
          %5439 = vmatprep.subr.bf16.mxu0 0
          %5440 = vmatpush2.bf16.msra.mxu0 0
          %5441 = vmatprep.subr.bf16.mxu0 0
          %5442 = vmatpush2.bf16.msra.mxu0 0
          %5443 = vmatprep.subr.bf16.mxu0 0
          %5444 = vmatpush2.bf16.msra.mxu0 0
          %5445 = vmatprep.subr.bf16.mxu0 0
          %5446 = vmatpush2.bf16.msra.mxu0 0
          %5447 = vmatprep.subr.bf16.mxu0 0
          %5448 = vmatpush2.bf16.msra.mxu0 0
          %5449 = vmatprep.subr.bf16.mxu0 0
          %5450 = vmatpush2.bf16.msra.mxu0 0
          %5451 = vmatprep.subr.bf16.mxu0 0
          %5452 = vmatpush2.bf16.msra.mxu0 0
          %5453 = vmatprep.subr.bf16.mxu0 0
          %5454 = vmatpush2.bf16.msra.mxu0 0
          %5455 = vmatprep.mubr.bf16.mxu0 0
          %5456 = vmatmul.mubr.bf16.gmra.mxu0 %v5421
          %v5457 = vpop.f32.mrf.mxu0
          %v5458 = vadd.f32 0.0, %v5457
          %v5459 = vpop.f32.mrf.mxu0
          %v5460 = vadd.f32 0.0, %v5459
          %v5461 = vpop.f32.mrf.mxu0
          %v5462 = vpop.f32.mrf.mxu0
          %5463 = vdwg.mxu0
          %v5464 = vpack.c.bf16 %v5458, %v5458
          %v5465 = vpack.c.bf16 %v5460, %v5460
          %v5468 = vunpack.c.l.b16 %v5464
          %v5469 = vunpack.c.l.b16 %v5465
          %v5470 = vpack.c.b16 %v5469, %v5468
          %5472 = vst [vmem:[#allocation4 + $0x70] sm:$0xff] %v5470
          %s5473 = scalar_lea.vmem [#allocation15], 60
          %v5474 = vld [vmem:[%s5473] sm:$0xf]
          %v5476 = vsel %vm4649, %v5474, 0
          %5478 = vmatprep.subr.bf16.mxu0 0
          %5479 = vmatpush1.bf16.msra.mxu0 0
          %5480 = vmatprep.subr.bf16.mxu0 0
          %5481 = vmatpush1.bf16.msra.mxu0 0
          %5482 = vmatprep.subr.bf16.mxu0 0
          %5483 = vmatpush1.bf16.msra.mxu0 0
          %5484 = vmatprep.subr.bf16.mxu0 0
          %5485 = vmatpush1.bf16.msra.mxu0 0
          %5486 = vmatprep.subr.bf16.mxu0 0
          %5487 = vmatpush1.bf16.msra.mxu0 0
          %5488 = vmatprep.subr.bf16.mxu0 0
          %5489 = vmatpush1.bf16.msra.mxu0 0
          %5490 = vmatprep.subr.bf16.mxu0 %v4647
          %5491 = vmatpush1.bf16.msra.mxu0 %v4646
          %5492 = vmatprep.subr.bf16.mxu0 %v4645
          %5493 = vmatpush1.bf16.msra.mxu0 %v4644
          %5494 = vmatprep.subr.bf16.mxu0 0
          %5495 = vmatpush2.bf16.msra.mxu0 0
          %5496 = vmatprep.subr.bf16.mxu0 0
          %5497 = vmatpush2.bf16.msra.mxu0 0
          %5498 = vmatprep.subr.bf16.mxu0 0
          %5499 = vmatpush2.bf16.msra.mxu0 0
          %5500 = vmatprep.subr.bf16.mxu0 0
          %5501 = vmatpush2.bf16.msra.mxu0 0
          %5502 = vmatprep.subr.bf16.mxu0 0
          %5503 = vmatpush2.bf16.msra.mxu0 0
          %5504 = vmatprep.subr.bf16.mxu0 0
          %5505 = vmatpush2.bf16.msra.mxu0 0
          %5506 = vmatprep.subr.bf16.mxu0 0
          %5507 = vmatpush2.bf16.msra.mxu0 0
          %5508 = vmatprep.subr.bf16.mxu0 0
          %5509 = vmatpush2.bf16.msra.mxu0 0
          %5510 = vmatprep.mubr.bf16.mxu0 0
          %5511 = vmatmul.mubr.bf16.gmra.mxu0 %v5476
          %v5512 = vpop.f32.mrf.mxu0
          %v5513 = vadd.f32 0.0, %v5512
          %v5514 = vpop.f32.mrf.mxu0
          %v5515 = vadd.f32 0.0, %v5514
          %v5516 = vpop.f32.mrf.mxu0
          %v5517 = vpop.f32.mrf.mxu0
          %5518 = vdwg.mxu0
          %v5519 = vpack.c.bf16 %v5513, %v5513
          %v5520 = vpack.c.bf16 %v5515, %v5515
          %v5523 = vunpack.c.l.b16 %v5519
          %v5524 = vunpack.c.l.b16 %v5520
          %v5525 = vpack.c.b16 %v5524, %v5523
          %5527 = vst [vmem:[#allocation4 + $0x78] sm:$0xff] %v5525
          %v5528 = vld [vmem:[#allocation4] sm:$0xff]
          %v5529 = vld [vmem:[#allocation4 + $0x8] sm:$0xff]
          %v5530 = vld [vmem:[#allocation4 + $0x10] sm:$0xff]
          %v5531 = vld [vmem:[#allocation4 + $0x18] sm:$0xff]
          %v5532 = vld [vmem:[#allocation4 + $0x20] sm:$0xff]
          %v5533 = vld [vmem:[#allocation4 + $0x28] sm:$0xff]
          %v5534 = vld [vmem:[#allocation4 + $0x30] sm:$0xff]
          %v5535 = vld [vmem:[#allocation4 + $0x38] sm:$0xff]
          %v5536 = vld [vmem:[#allocation4 + $0x40] sm:$0xff]
          %v5537 = vld [vmem:[#allocation4 + $0x48] sm:$0xff]
          %v5538 = vld [vmem:[#allocation4 + $0x50] sm:$0xff]
          %v5539 = vld [vmem:[#allocation4 + $0x58] sm:$0xff]
          %v5540 = vld [vmem:[#allocation4 + $0x60] sm:$0xff]
          %v5541 = vld [vmem:[#allocation4 + $0x68] sm:$0xff]
          %v5542 = vld [vmem:[#allocation4 + $0x70] sm:$0xff]
          %v5543 = vld [vmem:[#allocation4 + $0x78] sm:$0xff]
          %v5544 = vld [vmem:[#allocation17] sm:$0xff]
          %v5545 = vld [vmem:[#allocation17 + $0x8] sm:$0xff]
          %v5546 = vld [vmem:[#allocation17 + $0x10] sm:$0xff]
          %v5547 = vld [vmem:[#allocation17 + $0x18] sm:$0xff]
          %v5548 = vld [vmem:[#allocation17 + $0x20] sm:$0xff]
          %v5549 = vld [vmem:[#allocation17 + $0x28] sm:$0xff]
          %v5550 = vld [vmem:[#allocation17 + $0x30] sm:$0xff]
          %v5551 = vld [vmem:[#allocation17 + $0x38] sm:$0xff]
          %v5552 = vld [vmem:[#allocation17 + $0x40] sm:$0xff]
          %v5553 = vld [vmem:[#allocation17 + $0x48] sm:$0xff]
          %v5554 = vld [vmem:[#allocation17 + $0x50] sm:$0xff]
          %v5555 = vld [vmem:[#allocation17 + $0x58] sm:$0xff]
          %v5556 = vld [vmem:[#allocation17 + $0x60] sm:$0xff]
          %v5557 = vld [vmem:[#allocation17 + $0x68] sm:$0xff]
          %v5558 = vld [vmem:[#allocation17 + $0x70] sm:$0xff]
          %v5559 = vld [vmem:[#allocation17 + $0x78] sm:$0xff]
          %v5560 = vld [vmem:[#allocation17 + $0x80] sm:$0xff]
          %v5561 = vld [vmem:[#allocation17 + $0x88] sm:$0xff]
          %v5562 = vld [vmem:[#allocation17 + $0x90] sm:$0xff]
          %v5563 = vld [vmem:[#allocation17 + $0x98] sm:$0xff]
          %v5564 = vld [vmem:[#allocation17 + $0xa0] sm:$0xff]
          %v5565 = vld [vmem:[#allocation17 + $0xa8] sm:$0xff]
          %v5566 = vld [vmem:[#allocation17 + $0xb0] sm:$0xff]
          %v5567 = vld [vmem:[#allocation17 + $0xb8] sm:$0xff]
          %v5568 = vld [vmem:[#allocation17 + $0xc0] sm:$0xff]
          %v5569 = vld [vmem:[#allocation17 + $0xc8] sm:$0xff]
          %v5570 = vld [vmem:[#allocation17 + $0xd0] sm:$0xff]
          %v5571 = vld [vmem:[#allocation17 + $0xd8] sm:$0xff]
          %v5572 = vld [vmem:[#allocation17 + $0xe0] sm:$0xff]
          %v5573 = vld [vmem:[#allocation17 + $0xe8] sm:$0xff]
          %v5574 = vld [vmem:[#allocation17 + $0xf0] sm:$0xff]
          %v5575 = vld [vmem:[#allocation17 + $0xf8] sm:$0xff]
          %v5576 = vld [vmem:[#allocation17 + $0x100] sm:$0xff]
          %v5577 = vld [vmem:[#allocation17 + $0x108] sm:$0xff]
          %v5578 = vld [vmem:[#allocation17 + $0x110] sm:$0xff]
          %v5579 = vld [vmem:[#allocation17 + $0x118] sm:$0xff]
          %v5580 = vld [vmem:[#allocation17 + $0x120] sm:$0xff]
          %v5581 = vld [vmem:[#allocation17 + $0x128] sm:$0xff]
          %v5582 = vld [vmem:[#allocation17 + $0x130] sm:$0xff]
          %v5583 = vld [vmem:[#allocation17 + $0x138] sm:$0xff]
          %v5584 = vld [vmem:[#allocation17 + $0x140] sm:$0xff]
          %v5585 = vld [vmem:[#allocation17 + $0x148] sm:$0xff]
          %v5586 = vld [vmem:[#allocation17 + $0x150] sm:$0xff]
          %v5587 = vld [vmem:[#allocation17 + $0x158] sm:$0xff]
          %v5588 = vld [vmem:[#allocation17 + $0x160] sm:$0xff]
          %v5589 = vld [vmem:[#allocation17 + $0x168] sm:$0xff]
          %v5590 = vld [vmem:[#allocation17 + $0x170] sm:$0xff]
          %v5591 = vld [vmem:[#allocation17 + $0x178] sm:$0xff]
          %v5592 = vld [vmem:[#allocation17 + $0x180] sm:$0xff]
          %v5593 = vld [vmem:[#allocation17 + $0x188] sm:$0xff]
          %v5594 = vld [vmem:[#allocation17 + $0x190] sm:$0xff]
          %v5595 = vld [vmem:[#allocation17 + $0x198] sm:$0xff]
          %v5596 = vld [vmem:[#allocation17 + $0x1a0] sm:$0xff]
          %v5597 = vld [vmem:[#allocation17 + $0x1a8] sm:$0xff]
          %v5598 = vld [vmem:[#allocation17 + $0x1b0] sm:$0xff]
          %v5599 = vld [vmem:[#allocation17 + $0x1b8] sm:$0xff]
          %v5600 = vld [vmem:[#allocation17 + $0x1c0] sm:$0xff]
          %v5601 = vld [vmem:[#allocation17 + $0x1c8] sm:$0xff]
          %v5602 = vld [vmem:[#allocation17 + $0x1d0] sm:$0xff]
          %v5603 = vld [vmem:[#allocation17 + $0x1d8] sm:$0xff]
          %v5604 = vld [vmem:[#allocation17 + $0x1e0] sm:$0xff]
          %v5605 = vld [vmem:[#allocation17 + $0x1e8] sm:$0xff]
          %v5606 = vld [vmem:[#allocation17 + $0x1f0] sm:$0xff]
          %v5607 = vld [vmem:[#allocation17 + $0x1f8] sm:$0xff]
          %v5608 = vld [vmem:[#allocation17 + $0x200] sm:$0xff]
          %v5609 = vld [vmem:[#allocation17 + $0x208] sm:$0xff]
          %v5610 = vld [vmem:[#allocation17 + $0x210] sm:$0xff]
          %v5611 = vld [vmem:[#allocation17 + $0x218] sm:$0xff]
          %v5612 = vld [vmem:[#allocation17 + $0x220] sm:$0xff]
          %v5613 = vld [vmem:[#allocation17 + $0x228] sm:$0xff]
          %v5614 = vld [vmem:[#allocation17 + $0x230] sm:$0xff]
          %v5615 = vld [vmem:[#allocation17 + $0x238] sm:$0xff]
          %v5616 = vld [vmem:[#allocation17 + $0x240] sm:$0xff]
          %v5617 = vld [vmem:[#allocation17 + $0x248] sm:$0xff]
          %v5618 = vld [vmem:[#allocation17 + $0x250] sm:$0xff]
          %v5619 = vld [vmem:[#allocation17 + $0x258] sm:$0xff]
          %v5620 = vld [vmem:[#allocation17 + $0x260] sm:$0xff]
          %v5621 = vld [vmem:[#allocation17 + $0x268] sm:$0xff]
          %v5622 = vld [vmem:[#allocation17 + $0x270] sm:$0xff]
          %v5623 = vld [vmem:[#allocation17 + $0x278] sm:$0xff]
          %v5624 = vld [vmem:[#allocation17 + $0x280] sm:$0xff]
          %v5625 = vld [vmem:[#allocation17 + $0x288] sm:$0xff]
          %v5626 = vld [vmem:[#allocation17 + $0x290] sm:$0xff]
          %v5627 = vld [vmem:[#allocation17 + $0x298] sm:$0xff]
          %v5628 = vld [vmem:[#allocation17 + $0x2a0] sm:$0xff]
          %v5629 = vld [vmem:[#allocation17 + $0x2a8] sm:$0xff]
          %v5630 = vld [vmem:[#allocation17 + $0x2b0] sm:$0xff]
          %v5631 = vld [vmem:[#allocation17 + $0x2b8] sm:$0xff]
          %v5632 = vld [vmem:[#allocation17 + $0x2c0] sm:$0xff]
          %v5633 = vld [vmem:[#allocation17 + $0x2c8] sm:$0xff]
          %v5634 = vld [vmem:[#allocation17 + $0x2d0] sm:$0xff]
          %v5635 = vld [vmem:[#allocation17 + $0x2d8] sm:$0xff]
          %v5636 = vld [vmem:[#allocation17 + $0x2e0] sm:$0xff]
          %v5637 = vld [vmem:[#allocation17 + $0x2e8] sm:$0xff]
          %v5638 = vld [vmem:[#allocation17 + $0x2f0] sm:$0xff]
          %v5639 = vld [vmem:[#allocation17 + $0x2f8] sm:$0xff]
          %v5640 = vld [vmem:[#allocation17 + $0x300] sm:$0xff]
          %v5641 = vld [vmem:[#allocation17 + $0x308] sm:$0xff]
          %v5642 = vld [vmem:[#allocation17 + $0x310] sm:$0xff]
          %v5643 = vld [vmem:[#allocation17 + $0x318] sm:$0xff]
          %v5644 = vld [vmem:[#allocation17 + $0x320] sm:$0xff]
          %v5645 = vld [vmem:[#allocation17 + $0x328] sm:$0xff]
          %v5646 = vld [vmem:[#allocation17 + $0x330] sm:$0xff]
          %v5647 = vld [vmem:[#allocation17 + $0x338] sm:$0xff]
          %v5648 = vld [vmem:[#allocation17 + $0x340] sm:$0xff]
          %v5649 = vld [vmem:[#allocation17 + $0x348] sm:$0xff]
          %v5650 = vld [vmem:[#allocation17 + $0x350] sm:$0xff]
          %v5651 = vld [vmem:[#allocation17 + $0x358] sm:$0xff]
          %v5652 = vld [vmem:[#allocation17 + $0x360] sm:$0xff]
          %v5653 = vld [vmem:[#allocation17 + $0x368] sm:$0xff]
          %v5654 = vld [vmem:[#allocation17 + $0x370] sm:$0xff]
          %v5655 = vld [vmem:[#allocation17 + $0x378] sm:$0xff]
          %v5656 = vld [vmem:[#allocation17 + $0x380] sm:$0xff]
          %v5657 = vld [vmem:[#allocation17 + $0x388] sm:$0xff]
          %v5658 = vld [vmem:[#allocation17 + $0x390] sm:$0xff]
          %v5659 = vld [vmem:[#allocation17 + $0x398] sm:$0xff]
          %v5660 = vld [vmem:[#allocation17 + $0x3a0] sm:$0xff]
          %v5661 = vld [vmem:[#allocation17 + $0x3a8] sm:$0xff]
          %v5662 = vld [vmem:[#allocation17 + $0x3b0] sm:$0xff]
          %v5663 = vld [vmem:[#allocation17 + $0x3b8] sm:$0xff]
          %v5664 = vld [vmem:[#allocation17 + $0x3c0] sm:$0xff]
          %v5665 = vld [vmem:[#allocation17 + $0x3c8] sm:$0xff]
          %v5666 = vld [vmem:[#allocation17 + $0x3d0] sm:$0xff]
          %v5667 = vld [vmem:[#allocation17 + $0x3d8] sm:$0xff]
          %v5668 = vld [vmem:[#allocation17 + $0x3e0] sm:$0xff]
          %v5669 = vld [vmem:[#allocation17 + $0x3e8] sm:$0xff]
          %v5670 = vld [vmem:[#allocation17 + $0x3f0] sm:$0xff]
          %v5671 = vld [vmem:[#allocation17 + $0x3f8] sm:$0xff]
          %v5672 = vld [vmem:[#allocation17 + $0x400] sm:$0xff]
          %v5673 = vld [vmem:[#allocation17 + $0x408] sm:$0xff]
          %v5674 = vld [vmem:[#allocation17 + $0x410] sm:$0xff]
          %v5675 = vld [vmem:[#allocation17 + $0x418] sm:$0xff]
          %v5676 = vld [vmem:[#allocation17 + $0x420] sm:$0xff]
          %v5677 = vld [vmem:[#allocation17 + $0x428] sm:$0xff]
          %v5678 = vld [vmem:[#allocation17 + $0x430] sm:$0xff]
          %v5679 = vld [vmem:[#allocation17 + $0x438] sm:$0xff]
          %v5680 = vld [vmem:[#allocation17 + $0x440] sm:$0xff]
          %v5681 = vld [vmem:[#allocation17 + $0x448] sm:$0xff]
          %v5682 = vld [vmem:[#allocation17 + $0x450] sm:$0xff]
          %v5683 = vld [vmem:[#allocation17 + $0x458] sm:$0xff]
          %v5684 = vld [vmem:[#allocation17 + $0x460] sm:$0xff]
          %v5685 = vld [vmem:[#allocation17 + $0x468] sm:$0xff]
          %v5686 = vld [vmem:[#allocation17 + $0x470] sm:$0xff]
          %v5687 = vld [vmem:[#allocation17 + $0x478] sm:$0xff]
          %v5688 = vld [vmem:[#allocation17 + $0x480] sm:$0xff]
          %v5689 = vld [vmem:[#allocation17 + $0x488] sm:$0xff]
          %v5690 = vld [vmem:[#allocation17 + $0x490] sm:$0xff]
          %v5691 = vld [vmem:[#allocation17 + $0x498] sm:$0xff]
          %v5692 = vld [vmem:[#allocation17 + $0x4a0] sm:$0xff]
          %v5693 = vld [vmem:[#allocation17 + $0x4a8] sm:$0xff]
          %v5694 = vld [vmem:[#allocation17 + $0x4b0] sm:$0xff]
          %v5695 = vld [vmem:[#allocation17 + $0x4b8] sm:$0xff]
          %v5696 = vld [vmem:[#allocation17 + $0x4c0] sm:$0xff]
          %v5697 = vld [vmem:[#allocation17 + $0x4c8] sm:$0xff]
          %v5698 = vld [vmem:[#allocation17 + $0x4d0] sm:$0xff]
          %v5699 = vld [vmem:[#allocation17 + $0x4d8] sm:$0xff]
          %v5700 = vld [vmem:[#allocation17 + $0x4e0] sm:$0xff]
          %v5701 = vld [vmem:[#allocation17 + $0x4e8] sm:$0xff]
          %v5702 = vld [vmem:[#allocation17 + $0x4f0] sm:$0xff]
          %v5703 = vld [vmem:[#allocation17 + $0x4f8] sm:$0xff]
          %v5704 = vld [vmem:[#allocation17 + $0x500] sm:$0xff]
          %v5705 = vld [vmem:[#allocation17 + $0x508] sm:$0xff]
          %v5706 = vld [vmem:[#allocation17 + $0x510] sm:$0xff]
          %v5707 = vld [vmem:[#allocation17 + $0x518] sm:$0xff]
          %v5708 = vld [vmem:[#allocation17 + $0x520] sm:$0xff]
          %v5709 = vld [vmem:[#allocation17 + $0x528] sm:$0xff]
          %v5710 = vld [vmem:[#allocation17 + $0x530] sm:$0xff]
          %v5711 = vld [vmem:[#allocation17 + $0x538] sm:$0xff]
          %v5712 = vld [vmem:[#allocation17 + $0x540] sm:$0xff]
          %v5713 = vld [vmem:[#allocation17 + $0x548] sm:$0xff]
          %v5714 = vld [vmem:[#allocation17 + $0x550] sm:$0xff]
          %v5715 = vld [vmem:[#allocation17 + $0x558] sm:$0xff]
          %v5716 = vld [vmem:[#allocation17 + $0x560] sm:$0xff]
          %v5717 = vld [vmem:[#allocation17 + $0x568] sm:$0xff]
          %v5718 = vld [vmem:[#allocation17 + $0x570] sm:$0xff]
          %v5719 = vld [vmem:[#allocation17 + $0x578] sm:$0xff]
          %v5720 = vld [vmem:[#allocation17 + $0x580] sm:$0xff]
          %v5721 = vld [vmem:[#allocation17 + $0x588] sm:$0xff]
          %v5722 = vld [vmem:[#allocation17 + $0x590] sm:$0xff]
          %v5723 = vld [vmem:[#allocation17 + $0x598] sm:$0xff]
          %v5724 = vld [vmem:[#allocation17 + $0x5a0] sm:$0xff]
          %v5725 = vld [vmem:[#allocation17 + $0x5a8] sm:$0xff]
          %v5726 = vld [vmem:[#allocation17 + $0x5b0] sm:$0xff]
          %v5727 = vld [vmem:[#allocation17 + $0x5b8] sm:$0xff]
          %v5728 = vld [vmem:[#allocation17 + $0x5c0] sm:$0xff]
          %v5729 = vld [vmem:[#allocation17 + $0x5c8] sm:$0xff]
          %v5730 = vld [vmem:[#allocation17 + $0x5d0] sm:$0xff]
          %v5731 = vld [vmem:[#allocation17 + $0x5d8] sm:$0xff]
          %v5732 = vld [vmem:[#allocation17 + $0x5e0] sm:$0xff]
          %v5733 = vld [vmem:[#allocation17 + $0x5e8] sm:$0xff]
          %v5734 = vld [vmem:[#allocation17 + $0x5f0] sm:$0xff]
          %v5735 = vld [vmem:[#allocation17 + $0x5f8] sm:$0xff]
          %v5736 = vld [vmem:[#allocation17 + $0x600] sm:$0xff]
          %v5737 = vld [vmem:[#allocation17 + $0x608] sm:$0xff]
          %v5738 = vld [vmem:[#allocation17 + $0x610] sm:$0xff]
          %v5739 = vld [vmem:[#allocation17 + $0x618] sm:$0xff]
          %v5740 = vld [vmem:[#allocation17 + $0x620] sm:$0xff]
          %v5741 = vld [vmem:[#allocation17 + $0x628] sm:$0xff]
          %v5742 = vld [vmem:[#allocation17 + $0x630] sm:$0xff]
          %v5743 = vld [vmem:[#allocation17 + $0x638] sm:$0xff]
          %v5744 = vld [vmem:[#allocation17 + $0x640] sm:$0xff]
          %v5745 = vld [vmem:[#allocation17 + $0x648] sm:$0xff]
          %v5746 = vld [vmem:[#allocation17 + $0x650] sm:$0xff]
          %v5747 = vld [vmem:[#allocation17 + $0x658] sm:$0xff]
          %v5748 = vld [vmem:[#allocation17 + $0x660] sm:$0xff]
          %v5749 = vld [vmem:[#allocation17 + $0x668] sm:$0xff]
          %v5750 = vld [vmem:[#allocation17 + $0x670] sm:$0xff]
          %v5751 = vld [vmem:[#allocation17 + $0x678] sm:$0xff]
          %v5752 = vld [vmem:[#allocation17 + $0x680] sm:$0xff]
          %v5753 = vld [vmem:[#allocation17 + $0x688] sm:$0xff]
          %v5754 = vld [vmem:[#allocation17 + $0x690] sm:$0xff]
          %v5755 = vld [vmem:[#allocation17 + $0x698] sm:$0xff]
          %v5756 = vld [vmem:[#allocation17 + $0x6a0] sm:$0xff]
          %v5757 = vld [vmem:[#allocation17 + $0x6a8] sm:$0xff]
          %v5758 = vld [vmem:[#allocation17 + $0x6b0] sm:$0xff]
          %v5759 = vld [vmem:[#allocation17 + $0x6b8] sm:$0xff]
          %v5760 = vld [vmem:[#allocation17 + $0x6c0] sm:$0xff]
          %v5761 = vld [vmem:[#allocation17 + $0x6c8] sm:$0xff]
          %v5762 = vld [vmem:[#allocation17 + $0x6d0] sm:$0xff]
          %v5763 = vld [vmem:[#allocation17 + $0x6d8] sm:$0xff]
          %v5764 = vld [vmem:[#allocation17 + $0x6e0] sm:$0xff]
          %v5765 = vld [vmem:[#allocation17 + $0x6e8] sm:$0xff]
          %v5766 = vld [vmem:[#allocation17 + $0x6f0] sm:$0xff]
          %v5767 = vld [vmem:[#allocation17 + $0x6f8] sm:$0xff]
          %v5768 = vld [vmem:[#allocation17 + $0x700] sm:$0xff]
          %v5769 = vld [vmem:[#allocation17 + $0x708] sm:$0xff]
          %v5770 = vld [vmem:[#allocation17 + $0x710] sm:$0xff]
          %v5771 = vld [vmem:[#allocation17 + $0x718] sm:$0xff]
          %v5772 = vld [vmem:[#allocation17 + $0x720] sm:$0xff]
          %v5773 = vld [vmem:[#allocation17 + $0x728] sm:$0xff]
          %v5774 = vld [vmem:[#allocation17 + $0x730] sm:$0xff]
          %v5775 = vld [vmem:[#allocation17 + $0x738] sm:$0xff]
          %v5776 = vld [vmem:[#allocation17 + $0x740] sm:$0xff]
          %v5777 = vld [vmem:[#allocation17 + $0x748] sm:$0xff]
          %v5778 = vld [vmem:[#allocation17 + $0x750] sm:$0xff]
          %v5779 = vld [vmem:[#allocation17 + $0x758] sm:$0xff]
          %v5780 = vld [vmem:[#allocation17 + $0x760] sm:$0xff]
          %v5781 = vld [vmem:[#allocation17 + $0x768] sm:$0xff]
          %v5782 = vld [vmem:[#allocation17 + $0x770] sm:$0xff]
          %v5783 = vld [vmem:[#allocation17 + $0x778] sm:$0xff]
          %v5784 = vld [vmem:[#allocation17 + $0x780] sm:$0xff]
          %v5785 = vld [vmem:[#allocation17 + $0x788] sm:$0xff]
          %v5786 = vld [vmem:[#allocation17 + $0x790] sm:$0xff]
          %v5787 = vld [vmem:[#allocation17 + $0x798] sm:$0xff]
          %v5788 = vld [vmem:[#allocation17 + $0x7a0] sm:$0xff]
          %v5789 = vld [vmem:[#allocation17 + $0x7a8] sm:$0xff]
          %v5790 = vld [vmem:[#allocation17 + $0x7b0] sm:$0xff]
          %v5791 = vld [vmem:[#allocation17 + $0x7b8] sm:$0xff]
          %v5792 = vld [vmem:[#allocation17 + $0x7c0] sm:$0xff]
          %v5793 = vld [vmem:[#allocation17 + $0x7c8] sm:$0xff]
          %v5794 = vld [vmem:[#allocation17 + $0x7d0] sm:$0xff]
          %v5795 = vld [vmem:[#allocation17 + $0x7d8] sm:$0xff]
          %v5796 = vld [vmem:[#allocation17 + $0x7e0] sm:$0xff]
          %v5797 = vld [vmem:[#allocation17 + $0x7e8] sm:$0xff]
          %v5798 = vld [vmem:[#allocation17 + $0x7f0] sm:$0xff]
          %v5799 = vld [vmem:[#allocation17 + $0x7f8] sm:$0xff]
          %v5800 = vunpack.c.l.s8.bf16 %v5544
          %v5801 = vunpack.c.l.s8.bf16 %v5545
          %v5802 = vunpack.c.h.s8.bf16 %v5544
          %v5803 = vunpack.c.h.s8.bf16 %v5545
          %v5804 = vunpack.c.l.s8.bf16 %v5546
          %v5805 = vunpack.c.l.s8.bf16 %v5547
          %v5806 = vunpack.c.h.s8.bf16 %v5546
          %v5807 = vunpack.c.h.s8.bf16 %v5547
          %v5808 = vunpack.c.l.s8.bf16 %v5548
          %v5809 = vunpack.c.l.s8.bf16 %v5549
          %v5810 = vunpack.c.h.s8.bf16 %v5548
          %v5811 = vunpack.c.h.s8.bf16 %v5549
          %v5812 = vunpack.c.l.s8.bf16 %v5550
          %v5813 = vunpack.c.l.s8.bf16 %v5551
          %v5814 = vunpack.c.h.s8.bf16 %v5550
          %v5815 = vunpack.c.h.s8.bf16 %v5551
          %v5816 = vunpack.c.l.s8.bf16 %v5552
          %v5817 = vunpack.c.l.s8.bf16 %v5553
          %v5818 = vunpack.c.h.s8.bf16 %v5552
          %v5819 = vunpack.c.h.s8.bf16 %v5553
          %v5820 = vunpack.c.l.s8.bf16 %v5554
          %v5821 = vunpack.c.l.s8.bf16 %v5555
          %v5822 = vunpack.c.h.s8.bf16 %v5554
          %v5823 = vunpack.c.h.s8.bf16 %v5555
          %v5824 = vunpack.c.l.s8.bf16 %v5556
          %v5825 = vunpack.c.l.s8.bf16 %v5557
          %v5826 = vunpack.c.h.s8.bf16 %v5556
          %v5827 = vunpack.c.h.s8.bf16 %v5557
          %v5828 = vunpack.c.l.s8.bf16 %v5558
          %v5829 = vunpack.c.l.s8.bf16 %v5559
          %v5830 = vunpack.c.h.s8.bf16 %v5558
          %v5831 = vunpack.c.h.s8.bf16 %v5559
          %v5832 = vunpack.c.l.s8.bf16 %v5560
          %v5833 = vunpack.c.l.s8.bf16 %v5561
          %v5834 = vunpack.c.h.s8.bf16 %v5560
          %v5835 = vunpack.c.h.s8.bf16 %v5561
          %v5836 = vunpack.c.l.s8.bf16 %v5562
          %v5837 = vunpack.c.l.s8.bf16 %v5563
          %v5838 = vunpack.c.h.s8.bf16 %v5562
          %v5839 = vunpack.c.h.s8.bf16 %v5563
          %v5840 = vunpack.c.l.s8.bf16 %v5564
          %v5841 = vunpack.c.l.s8.bf16 %v5565
          %v5842 = vunpack.c.h.s8.bf16 %v5564
          %v5843 = vunpack.c.h.s8.bf16 %v5565
          %v5844 = vunpack.c.l.s8.bf16 %v5566
          %v5845 = vunpack.c.l.s8.bf16 %v5567
          %v5846 = vunpack.c.h.s8.bf16 %v5566
          %v5847 = vunpack.c.h.s8.bf16 %v5567
          %v5848 = vunpack.c.l.s8.bf16 %v5568
          %v5849 = vunpack.c.l.s8.bf16 %v5569
          %v5850 = vunpack.c.h.s8.bf16 %v5568
          %v5851 = vunpack.c.h.s8.bf16 %v5569
          %v5852 = vunpack.c.l.s8.bf16 %v5570
          %v5853 = vunpack.c.l.s8.bf16 %v5571
          %v5854 = vunpack.c.h.s8.bf16 %v5570
          %v5855 = vunpack.c.h.s8.bf16 %v5571
          %v5856 = vunpack.c.l.s8.bf16 %v5572
          %v5857 = vunpack.c.l.s8.bf16 %v5573
          %v5858 = vunpack.c.h.s8.bf16 %v5572
          %v5859 = vunpack.c.h.s8.bf16 %v5573
          %v5860 = vunpack.c.l.s8.bf16 %v5574
          %v5861 = vunpack.c.l.s8.bf16 %v5575
          %v5862 = vunpack.c.h.s8.bf16 %v5574
          %v5863 = vunpack.c.h.s8.bf16 %v5575
          %v5864 = vunpack.c.l.s8.bf16 %v5576
          %v5865 = vunpack.c.l.s8.bf16 %v5577
          %v5866 = vunpack.c.h.s8.bf16 %v5576
          %v5867 = vunpack.c.h.s8.bf16 %v5577
          %v5868 = vunpack.c.l.s8.bf16 %v5578
          %v5869 = vunpack.c.l.s8.bf16 %v5579
          %v5870 = vunpack.c.h.s8.bf16 %v5578
          %v5871 = vunpack.c.h.s8.bf16 %v5579
          %v5872 = vunpack.c.l.s8.bf16 %v5580
          %v5873 = vunpack.c.l.s8.bf16 %v5581
          %v5874 = vunpack.c.h.s8.bf16 %v5580
          %v5875 = vunpack.c.h.s8.bf16 %v5581
          %v5876 = vunpack.c.l.s8.bf16 %v5582
          %v5877 = vunpack.c.l.s8.bf16 %v5583
          %v5878 = vunpack.c.h.s8.bf16 %v5582
          %v5879 = vunpack.c.h.s8.bf16 %v5583
          %v5880 = vunpack.c.l.s8.bf16 %v5584
          %v5881 = vunpack.c.l.s8.bf16 %v5585
          %v5882 = vunpack.c.h.s8.bf16 %v5584
          %v5883 = vunpack.c.h.s8.bf16 %v5585
          %v5884 = vunpack.c.l.s8.bf16 %v5586
          %v5885 = vunpack.c.l.s8.bf16 %v5587
          %v5886 = vunpack.c.h.s8.bf16 %v5586
          %v5887 = vunpack.c.h.s8.bf16 %v5587
          %v5888 = vunpack.c.l.s8.bf16 %v5588
          %v5889 = vunpack.c.l.s8.bf16 %v5589
          %v5890 = vunpack.c.h.s8.bf16 %v5588
          %v5891 = vunpack.c.h.s8.bf16 %v5589
          %v5892 = vunpack.c.l.s8.bf16 %v5590
          %v5893 = vunpack.c.l.s8.bf16 %v5591
          %v5894 = vunpack.c.h.s8.bf16 %v5590
          %v5895 = vunpack.c.h.s8.bf16 %v5591
          %v5896 = vunpack.c.l.s8.bf16 %v5592
          %v5897 = vunpack.c.l.s8.bf16 %v5593
          %v5898 = vunpack.c.h.s8.bf16 %v5592
          %v5899 = vunpack.c.h.s8.bf16 %v5593
          %v5900 = vunpack.c.l.s8.bf16 %v5594
          %v5901 = vunpack.c.l.s8.bf16 %v5595
          %v5902 = vunpack.c.h.s8.bf16 %v5594
          %v5903 = vunpack.c.h.s8.bf16 %v5595
          %v5904 = vunpack.c.l.s8.bf16 %v5596
          %v5905 = vunpack.c.l.s8.bf16 %v5597
          %v5906 = vunpack.c.h.s8.bf16 %v5596
          %v5907 = vunpack.c.h.s8.bf16 %v5597
          %v5908 = vunpack.c.l.s8.bf16 %v5598
          %v5909 = vunpack.c.l.s8.bf16 %v5599
          %v5910 = vunpack.c.h.s8.bf16 %v5598
          %v5911 = vunpack.c.h.s8.bf16 %v5599
          %v5912 = vunpack.c.l.s8.bf16 %v5600
          %v5913 = vunpack.c.l.s8.bf16 %v5601
          %v5914 = vunpack.c.h.s8.bf16 %v5600
          %v5915 = vunpack.c.h.s8.bf16 %v5601
          %v5916 = vunpack.c.l.s8.bf16 %v5602
          %v5917 = vunpack.c.l.s8.bf16 %v5603
          %v5918 = vunpack.c.h.s8.bf16 %v5602
          %v5919 = vunpack.c.h.s8.bf16 %v5603
          %v5920 = vunpack.c.l.s8.bf16 %v5604
          %v5921 = vunpack.c.l.s8.bf16 %v5605
          %v5922 = vunpack.c.h.s8.bf16 %v5604
          %v5923 = vunpack.c.h.s8.bf16 %v5605
          %v5924 = vunpack.c.l.s8.bf16 %v5606
          %v5925 = vunpack.c.l.s8.bf16 %v5607
          %v5926 = vunpack.c.h.s8.bf16 %v5606
          %v5927 = vunpack.c.h.s8.bf16 %v5607
          %v5928 = vunpack.c.l.s8.bf16 %v5608
          %v5929 = vunpack.c.l.s8.bf16 %v5609
          %v5930 = vunpack.c.h.s8.bf16 %v5608
          %v5931 = vunpack.c.h.s8.bf16 %v5609
          %v5932 = vunpack.c.l.s8.bf16 %v5610
          %v5933 = vunpack.c.l.s8.bf16 %v5611
          %v5934 = vunpack.c.h.s8.bf16 %v5610
          %v5935 = vunpack.c.h.s8.bf16 %v5611
          %v5936 = vunpack.c.l.s8.bf16 %v5612
          %v5937 = vunpack.c.l.s8.bf16 %v5613
          %v5938 = vunpack.c.h.s8.bf16 %v5612
          %v5939 = vunpack.c.h.s8.bf16 %v5613
          %v5940 = vunpack.c.l.s8.bf16 %v5614
          %v5941 = vunpack.c.l.s8.bf16 %v5615
          %v5942 = vunpack.c.h.s8.bf16 %v5614
          %v5943 = vunpack.c.h.s8.bf16 %v5615
          %v5944 = vunpack.c.l.s8.bf16 %v5616
          %v5945 = vunpack.c.l.s8.bf16 %v5617
          %v5946 = vunpack.c.h.s8.bf16 %v5616
          %v5947 = vunpack.c.h.s8.bf16 %v5617
          %v5948 = vunpack.c.l.s8.bf16 %v5618
          %v5949 = vunpack.c.l.s8.bf16 %v5619
          %v5950 = vunpack.c.h.s8.bf16 %v5618
          %v5951 = vunpack.c.h.s8.bf16 %v5619
          %v5952 = vunpack.c.l.s8.bf16 %v5620
          %v5953 = vunpack.c.l.s8.bf16 %v5621
          %v5954 = vunpack.c.h.s8.bf16 %v5620
          %v5955 = vunpack.c.h.s8.bf16 %v5621
          %v5956 = vunpack.c.l.s8.bf16 %v5622
          %v5957 = vunpack.c.l.s8.bf16 %v5623
          %v5958 = vunpack.c.h.s8.bf16 %v5622
          %v5959 = vunpack.c.h.s8.bf16 %v5623
          %v5960 = vunpack.c.l.s8.bf16 %v5624
          %v5961 = vunpack.c.l.s8.bf16 %v5625
          %v5962 = vunpack.c.h.s8.bf16 %v5624
          %v5963 = vunpack.c.h.s8.bf16 %v5625
          %v5964 = vunpack.c.l.s8.bf16 %v5626
          %v5965 = vunpack.c.l.s8.bf16 %v5627
          %v5966 = vunpack.c.h.s8.bf16 %v5626
          %v5967 = vunpack.c.h.s8.bf16 %v5627
          %v5968 = vunpack.c.l.s8.bf16 %v5628
          %v5969 = vunpack.c.l.s8.bf16 %v5629
          %v5970 = vunpack.c.h.s8.bf16 %v5628
          %v5971 = vunpack.c.h.s8.bf16 %v5629
          %v5972 = vunpack.c.l.s8.bf16 %v5630
          %v5973 = vunpack.c.l.s8.bf16 %v5631
          %v5974 = vunpack.c.h.s8.bf16 %v5630
          %v5975 = vunpack.c.h.s8.bf16 %v5631
          %v5976 = vunpack.c.l.s8.bf16 %v5632
          %v5977 = vunpack.c.l.s8.bf16 %v5633
          %v5978 = vunpack.c.h.s8.bf16 %v5632
          %v5979 = vunpack.c.h.s8.bf16 %v5633
          %v5980 = vunpack.c.l.s8.bf16 %v5634
          %v5981 = vunpack.c.l.s8.bf16 %v5635
          %v5982 = vunpack.c.h.s8.bf16 %v5634
          %v5983 = vunpack.c.h.s8.bf16 %v5635
          %v5984 = vunpack.c.l.s8.bf16 %v5636
          %v5985 = vunpack.c.l.s8.bf16 %v5637
          %v5986 = vunpack.c.h.s8.bf16 %v5636
          %v5987 = vunpack.c.h.s8.bf16 %v5637
          %v5988 = vunpack.c.l.s8.bf16 %v5638
          %v5989 = vunpack.c.l.s8.bf16 %v5639
          %v5990 = vunpack.c.h.s8.bf16 %v5638
          %v5991 = vunpack.c.h.s8.bf16 %v5639
          %v5992 = vunpack.c.l.s8.bf16 %v5640
          %v5993 = vunpack.c.l.s8.bf16 %v5641
          %v5994 = vunpack.c.h.s8.bf16 %v5640
          %v5995 = vunpack.c.h.s8.bf16 %v5641
          %v5996 = vunpack.c.l.s8.bf16 %v5642
          %v5997 = vunpack.c.l.s8.bf16 %v5643
          %v5998 = vunpack.c.h.s8.bf16 %v5642
          %v5999 = vunpack.c.h.s8.bf16 %v5643
          %v6000 = vunpack.c.l.s8.bf16 %v5644
          %v6001 = vunpack.c.l.s8.bf16 %v5645
          %v6002 = vunpack.c.h.s8.bf16 %v5644
          %v6003 = vunpack.c.h.s8.bf16 %v5645
          %v6004 = vunpack.c.l.s8.bf16 %v5646
          %v6005 = vunpack.c.l.s8.bf16 %v5647
          %v6006 = vunpack.c.h.s8.bf16 %v5646
          %v6007 = vunpack.c.h.s8.bf16 %v5647
          %v6008 = vunpack.c.l.s8.bf16 %v5648
          %v6009 = vunpack.c.l.s8.bf16 %v5649
          %v6010 = vunpack.c.h.s8.bf16 %v5648
          %v6011 = vunpack.c.h.s8.bf16 %v5649
          %v6012 = vunpack.c.l.s8.bf16 %v5650
          %v6013 = vunpack.c.l.s8.bf16 %v5651
          %v6014 = vunpack.c.h.s8.bf16 %v5650
          %v6015 = vunpack.c.h.s8.bf16 %v5651
          %v6016 = vunpack.c.l.s8.bf16 %v5652
          %v6017 = vunpack.c.l.s8.bf16 %v5653
          %v6018 = vunpack.c.h.s8.bf16 %v5652
          %v6019 = vunpack.c.h.s8.bf16 %v5653
          %v6020 = vunpack.c.l.s8.bf16 %v5654
          %v6021 = vunpack.c.l.s8.bf16 %v5655
          %v6022 = vunpack.c.h.s8.bf16 %v5654
          %v6023 = vunpack.c.h.s8.bf16 %v5655
          %v6024 = vunpack.c.l.s8.bf16 %v5656
          %v6025 = vunpack.c.l.s8.bf16 %v5657
          %v6026 = vunpack.c.h.s8.bf16 %v5656
          %v6027 = vunpack.c.h.s8.bf16 %v5657
          %v6028 = vunpack.c.l.s8.bf16 %v5658
          %v6029 = vunpack.c.l.s8.bf16 %v5659
          %v6030 = vunpack.c.h.s8.bf16 %v5658
          %v6031 = vunpack.c.h.s8.bf16 %v5659
          %v6032 = vunpack.c.l.s8.bf16 %v5660
          %v6033 = vunpack.c.l.s8.bf16 %v5661
          %v6034 = vunpack.c.h.s8.bf16 %v5660
          %v6035 = vunpack.c.h.s8.bf16 %v5661
          %v6036 = vunpack.c.l.s8.bf16 %v5662
          %v6037 = vunpack.c.l.s8.bf16 %v5663
          %v6038 = vunpack.c.h.s8.bf16 %v5662
          %v6039 = vunpack.c.h.s8.bf16 %v5663
          %v6040 = vunpack.c.l.s8.bf16 %v5664
          %v6041 = vunpack.c.l.s8.bf16 %v5665
          %v6042 = vunpack.c.h.s8.bf16 %v5664
          %v6043 = vunpack.c.h.s8.bf16 %v5665
          %v6044 = vunpack.c.l.s8.bf16 %v5666
          %v6045 = vunpack.c.l.s8.bf16 %v5667
          %v6046 = vunpack.c.h.s8.bf16 %v5666
          %v6047 = vunpack.c.h.s8.bf16 %v5667
          %v6048 = vunpack.c.l.s8.bf16 %v5668
          %v6049 = vunpack.c.l.s8.bf16 %v5669
          %v6050 = vunpack.c.h.s8.bf16 %v5668
          %v6051 = vunpack.c.h.s8.bf16 %v5669
          %v6052 = vunpack.c.l.s8.bf16 %v5670
          %v6053 = vunpack.c.l.s8.bf16 %v5671
          %v6054 = vunpack.c.h.s8.bf16 %v5670
          %v6055 = vunpack.c.h.s8.bf16 %v5671
          %v6056 = vunpack.c.l.s8.bf16 %v5672
          %v6057 = vunpack.c.l.s8.bf16 %v5673
          %v6058 = vunpack.c.h.s8.bf16 %v5672
          %v6059 = vunpack.c.h.s8.bf16 %v5673
          %v6060 = vunpack.c.l.s8.bf16 %v5674
          %v6061 = vunpack.c.l.s8.bf16 %v5675
          %v6062 = vunpack.c.h.s8.bf16 %v5674
          %v6063 = vunpack.c.h.s8.bf16 %v5675
          %v6064 = vunpack.c.l.s8.bf16 %v5676
          %v6065 = vunpack.c.l.s8.bf16 %v5677
          %v6066 = vunpack.c.h.s8.bf16 %v5676
          %v6067 = vunpack.c.h.s8.bf16 %v5677
          %v6068 = vunpack.c.l.s8.bf16 %v5678
          %v6069 = vunpack.c.l.s8.bf16 %v5679
          %v6070 = vunpack.c.h.s8.bf16 %v5678
          %v6071 = vunpack.c.h.s8.bf16 %v5679
          %v6072 = vunpack.c.l.s8.bf16 %v5680
          %v6073 = vunpack.c.l.s8.bf16 %v5681
          %v6074 = vunpack.c.h.s8.bf16 %v5680
          %v6075 = vunpack.c.h.s8.bf16 %v5681
          %v6076 = vunpack.c.l.s8.bf16 %v5682
          %v6077 = vunpack.c.l.s8.bf16 %v5683
          %v6078 = vunpack.c.h.s8.bf16 %v5682
          %v6079 = vunpack.c.h.s8.bf16 %v5683
          %v6080 = vunpack.c.l.s8.bf16 %v5684
          %v6081 = vunpack.c.l.s8.bf16 %v5685
          %v6082 = vunpack.c.h.s8.bf16 %v5684
          %v6083 = vunpack.c.h.s8.bf16 %v5685
          %v6084 = vunpack.c.l.s8.bf16 %v5686
          %v6085 = vunpack.c.l.s8.bf16 %v5687
          %v6086 = vunpack.c.h.s8.bf16 %v5686
          %v6087 = vunpack.c.h.s8.bf16 %v5687
          %v6088 = vunpack.c.l.s8.bf16 %v5688
          %v6089 = vunpack.c.l.s8.bf16 %v5689
          %v6090 = vunpack.c.h.s8.bf16 %v5688
          %v6091 = vunpack.c.h.s8.bf16 %v5689
          %v6092 = vunpack.c.l.s8.bf16 %v5690
          %v6093 = vunpack.c.l.s8.bf16 %v5691
          %v6094 = vunpack.c.h.s8.bf16 %v5690
          %v6095 = vunpack.c.h.s8.bf16 %v5691
          %v6096 = vunpack.c.l.s8.bf16 %v5692
          %v6097 = vunpack.c.l.s8.bf16 %v5693
          %v6098 = vunpack.c.h.s8.bf16 %v5692
          %v6099 = vunpack.c.h.s8.bf16 %v5693
          %v6100 = vunpack.c.l.s8.bf16 %v5694
          %v6101 = vunpack.c.l.s8.bf16 %v5695
          %v6102 = vunpack.c.h.s8.bf16 %v5694
          %v6103 = vunpack.c.h.s8.bf16 %v5695
          %v6104 = vunpack.c.l.s8.bf16 %v5696
          %v6105 = vunpack.c.l.s8.bf16 %v5697
          %v6106 = vunpack.c.h.s8.bf16 %v5696
          %v6107 = vunpack.c.h.s8.bf16 %v5697
          %v6108 = vunpack.c.l.s8.bf16 %v5698
          %v6109 = vunpack.c.l.s8.bf16 %v5699
          %v6110 = vunpack.c.h.s8.bf16 %v5698
          %v6111 = vunpack.c.h.s8.bf16 %v5699
          %v6112 = vunpack.c.l.s8.bf16 %v5700
          %v6113 = vunpack.c.l.s8.bf16 %v5701
          %v6114 = vunpack.c.h.s8.bf16 %v5700
          %v6115 = vunpack.c.h.s8.bf16 %v5701
          %v6116 = vunpack.c.l.s8.bf16 %v5702
          %v6117 = vunpack.c.l.s8.bf16 %v5703
          %v6118 = vunpack.c.h.s8.bf16 %v5702
          %v6119 = vunpack.c.h.s8.bf16 %v5703
          %v6120 = vunpack.c.l.s8.bf16 %v5704
          %v6121 = vunpack.c.l.s8.bf16 %v5705
          %v6122 = vunpack.c.h.s8.bf16 %v5704
          %v6123 = vunpack.c.h.s8.bf16 %v5705
          %v6124 = vunpack.c.l.s8.bf16 %v5706
          %v6125 = vunpack.c.l.s8.bf16 %v5707
          %v6126 = vunpack.c.h.s8.bf16 %v5706
          %v6127 = vunpack.c.h.s8.bf16 %v5707
          %v6128 = vunpack.c.l.s8.bf16 %v5708
          %v6129 = vunpack.c.l.s8.bf16 %v5709
          %v6130 = vunpack.c.h.s8.bf16 %v5708
          %v6131 = vunpack.c.h.s8.bf16 %v5709
          %v6132 = vunpack.c.l.s8.bf16 %v5710
          %v6133 = vunpack.c.l.s8.bf16 %v5711
          %v6134 = vunpack.c.h.s8.bf16 %v5710
          %v6135 = vunpack.c.h.s8.bf16 %v5711
          %v6136 = vunpack.c.l.s8.bf16 %v5712
          %v6137 = vunpack.c.l.s8.bf16 %v5713
          %v6138 = vunpack.c.h.s8.bf16 %v5712
          %v6139 = vunpack.c.h.s8.bf16 %v5713
          %v6140 = vunpack.c.l.s8.bf16 %v5714
          %v6141 = vunpack.c.l.s8.bf16 %v5715
          %v6142 = vunpack.c.h.s8.bf16 %v5714
          %v6143 = vunpack.c.h.s8.bf16 %v5715
          %v6144 = vunpack.c.l.s8.bf16 %v5716
          %v6145 = vunpack.c.l.s8.bf16 %v5717
          %v6146 = vunpack.c.h.s8.bf16 %v5716
          %v6147 = vunpack.c.h.s8.bf16 %v5717
          %v6148 = vunpack.c.l.s8.bf16 %v5718
          %v6149 = vunpack.c.l.s8.bf16 %v5719
          %v6150 = vunpack.c.h.s8.bf16 %v5718
          %v6151 = vunpack.c.h.s8.bf16 %v5719
          %v6152 = vunpack.c.l.s8.bf16 %v5720
          %v6153 = vunpack.c.l.s8.bf16 %v5721
          %v6154 = vunpack.c.h.s8.bf16 %v5720
          %v6155 = vunpack.c.h.s8.bf16 %v5721
          %v6156 = vunpack.c.l.s8.bf16 %v5722
          %v6157 = vunpack.c.l.s8.bf16 %v5723
          %v6158 = vunpack.c.h.s8.bf16 %v5722
          %v6159 = vunpack.c.h.s8.bf16 %v5723
          %v6160 = vunpack.c.l.s8.bf16 %v5724
          %v6161 = vunpack.c.l.s8.bf16 %v5725
          %v6162 = vunpack.c.h.s8.bf16 %v5724
          %v6163 = vunpack.c.h.s8.bf16 %v5725
          %v6164 = vunpack.c.l.s8.bf16 %v5726
          %v6165 = vunpack.c.l.s8.bf16 %v5727
          %v6166 = vunpack.c.h.s8.bf16 %v5726
          %v6167 = vunpack.c.h.s8.bf16 %v5727
          %v6168 = vunpack.c.l.s8.bf16 %v5728
          %v6169 = vunpack.c.l.s8.bf16 %v5729
          %v6170 = vunpack.c.h.s8.bf16 %v5728
          %v6171 = vunpack.c.h.s8.bf16 %v5729
          %v6172 = vunpack.c.l.s8.bf16 %v5730
          %v6173 = vunpack.c.l.s8.bf16 %v5731
          %v6174 = vunpack.c.h.s8.bf16 %v5730
          %v6175 = vunpack.c.h.s8.bf16 %v5731
          %v6176 = vunpack.c.l.s8.bf16 %v5732
          %v6177 = vunpack.c.l.s8.bf16 %v5733
          %v6178 = vunpack.c.h.s8.bf16 %v5732
          %v6179 = vunpack.c.h.s8.bf16 %v5733
          %v6180 = vunpack.c.l.s8.bf16 %v5734
          %v6181 = vunpack.c.l.s8.bf16 %v5735
          %v6182 = vunpack.c.h.s8.bf16 %v5734
          %v6183 = vunpack.c.h.s8.bf16 %v5735
          %v6184 = vunpack.c.l.s8.bf16 %v5736
          %v6185 = vunpack.c.l.s8.bf16 %v5737
          %v6186 = vunpack.c.h.s8.bf16 %v5736
          %v6187 = vunpack.c.h.s8.bf16 %v5737
          %v6188 = vunpack.c.l.s8.bf16 %v5738
          %v6189 = vunpack.c.l.s8.bf16 %v5739
          %v6190 = vunpack.c.h.s8.bf16 %v5738
          %v6191 = vunpack.c.h.s8.bf16 %v5739
          %v6192 = vunpack.c.l.s8.bf16 %v5740
          %v6193 = vunpack.c.l.s8.bf16 %v5741
          %v6194 = vunpack.c.h.s8.bf16 %v5740
          %v6195 = vunpack.c.h.s8.bf16 %v5741
          %v6196 = vunpack.c.l.s8.bf16 %v5742
          %v6197 = vunpack.c.l.s8.bf16 %v5743
          %v6198 = vunpack.c.h.s8.bf16 %v5742
          %v6199 = vunpack.c.h.s8.bf16 %v5743
          %v6200 = vunpack.c.l.s8.bf16 %v5744
          %v6201 = vunpack.c.l.s8.bf16 %v5745
          %v6202 = vunpack.c.h.s8.bf16 %v5744
          %v6203 = vunpack.c.h.s8.bf16 %v5745
          %v6204 = vunpack.c.l.s8.bf16 %v5746
          %v6205 = vunpack.c.l.s8.bf16 %v5747
          %v6206 = vunpack.c.h.s8.bf16 %v5746
          %v6207 = vunpack.c.h.s8.bf16 %v5747
          %v6208 = vunpack.c.l.s8.bf16 %v5748
          %v6209 = vunpack.c.l.s8.bf16 %v5749
          %v6210 = vunpack.c.h.s8.bf16 %v5748
          %v6211 = vunpack.c.h.s8.bf16 %v5749
          %v6212 = vunpack.c.l.s8.bf16 %v5750
          %v6213 = vunpack.c.l.s8.bf16 %v5751
          %v6214 = vunpack.c.h.s8.bf16 %v5750
          %v6215 = vunpack.c.h.s8.bf16 %v5751
          %v6216 = vunpack.c.l.s8.bf16 %v5752
          %v6217 = vunpack.c.l.s8.bf16 %v5753
          %v6218 = vunpack.c.h.s8.bf16 %v5752
          %v6219 = vunpack.c.h.s8.bf16 %v5753
          %v6220 = vunpack.c.l.s8.bf16 %v5754
          %v6221 = vunpack.c.l.s8.bf16 %v5755
          %v6222 = vunpack.c.h.s8.bf16 %v5754
          %v6223 = vunpack.c.h.s8.bf16 %v5755
          %v6224 = vunpack.c.l.s8.bf16 %v5756
          %v6225 = vunpack.c.l.s8.bf16 %v5757
          %v6226 = vunpack.c.h.s8.bf16 %v5756
          %v6227 = vunpack.c.h.s8.bf16 %v5757
          %v6228 = vunpack.c.l.s8.bf16 %v5758
          %v6229 = vunpack.c.l.s8.bf16 %v5759
          %v6230 = vunpack.c.h.s8.bf16 %v5758
          %v6231 = vunpack.c.h.s8.bf16 %v5759
          %v6232 = vunpack.c.l.s8.bf16 %v5760
          %v6233 = vunpack.c.l.s8.bf16 %v5761
          %v6234 = vunpack.c.h.s8.bf16 %v5760
          %v6235 = vunpack.c.h.s8.bf16 %v5761
          %v6236 = vunpack.c.l.s8.bf16 %v5762
          %v6237 = vunpack.c.l.s8.bf16 %v5763
          %v6238 = vunpack.c.h.s8.bf16 %v5762
          %v6239 = vunpack.c.h.s8.bf16 %v5763
          %v6240 = vunpack.c.l.s8.bf16 %v5764
          %v6241 = vunpack.c.l.s8.bf16 %v5765
          %v6242 = vunpack.c.h.s8.bf16 %v5764
          %v6243 = vunpack.c.h.s8.bf16 %v5765
          %v6244 = vunpack.c.l.s8.bf16 %v5766
          %v6245 = vunpack.c.l.s8.bf16 %v5767
          %v6246 = vunpack.c.h.s8.bf16 %v5766
          %v6247 = vunpack.c.h.s8.bf16 %v5767
          %v6248 = vunpack.c.l.s8.bf16 %v5768
          %v6249 = vunpack.c.l.s8.bf16 %v5769
          %v6250 = vunpack.c.h.s8.bf16 %v5768
          %v6251 = vunpack.c.h.s8.bf16 %v5769
          %v6252 = vunpack.c.l.s8.bf16 %v5770
          %v6253 = vunpack.c.l.s8.bf16 %v5771
          %v6254 = vunpack.c.h.s8.bf16 %v5770
          %v6255 = vunpack.c.h.s8.bf16 %v5771
          %v6256 = vunpack.c.l.s8.bf16 %v5772
          %v6257 = vunpack.c.l.s8.bf16 %v5773
          %v6258 = vunpack.c.h.s8.bf16 %v5772
          %v6259 = vunpack.c.h.s8.bf16 %v5773
          %v6260 = vunpack.c.l.s8.bf16 %v5774
          %v6261 = vunpack.c.l.s8.bf16 %v5775
          %v6262 = vunpack.c.h.s8.bf16 %v5774
          %v6263 = vunpack.c.h.s8.bf16 %v5775
          %v6264 = vunpack.c.l.s8.bf16 %v5776
          %v6265 = vunpack.c.l.s8.bf16 %v5777
          %v6266 = vunpack.c.h.s8.bf16 %v5776
          %v6267 = vunpack.c.h.s8.bf16 %v5777
          %v6268 = vunpack.c.l.s8.bf16 %v5778
          %v6269 = vunpack.c.l.s8.bf16 %v5779
          %v6270 = vunpack.c.h.s8.bf16 %v5778
          %v6271 = vunpack.c.h.s8.bf16 %v5779
          %v6272 = vunpack.c.l.s8.bf16 %v5780
          %v6273 = vunpack.c.l.s8.bf16 %v5781
          %v6274 = vunpack.c.h.s8.bf16 %v5780
          %v6275 = vunpack.c.h.s8.bf16 %v5781
          %v6276 = vunpack.c.l.s8.bf16 %v5782
          %v6277 = vunpack.c.l.s8.bf16 %v5783
          %v6278 = vunpack.c.h.s8.bf16 %v5782
          %v6279 = vunpack.c.h.s8.bf16 %v5783
          %v6280 = vunpack.c.l.s8.bf16 %v5784
          %v6281 = vunpack.c.l.s8.bf16 %v5785
          %v6282 = vunpack.c.h.s8.bf16 %v5784
          %v6283 = vunpack.c.h.s8.bf16 %v5785
          %v6284 = vunpack.c.l.s8.bf16 %v5786
          %v6285 = vunpack.c.l.s8.bf16 %v5787
          %v6286 = vunpack.c.h.s8.bf16 %v5786
          %v6287 = vunpack.c.h.s8.bf16 %v5787
          %v6288 = vunpack.c.l.s8.bf16 %v5788
          %v6289 = vunpack.c.l.s8.bf16 %v5789
          %v6290 = vunpack.c.h.s8.bf16 %v5788
          %v6291 = vunpack.c.h.s8.bf16 %v5789
          %v6292 = vunpack.c.l.s8.bf16 %v5790
          %v6293 = vunpack.c.l.s8.bf16 %v5791
          %v6294 = vunpack.c.h.s8.bf16 %v5790
          %v6295 = vunpack.c.h.s8.bf16 %v5791
          %v6296 = vunpack.c.l.s8.bf16 %v5792
          %v6297 = vunpack.c.l.s8.bf16 %v5793
          %v6298 = vunpack.c.h.s8.bf16 %v5792
          %v6299 = vunpack.c.h.s8.bf16 %v5793
          %v6300 = vunpack.c.l.s8.bf16 %v5794
          %v6301 = vunpack.c.l.s8.bf16 %v5795
          %v6302 = vunpack.c.h.s8.bf16 %v5794
          %v6303 = vunpack.c.h.s8.bf16 %v5795
          %v6304 = vunpack.c.l.s8.bf16 %v5796
          %v6305 = vunpack.c.l.s8.bf16 %v5797
          %v6306 = vunpack.c.h.s8.bf16 %v5796
          %v6307 = vunpack.c.h.s8.bf16 %v5797
          %v6308 = vunpack.c.l.s8.bf16 %v5798
          %v6309 = vunpack.c.l.s8.bf16 %v5799
          %v6310 = vunpack.c.h.s8.bf16 %v5798
          %v6311 = vunpack.c.h.s8.bf16 %v5799
          %v6328 = vunpack.c.l.b16 %v5528
          %v6329 = vunpack.c.h.b16 %v5528
          %v6330 = vunpack.c.l.b16 %v5529
          %v6331 = vunpack.c.h.b16 %v5529
          %v6332 = vunpack.c.l.b16 %v5530
          %v6333 = vunpack.c.h.b16 %v5530
          %v6334 = vunpack.c.l.b16 %v5531
          %v6335 = vunpack.c.h.b16 %v5531
          %v6336 = vunpack.c.l.b16 %v5532
          %v6337 = vunpack.c.h.b16 %v5532
          %v6338 = vunpack.c.l.b16 %v5533
          %v6339 = vunpack.c.h.b16 %v5533
          %v6340 = vunpack.c.l.b16 %v5534
          %v6341 = vunpack.c.h.b16 %v5534
          %v6342 = vunpack.c.l.b16 %v5535
          %v6343 = vunpack.c.h.b16 %v5535
          %v6344 = vunpack.c.l.b16 %v5536
          %v6345 = vunpack.c.h.b16 %v5536
          %v6346 = vunpack.c.l.b16 %v5537
          %v6347 = vunpack.c.h.b16 %v5537
          %v6348 = vunpack.c.l.b16 %v5538
          %v6349 = vunpack.c.h.b16 %v5538
          %v6350 = vunpack.c.l.b16 %v5539
          %v6351 = vunpack.c.h.b16 %v5539
          %v6352 = vunpack.c.l.b16 %v5540
          %v6353 = vunpack.c.h.b16 %v5540
          %v6354 = vunpack.c.l.b16 %v5541
          %v6355 = vunpack.c.h.b16 %v5541
          %v6356 = vunpack.c.l.b16 %v5542
          %v6357 = vunpack.c.h.b16 %v5542
          %v6358 = vunpack.c.l.b16 %v5543
          %v6359 = vunpack.c.h.b16 %v5543
          %v6360 = vpack.c.b16 %v6328, %v6328
          %v6361 = vpack.c.b16 %v6329, %v6329
          %v6362 = vpack.c.b16 %v6330, %v6330
          %v6363 = vpack.c.b16 %v6331, %v6331
          %v6364 = vpack.c.b16 %v6332, %v6332
          %v6365 = vpack.c.b16 %v6333, %v6333
          %v6366 = vpack.c.b16 %v6334, %v6334
          %v6367 = vpack.c.b16 %v6335, %v6335
          %v6368 = vpack.c.b16 %v6336, %v6336
          %v6369 = vpack.c.b16 %v6337, %v6337
          %v6370 = vpack.c.b16 %v6338, %v6338
          %v6371 = vpack.c.b16 %v6339, %v6339
          %v6372 = vpack.c.b16 %v6340, %v6340
          %v6373 = vpack.c.b16 %v6341, %v6341
          %v6374 = vpack.c.b16 %v6342, %v6342
          %v6375 = vpack.c.b16 %v6343, %v6343
          %v6376 = vpack.c.b16 %v6344, %v6344
          %v6377 = vpack.c.b16 %v6345, %v6345
          %v6378 = vpack.c.b16 %v6346, %v6346
          %v6379 = vpack.c.b16 %v6347, %v6347
          %v6380 = vpack.c.b16 %v6348, %v6348
          %v6381 = vpack.c.b16 %v6349, %v6349
          %v6382 = vpack.c.b16 %v6350, %v6350
          %v6383 = vpack.c.b16 %v6351, %v6351
          %v6384 = vpack.c.b16 %v6352, %v6352
          %v6385 = vpack.c.b16 %v6353, %v6353
          %v6386 = vpack.c.b16 %v6354, %v6354
          %v6387 = vpack.c.b16 %v6355, %v6355
          %v6388 = vpack.c.b16 %v6356, %v6356
          %v6389 = vpack.c.b16 %v6357, %v6357
          %v6390 = vpack.c.b16 %v6358, %v6358
          %v6391 = vpack.c.b16 %v6359, %v6359
          %6424 = vmatprep.subr.bf16.mxu0 %v5815
          %6425 = vmatpush1.bf16.msra.mxu0 %v5814
          %6426 = vmatprep.subr.bf16.mxu0 %v5813
          %6427 = vmatpush1.bf16.msra.mxu0 %v5812
          %6428 = vmatprep.subr.bf16.mxu0 %v5811
          %6429 = vmatpush1.bf16.msra.mxu0 %v5810
          %6430 = vmatprep.subr.bf16.mxu0 %v5809
          %6431 = vmatpush1.bf16.msra.mxu0 %v5808
          %6432 = vmatprep.subr.bf16.mxu0 %v5807
          %6433 = vmatpush1.bf16.msra.mxu0 %v5806
          %6434 = vmatprep.subr.bf16.mxu0 %v5805
          %6435 = vmatpush1.bf16.msra.mxu0 %v5804
          %6436 = vmatprep.subr.bf16.mxu0 %v5803
          %6437 = vmatpush1.bf16.msra.mxu0 %v5802
          %6438 = vmatprep.subr.bf16.mxu0 %v5801
          %6439 = vmatpush1.bf16.msra.mxu0 %v5800
          %6440 = vmatprep.subr.bf16.mxu0 %v5831
          %6441 = vmatpush2.bf16.msra.mxu0 %v5830
          %6442 = vmatprep.subr.bf16.mxu0 %v5829
          %6443 = vmatpush2.bf16.msra.mxu0 %v5828
          %6444 = vmatprep.subr.bf16.mxu0 %v5827
          %6445 = vmatpush2.bf16.msra.mxu0 %v5826
          %6446 = vmatprep.subr.bf16.mxu0 %v5825
          %6447 = vmatpush2.bf16.msra.mxu0 %v5824
          %6448 = vmatprep.subr.bf16.mxu0 %v5823
          %6449 = vmatpush2.bf16.msra.mxu0 %v5822
          %6450 = vmatprep.subr.bf16.mxu0 %v5821
          %6451 = vmatpush2.bf16.msra.mxu0 %v5820
          %6452 = vmatprep.subr.bf16.mxu0 %v5819
          %6453 = vmatpush2.bf16.msra.mxu0 %v5818
          %6454 = vmatprep.subr.bf16.mxu0 %v5817
          %6455 = vmatpush2.bf16.msra.mxu0 %v5816
          %6456 = vmatprep.mubr.bf16.mxu0 %v6361
          %6457 = vmatmul.mubr.bf16.gmra.mxu0 %v6360
          %v6458 = vpop.f32.mrf.mxu0
          %v6459 = vadd.f32 0.0, %v6458
          %v6460 = vpop.f32.mrf.mxu0
          %v6461 = vadd.f32 0.0, %v6460
          %v6462 = vpop.f32.mrf.mxu0
          %v6463 = vpop.f32.mrf.mxu0
          %6464 = vdwg.mxu0
          %6465 = vmatprep.subr.bf16.mxu0 %v5847
          %6466 = vmatpush1.bf16.msra.mxu0 %v5846
          %6467 = vmatprep.subr.bf16.mxu0 %v5845
          %6468 = vmatpush1.bf16.msra.mxu0 %v5844
          %6469 = vmatprep.subr.bf16.mxu0 %v5843
          %6470 = vmatpush1.bf16.msra.mxu0 %v5842
          %6471 = vmatprep.subr.bf16.mxu0 %v5841
          %6472 = vmatpush1.bf16.msra.mxu0 %v5840
          %6473 = vmatprep.subr.bf16.mxu0 %v5839
          %6474 = vmatpush1.bf16.msra.mxu0 %v5838
          %6475 = vmatprep.subr.bf16.mxu0 %v5837
          %6476 = vmatpush1.bf16.msra.mxu0 %v5836
          %6477 = vmatprep.subr.bf16.mxu0 %v5835
          %6478 = vmatpush1.bf16.msra.mxu0 %v5834
          %6479 = vmatprep.subr.bf16.mxu0 %v5833
          %6480 = vmatpush1.bf16.msra.mxu0 %v5832
          %6481 = vmatprep.subr.bf16.mxu0 %v5863
          %6482 = vmatpush2.bf16.msra.mxu0 %v5862
          %6483 = vmatprep.subr.bf16.mxu0 %v5861
          %6484 = vmatpush2.bf16.msra.mxu0 %v5860
          %6485 = vmatprep.subr.bf16.mxu0 %v5859
          %6486 = vmatpush2.bf16.msra.mxu0 %v5858
          %6487 = vmatprep.subr.bf16.mxu0 %v5857
          %6488 = vmatpush2.bf16.msra.mxu0 %v5856
          %6489 = vmatprep.subr.bf16.mxu0 %v5855
          %6490 = vmatpush2.bf16.msra.mxu0 %v5854
          %6491 = vmatprep.subr.bf16.mxu0 %v5853
          %6492 = vmatpush2.bf16.msra.mxu0 %v5852
          %6493 = vmatprep.subr.bf16.mxu0 %v5851
          %6494 = vmatpush2.bf16.msra.mxu0 %v5850
          %6495 = vmatprep.subr.bf16.mxu0 %v5849
          %6496 = vmatpush2.bf16.msra.mxu0 %v5848
          %6497 = vmatprep.mubr.bf16.mxu0 %v6363
          %6498 = vmatmul.mubr.bf16.gmra.mxu0 %v6362
          %v6499 = vpop.f32.mrf.mxu0
          %v6500 = vadd.f32 %v6459, %v6499
          %v6501 = vpop.f32.mrf.mxu0
          %v6502 = vadd.f32 %v6461, %v6501
          %v6503 = vpop.f32.mrf.mxu0
          %v6504 = vpop.f32.mrf.mxu0
          %6505 = vdwg.mxu0
          %6506 = vmatprep.subr.bf16.mxu0 %v5879
          %6507 = vmatpush1.bf16.msra.mxu0 %v5878
          %6508 = vmatprep.subr.bf16.mxu0 %v5877
          %6509 = vmatpush1.bf16.msra.mxu0 %v5876
          %6510 = vmatprep.subr.bf16.mxu0 %v5875
          %6511 = vmatpush1.bf16.msra.mxu0 %v5874
          %6512 = vmatprep.subr.bf16.mxu0 %v5873
          %6513 = vmatpush1.bf16.msra.mxu0 %v5872
          %6514 = vmatprep.subr.bf16.mxu0 %v5871
          %6515 = vmatpush1.bf16.msra.mxu0 %v5870
          %6516 = vmatprep.subr.bf16.mxu0 %v5869
          %6517 = vmatpush1.bf16.msra.mxu0 %v5868
          %6518 = vmatprep.subr.bf16.mxu0 %v5867
          %6519 = vmatpush1.bf16.msra.mxu0 %v5866
          %6520 = vmatprep.subr.bf16.mxu0 %v5865
          %6521 = vmatpush1.bf16.msra.mxu0 %v5864
          %6522 = vmatprep.subr.bf16.mxu0 %v5895
          %6523 = vmatpush2.bf16.msra.mxu0 %v5894
          %6524 = vmatprep.subr.bf16.mxu0 %v5893
          %6525 = vmatpush2.bf16.msra.mxu0 %v5892
          %6526 = vmatprep.subr.bf16.mxu0 %v5891
          %6527 = vmatpush2.bf16.msra.mxu0 %v5890
          %6528 = vmatprep.subr.bf16.mxu0 %v5889
          %6529 = vmatpush2.bf16.msra.mxu0 %v5888
          %6530 = vmatprep.subr.bf16.mxu0 %v5887
          %6531 = vmatpush2.bf16.msra.mxu0 %v5886
          %6532 = vmatprep.subr.bf16.mxu0 %v5885
          %6533 = vmatpush2.bf16.msra.mxu0 %v5884
          %6534 = vmatprep.subr.bf16.mxu0 %v5883
          %6535 = vmatpush2.bf16.msra.mxu0 %v5882
          %6536 = vmatprep.subr.bf16.mxu0 %v5881
          %6537 = vmatpush2.bf16.msra.mxu0 %v5880
          %6538 = vmatprep.mubr.bf16.mxu0 %v6365
          %6539 = vmatmul.mubr.bf16.gmra.mxu0 %v6364
          %v6540 = vpop.f32.mrf.mxu0
          %v6541 = vadd.f32 %v6500, %v6540
          %v6542 = vpop.f32.mrf.mxu0
          %v6543 = vadd.f32 %v6502, %v6542
          %v6544 = vpop.f32.mrf.mxu0
          %v6545 = vpop.f32.mrf.mxu0
          %6546 = vdwg.mxu0
          %6547 = vmatprep.subr.bf16.mxu0 %v5911
          %6548 = vmatpush1.bf16.msra.mxu0 %v5910
          %6549 = vmatprep.subr.bf16.mxu0 %v5909
          %6550 = vmatpush1.bf16.msra.mxu0 %v5908
          %6551 = vmatprep.subr.bf16.mxu0 %v5907
          %6552 = vmatpush1.bf16.msra.mxu0 %v5906
          %6553 = vmatprep.subr.bf16.mxu0 %v5905
          %6554 = vmatpush1.bf16.msra.mxu0 %v5904
          %6555 = vmatprep.subr.bf16.mxu0 %v5903
          %6556 = vmatpush1.bf16.msra.mxu0 %v5902
          %6557 = vmatprep.subr.bf16.mxu0 %v5901
          %6558 = vmatpush1.bf16.msra.mxu0 %v5900
          %6559 = vmatprep.subr.bf16.mxu0 %v5899
          %6560 = vmatpush1.bf16.msra.mxu0 %v5898
          %6561 = vmatprep.subr.bf16.mxu0 %v5897
          %6562 = vmatpush1.bf16.msra.mxu0 %v5896
          %6563 = vmatprep.subr.bf16.mxu0 %v5927
          %6564 = vmatpush2.bf16.msra.mxu0 %v5926
          %6565 = vmatprep.subr.bf16.mxu0 %v5925
          %6566 = vmatpush2.bf16.msra.mxu0 %v5924
          %6567 = vmatprep.subr.bf16.mxu0 %v5923
          %6568 = vmatpush2.bf16.msra.mxu0 %v5922
          %6569 = vmatprep.subr.bf16.mxu0 %v5921
          %6570 = vmatpush2.bf16.msra.mxu0 %v5920
          %6571 = vmatprep.subr.bf16.mxu0 %v5919
          %6572 = vmatpush2.bf16.msra.mxu0 %v5918
          %6573 = vmatprep.subr.bf16.mxu0 %v5917
          %6574 = vmatpush2.bf16.msra.mxu0 %v5916
          %6575 = vmatprep.subr.bf16.mxu0 %v5915
          %6576 = vmatpush2.bf16.msra.mxu0 %v5914
          %6577 = vmatprep.subr.bf16.mxu0 %v5913
          %6578 = vmatpush2.bf16.msra.mxu0 %v5912
          %6579 = vmatprep.mubr.bf16.mxu0 %v6367
          %6580 = vmatmul.mubr.bf16.gmra.mxu0 %v6366
          %v6581 = vpop.f32.mrf.mxu0
          %v6582 = vadd.f32 %v6541, %v6581
          %v6583 = vpop.f32.mrf.mxu0
          %v6584 = vadd.f32 %v6543, %v6583
          %v6585 = vpop.f32.mrf.mxu0
          %v6586 = vpop.f32.mrf.mxu0
          %6587 = vdwg.mxu0
          %6588 = vmatprep.subr.bf16.mxu0 %v5943
          %6589 = vmatpush1.bf16.msra.mxu0 %v5942
          %6590 = vmatprep.subr.bf16.mxu0 %v5941
          %6591 = vmatpush1.bf16.msra.mxu0 %v5940
          %6592 = vmatprep.subr.bf16.mxu0 %v5939
          %6593 = vmatpush1.bf16.msra.mxu0 %v5938
          %6594 = vmatprep.subr.bf16.mxu0 %v5937
          %6595 = vmatpush1.bf16.msra.mxu0 %v5936
          %6596 = vmatprep.subr.bf16.mxu0 %v5935
          %6597 = vmatpush1.bf16.msra.mxu0 %v5934
          %6598 = vmatprep.subr.bf16.mxu0 %v5933
          %6599 = vmatpush1.bf16.msra.mxu0 %v5932
          %6600 = vmatprep.subr.bf16.mxu0 %v5931
          %6601 = vmatpush1.bf16.msra.mxu0 %v5930
          %6602 = vmatprep.subr.bf16.mxu0 %v5929
          %6603 = vmatpush1.bf16.msra.mxu0 %v5928
          %6604 = vmatprep.subr.bf16.mxu0 %v5959
          %6605 = vmatpush2.bf16.msra.mxu0 %v5958
          %6606 = vmatprep.subr.bf16.mxu0 %v5957
          %6607 = vmatpush2.bf16.msra.mxu0 %v5956
          %6608 = vmatprep.subr.bf16.mxu0 %v5955
          %6609 = vmatpush2.bf16.msra.mxu0 %v5954
          %6610 = vmatprep.subr.bf16.mxu0 %v5953
          %6611 = vmatpush2.bf16.msra.mxu0 %v5952
          %6612 = vmatprep.subr.bf16.mxu0 %v5951
          %6613 = vmatpush2.bf16.msra.mxu0 %v5950
          %6614 = vmatprep.subr.bf16.mxu0 %v5949
          %6615 = vmatpush2.bf16.msra.mxu0 %v5948
          %6616 = vmatprep.subr.bf16.mxu0 %v5947
          %6617 = vmatpush2.bf16.msra.mxu0 %v5946
          %6618 = vmatprep.subr.bf16.mxu0 %v5945
          %6619 = vmatpush2.bf16.msra.mxu0 %v5944
          %6620 = vmatprep.mubr.bf16.mxu0 %v6369
          %6621 = vmatmul.mubr.bf16.gmra.mxu0 %v6368
          %v6622 = vpop.f32.mrf.mxu0
          %v6623 = vadd.f32 %v6582, %v6622
          %v6624 = vpop.f32.mrf.mxu0
          %v6625 = vadd.f32 %v6584, %v6624
          %v6626 = vpop.f32.mrf.mxu0
          %v6627 = vpop.f32.mrf.mxu0
          %6628 = vdwg.mxu0
          %6629 = vmatprep.subr.bf16.mxu0 %v5975
          %6630 = vmatpush1.bf16.msra.mxu0 %v5974
          %6631 = vmatprep.subr.bf16.mxu0 %v5973
          %6632 = vmatpush1.bf16.msra.mxu0 %v5972
          %6633 = vmatprep.subr.bf16.mxu0 %v5971
          %6634 = vmatpush1.bf16.msra.mxu0 %v5970
          %6635 = vmatprep.subr.bf16.mxu0 %v5969
          %6636 = vmatpush1.bf16.msra.mxu0 %v5968
          %6637 = vmatprep.subr.bf16.mxu0 %v5967
          %6638 = vmatpush1.bf16.msra.mxu0 %v5966
          %6639 = vmatprep.subr.bf16.mxu0 %v5965
          %6640 = vmatpush1.bf16.msra.mxu0 %v5964
          %6641 = vmatprep.subr.bf16.mxu0 %v5963
          %6642 = vmatpush1.bf16.msra.mxu0 %v5962
          %6643 = vmatprep.subr.bf16.mxu0 %v5961
          %6644 = vmatpush1.bf16.msra.mxu0 %v5960
          %6645 = vmatprep.subr.bf16.mxu0 %v5991
          %6646 = vmatpush2.bf16.msra.mxu0 %v5990
          %6647 = vmatprep.subr.bf16.mxu0 %v5989
          %6648 = vmatpush2.bf16.msra.mxu0 %v5988
          %6649 = vmatprep.subr.bf16.mxu0 %v5987
          %6650 = vmatpush2.bf16.msra.mxu0 %v5986
          %6651 = vmatprep.subr.bf16.mxu0 %v5985
          %6652 = vmatpush2.bf16.msra.mxu0 %v5984
          %6653 = vmatprep.subr.bf16.mxu0 %v5983
          %6654 = vmatpush2.bf16.msra.mxu0 %v5982
          %6655 = vmatprep.subr.bf16.mxu0 %v5981
          %6656 = vmatpush2.bf16.msra.mxu0 %v5980
          %6657 = vmatprep.subr.bf16.mxu0 %v5979
          %6658 = vmatpush2.bf16.msra.mxu0 %v5978
          %6659 = vmatprep.subr.bf16.mxu0 %v5977
          %6660 = vmatpush2.bf16.msra.mxu0 %v5976
          %6661 = vmatprep.mubr.bf16.mxu0 %v6371
          %6662 = vmatmul.mubr.bf16.gmra.mxu0 %v6370
          %v6663 = vpop.f32.mrf.mxu0
          %v6664 = vadd.f32 %v6623, %v6663
          %v6665 = vpop.f32.mrf.mxu0
          %v6666 = vadd.f32 %v6625, %v6665
          %v6667 = vpop.f32.mrf.mxu0
          %v6668 = vpop.f32.mrf.mxu0
          %6669 = vdwg.mxu0
          %6670 = vmatprep.subr.bf16.mxu0 %v6007
          %6671 = vmatpush1.bf16.msra.mxu0 %v6006
          %6672 = vmatprep.subr.bf16.mxu0 %v6005
          %6673 = vmatpush1.bf16.msra.mxu0 %v6004
          %6674 = vmatprep.subr.bf16.mxu0 %v6003
          %6675 = vmatpush1.bf16.msra.mxu0 %v6002
          %6676 = vmatprep.subr.bf16.mxu0 %v6001
          %6677 = vmatpush1.bf16.msra.mxu0 %v6000
          %6678 = vmatprep.subr.bf16.mxu0 %v5999
          %6679 = vmatpush1.bf16.msra.mxu0 %v5998
          %6680 = vmatprep.subr.bf16.mxu0 %v5997
          %6681 = vmatpush1.bf16.msra.mxu0 %v5996
          %6682 = vmatprep.subr.bf16.mxu0 %v5995
          %6683 = vmatpush1.bf16.msra.mxu0 %v5994
          %6684 = vmatprep.subr.bf16.mxu0 %v5993
          %6685 = vmatpush1.bf16.msra.mxu0 %v5992
          %6686 = vmatprep.subr.bf16.mxu0 %v6023
          %6687 = vmatpush2.bf16.msra.mxu0 %v6022
          %6688 = vmatprep.subr.bf16.mxu0 %v6021
          %6689 = vmatpush2.bf16.msra.mxu0 %v6020
          %6690 = vmatprep.subr.bf16.mxu0 %v6019
          %6691 = vmatpush2.bf16.msra.mxu0 %v6018
          %6692 = vmatprep.subr.bf16.mxu0 %v6017
          %6693 = vmatpush2.bf16.msra.mxu0 %v6016
          %6694 = vmatprep.subr.bf16.mxu0 %v6015
          %6695 = vmatpush2.bf16.msra.mxu0 %v6014
          %6696 = vmatprep.subr.bf16.mxu0 %v6013
          %6697 = vmatpush2.bf16.msra.mxu0 %v6012
          %6698 = vmatprep.subr.bf16.mxu0 %v6011
          %6699 = vmatpush2.bf16.msra.mxu0 %v6010
          %6700 = vmatprep.subr.bf16.mxu0 %v6009
          %6701 = vmatpush2.bf16.msra.mxu0 %v6008
          %6702 = vmatprep.mubr.bf16.mxu0 %v6373
          %6703 = vmatmul.mubr.bf16.gmra.mxu0 %v6372
          %v6704 = vpop.f32.mrf.mxu0
          %v6705 = vadd.f32 %v6664, %v6704
          %v6706 = vpop.f32.mrf.mxu0
          %v6707 = vadd.f32 %v6666, %v6706
          %v6708 = vpop.f32.mrf.mxu0
          %v6709 = vpop.f32.mrf.mxu0
          %6710 = vdwg.mxu0
          %6711 = vmatprep.subr.bf16.mxu0 %v6039
          %6712 = vmatpush1.bf16.msra.mxu0 %v6038
          %6713 = vmatprep.subr.bf16.mxu0 %v6037
          %6714 = vmatpush1.bf16.msra.mxu0 %v6036
          %6715 = vmatprep.subr.bf16.mxu0 %v6035
          %6716 = vmatpush1.bf16.msra.mxu0 %v6034
          %6717 = vmatprep.subr.bf16.mxu0 %v6033
          %6718 = vmatpush1.bf16.msra.mxu0 %v6032
          %6719 = vmatprep.subr.bf16.mxu0 %v6031
          %6720 = vmatpush1.bf16.msra.mxu0 %v6030
          %6721 = vmatprep.subr.bf16.mxu0 %v6029
          %6722 = vmatpush1.bf16.msra.mxu0 %v6028
          %6723 = vmatprep.subr.bf16.mxu0 %v6027
          %6724 = vmatpush1.bf16.msra.mxu0 %v6026
          %6725 = vmatprep.subr.bf16.mxu0 %v6025
          %6726 = vmatpush1.bf16.msra.mxu0 %v6024
          %6727 = vmatprep.subr.bf16.mxu0 %v6055
          %6728 = vmatpush2.bf16.msra.mxu0 %v6054
          %6729 = vmatprep.subr.bf16.mxu0 %v6053
          %6730 = vmatpush2.bf16.msra.mxu0 %v6052
          %6731 = vmatprep.subr.bf16.mxu0 %v6051
          %6732 = vmatpush2.bf16.msra.mxu0 %v6050
          %6733 = vmatprep.subr.bf16.mxu0 %v6049
          %6734 = vmatpush2.bf16.msra.mxu0 %v6048
          %6735 = vmatprep.subr.bf16.mxu0 %v6047
          %6736 = vmatpush2.bf16.msra.mxu0 %v6046
          %6737 = vmatprep.subr.bf16.mxu0 %v6045
          %6738 = vmatpush2.bf16.msra.mxu0 %v6044
          %6739 = vmatprep.subr.bf16.mxu0 %v6043
          %6740 = vmatpush2.bf16.msra.mxu0 %v6042
          %6741 = vmatprep.subr.bf16.mxu0 %v6041
          %6742 = vmatpush2.bf16.msra.mxu0 %v6040
          %6743 = vmatprep.mubr.bf16.mxu0 %v6375
          %6744 = vmatmul.mubr.bf16.gmra.mxu0 %v6374
          %v6745 = vpop.f32.mrf.mxu0
          %v6746 = vadd.f32 %v6705, %v6745
          %v6747 = vpop.f32.mrf.mxu0
          %v6748 = vadd.f32 %v6707, %v6747
          %v6749 = vpop.f32.mrf.mxu0
          %v6750 = vpop.f32.mrf.mxu0
          %6751 = vdwg.mxu0
          %6752 = vmatprep.subr.bf16.mxu0 %v6071
          %6753 = vmatpush1.bf16.msra.mxu0 %v6070
          %6754 = vmatprep.subr.bf16.mxu0 %v6069
          %6755 = vmatpush1.bf16.msra.mxu0 %v6068
          %6756 = vmatprep.subr.bf16.mxu0 %v6067
          %6757 = vmatpush1.bf16.msra.mxu0 %v6066
          %6758 = vmatprep.subr.bf16.mxu0 %v6065
          %6759 = vmatpush1.bf16.msra.mxu0 %v6064
          %6760 = vmatprep.subr.bf16.mxu0 %v6063
          %6761 = vmatpush1.bf16.msra.mxu0 %v6062
          %6762 = vmatprep.subr.bf16.mxu0 %v6061
          %6763 = vmatpush1.bf16.msra.mxu0 %v6060
          %6764 = vmatprep.subr.bf16.mxu0 %v6059
          %6765 = vmatpush1.bf16.msra.mxu0 %v6058
          %6766 = vmatprep.subr.bf16.mxu0 %v6057
          %6767 = vmatpush1.bf16.msra.mxu0 %v6056
          %6768 = vmatprep.subr.bf16.mxu0 %v6087
          %6769 = vmatpush2.bf16.msra.mxu0 %v6086
          %6770 = vmatprep.subr.bf16.mxu0 %v6085
          %6771 = vmatpush2.bf16.msra.mxu0 %v6084
          %6772 = vmatprep.subr.bf16.mxu0 %v6083
          %6773 = vmatpush2.bf16.msra.mxu0 %v6082
          %6774 = vmatprep.subr.bf16.mxu0 %v6081
          %6775 = vmatpush2.bf16.msra.mxu0 %v6080
          %6776 = vmatprep.subr.bf16.mxu0 %v6079
          %6777 = vmatpush2.bf16.msra.mxu0 %v6078
          %6778 = vmatprep.subr.bf16.mxu0 %v6077
          %6779 = vmatpush2.bf16.msra.mxu0 %v6076
          %6780 = vmatprep.subr.bf16.mxu0 %v6075
          %6781 = vmatpush2.bf16.msra.mxu0 %v6074
          %6782 = vmatprep.subr.bf16.mxu0 %v6073
          %6783 = vmatpush2.bf16.msra.mxu0 %v6072
          %6784 = vmatprep.mubr.bf16.mxu0 %v6377
          %6785 = vmatmul.mubr.bf16.gmra.mxu0 %v6376
          %v6786 = vpop.f32.mrf.mxu0
          %v6787 = vadd.f32 %v6746, %v6786
          %v6788 = vpop.f32.mrf.mxu0
          %v6789 = vadd.f32 %v6748, %v6788
          %v6790 = vpop.f32.mrf.mxu0
          %v6791 = vpop.f32.mrf.mxu0
          %6792 = vdwg.mxu0
          %6793 = vmatprep.subr.bf16.mxu0 %v6103
          %6794 = vmatpush1.bf16.msra.mxu0 %v6102
          %6795 = vmatprep.subr.bf16.mxu0 %v6101
          %6796 = vmatpush1.bf16.msra.mxu0 %v6100
          %6797 = vmatprep.subr.bf16.mxu0 %v6099
          %6798 = vmatpush1.bf16.msra.mxu0 %v6098
          %6799 = vmatprep.subr.bf16.mxu0 %v6097
          %6800 = vmatpush1.bf16.msra.mxu0 %v6096
          %6801 = vmatprep.subr.bf16.mxu0 %v6095
          %6802 = vmatpush1.bf16.msra.mxu0 %v6094
          %6803 = vmatprep.subr.bf16.mxu0 %v6093
          %6804 = vmatpush1.bf16.msra.mxu0 %v6092
          %6805 = vmatprep.subr.bf16.mxu0 %v6091
          %6806 = vmatpush1.bf16.msra.mxu0 %v6090
          %6807 = vmatprep.subr.bf16.mxu0 %v6089
          %6808 = vmatpush1.bf16.msra.mxu0 %v6088
          %6809 = vmatprep.subr.bf16.mxu0 %v6119
          %6810 = vmatpush2.bf16.msra.mxu0 %v6118
          %6811 = vmatprep.subr.bf16.mxu0 %v6117
          %6812 = vmatpush2.bf16.msra.mxu0 %v6116
          %6813 = vmatprep.subr.bf16.mxu0 %v6115
          %6814 = vmatpush2.bf16.msra.mxu0 %v6114
          %6815 = vmatprep.subr.bf16.mxu0 %v6113
          %6816 = vmatpush2.bf16.msra.mxu0 %v6112
          %6817 = vmatprep.subr.bf16.mxu0 %v6111
          %6818 = vmatpush2.bf16.msra.mxu0 %v6110
          %6819 = vmatprep.subr.bf16.mxu0 %v6109
          %6820 = vmatpush2.bf16.msra.mxu0 %v6108
          %6821 = vmatprep.subr.bf16.mxu0 %v6107
          %6822 = vmatpush2.bf16.msra.mxu0 %v6106
          %6823 = vmatprep.subr.bf16.mxu0 %v6105
          %6824 = vmatpush2.bf16.msra.mxu0 %v6104
          %6825 = vmatprep.mubr.bf16.mxu0 %v6379
          %6826 = vmatmul.mubr.bf16.gmra.mxu0 %v6378
          %v6827 = vpop.f32.mrf.mxu0
          %v6828 = vadd.f32 %v6787, %v6827
          %v6829 = vpop.f32.mrf.mxu0
          %v6830 = vadd.f32 %v6789, %v6829
          %v6831 = vpop.f32.mrf.mxu0
          %v6832 = vpop.f32.mrf.mxu0
          %6833 = vdwg.mxu0
          %6834 = vmatprep.subr.bf16.mxu0 %v6135
          %6835 = vmatpush1.bf16.msra.mxu0 %v6134
          %6836 = vmatprep.subr.bf16.mxu0 %v6133
          %6837 = vmatpush1.bf16.msra.mxu0 %v6132
          %6838 = vmatprep.subr.bf16.mxu0 %v6131
          %6839 = vmatpush1.bf16.msra.mxu0 %v6130
          %6840 = vmatprep.subr.bf16.mxu0 %v6129
          %6841 = vmatpush1.bf16.msra.mxu0 %v6128
          %6842 = vmatprep.subr.bf16.mxu0 %v6127
          %6843 = vmatpush1.bf16.msra.mxu0 %v6126
          %6844 = vmatprep.subr.bf16.mxu0 %v6125
          %6845 = vmatpush1.bf16.msra.mxu0 %v6124
          %6846 = vmatprep.subr.bf16.mxu0 %v6123
          %6847 = vmatpush1.bf16.msra.mxu0 %v6122
          %6848 = vmatprep.subr.bf16.mxu0 %v6121
          %6849 = vmatpush1.bf16.msra.mxu0 %v6120
          %6850 = vmatprep.subr.bf16.mxu0 %v6151
          %6851 = vmatpush2.bf16.msra.mxu0 %v6150
          %6852 = vmatprep.subr.bf16.mxu0 %v6149
          %6853 = vmatpush2.bf16.msra.mxu0 %v6148
          %6854 = vmatprep.subr.bf16.mxu0 %v6147
          %6855 = vmatpush2.bf16.msra.mxu0 %v6146
          %6856 = vmatprep.subr.bf16.mxu0 %v6145
          %6857 = vmatpush2.bf16.msra.mxu0 %v6144
          %6858 = vmatprep.subr.bf16.mxu0 %v6143
          %6859 = vmatpush2.bf16.msra.mxu0 %v6142
          %6860 = vmatprep.subr.bf16.mxu0 %v6141
          %6861 = vmatpush2.bf16.msra.mxu0 %v6140
          %6862 = vmatprep.subr.bf16.mxu0 %v6139
          %6863 = vmatpush2.bf16.msra.mxu0 %v6138
          %6864 = vmatprep.subr.bf16.mxu0 %v6137
          %6865 = vmatpush2.bf16.msra.mxu0 %v6136
          %6866 = vmatprep.mubr.bf16.mxu0 %v6381
          %6867 = vmatmul.mubr.bf16.gmra.mxu0 %v6380
          %v6868 = vpop.f32.mrf.mxu0
          %v6869 = vadd.f32 %v6828, %v6868
          %v6870 = vpop.f32.mrf.mxu0
          %v6871 = vadd.f32 %v6830, %v6870
          %v6872 = vpop.f32.mrf.mxu0
          %v6873 = vpop.f32.mrf.mxu0
          %6874 = vdwg.mxu0
          %6875 = vmatprep.subr.bf16.mxu0 %v6167
          %6876 = vmatpush1.bf16.msra.mxu0 %v6166
          %6877 = vmatprep.subr.bf16.mxu0 %v6165
          %6878 = vmatpush1.bf16.msra.mxu0 %v6164
          %6879 = vmatprep.subr.bf16.mxu0 %v6163
          %6880 = vmatpush1.bf16.msra.mxu0 %v6162
          %6881 = vmatprep.subr.bf16.mxu0 %v6161
          %6882 = vmatpush1.bf16.msra.mxu0 %v6160
          %6883 = vmatprep.subr.bf16.mxu0 %v6159
          %6884 = vmatpush1.bf16.msra.mxu0 %v6158
          %6885 = vmatprep.subr.bf16.mxu0 %v6157
          %6886 = vmatpush1.bf16.msra.mxu0 %v6156
          %6887 = vmatprep.subr.bf16.mxu0 %v6155
          %6888 = vmatpush1.bf16.msra.mxu0 %v6154
          %6889 = vmatprep.subr.bf16.mxu0 %v6153
          %6890 = vmatpush1.bf16.msra.mxu0 %v6152
          %6891 = vmatprep.subr.bf16.mxu0 %v6183
          %6892 = vmatpush2.bf16.msra.mxu0 %v6182
          %6893 = vmatprep.subr.bf16.mxu0 %v6181
          %6894 = vmatpush2.bf16.msra.mxu0 %v6180
          %6895 = vmatprep.subr.bf16.mxu0 %v6179
          %6896 = vmatpush2.bf16.msra.mxu0 %v6178
          %6897 = vmatprep.subr.bf16.mxu0 %v6177
          %6898 = vmatpush2.bf16.msra.mxu0 %v6176
          %6899 = vmatprep.subr.bf16.mxu0 %v6175
          %6900 = vmatpush2.bf16.msra.mxu0 %v6174
          %6901 = vmatprep.subr.bf16.mxu0 %v6173
          %6902 = vmatpush2.bf16.msra.mxu0 %v6172
          %6903 = vmatprep.subr.bf16.mxu0 %v6171
          %6904 = vmatpush2.bf16.msra.mxu0 %v6170
          %6905 = vmatprep.subr.bf16.mxu0 %v6169
          %6906 = vmatpush2.bf16.msra.mxu0 %v6168
          %6907 = vmatprep.mubr.bf16.mxu0 %v6383
          %6908 = vmatmul.mubr.bf16.gmra.mxu0 %v6382
          %v6909 = vpop.f32.mrf.mxu0
          %v6910 = vadd.f32 %v6869, %v6909
          %v6911 = vpop.f32.mrf.mxu0
          %v6912 = vadd.f32 %v6871, %v6911
          %v6913 = vpop.f32.mrf.mxu0
          %v6914 = vpop.f32.mrf.mxu0
          %6915 = vdwg.mxu0
          %6916 = vmatprep.subr.bf16.mxu0 %v6199
          %6917 = vmatpush1.bf16.msra.mxu0 %v6198
          %6918 = vmatprep.subr.bf16.mxu0 %v6197
          %6919 = vmatpush1.bf16.msra.mxu0 %v6196
          %6920 = vmatprep.subr.bf16.mxu0 %v6195
          %6921 = vmatpush1.bf16.msra.mxu0 %v6194
          %6922 = vmatprep.subr.bf16.mxu0 %v6193
          %6923 = vmatpush1.bf16.msra.mxu0 %v6192
          %6924 = vmatprep.subr.bf16.mxu0 %v6191
          %6925 = vmatpush1.bf16.msra.mxu0 %v6190
          %6926 = vmatprep.subr.bf16.mxu0 %v6189
          %6927 = vmatpush1.bf16.msra.mxu0 %v6188
          %6928 = vmatprep.subr.bf16.mxu0 %v6187
          %6929 = vmatpush1.bf16.msra.mxu0 %v6186
          %6930 = vmatprep.subr.bf16.mxu0 %v6185
          %6931 = vmatpush1.bf16.msra.mxu0 %v6184
          %6932 = vmatprep.subr.bf16.mxu0 %v6215
          %6933 = vmatpush2.bf16.msra.mxu0 %v6214
          %6934 = vmatprep.subr.bf16.mxu0 %v6213
          %6935 = vmatpush2.bf16.msra.mxu0 %v6212
          %6936 = vmatprep.subr.bf16.mxu0 %v6211
          %6937 = vmatpush2.bf16.msra.mxu0 %v6210
          %6938 = vmatprep.subr.bf16.mxu0 %v6209
          %6939 = vmatpush2.bf16.msra.mxu0 %v6208
          %6940 = vmatprep.subr.bf16.mxu0 %v6207
          %6941 = vmatpush2.bf16.msra.mxu0 %v6206
          %6942 = vmatprep.subr.bf16.mxu0 %v6205
          %6943 = vmatpush2.bf16.msra.mxu0 %v6204
          %6944 = vmatprep.subr.bf16.mxu0 %v6203
          %6945 = vmatpush2.bf16.msra.mxu0 %v6202
          %6946 = vmatprep.subr.bf16.mxu0 %v6201
          %6947 = vmatpush2.bf16.msra.mxu0 %v6200
          %6948 = vmatprep.mubr.bf16.mxu0 %v6385
          %6949 = vmatmul.mubr.bf16.gmra.mxu0 %v6384
          %v6950 = vpop.f32.mrf.mxu0
          %v6951 = vadd.f32 %v6910, %v6950
          %v6952 = vpop.f32.mrf.mxu0
          %v6953 = vadd.f32 %v6912, %v6952
          %v6954 = vpop.f32.mrf.mxu0
          %v6955 = vpop.f32.mrf.mxu0
          %6956 = vdwg.mxu0
          %6957 = vmatprep.subr.bf16.mxu0 %v6231
          %6958 = vmatpush1.bf16.msra.mxu0 %v6230
          %6959 = vmatprep.subr.bf16.mxu0 %v6229
          %6960 = vmatpush1.bf16.msra.mxu0 %v6228
          %6961 = vmatprep.subr.bf16.mxu0 %v6227
          %6962 = vmatpush1.bf16.msra.mxu0 %v6226
          %6963 = vmatprep.subr.bf16.mxu0 %v6225
          %6964 = vmatpush1.bf16.msra.mxu0 %v6224
          %6965 = vmatprep.subr.bf16.mxu0 %v6223
          %6966 = vmatpush1.bf16.msra.mxu0 %v6222
          %6967 = vmatprep.subr.bf16.mxu0 %v6221
          %6968 = vmatpush1.bf16.msra.mxu0 %v6220
          %6969 = vmatprep.subr.bf16.mxu0 %v6219
          %6970 = vmatpush1.bf16.msra.mxu0 %v6218
          %6971 = vmatprep.subr.bf16.mxu0 %v6217
          %6972 = vmatpush1.bf16.msra.mxu0 %v6216
          %6973 = vmatprep.subr.bf16.mxu0 %v6247
          %6974 = vmatpush2.bf16.msra.mxu0 %v6246
          %6975 = vmatprep.subr.bf16.mxu0 %v6245
          %6976 = vmatpush2.bf16.msra.mxu0 %v6244
          %6977 = vmatprep.subr.bf16.mxu0 %v6243
          %6978 = vmatpush2.bf16.msra.mxu0 %v6242
          %6979 = vmatprep.subr.bf16.mxu0 %v6241
          %6980 = vmatpush2.bf16.msra.mxu0 %v6240
          %6981 = vmatprep.subr.bf16.mxu0 %v6239
          %6982 = vmatpush2.bf16.msra.mxu0 %v6238
          %6983 = vmatprep.subr.bf16.mxu0 %v6237
          %6984 = vmatpush2.bf16.msra.mxu0 %v6236
          %6985 = vmatprep.subr.bf16.mxu0 %v6235
          %6986 = vmatpush2.bf16.msra.mxu0 %v6234
          %6987 = vmatprep.subr.bf16.mxu0 %v6233
          %6988 = vmatpush2.bf16.msra.mxu0 %v6232
          %6989 = vmatprep.mubr.bf16.mxu0 %v6387
          %6990 = vmatmul.mubr.bf16.gmra.mxu0 %v6386
          %v6991 = vpop.f32.mrf.mxu0
          %v6992 = vadd.f32 %v6951, %v6991
          %v6993 = vpop.f32.mrf.mxu0
          %v6994 = vadd.f32 %v6953, %v6993
          %v6995 = vpop.f32.mrf.mxu0
          %v6996 = vpop.f32.mrf.mxu0
          %6997 = vdwg.mxu0
          %6998 = vmatprep.subr.bf16.mxu0 %v6263
          %6999 = vmatpush1.bf16.msra.mxu0 %v6262
          %7000 = vmatprep.subr.bf16.mxu0 %v6261
          %7001 = vmatpush1.bf16.msra.mxu0 %v6260
          %7002 = vmatprep.subr.bf16.mxu0 %v6259
          %7003 = vmatpush1.bf16.msra.mxu0 %v6258
          %7004 = vmatprep.subr.bf16.mxu0 %v6257
          %7005 = vmatpush1.bf16.msra.mxu0 %v6256
          %7006 = vmatprep.subr.bf16.mxu0 %v6255
          %7007 = vmatpush1.bf16.msra.mxu0 %v6254
          %7008 = vmatprep.subr.bf16.mxu0 %v6253
          %7009 = vmatpush1.bf16.msra.mxu0 %v6252
          %7010 = vmatprep.subr.bf16.mxu0 %v6251
          %7011 = vmatpush1.bf16.msra.mxu0 %v6250
          %7012 = vmatprep.subr.bf16.mxu0 %v6249
          %7013 = vmatpush1.bf16.msra.mxu0 %v6248
          %7014 = vmatprep.subr.bf16.mxu0 %v6279
          %7015 = vmatpush2.bf16.msra.mxu0 %v6278
          %7016 = vmatprep.subr.bf16.mxu0 %v6277
          %7017 = vmatpush2.bf16.msra.mxu0 %v6276
          %7018 = vmatprep.subr.bf16.mxu0 %v6275
          %7019 = vmatpush2.bf16.msra.mxu0 %v6274
          %7020 = vmatprep.subr.bf16.mxu0 %v6273
          %7021 = vmatpush2.bf16.msra.mxu0 %v6272
          %7022 = vmatprep.subr.bf16.mxu0 %v6271
          %7023 = vmatpush2.bf16.msra.mxu0 %v6270
          %7024 = vmatprep.subr.bf16.mxu0 %v6269
          %7025 = vmatpush2.bf16.msra.mxu0 %v6268
          %7026 = vmatprep.subr.bf16.mxu0 %v6267
          %7027 = vmatpush2.bf16.msra.mxu0 %v6266
          %7028 = vmatprep.subr.bf16.mxu0 %v6265
          %7029 = vmatpush2.bf16.msra.mxu0 %v6264
          %7030 = vmatprep.mubr.bf16.mxu0 %v6389
          %7031 = vmatmul.mubr.bf16.gmra.mxu0 %v6388
          %v7032 = vpop.f32.mrf.mxu0
          %v7033 = vadd.f32 %v6992, %v7032
          %v7034 = vpop.f32.mrf.mxu0
          %v7035 = vadd.f32 %v6994, %v7034
          %v7036 = vpop.f32.mrf.mxu0
          %v7037 = vpop.f32.mrf.mxu0
          %7038 = vdwg.mxu0
          %7039 = vmatprep.subr.bf16.mxu0 %v6295
          %7040 = vmatpush1.bf16.msra.mxu0 %v6294
          %7041 = vmatprep.subr.bf16.mxu0 %v6293
          %7042 = vmatpush1.bf16.msra.mxu0 %v6292
          %7043 = vmatprep.subr.bf16.mxu0 %v6291
          %7044 = vmatpush1.bf16.msra.mxu0 %v6290
          %7045 = vmatprep.subr.bf16.mxu0 %v6289
          %7046 = vmatpush1.bf16.msra.mxu0 %v6288
          %7047 = vmatprep.subr.bf16.mxu0 %v6287
          %7048 = vmatpush1.bf16.msra.mxu0 %v6286
          %7049 = vmatprep.subr.bf16.mxu0 %v6285
          %7050 = vmatpush1.bf16.msra.mxu0 %v6284
          %7051 = vmatprep.subr.bf16.mxu0 %v6283
          %7052 = vmatpush1.bf16.msra.mxu0 %v6282
          %7053 = vmatprep.subr.bf16.mxu0 %v6281
          %7054 = vmatpush1.bf16.msra.mxu0 %v6280
          %7055 = vmatprep.subr.bf16.mxu0 %v6311
          %7056 = vmatpush2.bf16.msra.mxu0 %v6310
          %7057 = vmatprep.subr.bf16.mxu0 %v6309
          %7058 = vmatpush2.bf16.msra.mxu0 %v6308
          %7059 = vmatprep.subr.bf16.mxu0 %v6307
          %7060 = vmatpush2.bf16.msra.mxu0 %v6306
          %7061 = vmatprep.subr.bf16.mxu0 %v6305
          %7062 = vmatpush2.bf16.msra.mxu0 %v6304
          %7063 = vmatprep.subr.bf16.mxu0 %v6303
          %7064 = vmatpush2.bf16.msra.mxu0 %v6302
          %7065 = vmatprep.subr.bf16.mxu0 %v6301
          %7066 = vmatpush2.bf16.msra.mxu0 %v6300
          %7067 = vmatprep.subr.bf16.mxu0 %v6299
          %7068 = vmatpush2.bf16.msra.mxu0 %v6298
          %7069 = vmatprep.subr.bf16.mxu0 %v6297
          %7070 = vmatpush2.bf16.msra.mxu0 %v6296
          %7071 = vmatprep.mubr.bf16.mxu0 %v6391
          %7072 = vmatmul.mubr.bf16.gmra.mxu0 %v6390
          %v7073 = vpop.f32.mrf.mxu0
          %v7074 = vadd.f32 %v7033, %v7073
          %v7075 = vpop.f32.mrf.mxu0
          %v7076 = vadd.f32 %v7035, %v7075
          %v7077 = vpop.f32.mrf.mxu0
          %v7078 = vpop.f32.mrf.mxu0
          %7079 = vdwg.mxu0
          %v7080 = vld [vmem:[#allocation18] sm:$0x3]
          %v7082 = vlaneseq
          %v7083 = vshrl.u32 %v7082, 7
          %v7084 = vsub.s32 0, %v7083
          %v7085 = vrot.slane %v7080, %v7084
          %v7086 = vlaneseq
          %v7087 = vshrl.u32 %v7086, 7
          %v7088 = vsub.s32 1, %v7087
          %v7089 = vrot.slane %v7080, %v7088
          %v7092 = vmul.f32 %v7074, %v7085
          %v7093 = vmul.f32 %v7076, %v7089
          %v7094 = vld [vmem:[#allocation20] sm:$0x3]
          %v7096 = vlaneseq
          %v7097 = vshrl.u32 %v7096, 7
          %v7098 = vsub.s32 0, %v7097
          %v7099 = vrot.slane %v7094, %v7098
          %v7100 = vlaneseq
          %v7101 = vshrl.u32 %v7100, 7
          %v7102 = vsub.s32 1, %v7101
          %v7103 = vrot.slane %v7094, %v7102
          %v7106 = vadd.f32 %v7092, %v7099
          %v7107 = vadd.f32 %v7093, %v7103
          %v7108 = vmax.f32 %v7106, 0.0
          %v7109 = vmax.f32 %v7107, 0.0
          %v7110 = vpack.c.bf16 %v7108, %v7108
          %v7111 = vpack.c.bf16 %v7109, %v7109
          %v7114 = vunpack.c.l.b16 %v7110
          %v7115 = vunpack.c.l.b16 %v7111
          %v7116 = vpack.c.b16 %v7115, %v7114
          %7118 = vst [vmem:[#allocation2] sm:$0xff] %v7116
          %vm7119 = vcmask 7168
          %7120 = vst.msk [vmem:[#allocation5] sm:$0xff] %vm7119, -inf
          %7121 = vst.msk [vmem:[#allocation6] sm:$0xff] %vm7119, 0
        $region132: #{mim_processor_forward.1} parent=79 // pred_fallthru
          _
        %v7122 = vld [vmem:[%s647] sm:$0xff]
        %v7123 = vld [vmem:[%s647 + $0x8] sm:$0xff]
        %v7124 = vld [vmem:[%s647 + $0x10] sm:$0xff]
        %v7125 = vld [vmem:[%s647 + $0x18] sm:$0xff]
        %v7126 = vld [vmem:[%s647 + $0x20] sm:$0xff]
        %v7127 = vld [vmem:[%s647 + $0x28] sm:$0xff]
        %v7128 = vld [vmem:[%s647 + $0x30] sm:$0xff]
        %v7129 = vld [vmem:[%s647 + $0x38] sm:$0xff]
        %v7130 = vld [vmem:[%s647 + $0x40] sm:$0xff]
        %v7131 = vld [vmem:[%s647 + $0x48] sm:$0xff]
        %v7132 = vld [vmem:[%s647 + $0x50] sm:$0xff]
        %v7133 = vld [vmem:[%s647 + $0x58] sm:$0xff]
        %v7134 = vld [vmem:[%s647 + $0x60] sm:$0xff]
        %v7135 = vld [vmem:[%s647 + $0x68] sm:$0xff]
        %v7136 = vld [vmem:[%s647 + $0x70] sm:$0xff]
        %v7137 = vld [vmem:[%s647 + $0x78] sm:$0xff]
        %v7138 = vld [vmem:[%s647 + $0x80] sm:$0xff]
        %v7139 = vld [vmem:[%s647 + $0x88] sm:$0xff]
        %v7140 = vld [vmem:[%s647 + $0x90] sm:$0xff]
        %v7141 = vld [vmem:[%s647 + $0x98] sm:$0xff]
        %v7142 = vld [vmem:[%s647 + $0xa0] sm:$0xff]
        %v7143 = vld [vmem:[%s647 + $0xa8] sm:$0xff]
        %v7144 = vld [vmem:[%s647 + $0xb0] sm:$0xff]
        %v7145 = vld [vmem:[%s647 + $0xb8] sm:$0xff]
        %v7146 = vld [vmem:[%s647 + $0xc0] sm:$0xff]
        %v7147 = vld [vmem:[%s647 + $0xc8] sm:$0xff]
        %v7148 = vld [vmem:[%s647 + $0xd0] sm:$0xff]
        %v7149 = vld [vmem:[%s647 + $0xd8] sm:$0xff]
        %v7150 = vld [vmem:[%s647 + $0xe0] sm:$0xff]
        %v7151 = vld [vmem:[%s647 + $0xe8] sm:$0xff]
        %v7152 = vld [vmem:[%s647 + $0xf0] sm:$0xff]
        %v7153 = vld [vmem:[%s647 + $0xf8] sm:$0xff]
        %v7154 = vld [vmem:[%s647 + $0x100] sm:$0xff]
        %v7155 = vld [vmem:[%s647 + $0x108] sm:$0xff]
        %v7156 = vld [vmem:[%s647 + $0x110] sm:$0xff]
        %v7157 = vld [vmem:[%s647 + $0x118] sm:$0xff]
        %v7158 = vld [vmem:[%s647 + $0x120] sm:$0xff]
        %v7159 = vld [vmem:[%s647 + $0x128] sm:$0xff]
        %v7160 = vld [vmem:[%s647 + $0x130] sm:$0xff]
        %v7161 = vld [vmem:[%s647 + $0x138] sm:$0xff]
        %v7162 = vld [vmem:[%s647 + $0x140] sm:$0xff]
        %v7163 = vld [vmem:[%s647 + $0x148] sm:$0xff]
        %v7164 = vld [vmem:[%s647 + $0x150] sm:$0xff]
        %v7165 = vld [vmem:[%s647 + $0x158] sm:$0xff]
        %v7166 = vld [vmem:[%s647 + $0x160] sm:$0xff]
        %v7167 = vld [vmem:[%s647 + $0x168] sm:$0xff]
        %v7168 = vld [vmem:[%s647 + $0x170] sm:$0xff]
        %v7169 = vld [vmem:[%s647 + $0x178] sm:$0xff]
        %v7170 = vld [vmem:[%s647 + $0x180] sm:$0xff]
        %v7171 = vld [vmem:[%s647 + $0x188] sm:$0xff]
        %v7172 = vld [vmem:[%s647 + $0x190] sm:$0xff]
        %v7173 = vld [vmem:[%s647 + $0x198] sm:$0xff]
        %v7174 = vld [vmem:[%s647 + $0x1a0] sm:$0xff]
        %v7175 = vld [vmem:[%s647 + $0x1a8] sm:$0xff]
        %v7176 = vld [vmem:[%s647 + $0x1b0] sm:$0xff]
        %v7177 = vld [vmem:[%s647 + $0x1b8] sm:$0xff]
        %v7178 = vld [vmem:[%s647 + $0x1c0] sm:$0xff]
        %v7179 = vld [vmem:[%s647 + $0x1c8] sm:$0xff]
        %v7180 = vld [vmem:[%s647 + $0x1d0] sm:$0xff]
        %v7181 = vld [vmem:[%s647 + $0x1d8] sm:$0xff]
        %v7182 = vld [vmem:[%s647 + $0x1e0] sm:$0xff]
        %v7183 = vld [vmem:[%s647 + $0x1e8] sm:$0xff]
        %v7184 = vld [vmem:[%s647 + $0x1f0] sm:$0xff]
        %v7185 = vld [vmem:[%s647 + $0x1f8] sm:$0xff]
        %v7186 = vld [vmem:[%s647 + $0x200] sm:$0xff]
        %v7187 = vld [vmem:[%s647 + $0x208] sm:$0xff]
        %v7188 = vld [vmem:[%s647 + $0x210] sm:$0xff]
        %v7189 = vld [vmem:[%s647 + $0x218] sm:$0xff]
        %v7190 = vld [vmem:[%s647 + $0x220] sm:$0xff]
        %v7191 = vld [vmem:[%s647 + $0x228] sm:$0xff]
        %v7192 = vld [vmem:[%s647 + $0x230] sm:$0xff]
        %v7193 = vld [vmem:[%s647 + $0x238] sm:$0xff]
        %v7194 = vld [vmem:[%s647 + $0x240] sm:$0xff]
        %v7195 = vld [vmem:[%s647 + $0x248] sm:$0xff]
        %v7196 = vld [vmem:[%s647 + $0x250] sm:$0xff]
        %v7197 = vld [vmem:[%s647 + $0x258] sm:$0xff]
        %v7198 = vld [vmem:[%s647 + $0x260] sm:$0xff]
        %v7199 = vld [vmem:[%s647 + $0x268] sm:$0xff]
        %v7200 = vld [vmem:[%s647 + $0x270] sm:$0xff]
        %v7201 = vld [vmem:[%s647 + $0x278] sm:$0xff]
        %v7202 = vld [vmem:[%s647 + $0x280] sm:$0xff]
        %v7203 = vld [vmem:[%s647 + $0x288] sm:$0xff]
        %v7204 = vld [vmem:[%s647 + $0x290] sm:$0xff]
        %v7205 = vld [vmem:[%s647 + $0x298] sm:$0xff]
        %v7206 = vld [vmem:[%s647 + $0x2a0] sm:$0xff]
        %v7207 = vld [vmem:[%s647 + $0x2a8] sm:$0xff]
        %v7208 = vld [vmem:[%s647 + $0x2b0] sm:$0xff]
        %v7209 = vld [vmem:[%s647 + $0x2b8] sm:$0xff]
        %v7210 = vld [vmem:[%s647 + $0x2c0] sm:$0xff]
        %v7211 = vld [vmem:[%s647 + $0x2c8] sm:$0xff]
        %v7212 = vld [vmem:[%s647 + $0x2d0] sm:$0xff]
        %v7213 = vld [vmem:[%s647 + $0x2d8] sm:$0xff]
        %v7214 = vld [vmem:[%s647 + $0x2e0] sm:$0xff]
        %v7215 = vld [vmem:[%s647 + $0x2e8] sm:$0xff]
        %v7216 = vld [vmem:[%s647 + $0x2f0] sm:$0xff]
        %v7217 = vld [vmem:[%s647 + $0x2f8] sm:$0xff]
        %v7218 = vld [vmem:[%s647 + $0x300] sm:$0xff]
        %v7219 = vld [vmem:[%s647 + $0x308] sm:$0xff]
        %v7220 = vld [vmem:[%s647 + $0x310] sm:$0xff]
        %v7221 = vld [vmem:[%s647 + $0x318] sm:$0xff]
        %v7222 = vld [vmem:[%s647 + $0x320] sm:$0xff]
        %v7223 = vld [vmem:[%s647 + $0x328] sm:$0xff]
        %v7224 = vld [vmem:[%s647 + $0x330] sm:$0xff]
        %v7225 = vld [vmem:[%s647 + $0x338] sm:$0xff]
        %v7226 = vld [vmem:[%s647 + $0x340] sm:$0xff]
        %v7227 = vld [vmem:[%s647 + $0x348] sm:$0xff]
        %v7228 = vld [vmem:[%s647 + $0x350] sm:$0xff]
        %v7229 = vld [vmem:[%s647 + $0x358] sm:$0xff]
        %v7230 = vld [vmem:[%s647 + $0x360] sm:$0xff]
        %v7231 = vld [vmem:[%s647 + $0x368] sm:$0xff]
        %v7232 = vld [vmem:[%s647 + $0x370] sm:$0xff]
        %v7233 = vld [vmem:[%s647 + $0x378] sm:$0xff]
        %v7234 = vld [vmem:[%s647 + $0x380] sm:$0xff]
        %v7235 = vld [vmem:[%s647 + $0x388] sm:$0xff]
        %v7236 = vld [vmem:[%s647 + $0x390] sm:$0xff]
        %v7237 = vld [vmem:[%s647 + $0x398] sm:$0xff]
        %v7238 = vld [vmem:[%s647 + $0x3a0] sm:$0xff]
        %v7239 = vld [vmem:[%s647 + $0x3a8] sm:$0xff]
        %v7240 = vld [vmem:[%s647 + $0x3b0] sm:$0xff]
        %v7241 = vld [vmem:[%s647 + $0x3b8] sm:$0xff]
        %v7242 = vld [vmem:[%s647 + $0x3c0] sm:$0xff]
        %v7243 = vld [vmem:[%s647 + $0x3c8] sm:$0xff]
        %v7244 = vld [vmem:[%s647 + $0x3d0] sm:$0xff]
        %v7245 = vld [vmem:[%s647 + $0x3d8] sm:$0xff]
        %v7246 = vld [vmem:[%s647 + $0x3e0] sm:$0xff]
        %v7247 = vld [vmem:[%s647 + $0x3e8] sm:$0xff]
        %v7248 = vld [vmem:[%s647 + $0x3f0] sm:$0xff]
        %v7249 = vld [vmem:[%s647 + $0x3f8] sm:$0xff]
        %v7250 = vld [vmem:[%s647 + $0x400] sm:$0xff]
        %v7251 = vld [vmem:[%s647 + $0x408] sm:$0xff]
        %v7252 = vld [vmem:[%s647 + $0x410] sm:$0xff]
        %v7253 = vld [vmem:[%s647 + $0x418] sm:$0xff]
        %v7254 = vld [vmem:[%s647 + $0x420] sm:$0xff]
        %v7255 = vld [vmem:[%s647 + $0x428] sm:$0xff]
        %v7256 = vld [vmem:[%s647 + $0x430] sm:$0xff]
        %v7257 = vld [vmem:[%s647 + $0x438] sm:$0xff]
        %v7258 = vld [vmem:[%s647 + $0x440] sm:$0xff]
        %v7259 = vld [vmem:[%s647 + $0x448] sm:$0xff]
        %v7260 = vld [vmem:[%s647 + $0x450] sm:$0xff]
        %v7261 = vld [vmem:[%s647 + $0x458] sm:$0xff]
        %v7262 = vld [vmem:[%s647 + $0x460] sm:$0xff]
        %v7263 = vld [vmem:[%s647 + $0x468] sm:$0xff]
        %v7264 = vld [vmem:[%s647 + $0x470] sm:$0xff]
        %v7265 = vld [vmem:[%s647 + $0x478] sm:$0xff]
        %v7266 = vld [vmem:[%s647 + $0x480] sm:$0xff]
        %v7267 = vld [vmem:[%s647 + $0x488] sm:$0xff]
        %v7268 = vld [vmem:[%s647 + $0x490] sm:$0xff]
        %v7269 = vld [vmem:[%s647 + $0x498] sm:$0xff]
        %v7270 = vld [vmem:[%s647 + $0x4a0] sm:$0xff]
        %v7271 = vld [vmem:[%s647 + $0x4a8] sm:$0xff]
        %v7272 = vld [vmem:[%s647 + $0x4b0] sm:$0xff]
        %v7273 = vld [vmem:[%s647 + $0x4b8] sm:$0xff]
        %v7274 = vld [vmem:[%s647 + $0x4c0] sm:$0xff]
        %v7275 = vld [vmem:[%s647 + $0x4c8] sm:$0xff]
        %v7276 = vld [vmem:[%s647 + $0x4d0] sm:$0xff]
        %v7277 = vld [vmem:[%s647 + $0x4d8] sm:$0xff]
        %v7278 = vld [vmem:[%s647 + $0x4e0] sm:$0xff]
        %v7279 = vld [vmem:[%s647 + $0x4e8] sm:$0xff]
        %v7280 = vld [vmem:[%s647 + $0x4f0] sm:$0xff]
        %v7281 = vld [vmem:[%s647 + $0x4f8] sm:$0xff]
        %v7282 = vld [vmem:[%s647 + $0x500] sm:$0xff]
        %v7283 = vld [vmem:[%s647 + $0x508] sm:$0xff]
        %v7284 = vld [vmem:[%s647 + $0x510] sm:$0xff]
        %v7285 = vld [vmem:[%s647 + $0x518] sm:$0xff]
        %v7286 = vld [vmem:[%s647 + $0x520] sm:$0xff]
        %v7287 = vld [vmem:[%s647 + $0x528] sm:$0xff]
        %v7288 = vld [vmem:[%s647 + $0x530] sm:$0xff]
        %v7289 = vld [vmem:[%s647 + $0x538] sm:$0xff]
        %v7290 = vld [vmem:[%s647 + $0x540] sm:$0xff]
        %v7291 = vld [vmem:[%s647 + $0x548] sm:$0xff]
        %v7292 = vld [vmem:[%s647 + $0x550] sm:$0xff]
        %v7293 = vld [vmem:[%s647 + $0x558] sm:$0xff]
        %v7294 = vld [vmem:[%s647 + $0x560] sm:$0xff]
        %v7295 = vld [vmem:[%s647 + $0x568] sm:$0xff]
        %v7296 = vld [vmem:[%s647 + $0x570] sm:$0xff]
        %v7297 = vld [vmem:[%s647 + $0x578] sm:$0xff]
        %v7298 = vld [vmem:[%s647 + $0x580] sm:$0xff]
        %v7299 = vld [vmem:[%s647 + $0x588] sm:$0xff]
        %v7300 = vld [vmem:[%s647 + $0x590] sm:$0xff]
        %v7301 = vld [vmem:[%s647 + $0x598] sm:$0xff]
        %v7302 = vld [vmem:[%s647 + $0x5a0] sm:$0xff]
        %v7303 = vld [vmem:[%s647 + $0x5a8] sm:$0xff]
        %v7304 = vld [vmem:[%s647 + $0x5b0] sm:$0xff]
        %v7305 = vld [vmem:[%s647 + $0x5b8] sm:$0xff]
        %v7306 = vld [vmem:[%s647 + $0x5c0] sm:$0xff]
        %v7307 = vld [vmem:[%s647 + $0x5c8] sm:$0xff]
        %v7308 = vld [vmem:[%s647 + $0x5d0] sm:$0xff]
        %v7309 = vld [vmem:[%s647 + $0x5d8] sm:$0xff]
        %v7310 = vld [vmem:[%s647 + $0x5e0] sm:$0xff]
        %v7311 = vld [vmem:[%s647 + $0x5e8] sm:$0xff]
        %v7312 = vld [vmem:[%s647 + $0x5f0] sm:$0xff]
        %v7313 = vld [vmem:[%s647 + $0x5f8] sm:$0xff]
        %v7314 = vld [vmem:[%s647 + $0x600] sm:$0xff]
        %v7315 = vld [vmem:[%s647 + $0x608] sm:$0xff]
        %v7316 = vld [vmem:[%s647 + $0x610] sm:$0xff]
        %v7317 = vld [vmem:[%s647 + $0x618] sm:$0xff]
        %v7318 = vld [vmem:[%s647 + $0x620] sm:$0xff]
        %v7319 = vld [vmem:[%s647 + $0x628] sm:$0xff]
        %v7320 = vld [vmem:[%s647 + $0x630] sm:$0xff]
        %v7321 = vld [vmem:[%s647 + $0x638] sm:$0xff]
        %v7322 = vld [vmem:[%s647 + $0x640] sm:$0xff]
        %v7323 = vld [vmem:[%s647 + $0x648] sm:$0xff]
        %v7324 = vld [vmem:[%s647 + $0x650] sm:$0xff]
        %v7325 = vld [vmem:[%s647 + $0x658] sm:$0xff]
        %v7326 = vld [vmem:[%s647 + $0x660] sm:$0xff]
        %v7327 = vld [vmem:[%s647 + $0x668] sm:$0xff]
        %v7328 = vld [vmem:[%s647 + $0x670] sm:$0xff]
        %v7329 = vld [vmem:[%s647 + $0x678] sm:$0xff]
        %v7330 = vld [vmem:[%s647 + $0x680] sm:$0xff]
        %v7331 = vld [vmem:[%s647 + $0x688] sm:$0xff]
        %v7332 = vld [vmem:[%s647 + $0x690] sm:$0xff]
        %v7333 = vld [vmem:[%s647 + $0x698] sm:$0xff]
        %v7334 = vld [vmem:[%s647 + $0x6a0] sm:$0xff]
        %v7335 = vld [vmem:[%s647 + $0x6a8] sm:$0xff]
        %v7336 = vld [vmem:[%s647 + $0x6b0] sm:$0xff]
        %v7337 = vld [vmem:[%s647 + $0x6b8] sm:$0xff]
        %v7338 = vld [vmem:[%s647 + $0x6c0] sm:$0xff]
        %v7339 = vld [vmem:[%s647 + $0x6c8] sm:$0xff]
        %v7340 = vld [vmem:[%s647 + $0x6d0] sm:$0xff]
        %v7341 = vld [vmem:[%s647 + $0x6d8] sm:$0xff]
        %v7342 = vld [vmem:[%s647 + $0x6e0] sm:$0xff]
        %v7343 = vld [vmem:[%s647 + $0x6e8] sm:$0xff]
        %v7344 = vld [vmem:[%s647 + $0x6f0] sm:$0xff]
        %v7345 = vld [vmem:[%s647 + $0x6f8] sm:$0xff]
        %v7346 = vld [vmem:[%s647 + $0x700] sm:$0xff]
        %v7347 = vld [vmem:[%s647 + $0x708] sm:$0xff]
        %v7348 = vld [vmem:[%s647 + $0x710] sm:$0xff]
        %v7349 = vld [vmem:[%s647 + $0x718] sm:$0xff]
        %v7350 = vld [vmem:[%s647 + $0x720] sm:$0xff]
        %v7351 = vld [vmem:[%s647 + $0x728] sm:$0xff]
        %v7352 = vld [vmem:[%s647 + $0x730] sm:$0xff]
        %v7353 = vld [vmem:[%s647 + $0x738] sm:$0xff]
        %v7354 = vld [vmem:[%s647 + $0x740] sm:$0xff]
        %v7355 = vld [vmem:[%s647 + $0x748] sm:$0xff]
        %v7356 = vld [vmem:[%s647 + $0x750] sm:$0xff]
        %v7357 = vld [vmem:[%s647 + $0x758] sm:$0xff]
        %v7358 = vld [vmem:[%s647 + $0x760] sm:$0xff]
        %v7359 = vld [vmem:[%s647 + $0x768] sm:$0xff]
        %v7360 = vld [vmem:[%s647 + $0x770] sm:$0xff]
        %v7361 = vld [vmem:[%s647 + $0x778] sm:$0xff]
        %v7362 = vld [vmem:[%s647 + $0x780] sm:$0xff]
        %v7363 = vld [vmem:[%s647 + $0x788] sm:$0xff]
        %v7364 = vld [vmem:[%s647 + $0x790] sm:$0xff]
        %v7365 = vld [vmem:[%s647 + $0x798] sm:$0xff]
        %v7366 = vld [vmem:[%s647 + $0x7a0] sm:$0xff]
        %v7367 = vld [vmem:[%s647 + $0x7a8] sm:$0xff]
        %v7368 = vld [vmem:[%s647 + $0x7b0] sm:$0xff]
        %v7369 = vld [vmem:[%s647 + $0x7b8] sm:$0xff]
        %v7370 = vld [vmem:[%s647 + $0x7c0] sm:$0xff]
        %v7371 = vld [vmem:[%s647 + $0x7c8] sm:$0xff]
        %v7372 = vld [vmem:[%s647 + $0x7d0] sm:$0xff]
        %v7373 = vld [vmem:[%s647 + $0x7d8] sm:$0xff]
        %v7374 = vld [vmem:[%s647 + $0x7e0] sm:$0xff]
        %v7375 = vld [vmem:[%s647 + $0x7e8] sm:$0xff]
        %v7376 = vld [vmem:[%s647 + $0x7f0] sm:$0xff]
        %v7377 = vld [vmem:[%s647 + $0x7f8] sm:$0xff]
        %v7378 = vunpack.c.l.s8.bf16 %v7122
        %v7379 = vunpack.c.l.s8.bf16 %v7123
        %v7380 = vunpack.c.l.s8.bf16 %v7124
        %v7381 = vunpack.c.l.s8.bf16 %v7125
        %v7382 = vunpack.c.l.s8.bf16 %v7126
        %v7383 = vunpack.c.l.s8.bf16 %v7127
        %v7384 = vunpack.c.l.s8.bf16 %v7128
        %v7385 = vunpack.c.l.s8.bf16 %v7129
        %v7386 = vunpack.c.l.s8.bf16 %v7130
        %v7387 = vunpack.c.l.s8.bf16 %v7131
        %v7388 = vunpack.c.l.s8.bf16 %v7132
        %v7389 = vunpack.c.l.s8.bf16 %v7133
        %v7390 = vunpack.c.l.s8.bf16 %v7134
        %v7391 = vunpack.c.l.s8.bf16 %v7135
        %v7392 = vunpack.c.l.s8.bf16 %v7136
        %v7393 = vunpack.c.l.s8.bf16 %v7137
        %v7394 = vunpack.c.l.s8.bf16 %v7138
        %v7395 = vunpack.c.l.s8.bf16 %v7139
        %v7396 = vunpack.c.l.s8.bf16 %v7140
        %v7397 = vunpack.c.l.s8.bf16 %v7141
        %v7398 = vunpack.c.l.s8.bf16 %v7142
        %v7399 = vunpack.c.l.s8.bf16 %v7143
        %v7400 = vunpack.c.l.s8.bf16 %v7144
        %v7401 = vunpack.c.l.s8.bf16 %v7145
        %v7402 = vunpack.c.l.s8.bf16 %v7146
        %v7403 = vunpack.c.l.s8.bf16 %v7147
        %v7404 = vunpack.c.l.s8.bf16 %v7148
        %v7405 = vunpack.c.l.s8.bf16 %v7149
        %v7406 = vunpack.c.l.s8.bf16 %v7150
        %v7407 = vunpack.c.l.s8.bf16 %v7151
        %v7408 = vunpack.c.l.s8.bf16 %v7152
        %v7409 = vunpack.c.l.s8.bf16 %v7153
        %v7410 = vunpack.c.h.s8.bf16 %v7122
        %v7411 = vunpack.c.h.s8.bf16 %v7123
        %v7412 = vunpack.c.h.s8.bf16 %v7124
        %v7413 = vunpack.c.h.s8.bf16 %v7125
        %v7414 = vunpack.c.h.s8.bf16 %v7126
        %v7415 = vunpack.c.h.s8.bf16 %v7127
        %v7416 = vunpack.c.h.s8.bf16 %v7128
        %v7417 = vunpack.c.h.s8.bf16 %v7129
        %v7418 = vunpack.c.h.s8.bf16 %v7130
        %v7419 = vunpack.c.h.s8.bf16 %v7131
        %v7420 = vunpack.c.h.s8.bf16 %v7132
        %v7421 = vunpack.c.h.s8.bf16 %v7133
        %v7422 = vunpack.c.h.s8.bf16 %v7134
        %v7423 = vunpack.c.h.s8.bf16 %v7135
        %v7424 = vunpack.c.h.s8.bf16 %v7136
        %v7425 = vunpack.c.h.s8.bf16 %v7137
        %v7426 = vunpack.c.h.s8.bf16 %v7138
        %v7427 = vunpack.c.h.s8.bf16 %v7139
        %v7428 = vunpack.c.h.s8.bf16 %v7140
        %v7429 = vunpack.c.h.s8.bf16 %v7141
        %v7430 = vunpack.c.h.s8.bf16 %v7142
        %v7431 = vunpack.c.h.s8.bf16 %v7143
        %v7432 = vunpack.c.h.s8.bf16 %v7144
        %v7433 = vunpack.c.h.s8.bf16 %v7145
        %v7434 = vunpack.c.h.s8.bf16 %v7146
        %v7435 = vunpack.c.h.s8.bf16 %v7147
        %v7436 = vunpack.c.h.s8.bf16 %v7148
        %v7437 = vunpack.c.h.s8.bf16 %v7149
        %v7438 = vunpack.c.h.s8.bf16 %v7150
        %v7439 = vunpack.c.h.s8.bf16 %v7151
        %v7440 = vunpack.c.h.s8.bf16 %v7152
        %v7441 = vunpack.c.h.s8.bf16 %v7153
        %v7442 = vunpack.c.l.s8.bf16 %v7154
        %v7443 = vunpack.c.l.s8.bf16 %v7155
        %v7444 = vunpack.c.l.s8.bf16 %v7156
        %v7445 = vunpack.c.l.s8.bf16 %v7157
        %v7446 = vunpack.c.l.s8.bf16 %v7158
        %v7447 = vunpack.c.l.s8.bf16 %v7159
        %v7448 = vunpack.c.l.s8.bf16 %v7160
        %v7449 = vunpack.c.l.s8.bf16 %v7161
        %v7450 = vunpack.c.l.s8.bf16 %v7162
        %v7451 = vunpack.c.l.s8.bf16 %v7163
        %v7452 = vunpack.c.l.s8.bf16 %v7164
        %v7453 = vunpack.c.l.s8.bf16 %v7165
        %v7454 = vunpack.c.l.s8.bf16 %v7166
        %v7455 = vunpack.c.l.s8.bf16 %v7167
        %v7456 = vunpack.c.l.s8.bf16 %v7168
        %v7457 = vunpack.c.l.s8.bf16 %v7169
        %v7458 = vunpack.c.l.s8.bf16 %v7170
        %v7459 = vunpack.c.l.s8.bf16 %v7171
        %v7460 = vunpack.c.l.s8.bf16 %v7172
        %v7461 = vunpack.c.l.s8.bf16 %v7173
        %v7462 = vunpack.c.l.s8.bf16 %v7174
        %v7463 = vunpack.c.l.s8.bf16 %v7175
        %v7464 = vunpack.c.l.s8.bf16 %v7176
        %v7465 = vunpack.c.l.s8.bf16 %v7177
        %v7466 = vunpack.c.l.s8.bf16 %v7178
        %v7467 = vunpack.c.l.s8.bf16 %v7179
        %v7468 = vunpack.c.l.s8.bf16 %v7180
        %v7469 = vunpack.c.l.s8.bf16 %v7181
        %v7470 = vunpack.c.l.s8.bf16 %v7182
        %v7471 = vunpack.c.l.s8.bf16 %v7183
        %v7472 = vunpack.c.l.s8.bf16 %v7184
        %v7473 = vunpack.c.l.s8.bf16 %v7185
        %v7474 = vunpack.c.h.s8.bf16 %v7154
        %v7475 = vunpack.c.h.s8.bf16 %v7155
        %v7476 = vunpack.c.h.s8.bf16 %v7156
        %v7477 = vunpack.c.h.s8.bf16 %v7157
        %v7478 = vunpack.c.h.s8.bf16 %v7158
        %v7479 = vunpack.c.h.s8.bf16 %v7159
        %v7480 = vunpack.c.h.s8.bf16 %v7160
        %v7481 = vunpack.c.h.s8.bf16 %v7161
        %v7482 = vunpack.c.h.s8.bf16 %v7162
        %v7483 = vunpack.c.h.s8.bf16 %v7163
        %v7484 = vunpack.c.h.s8.bf16 %v7164
        %v7485 = vunpack.c.h.s8.bf16 %v7165
        %v7486 = vunpack.c.h.s8.bf16 %v7166
        %v7487 = vunpack.c.h.s8.bf16 %v7167
        %v7488 = vunpack.c.h.s8.bf16 %v7168
        %v7489 = vunpack.c.h.s8.bf16 %v7169
        %v7490 = vunpack.c.h.s8.bf16 %v7170
        %v7491 = vunpack.c.h.s8.bf16 %v7171
        %v7492 = vunpack.c.h.s8.bf16 %v7172
        %v7493 = vunpack.c.h.s8.bf16 %v7173
        %v7494 = vunpack.c.h.s8.bf16 %v7174
        %v7495 = vunpack.c.h.s8.bf16 %v7175
        %v7496 = vunpack.c.h.s8.bf16 %v7176
        %v7497 = vunpack.c.h.s8.bf16 %v7177
        %v7498 = vunpack.c.h.s8.bf16 %v7178
        %v7499 = vunpack.c.h.s8.bf16 %v7179
        %v7500 = vunpack.c.h.s8.bf16 %v7180
        %v7501 = vunpack.c.h.s8.bf16 %v7181
        %v7502 = vunpack.c.h.s8.bf16 %v7182
        %v7503 = vunpack.c.h.s8.bf16 %v7183
        %v7504 = vunpack.c.h.s8.bf16 %v7184
        %v7505 = vunpack.c.h.s8.bf16 %v7185
        %v7506 = vunpack.c.l.s8.bf16 %v7186
        %v7507 = vunpack.c.l.s8.bf16 %v7187
        %v7508 = vunpack.c.l.s8.bf16 %v7188
        %v7509 = vunpack.c.l.s8.bf16 %v7189
        %v7510 = vunpack.c.l.s8.bf16 %v7190
        %v7511 = vunpack.c.l.s8.bf16 %v7191
        %v7512 = vunpack.c.l.s8.bf16 %v7192
        %v7513 = vunpack.c.l.s8.bf16 %v7193
        %v7514 = vunpack.c.l.s8.bf16 %v7194
        %v7515 = vunpack.c.l.s8.bf16 %v7195
        %v7516 = vunpack.c.l.s8.bf16 %v7196
        %v7517 = vunpack.c.l.s8.bf16 %v7197
        %v7518 = vunpack.c.l.s8.bf16 %v7198
        %v7519 = vunpack.c.l.s8.bf16 %v7199
        %v7520 = vunpack.c.l.s8.bf16 %v7200
        %v7521 = vunpack.c.l.s8.bf16 %v7201
        %v7522 = vunpack.c.l.s8.bf16 %v7202
        %v7523 = vunpack.c.l.s8.bf16 %v7203
        %v7524 = vunpack.c.l.s8.bf16 %v7204
        %v7525 = vunpack.c.l.s8.bf16 %v7205
        %v7526 = vunpack.c.l.s8.bf16 %v7206
        %v7527 = vunpack.c.l.s8.bf16 %v7207
        %v7528 = vunpack.c.l.s8.bf16 %v7208
        %v7529 = vunpack.c.l.s8.bf16 %v7209
        %v7530 = vunpack.c.l.s8.bf16 %v7210
        %v7531 = vunpack.c.l.s8.bf16 %v7211
        %v7532 = vunpack.c.l.s8.bf16 %v7212
        %v7533 = vunpack.c.l.s8.bf16 %v7213
        %v7534 = vunpack.c.l.s8.bf16 %v7214
        %v7535 = vunpack.c.l.s8.bf16 %v7215
        %v7536 = vunpack.c.l.s8.bf16 %v7216
        %v7537 = vunpack.c.l.s8.bf16 %v7217
        %v7538 = vunpack.c.h.s8.bf16 %v7186
        %v7539 = vunpack.c.h.s8.bf16 %v7187
        %v7540 = vunpack.c.h.s8.bf16 %v7188
        %v7541 = vunpack.c.h.s8.bf16 %v7189
        %v7542 = vunpack.c.h.s8.bf16 %v7190
        %v7543 = vunpack.c.h.s8.bf16 %v7191
        %v7544 = vunpack.c.h.s8.bf16 %v7192
        %v7545 = vunpack.c.h.s8.bf16 %v7193
        %v7546 = vunpack.c.h.s8.bf16 %v7194
        %v7547 = vunpack.c.h.s8.bf16 %v7195
        %v7548 = vunpack.c.h.s8.bf16 %v7196
        %v7549 = vunpack.c.h.s8.bf16 %v7197
        %v7550 = vunpack.c.h.s8.bf16 %v7198
        %v7551 = vunpack.c.h.s8.bf16 %v7199
        %v7552 = vunpack.c.h.s8.bf16 %v7200
        %v7553 = vunpack.c.h.s8.bf16 %v7201
        %v7554 = vunpack.c.h.s8.bf16 %v7202
        %v7555 = vunpack.c.h.s8.bf16 %v7203
        %v7556 = vunpack.c.h.s8.bf16 %v7204
        %v7557 = vunpack.c.h.s8.bf16 %v7205
        %v7558 = vunpack.c.h.s8.bf16 %v7206
        %v7559 = vunpack.c.h.s8.bf16 %v7207
        %v7560 = vunpack.c.h.s8.bf16 %v7208
        %v7561 = vunpack.c.h.s8.bf16 %v7209
        %v7562 = vunpack.c.h.s8.bf16 %v7210
        %v7563 = vunpack.c.h.s8.bf16 %v7211
        %v7564 = vunpack.c.h.s8.bf16 %v7212
        %v7565 = vunpack.c.h.s8.bf16 %v7213
        %v7566 = vunpack.c.h.s8.bf16 %v7214
        %v7567 = vunpack.c.h.s8.bf16 %v7215
        %v7568 = vunpack.c.h.s8.bf16 %v7216
        %v7569 = vunpack.c.h.s8.bf16 %v7217
        %v7570 = vunpack.c.l.s8.bf16 %v7218
        %v7571 = vunpack.c.l.s8.bf16 %v7219
        %v7572 = vunpack.c.l.s8.bf16 %v7220
        %v7573 = vunpack.c.l.s8.bf16 %v7221
        %v7574 = vunpack.c.l.s8.bf16 %v7222
        %v7575 = vunpack.c.l.s8.bf16 %v7223
        %v7576 = vunpack.c.l.s8.bf16 %v7224
        %v7577 = vunpack.c.l.s8.bf16 %v7225
        %v7578 = vunpack.c.l.s8.bf16 %v7226
        %v7579 = vunpack.c.l.s8.bf16 %v7227
        %v7580 = vunpack.c.l.s8.bf16 %v7228
        %v7581 = vunpack.c.l.s8.bf16 %v7229
        %v7582 = vunpack.c.l.s8.bf16 %v7230
        %v7583 = vunpack.c.l.s8.bf16 %v7231
        %v7584 = vunpack.c.l.s8.bf16 %v7232
        %v7585 = vunpack.c.l.s8.bf16 %v7233
        %v7586 = vunpack.c.l.s8.bf16 %v7234
        %v7587 = vunpack.c.l.s8.bf16 %v7235
        %v7588 = vunpack.c.l.s8.bf16 %v7236
        %v7589 = vunpack.c.l.s8.bf16 %v7237
        %v7590 = vunpack.c.l.s8.bf16 %v7238
        %v7591 = vunpack.c.l.s8.bf16 %v7239
        %v7592 = vunpack.c.l.s8.bf16 %v7240
        %v7593 = vunpack.c.l.s8.bf16 %v7241
        %v7594 = vunpack.c.l.s8.bf16 %v7242
        %v7595 = vunpack.c.l.s8.bf16 %v7243
        %v7596 = vunpack.c.l.s8.bf16 %v7244
        %v7597 = vunpack.c.l.s8.bf16 %v7245
        %v7598 = vunpack.c.l.s8.bf16 %v7246
        %v7599 = vunpack.c.l.s8.bf16 %v7247
        %v7600 = vunpack.c.l.s8.bf16 %v7248
        %v7601 = vunpack.c.l.s8.bf16 %v7249
        %v7602 = vunpack.c.h.s8.bf16 %v7218
        %v7603 = vunpack.c.h.s8.bf16 %v7219
        %v7604 = vunpack.c.h.s8.bf16 %v7220
        %v7605 = vunpack.c.h.s8.bf16 %v7221
        %v7606 = vunpack.c.h.s8.bf16 %v7222
        %v7607 = vunpack.c.h.s8.bf16 %v7223
        %v7608 = vunpack.c.h.s8.bf16 %v7224
        %v7609 = vunpack.c.h.s8.bf16 %v7225
        %v7610 = vunpack.c.h.s8.bf16 %v7226
        %v7611 = vunpack.c.h.s8.bf16 %v7227
        %v7612 = vunpack.c.h.s8.bf16 %v7228
        %v7613 = vunpack.c.h.s8.bf16 %v7229
        %v7614 = vunpack.c.h.s8.bf16 %v7230
        %v7615 = vunpack.c.h.s8.bf16 %v7231
        %v7616 = vunpack.c.h.s8.bf16 %v7232
        %v7617 = vunpack.c.h.s8.bf16 %v7233
        %v7618 = vunpack.c.h.s8.bf16 %v7234
        %v7619 = vunpack.c.h.s8.bf16 %v7235
        %v7620 = vunpack.c.h.s8.bf16 %v7236
        %v7621 = vunpack.c.h.s8.bf16 %v7237
        %v7622 = vunpack.c.h.s8.bf16 %v7238
        %v7623 = vunpack.c.h.s8.bf16 %v7239
        %v7624 = vunpack.c.h.s8.bf16 %v7240
        %v7625 = vunpack.c.h.s8.bf16 %v7241
        %v7626 = vunpack.c.h.s8.bf16 %v7242
        %v7627 = vunpack.c.h.s8.bf16 %v7243
        %v7628 = vunpack.c.h.s8.bf16 %v7244
        %v7629 = vunpack.c.h.s8.bf16 %v7245
        %v7630 = vunpack.c.h.s8.bf16 %v7246
        %v7631 = vunpack.c.h.s8.bf16 %v7247
        %v7632 = vunpack.c.h.s8.bf16 %v7248
        %v7633 = vunpack.c.h.s8.bf16 %v7249
        %v7634 = vunpack.c.l.s8.bf16 %v7250
        %v7635 = vunpack.c.l.s8.bf16 %v7251
        %v7636 = vunpack.c.l.s8.bf16 %v7252
        %v7637 = vunpack.c.l.s8.bf16 %v7253
        %v7638 = vunpack.c.l.s8.bf16 %v7254
        %v7639 = vunpack.c.l.s8.bf16 %v7255
        %v7640 = vunpack.c.l.s8.bf16 %v7256
        %v7641 = vunpack.c.l.s8.bf16 %v7257
        %v7642 = vunpack.c.l.s8.bf16 %v7258
        %v7643 = vunpack.c.l.s8.bf16 %v7259
        %v7644 = vunpack.c.l.s8.bf16 %v7260
        %v7645 = vunpack.c.l.s8.bf16 %v7261
        %v7646 = vunpack.c.l.s8.bf16 %v7262
        %v7647 = vunpack.c.l.s8.bf16 %v7263
        %v7648 = vunpack.c.l.s8.bf16 %v7264
        %v7649 = vunpack.c.l.s8.bf16 %v7265
        %v7650 = vunpack.c.l.s8.bf16 %v7266
        %v7651 = vunpack.c.l.s8.bf16 %v7267
        %v7652 = vunpack.c.l.s8.bf16 %v7268
        %v7653 = vunpack.c.l.s8.bf16 %v7269
        %v7654 = vunpack.c.l.s8.bf16 %v7270
        %v7655 = vunpack.c.l.s8.bf16 %v7271
        %v7656 = vunpack.c.l.s8.bf16 %v7272
        %v7657 = vunpack.c.l.s8.bf16 %v7273
        %v7658 = vunpack.c.l.s8.bf16 %v7274
        %v7659 = vunpack.c.l.s8.bf16 %v7275
        %v7660 = vunpack.c.l.s8.bf16 %v7276
        %v7661 = vunpack.c.l.s8.bf16 %v7277
        %v7662 = vunpack.c.l.s8.bf16 %v7278
        %v7663 = vunpack.c.l.s8.bf16 %v7279
        %v7664 = vunpack.c.l.s8.bf16 %v7280
        %v7665 = vunpack.c.l.s8.bf16 %v7281
        %v7666 = vunpack.c.h.s8.bf16 %v7250
        %v7667 = vunpack.c.h.s8.bf16 %v7251
        %v7668 = vunpack.c.h.s8.bf16 %v7252
        %v7669 = vunpack.c.h.s8.bf16 %v7253
        %v7670 = vunpack.c.h.s8.bf16 %v7254
        %v7671 = vunpack.c.h.s8.bf16 %v7255
        %v7672 = vunpack.c.h.s8.bf16 %v7256
        %v7673 = vunpack.c.h.s8.bf16 %v7257
        %v7674 = vunpack.c.h.s8.bf16 %v7258
        %v7675 = vunpack.c.h.s8.bf16 %v7259
        %v7676 = vunpack.c.h.s8.bf16 %v7260
        %v7677 = vunpack.c.h.s8.bf16 %v7261
        %v7678 = vunpack.c.h.s8.bf16 %v7262
        %v7679 = vunpack.c.h.s8.bf16 %v7263
        %v7680 = vunpack.c.h.s8.bf16 %v7264
        %v7681 = vunpack.c.h.s8.bf16 %v7265
        %v7682 = vunpack.c.h.s8.bf16 %v7266
        %v7683 = vunpack.c.h.s8.bf16 %v7267
        %v7684 = vunpack.c.h.s8.bf16 %v7268
        %v7685 = vunpack.c.h.s8.bf16 %v7269
        %v7686 = vunpack.c.h.s8.bf16 %v7270
        %v7687 = vunpack.c.h.s8.bf16 %v7271
        %v7688 = vunpack.c.h.s8.bf16 %v7272
        %v7689 = vunpack.c.h.s8.bf16 %v7273
        %v7690 = vunpack.c.h.s8.bf16 %v7274
        %v7691 = vunpack.c.h.s8.bf16 %v7275
        %v7692 = vunpack.c.h.s8.bf16 %v7276
        %v7693 = vunpack.c.h.s8.bf16 %v7277
        %v7694 = vunpack.c.h.s8.bf16 %v7278
        %v7695 = vunpack.c.h.s8.bf16 %v7279
        %v7696 = vunpack.c.h.s8.bf16 %v7280
        %v7697 = vunpack.c.h.s8.bf16 %v7281
        %v7698 = vunpack.c.l.s8.bf16 %v7282
        %v7699 = vunpack.c.l.s8.bf16 %v7283
        %v7700 = vunpack.c.l.s8.bf16 %v7284
        %v7701 = vunpack.c.l.s8.bf16 %v7285
        %v7702 = vunpack.c.l.s8.bf16 %v7286
        %v7703 = vunpack.c.l.s8.bf16 %v7287
        %v7704 = vunpack.c.l.s8.bf16 %v7288
        %v7705 = vunpack.c.l.s8.bf16 %v7289
        %v7706 = vunpack.c.l.s8.bf16 %v7290
        %v7707 = vunpack.c.l.s8.bf16 %v7291
        %v7708 = vunpack.c.l.s8.bf16 %v7292
        %v7709 = vunpack.c.l.s8.bf16 %v7293
        %v7710 = vunpack.c.l.s8.bf16 %v7294
        %v7711 = vunpack.c.l.s8.bf16 %v7295
        %v7712 = vunpack.c.l.s8.bf16 %v7296
        %v7713 = vunpack.c.l.s8.bf16 %v7297
        %v7714 = vunpack.c.l.s8.bf16 %v7298
        %v7715 = vunpack.c.l.s8.bf16 %v7299
        %v7716 = vunpack.c.l.s8.bf16 %v7300
        %v7717 = vunpack.c.l.s8.bf16 %v7301
        %v7718 = vunpack.c.l.s8.bf16 %v7302
        %v7719 = vunpack.c.l.s8.bf16 %v7303
        %v7720 = vunpack.c.l.s8.bf16 %v7304
        %v7721 = vunpack.c.l.s8.bf16 %v7305
        %v7722 = vunpack.c.l.s8.bf16 %v7306
        %v7723 = vunpack.c.l.s8.bf16 %v7307
        %v7724 = vunpack.c.l.s8.bf16 %v7308
        %v7725 = vunpack.c.l.s8.bf16 %v7309
        %v7726 = vunpack.c.l.s8.bf16 %v7310
        %v7727 = vunpack.c.l.s8.bf16 %v7311
        %v7728 = vunpack.c.l.s8.bf16 %v7312
        %v7729 = vunpack.c.l.s8.bf16 %v7313
        %v7730 = vunpack.c.h.s8.bf16 %v7282
        %v7731 = vunpack.c.h.s8.bf16 %v7283
        %v7732 = vunpack.c.h.s8.bf16 %v7284
        %v7733 = vunpack.c.h.s8.bf16 %v7285
        %v7734 = vunpack.c.h.s8.bf16 %v7286
        %v7735 = vunpack.c.h.s8.bf16 %v7287
        %v7736 = vunpack.c.h.s8.bf16 %v7288
        %v7737 = vunpack.c.h.s8.bf16 %v7289
        %v7738 = vunpack.c.h.s8.bf16 %v7290
        %v7739 = vunpack.c.h.s8.bf16 %v7291
        %v7740 = vunpack.c.h.s8.bf16 %v7292
        %v7741 = vunpack.c.h.s8.bf16 %v7293
        %v7742 = vunpack.c.h.s8.bf16 %v7294
        %v7743 = vunpack.c.h.s8.bf16 %v7295
        %v7744 = vunpack.c.h.s8.bf16 %v7296
        %v7745 = vunpack.c.h.s8.bf16 %v7297
        %v7746 = vunpack.c.h.s8.bf16 %v7298
        %v7747 = vunpack.c.h.s8.bf16 %v7299
        %v7748 = vunpack.c.h.s8.bf16 %v7300
        %v7749 = vunpack.c.h.s8.bf16 %v7301
        %v7750 = vunpack.c.h.s8.bf16 %v7302
        %v7751 = vunpack.c.h.s8.bf16 %v7303
        %v7752 = vunpack.c.h.s8.bf16 %v7304
        %v7753 = vunpack.c.h.s8.bf16 %v7305
        %v7754 = vunpack.c.h.s8.bf16 %v7306
        %v7755 = vunpack.c.h.s8.bf16 %v7307
        %v7756 = vunpack.c.h.s8.bf16 %v7308
        %v7757 = vunpack.c.h.s8.bf16 %v7309
        %v7758 = vunpack.c.h.s8.bf16 %v7310
        %v7759 = vunpack.c.h.s8.bf16 %v7311
        %v7760 = vunpack.c.h.s8.bf16 %v7312
        %v7761 = vunpack.c.h.s8.bf16 %v7313
        %v7762 = vunpack.c.l.s8.bf16 %v7314
        %v7763 = vunpack.c.l.s8.bf16 %v7315
        %v7764 = vunpack.c.l.s8.bf16 %v7316
        %v7765 = vunpack.c.l.s8.bf16 %v7317
        %v7766 = vunpack.c.l.s8.bf16 %v7318
        %v7767 = vunpack.c.l.s8.bf16 %v7319
        %v7768 = vunpack.c.l.s8.bf16 %v7320
        %v7769 = vunpack.c.l.s8.bf16 %v7321
        %v7770 = vunpack.c.l.s8.bf16 %v7322
        %v7771 = vunpack.c.l.s8.bf16 %v7323
        %v7772 = vunpack.c.l.s8.bf16 %v7324
        %v7773 = vunpack.c.l.s8.bf16 %v7325
        %v7774 = vunpack.c.l.s8.bf16 %v7326
        %v7775 = vunpack.c.l.s8.bf16 %v7327
        %v7776 = vunpack.c.l.s8.bf16 %v7328
        %v7777 = vunpack.c.l.s8.bf16 %v7329
        %v7778 = vunpack.c.l.s8.bf16 %v7330
        %v7779 = vunpack.c.l.s8.bf16 %v7331
        %v7780 = vunpack.c.l.s8.bf16 %v7332
        %v7781 = vunpack.c.l.s8.bf16 %v7333
        %v7782 = vunpack.c.l.s8.bf16 %v7334
        %v7783 = vunpack.c.l.s8.bf16 %v7335
        %v7784 = vunpack.c.l.s8.bf16 %v7336
        %v7785 = vunpack.c.l.s8.bf16 %v7337
        %v7786 = vunpack.c.l.s8.bf16 %v7338
        %v7787 = vunpack.c.l.s8.bf16 %v7339
        %v7788 = vunpack.c.l.s8.bf16 %v7340
        %v7789 = vunpack.c.l.s8.bf16 %v7341
        %v7790 = vunpack.c.l.s8.bf16 %v7342
        %v7791 = vunpack.c.l.s8.bf16 %v7343
        %v7792 = vunpack.c.l.s8.bf16 %v7344
        %v7793 = vunpack.c.l.s8.bf16 %v7345
        %v7794 = vunpack.c.h.s8.bf16 %v7314
        %v7795 = vunpack.c.h.s8.bf16 %v7315
        %v7796 = vunpack.c.h.s8.bf16 %v7316
        %v7797 = vunpack.c.h.s8.bf16 %v7317
        %v7798 = vunpack.c.h.s8.bf16 %v7318
        %v7799 = vunpack.c.h.s8.bf16 %v7319
        %v7800 = vunpack.c.h.s8.bf16 %v7320
        %v7801 = vunpack.c.h.s8.bf16 %v7321
        %v7802 = vunpack.c.h.s8.bf16 %v7322
        %v7803 = vunpack.c.h.s8.bf16 %v7323
        %v7804 = vunpack.c.h.s8.bf16 %v7324
        %v7805 = vunpack.c.h.s8.bf16 %v7325
        %v7806 = vunpack.c.h.s8.bf16 %v7326
        %v7807 = vunpack.c.h.s8.bf16 %v7327
        %v7808 = vunpack.c.h.s8.bf16 %v7328
        %v7809 = vunpack.c.h.s8.bf16 %v7329
        %v7810 = vunpack.c.h.s8.bf16 %v7330
        %v7811 = vunpack.c.h.s8.bf16 %v7331
        %v7812 = vunpack.c.h.s8.bf16 %v7332
        %v7813 = vunpack.c.h.s8.bf16 %v7333
        %v7814 = vunpack.c.h.s8.bf16 %v7334
        %v7815 = vunpack.c.h.s8.bf16 %v7335
        %v7816 = vunpack.c.h.s8.bf16 %v7336
        %v7817 = vunpack.c.h.s8.bf16 %v7337
        %v7818 = vunpack.c.h.s8.bf16 %v7338
        %v7819 = vunpack.c.h.s8.bf16 %v7339
        %v7820 = vunpack.c.h.s8.bf16 %v7340
        %v7821 = vunpack.c.h.s8.bf16 %v7341
        %v7822 = vunpack.c.h.s8.bf16 %v7342
        %v7823 = vunpack.c.h.s8.bf16 %v7343
        %v7824 = vunpack.c.h.s8.bf16 %v7344
        %v7825 = vunpack.c.h.s8.bf16 %v7345
        %v7826 = vunpack.c.l.s8.bf16 %v7346
        %v7827 = vunpack.c.l.s8.bf16 %v7347
        %v7828 = vunpack.c.l.s8.bf16 %v7348
        %v7829 = vunpack.c.l.s8.bf16 %v7349
        %v7830 = vunpack.c.l.s8.bf16 %v7350
        %v7831 = vunpack.c.l.s8.bf16 %v7351
        %v7832 = vunpack.c.l.s8.bf16 %v7352
        %v7833 = vunpack.c.l.s8.bf16 %v7353
        %v7834 = vunpack.c.l.s8.bf16 %v7354
        %v7835 = vunpack.c.l.s8.bf16 %v7355
        %v7836 = vunpack.c.l.s8.bf16 %v7356
        %v7837 = vunpack.c.l.s8.bf16 %v7357
        %v7838 = vunpack.c.l.s8.bf16 %v7358
        %v7839 = vunpack.c.l.s8.bf16 %v7359
        %v7840 = vunpack.c.l.s8.bf16 %v7360
        %v7841 = vunpack.c.l.s8.bf16 %v7361
        %v7842 = vunpack.c.l.s8.bf16 %v7362
        %v7843 = vunpack.c.l.s8.bf16 %v7363
        %v7844 = vunpack.c.l.s8.bf16 %v7364
        %v7845 = vunpack.c.l.s8.bf16 %v7365
        %v7846 = vunpack.c.l.s8.bf16 %v7366
        %v7847 = vunpack.c.l.s8.bf16 %v7367
        %v7848 = vunpack.c.l.s8.bf16 %v7368
        %v7849 = vunpack.c.l.s8.bf16 %v7369
        %v7850 = vunpack.c.l.s8.bf16 %v7370
        %v7851 = vunpack.c.l.s8.bf16 %v7371
        %v7852 = vunpack.c.l.s8.bf16 %v7372
        %v7853 = vunpack.c.l.s8.bf16 %v7373
        %v7854 = vunpack.c.l.s8.bf16 %v7374
        %v7855 = vunpack.c.l.s8.bf16 %v7375
        %v7856 = vunpack.c.l.s8.bf16 %v7376
        %v7857 = vunpack.c.l.s8.bf16 %v7377
        %v7858 = vunpack.c.h.s8.bf16 %v7346
        %v7859 = vunpack.c.h.s8.bf16 %v7347
        %v7860 = vunpack.c.h.s8.bf16 %v7348
        %v7861 = vunpack.c.h.s8.bf16 %v7349
        %v7862 = vunpack.c.h.s8.bf16 %v7350
        %v7863 = vunpack.c.h.s8.bf16 %v7351
        %v7864 = vunpack.c.h.s8.bf16 %v7352
        %v7865 = vunpack.c.h.s8.bf16 %v7353
        %v7866 = vunpack.c.h.s8.bf16 %v7354
        %v7867 = vunpack.c.h.s8.bf16 %v7355
        %v7868 = vunpack.c.h.s8.bf16 %v7356
        %v7869 = vunpack.c.h.s8.bf16 %v7357
        %v7870 = vunpack.c.h.s8.bf16 %v7358
        %v7871 = vunpack.c.h.s8.bf16 %v7359
        %v7872 = vunpack.c.h.s8.bf16 %v7360
        %v7873 = vunpack.c.h.s8.bf16 %v7361
        %v7874 = vunpack.c.h.s8.bf16 %v7362
        %v7875 = vunpack.c.h.s8.bf16 %v7363
        %v7876 = vunpack.c.h.s8.bf16 %v7364
        %v7877 = vunpack.c.h.s8.bf16 %v7365
        %v7878 = vunpack.c.h.s8.bf16 %v7366
        %v7879 = vunpack.c.h.s8.bf16 %v7367
        %v7880 = vunpack.c.h.s8.bf16 %v7368
        %v7881 = vunpack.c.h.s8.bf16 %v7369
        %v7882 = vunpack.c.h.s8.bf16 %v7370
        %v7883 = vunpack.c.h.s8.bf16 %v7371
        %v7884 = vunpack.c.h.s8.bf16 %v7372
        %v7885 = vunpack.c.h.s8.bf16 %v7373
        %v7886 = vunpack.c.h.s8.bf16 %v7374
        %v7887 = vunpack.c.h.s8.bf16 %v7375
        %v7888 = vunpack.c.h.s8.bf16 %v7376
        %v7889 = vunpack.c.h.s8.bf16 %v7377
        %v7890 = vld [vmem:[#allocation2] sm:$0xff]
        %v7892 = vunpack.c.l.b16 %v7890
        %v7893 = vunpack.c.h.b16 %v7890
        %v7894 = vpack.c.b16 %v7892, %v7892
        %v7895 = vpack.c.b16 %v7893, %v7893
        %7898 = vmatprep.subr.bf16.mxu0 %v7603
        %7899 = vmatpush1.bf16.msra.mxu0 %v7602
        %7900 = vmatprep.subr.bf16.mxu0 %v7571
        %7901 = vmatpush1.bf16.msra.mxu0 %v7570
        %7902 = vmatprep.subr.bf16.mxu0 %v7539
        %7903 = vmatpush1.bf16.msra.mxu0 %v7538
        %7904 = vmatprep.subr.bf16.mxu0 %v7507
        %7905 = vmatpush1.bf16.msra.mxu0 %v7506
        %7906 = vmatprep.subr.bf16.mxu0 %v7475
        %7907 = vmatpush1.bf16.msra.mxu0 %v7474
        %7908 = vmatprep.subr.bf16.mxu0 %v7443
        %7909 = vmatpush1.bf16.msra.mxu0 %v7442
        %7910 = vmatprep.subr.bf16.mxu0 %v7411
        %7911 = vmatpush1.bf16.msra.mxu0 %v7410
        %7912 = vmatprep.subr.bf16.mxu0 %v7379
        %7913 = vmatpush1.bf16.msra.mxu0 %v7378
        %7914 = vmatprep.subr.bf16.mxu0 %v7859
        %7915 = vmatpush2.bf16.msra.mxu0 %v7858
        %7916 = vmatprep.subr.bf16.mxu0 %v7827
        %7917 = vmatpush2.bf16.msra.mxu0 %v7826
        %7918 = vmatprep.subr.bf16.mxu0 %v7795
        %7919 = vmatpush2.bf16.msra.mxu0 %v7794
        %7920 = vmatprep.subr.bf16.mxu0 %v7763
        %7921 = vmatpush2.bf16.msra.mxu0 %v7762
        %7922 = vmatprep.subr.bf16.mxu0 %v7731
        %7923 = vmatpush2.bf16.msra.mxu0 %v7730
        %7924 = vmatprep.subr.bf16.mxu0 %v7699
        %7925 = vmatpush2.bf16.msra.mxu0 %v7698
        %7926 = vmatprep.subr.bf16.mxu0 %v7667
        %7927 = vmatpush2.bf16.msra.mxu0 %v7666
        %7928 = vmatprep.subr.bf16.mxu0 %v7635
        %7929 = vmatpush2.bf16.msra.mxu0 %v7634
        %7930 = vmatprep.mubr.bf16.mxu0 %v7895
        %7931 = vmatmul.mubr.bf16.gmra.mxu0 %v7894
        %v7932 = vpop.f32.mrf.mxu0
        %v7933 = vadd.f32 0.0, %v7932
        %v7934 = vpop.f32.mrf.mxu0
        %v7935 = vadd.f32 0.0, %v7934
        %v7936 = vpop.f32.mrf.mxu0
        %v7937 = vpop.f32.mrf.mxu0
        %7938 = vdwg.mxu0
        %7939 = vmatprep.subr.bf16.mxu0 %v7605
        %7940 = vmatpush1.bf16.msra.mxu0 %v7604
        %7941 = vmatprep.subr.bf16.mxu0 %v7573
        %7942 = vmatpush1.bf16.msra.mxu0 %v7572
        %7943 = vmatprep.subr.bf16.mxu0 %v7541
        %7944 = vmatpush1.bf16.msra.mxu0 %v7540
        %7945 = vmatprep.subr.bf16.mxu0 %v7509
        %7946 = vmatpush1.bf16.msra.mxu0 %v7508
        %7947 = vmatprep.subr.bf16.mxu0 %v7477
        %7948 = vmatpush1.bf16.msra.mxu0 %v7476
        %7949 = vmatprep.subr.bf16.mxu0 %v7445
        %7950 = vmatpush1.bf16.msra.mxu0 %v7444
        %7951 = vmatprep.subr.bf16.mxu0 %v7413
        %7952 = vmatpush1.bf16.msra.mxu0 %v7412
        %7953 = vmatprep.subr.bf16.mxu0 %v7381
        %7954 = vmatpush1.bf16.msra.mxu0 %v7380
        %7955 = vmatprep.subr.bf16.mxu0 %v7861
        %7956 = vmatpush2.bf16.msra.mxu0 %v7860
        %7957 = vmatprep.subr.bf16.mxu0 %v7829
        %7958 = vmatpush2.bf16.msra.mxu0 %v7828
        %7959 = vmatprep.subr.bf16.mxu0 %v7797
        %7960 = vmatpush2.bf16.msra.mxu0 %v7796
        %7961 = vmatprep.subr.bf16.mxu0 %v7765
        %7962 = vmatpush2.bf16.msra.mxu0 %v7764
        %7963 = vmatprep.subr.bf16.mxu0 %v7733
        %7964 = vmatpush2.bf16.msra.mxu0 %v7732
        %7965 = vmatprep.subr.bf16.mxu0 %v7701
        %7966 = vmatpush2.bf16.msra.mxu0 %v7700
        %7967 = vmatprep.subr.bf16.mxu0 %v7669
        %7968 = vmatpush2.bf16.msra.mxu0 %v7668
        %7969 = vmatprep.subr.bf16.mxu0 %v7637
        %7970 = vmatpush2.bf16.msra.mxu0 %v7636
        %7971 = vmatprep.mubr.bf16.mxu0 %v7895
        %7972 = vmatmul.mubr.bf16.gmra.mxu0 %v7894
        %v7973 = vpop.f32.mrf.mxu0
        %v7974 = vadd.f32 0.0, %v7973
        %v7975 = vpop.f32.mrf.mxu0
        %v7976 = vadd.f32 0.0, %v7975
        %v7977 = vpop.f32.mrf.mxu0
        %v7978 = vpop.f32.mrf.mxu0
        %7979 = vdwg.mxu0
        %7980 = vmatprep.subr.bf16.mxu0 %v7607
        %7981 = vmatpush1.bf16.msra.mxu0 %v7606
        %7982 = vmatprep.subr.bf16.mxu0 %v7575
        %7983 = vmatpush1.bf16.msra.mxu0 %v7574
        %7984 = vmatprep.subr.bf16.mxu0 %v7543
        %7985 = vmatpush1.bf16.msra.mxu0 %v7542
        %7986 = vmatprep.subr.bf16.mxu0 %v7511
        %7987 = vmatpush1.bf16.msra.mxu0 %v7510
        %7988 = vmatprep.subr.bf16.mxu0 %v7479
        %7989 = vmatpush1.bf16.msra.mxu0 %v7478
        %7990 = vmatprep.subr.bf16.mxu0 %v7447
        %7991 = vmatpush1.bf16.msra.mxu0 %v7446
        %7992 = vmatprep.subr.bf16.mxu0 %v7415
        %7993 = vmatpush1.bf16.msra.mxu0 %v7414
        %7994 = vmatprep.subr.bf16.mxu0 %v7383
        %7995 = vmatpush1.bf16.msra.mxu0 %v7382
        %7996 = vmatprep.subr.bf16.mxu0 %v7863
        %7997 = vmatpush2.bf16.msra.mxu0 %v7862
        %7998 = vmatprep.subr.bf16.mxu0 %v7831
        %7999 = vmatpush2.bf16.msra.mxu0 %v7830
        %8000 = vmatprep.subr.bf16.mxu0 %v7799
        %8001 = vmatpush2.bf16.msra.mxu0 %v7798
        %8002 = vmatprep.subr.bf16.mxu0 %v7767
        %8003 = vmatpush2.bf16.msra.mxu0 %v7766
        %8004 = vmatprep.subr.bf16.mxu0 %v7735
        %8005 = vmatpush2.bf16.msra.mxu0 %v7734
        %8006 = vmatprep.subr.bf16.mxu0 %v7703
        %8007 = vmatpush2.bf16.msra.mxu0 %v7702
        %8008 = vmatprep.subr.bf16.mxu0 %v7671
        %8009 = vmatpush2.bf16.msra.mxu0 %v7670
        %8010 = vmatprep.subr.bf16.mxu0 %v7639
        %8011 = vmatpush2.bf16.msra.mxu0 %v7638
        %8012 = vmatprep.mubr.bf16.mxu0 %v7895
        %8013 = vmatmul.mubr.bf16.gmra.mxu0 %v7894
        %v8014 = vpop.f32.mrf.mxu0
        %v8015 = vadd.f32 0.0, %v8014
        %v8016 = vpop.f32.mrf.mxu0
        %v8017 = vadd.f32 0.0, %v8016
        %v8018 = vpop.f32.mrf.mxu0
        %v8019 = vpop.f32.mrf.mxu0
        %8020 = vdwg.mxu0
        %8021 = vmatprep.subr.bf16.mxu0 %v7609
        %8022 = vmatpush1.bf16.msra.mxu0 %v7608
        %8023 = vmatprep.subr.bf16.mxu0 %v7577
        %8024 = vmatpush1.bf16.msra.mxu0 %v7576
        %8025 = vmatprep.subr.bf16.mxu0 %v7545
        %8026 = vmatpush1.bf16.msra.mxu0 %v7544
        %8027 = vmatprep.subr.bf16.mxu0 %v7513
        %8028 = vmatpush1.bf16.msra.mxu0 %v7512
        %8029 = vmatprep.subr.bf16.mxu0 %v7481
        %8030 = vmatpush1.bf16.msra.mxu0 %v7480
        %8031 = vmatprep.subr.bf16.mxu0 %v7449
        %8032 = vmatpush1.bf16.msra.mxu0 %v7448
        %8033 = vmatprep.subr.bf16.mxu0 %v7417
        %8034 = vmatpush1.bf16.msra.mxu0 %v7416
        %8035 = vmatprep.subr.bf16.mxu0 %v7385
        %8036 = vmatpush1.bf16.msra.mxu0 %v7384
        %8037 = vmatprep.subr.bf16.mxu0 %v7865
        %8038 = vmatpush2.bf16.msra.mxu0 %v7864
        %8039 = vmatprep.subr.bf16.mxu0 %v7833
        %8040 = vmatpush2.bf16.msra.mxu0 %v7832
        %8041 = vmatprep.subr.bf16.mxu0 %v7801
        %8042 = vmatpush2.bf16.msra.mxu0 %v7800
        %8043 = vmatprep.subr.bf16.mxu0 %v7769
        %8044 = vmatpush2.bf16.msra.mxu0 %v7768
        %8045 = vmatprep.subr.bf16.mxu0 %v7737
        %8046 = vmatpush2.bf16.msra.mxu0 %v7736
        %8047 = vmatprep.subr.bf16.mxu0 %v7705
        %8048 = vmatpush2.bf16.msra.mxu0 %v7704
        %8049 = vmatprep.subr.bf16.mxu0 %v7673
        %8050 = vmatpush2.bf16.msra.mxu0 %v7672
        %8051 = vmatprep.subr.bf16.mxu0 %v7641
        %8052 = vmatpush2.bf16.msra.mxu0 %v7640
        %8053 = vmatprep.mubr.bf16.mxu0 %v7895
        %8054 = vmatmul.mubr.bf16.gmra.mxu0 %v7894
        %v8055 = vpop.f32.mrf.mxu0
        %v8056 = vadd.f32 0.0, %v8055
        %v8057 = vpop.f32.mrf.mxu0
        %v8058 = vadd.f32 0.0, %v8057
        %v8059 = vpop.f32.mrf.mxu0
        %v8060 = vpop.f32.mrf.mxu0
        %8061 = vdwg.mxu0
        %8062 = vmatprep.subr.bf16.mxu0 %v7611
        %8063 = vmatpush1.bf16.msra.mxu0 %v7610
        %8064 = vmatprep.subr.bf16.mxu0 %v7579
        %8065 = vmatpush1.bf16.msra.mxu0 %v7578
        %8066 = vmatprep.subr.bf16.mxu0 %v7547
        %8067 = vmatpush1.bf16.msra.mxu0 %v7546
        %8068 = vmatprep.subr.bf16.mxu0 %v7515
        %8069 = vmatpush1.bf16.msra.mxu0 %v7514
        %8070 = vmatprep.subr.bf16.mxu0 %v7483
        %8071 = vmatpush1.bf16.msra.mxu0 %v7482
        %8072 = vmatprep.subr.bf16.mxu0 %v7451
        %8073 = vmatpush1.bf16.msra.mxu0 %v7450
        %8074 = vmatprep.subr.bf16.mxu0 %v7419
        %8075 = vmatpush1.bf16.msra.mxu0 %v7418
        %8076 = vmatprep.subr.bf16.mxu0 %v7387
        %8077 = vmatpush1.bf16.msra.mxu0 %v7386
        %8078 = vmatprep.subr.bf16.mxu0 %v7867
        %8079 = vmatpush2.bf16.msra.mxu0 %v7866
        %8080 = vmatprep.subr.bf16.mxu0 %v7835
        %8081 = vmatpush2.bf16.msra.mxu0 %v7834
        %8082 = vmatprep.subr.bf16.mxu0 %v7803
        %8083 = vmatpush2.bf16.msra.mxu0 %v7802
        %8084 = vmatprep.subr.bf16.mxu0 %v7771
        %8085 = vmatpush2.bf16.msra.mxu0 %v7770
        %8086 = vmatprep.subr.bf16.mxu0 %v7739
        %8087 = vmatpush2.bf16.msra.mxu0 %v7738
        %8088 = vmatprep.subr.bf16.mxu0 %v7707
        %8089 = vmatpush2.bf16.msra.mxu0 %v7706
        %8090 = vmatprep.subr.bf16.mxu0 %v7675
        %8091 = vmatpush2.bf16.msra.mxu0 %v7674
        %8092 = vmatprep.subr.bf16.mxu0 %v7643
        %8093 = vmatpush2.bf16.msra.mxu0 %v7642
        %8094 = vmatprep.mubr.bf16.mxu0 %v7895
        %8095 = vmatmul.mubr.bf16.gmra.mxu0 %v7894
        %v8096 = vpop.f32.mrf.mxu0
        %v8097 = vadd.f32 0.0, %v8096
        %v8098 = vpop.f32.mrf.mxu0
        %v8099 = vadd.f32 0.0, %v8098
        %v8100 = vpop.f32.mrf.mxu0
        %v8101 = vpop.f32.mrf.mxu0
        %8102 = vdwg.mxu0
        %8103 = vmatprep.subr.bf16.mxu0 %v7613
        %8104 = vmatpush1.bf16.msra.mxu0 %v7612
        %8105 = vmatprep.subr.bf16.mxu0 %v7581
        %8106 = vmatpush1.bf16.msra.mxu0 %v7580
        %8107 = vmatprep.subr.bf16.mxu0 %v7549
        %8108 = vmatpush1.bf16.msra.mxu0 %v7548
        %8109 = vmatprep.subr.bf16.mxu0 %v7517
        %8110 = vmatpush1.bf16.msra.mxu0 %v7516
        %8111 = vmatprep.subr.bf16.mxu0 %v7485
        %8112 = vmatpush1.bf16.msra.mxu0 %v7484
        %8113 = vmatprep.subr.bf16.mxu0 %v7453
        %8114 = vmatpush1.bf16.msra.mxu0 %v7452
        %8115 = vmatprep.subr.bf16.mxu0 %v7421
        %8116 = vmatpush1.bf16.msra.mxu0 %v7420
        %8117 = vmatprep.subr.bf16.mxu0 %v7389
        %8118 = vmatpush1.bf16.msra.mxu0 %v7388
        %8119 = vmatprep.subr.bf16.mxu0 %v7869
        %8120 = vmatpush2.bf16.msra.mxu0 %v7868
        %8121 = vmatprep.subr.bf16.mxu0 %v7837
        %8122 = vmatpush2.bf16.msra.mxu0 %v7836
        %8123 = vmatprep.subr.bf16.mxu0 %v7805
        %8124 = vmatpush2.bf16.msra.mxu0 %v7804
        %8125 = vmatprep.subr.bf16.mxu0 %v7773
        %8126 = vmatpush2.bf16.msra.mxu0 %v7772
        %8127 = vmatprep.subr.bf16.mxu0 %v7741
        %8128 = vmatpush2.bf16.msra.mxu0 %v7740
        %8129 = vmatprep.subr.bf16.mxu0 %v7709
        %8130 = vmatpush2.bf16.msra.mxu0 %v7708
        %8131 = vmatprep.subr.bf16.mxu0 %v7677
        %8132 = vmatpush2.bf16.msra.mxu0 %v7676
        %8133 = vmatprep.subr.bf16.mxu0 %v7645
        %8134 = vmatpush2.bf16.msra.mxu0 %v7644
        %8135 = vmatprep.mubr.bf16.mxu0 %v7895
        %8136 = vmatmul.mubr.bf16.gmra.mxu0 %v7894
        %v8137 = vpop.f32.mrf.mxu0
        %v8138 = vadd.f32 0.0, %v8137
        %v8139 = vpop.f32.mrf.mxu0
        %v8140 = vadd.f32 0.0, %v8139
        %v8141 = vpop.f32.mrf.mxu0
        %v8142 = vpop.f32.mrf.mxu0
        %8143 = vdwg.mxu0
        %8144 = vmatprep.subr.bf16.mxu0 %v7615
        %8145 = vmatpush1.bf16.msra.mxu0 %v7614
        %8146 = vmatprep.subr.bf16.mxu0 %v7583
        %8147 = vmatpush1.bf16.msra.mxu0 %v7582
        %8148 = vmatprep.subr.bf16.mxu0 %v7551
        %8149 = vmatpush1.bf16.msra.mxu0 %v7550
        %8150 = vmatprep.subr.bf16.mxu0 %v7519
        %8151 = vmatpush1.bf16.msra.mxu0 %v7518
        %8152 = vmatprep.subr.bf16.mxu0 %v7487
        %8153 = vmatpush1.bf16.msra.mxu0 %v7486
        %8154 = vmatprep.subr.bf16.mxu0 %v7455
        %8155 = vmatpush1.bf16.msra.mxu0 %v7454
        %8156 = vmatprep.subr.bf16.mxu0 %v7423
        %8157 = vmatpush1.bf16.msra.mxu0 %v7422
        %8158 = vmatprep.subr.bf16.mxu0 %v7391
        %8159 = vmatpush1.bf16.msra.mxu0 %v7390
        %8160 = vmatprep.subr.bf16.mxu0 %v7871
        %8161 = vmatpush2.bf16.msra.mxu0 %v7870
        %8162 = vmatprep.subr.bf16.mxu0 %v7839
        %8163 = vmatpush2.bf16.msra.mxu0 %v7838
        %8164 = vmatprep.subr.bf16.mxu0 %v7807
        %8165 = vmatpush2.bf16.msra.mxu0 %v7806
        %8166 = vmatprep.subr.bf16.mxu0 %v7775
        %8167 = vmatpush2.bf16.msra.mxu0 %v7774
        %8168 = vmatprep.subr.bf16.mxu0 %v7743
        %8169 = vmatpush2.bf16.msra.mxu0 %v7742
        %8170 = vmatprep.subr.bf16.mxu0 %v7711
        %8171 = vmatpush2.bf16.msra.mxu0 %v7710
        %8172 = vmatprep.subr.bf16.mxu0 %v7679
        %8173 = vmatpush2.bf16.msra.mxu0 %v7678
        %8174 = vmatprep.subr.bf16.mxu0 %v7647
        %8175 = vmatpush2.bf16.msra.mxu0 %v7646
        %8176 = vmatprep.mubr.bf16.mxu0 %v7895
        %8177 = vmatmul.mubr.bf16.gmra.mxu0 %v7894
        %v8178 = vpop.f32.mrf.mxu0
        %v8179 = vadd.f32 0.0, %v8178
        %v8180 = vpop.f32.mrf.mxu0
        %v8181 = vadd.f32 0.0, %v8180
        %v8182 = vpop.f32.mrf.mxu0
        %v8183 = vpop.f32.mrf.mxu0
        %8184 = vdwg.mxu0
        %8185 = vmatprep.subr.bf16.mxu0 %v7617
        %8186 = vmatpush1.bf16.msra.mxu0 %v7616
        %8187 = vmatprep.subr.bf16.mxu0 %v7585
        %8188 = vmatpush1.bf16.msra.mxu0 %v7584
        %8189 = vmatprep.subr.bf16.mxu0 %v7553
        %8190 = vmatpush1.bf16.msra.mxu0 %v7552
        %8191 = vmatprep.subr.bf16.mxu0 %v7521
        %8192 = vmatpush1.bf16.msra.mxu0 %v7520
        %8193 = vmatprep.subr.bf16.mxu0 %v7489
        %8194 = vmatpush1.bf16.msra.mxu0 %v7488
        %8195 = vmatprep.subr.bf16.mxu0 %v7457
        %8196 = vmatpush1.bf16.msra.mxu0 %v7456
        %8197 = vmatprep.subr.bf16.mxu0 %v7425
        %8198 = vmatpush1.bf16.msra.mxu0 %v7424
        %8199 = vmatprep.subr.bf16.mxu0 %v7393
        %8200 = vmatpush1.bf16.msra.mxu0 %v7392
        %8201 = vmatprep.subr.bf16.mxu0 %v7873
        %8202 = vmatpush2.bf16.msra.mxu0 %v7872
        %8203 = vmatprep.subr.bf16.mxu0 %v7841
        %8204 = vmatpush2.bf16.msra.mxu0 %v7840
        %8205 = vmatprep.subr.bf16.mxu0 %v7809
        %8206 = vmatpush2.bf16.msra.mxu0 %v7808
        %8207 = vmatprep.subr.bf16.mxu0 %v7777
        %8208 = vmatpush2.bf16.msra.mxu0 %v7776
        %8209 = vmatprep.subr.bf16.mxu0 %v7745
        %8210 = vmatpush2.bf16.msra.mxu0 %v7744
        %8211 = vmatprep.subr.bf16.mxu0 %v7713
        %8212 = vmatpush2.bf16.msra.mxu0 %v7712
        %8213 = vmatprep.subr.bf16.mxu0 %v7681
        %8214 = vmatpush2.bf16.msra.mxu0 %v7680
        %8215 = vmatprep.subr.bf16.mxu0 %v7649
        %8216 = vmatpush2.bf16.msra.mxu0 %v7648
        %8217 = vmatprep.mubr.bf16.mxu0 %v7895
        %8218 = vmatmul.mubr.bf16.gmra.mxu0 %v7894
        %v8219 = vpop.f32.mrf.mxu0
        %v8220 = vadd.f32 0.0, %v8219
        %v8221 = vpop.f32.mrf.mxu0
        %v8222 = vadd.f32 0.0, %v8221
        %v8223 = vpop.f32.mrf.mxu0
        %v8224 = vpop.f32.mrf.mxu0
        %8225 = vdwg.mxu0
        %8226 = vmatprep.subr.bf16.mxu0 %v7619
        %8227 = vmatpush1.bf16.msra.mxu0 %v7618
        %8228 = vmatprep.subr.bf16.mxu0 %v7587
        %8229 = vmatpush1.bf16.msra.mxu0 %v7586
        %8230 = vmatprep.subr.bf16.mxu0 %v7555
        %8231 = vmatpush1.bf16.msra.mxu0 %v7554
        %8232 = vmatprep.subr.bf16.mxu0 %v7523
        %8233 = vmatpush1.bf16.msra.mxu0 %v7522
        %8234 = vmatprep.subr.bf16.mxu0 %v7491
        %8235 = vmatpush1.bf16.msra.mxu0 %v7490
        %8236 = vmatprep.subr.bf16.mxu0 %v7459
        %8237 = vmatpush1.bf16.msra.mxu0 %v7458
        %8238 = vmatprep.subr.bf16.mxu0 %v7427
        %8239 = vmatpush1.bf16.msra.mxu0 %v7426
        %8240 = vmatprep.subr.bf16.mxu0 %v7395
        %8241 = vmatpush1.bf16.msra.mxu0 %v7394
        %8242 = vmatprep.subr.bf16.mxu0 %v7875
        %8243 = vmatpush2.bf16.msra.mxu0 %v7874
        %8244 = vmatprep.subr.bf16.mxu0 %v7843
        %8245 = vmatpush2.bf16.msra.mxu0 %v7842
        %8246 = vmatprep.subr.bf16.mxu0 %v7811
        %8247 = vmatpush2.bf16.msra.mxu0 %v7810
        %8248 = vmatprep.subr.bf16.mxu0 %v7779
        %8249 = vmatpush2.bf16.msra.mxu0 %v7778
        %8250 = vmatprep.subr.bf16.mxu0 %v7747
        %8251 = vmatpush2.bf16.msra.mxu0 %v7746
        %8252 = vmatprep.subr.bf16.mxu0 %v7715
        %8253 = vmatpush2.bf16.msra.mxu0 %v7714
        %8254 = vmatprep.subr.bf16.mxu0 %v7683
        %8255 = vmatpush2.bf16.msra.mxu0 %v7682
        %8256 = vmatprep.subr.bf16.mxu0 %v7651
        %8257 = vmatpush2.bf16.msra.mxu0 %v7650
        %8258 = vmatprep.mubr.bf16.mxu0 %v7895
        %8259 = vmatmul.mubr.bf16.gmra.mxu0 %v7894
        %v8260 = vpop.f32.mrf.mxu0
        %v8261 = vadd.f32 0.0, %v8260
        %v8262 = vpop.f32.mrf.mxu0
        %v8263 = vadd.f32 0.0, %v8262
        %v8264 = vpop.f32.mrf.mxu0
        %v8265 = vpop.f32.mrf.mxu0
        %8266 = vdwg.mxu0
        %8267 = vmatprep.subr.bf16.mxu0 %v7621
        %8268 = vmatpush1.bf16.msra.mxu0 %v7620
        %8269 = vmatprep.subr.bf16.mxu0 %v7589
        %8270 = vmatpush1.bf16.msra.mxu0 %v7588
        %8271 = vmatprep.subr.bf16.mxu0 %v7557
        %8272 = vmatpush1.bf16.msra.mxu0 %v7556
        %8273 = vmatprep.subr.bf16.mxu0 %v7525
        %8274 = vmatpush1.bf16.msra.mxu0 %v7524
        %8275 = vmatprep.subr.bf16.mxu0 %v7493
        %8276 = vmatpush1.bf16.msra.mxu0 %v7492
        %8277 = vmatprep.subr.bf16.mxu0 %v7461
        %8278 = vmatpush1.bf16.msra.mxu0 %v7460
        %8279 = vmatprep.subr.bf16.mxu0 %v7429
        %8280 = vmatpush1.bf16.msra.mxu0 %v7428
        %8281 = vmatprep.subr.bf16.mxu0 %v7397
        %8282 = vmatpush1.bf16.msra.mxu0 %v7396
        %8283 = vmatprep.subr.bf16.mxu0 %v7877
        %8284 = vmatpush2.bf16.msra.mxu0 %v7876
        %8285 = vmatprep.subr.bf16.mxu0 %v7845
        %8286 = vmatpush2.bf16.msra.mxu0 %v7844
        %8287 = vmatprep.subr.bf16.mxu0 %v7813
        %8288 = vmatpush2.bf16.msra.mxu0 %v7812
        %8289 = vmatprep.subr.bf16.mxu0 %v7781
        %8290 = vmatpush2.bf16.msra.mxu0 %v7780
        %8291 = vmatprep.subr.bf16.mxu0 %v7749
        %8292 = vmatpush2.bf16.msra.mxu0 %v7748
        %8293 = vmatprep.subr.bf16.mxu0 %v7717
        %8294 = vmatpush2.bf16.msra.mxu0 %v7716
        %8295 = vmatprep.subr.bf16.mxu0 %v7685
        %8296 = vmatpush2.bf16.msra.mxu0 %v7684
        %8297 = vmatprep.subr.bf16.mxu0 %v7653
        %8298 = vmatpush2.bf16.msra.mxu0 %v7652
        %8299 = vmatprep.mubr.bf16.mxu0 %v7895
        %8300 = vmatmul.mubr.bf16.gmra.mxu0 %v7894
        %v8301 = vpop.f32.mrf.mxu0
        %v8302 = vadd.f32 0.0, %v8301
        %v8303 = vpop.f32.mrf.mxu0
        %v8304 = vadd.f32 0.0, %v8303
        %v8305 = vpop.f32.mrf.mxu0
        %v8306 = vpop.f32.mrf.mxu0
        %8307 = vdwg.mxu0
        %8308 = vmatprep.subr.bf16.mxu0 %v7623
        %8309 = vmatpush1.bf16.msra.mxu0 %v7622
        %8310 = vmatprep.subr.bf16.mxu0 %v7591
        %8311 = vmatpush1.bf16.msra.mxu0 %v7590
        %8312 = vmatprep.subr.bf16.mxu0 %v7559
        %8313 = vmatpush1.bf16.msra.mxu0 %v7558
        %8314 = vmatprep.subr.bf16.mxu0 %v7527
        %8315 = vmatpush1.bf16.msra.mxu0 %v7526
        %8316 = vmatprep.subr.bf16.mxu0 %v7495
        %8317 = vmatpush1.bf16.msra.mxu0 %v7494
        %8318 = vmatprep.subr.bf16.mxu0 %v7463
        %8319 = vmatpush1.bf16.msra.mxu0 %v7462
        %8320 = vmatprep.subr.bf16.mxu0 %v7431
        %8321 = vmatpush1.bf16.msra.mxu0 %v7430
        %8322 = vmatprep.subr.bf16.mxu0 %v7399
        %8323 = vmatpush1.bf16.msra.mxu0 %v7398
        %8324 = vmatprep.subr.bf16.mxu0 %v7879
        %8325 = vmatpush2.bf16.msra.mxu0 %v7878
        %8326 = vmatprep.subr.bf16.mxu0 %v7847
        %8327 = vmatpush2.bf16.msra.mxu0 %v7846
        %8328 = vmatprep.subr.bf16.mxu0 %v7815
        %8329 = vmatpush2.bf16.msra.mxu0 %v7814
        %8330 = vmatprep.subr.bf16.mxu0 %v7783
        %8331 = vmatpush2.bf16.msra.mxu0 %v7782
        %8332 = vmatprep.subr.bf16.mxu0 %v7751
        %8333 = vmatpush2.bf16.msra.mxu0 %v7750
        %8334 = vmatprep.subr.bf16.mxu0 %v7719
        %8335 = vmatpush2.bf16.msra.mxu0 %v7718
        %8336 = vmatprep.subr.bf16.mxu0 %v7687
        %8337 = vmatpush2.bf16.msra.mxu0 %v7686
        %8338 = vmatprep.subr.bf16.mxu0 %v7655
        %8339 = vmatpush2.bf16.msra.mxu0 %v7654
        %8340 = vmatprep.mubr.bf16.mxu0 %v7895
        %8341 = vmatmul.mubr.bf16.gmra.mxu0 %v7894
        %v8342 = vpop.f32.mrf.mxu0
        %v8343 = vadd.f32 0.0, %v8342
        %v8344 = vpop.f32.mrf.mxu0
        %v8345 = vadd.f32 0.0, %v8344
        %v8346 = vpop.f32.mrf.mxu0
        %v8347 = vpop.f32.mrf.mxu0
        %8348 = vdwg.mxu0
        %8349 = vmatprep.subr.bf16.mxu0 %v7625
        %8350 = vmatpush1.bf16.msra.mxu0 %v7624
        %8351 = vmatprep.subr.bf16.mxu0 %v7593
        %8352 = vmatpush1.bf16.msra.mxu0 %v7592
        %8353 = vmatprep.subr.bf16.mxu0 %v7561
        %8354 = vmatpush1.bf16.msra.mxu0 %v7560
        %8355 = vmatprep.subr.bf16.mxu0 %v7529
        %8356 = vmatpush1.bf16.msra.mxu0 %v7528
        %8357 = vmatprep.subr.bf16.mxu0 %v7497
        %8358 = vmatpush1.bf16.msra.mxu0 %v7496
        %8359 = vmatprep.subr.bf16.mxu0 %v7465
        %8360 = vmatpush1.bf16.msra.mxu0 %v7464
        %8361 = vmatprep.subr.bf16.mxu0 %v7433
        %8362 = vmatpush1.bf16.msra.mxu0 %v7432
        %8363 = vmatprep.subr.bf16.mxu0 %v7401
        %8364 = vmatpush1.bf16.msra.mxu0 %v7400
        %8365 = vmatprep.subr.bf16.mxu0 %v7881
        %8366 = vmatpush2.bf16.msra.mxu0 %v7880
        %8367 = vmatprep.subr.bf16.mxu0 %v7849
        %8368 = vmatpush2.bf16.msra.mxu0 %v7848
        %8369 = vmatprep.subr.bf16.mxu0 %v7817
        %8370 = vmatpush2.bf16.msra.mxu0 %v7816
        %8371 = vmatprep.subr.bf16.mxu0 %v7785
        %8372 = vmatpush2.bf16.msra.mxu0 %v7784
        %8373 = vmatprep.subr.bf16.mxu0 %v7753
        %8374 = vmatpush2.bf16.msra.mxu0 %v7752
        %8375 = vmatprep.subr.bf16.mxu0 %v7721
        %8376 = vmatpush2.bf16.msra.mxu0 %v7720
        %8377 = vmatprep.subr.bf16.mxu0 %v7689
        %8378 = vmatpush2.bf16.msra.mxu0 %v7688
        %8379 = vmatprep.subr.bf16.mxu0 %v7657
        %8380 = vmatpush2.bf16.msra.mxu0 %v7656
        %8381 = vmatprep.mubr.bf16.mxu0 %v7895
        %8382 = vmatmul.mubr.bf16.gmra.mxu0 %v7894
        %v8383 = vpop.f32.mrf.mxu0
        %v8384 = vadd.f32 0.0, %v8383
        %v8385 = vpop.f32.mrf.mxu0
        %v8386 = vadd.f32 0.0, %v8385
        %v8387 = vpop.f32.mrf.mxu0
        %v8388 = vpop.f32.mrf.mxu0
        %8389 = vdwg.mxu0
        %8390 = vmatprep.subr.bf16.mxu0 %v7627
        %8391 = vmatpush1.bf16.msra.mxu0 %v7626
        %8392 = vmatprep.subr.bf16.mxu0 %v7595
        %8393 = vmatpush1.bf16.msra.mxu0 %v7594
        %8394 = vmatprep.subr.bf16.mxu0 %v7563
        %8395 = vmatpush1.bf16.msra.mxu0 %v7562
        %8396 = vmatprep.subr.bf16.mxu0 %v7531
        %8397 = vmatpush1.bf16.msra.mxu0 %v7530
        %8398 = vmatprep.subr.bf16.mxu0 %v7499
        %8399 = vmatpush1.bf16.msra.mxu0 %v7498
        %8400 = vmatprep.subr.bf16.mxu0 %v7467
        %8401 = vmatpush1.bf16.msra.mxu0 %v7466
        %8402 = vmatprep.subr.bf16.mxu0 %v7435
        %8403 = vmatpush1.bf16.msra.mxu0 %v7434
        %8404 = vmatprep.subr.bf16.mxu0 %v7403
        %8405 = vmatpush1.bf16.msra.mxu0 %v7402
        %8406 = vmatprep.subr.bf16.mxu0 %v7883
        %8407 = vmatpush2.bf16.msra.mxu0 %v7882
        %8408 = vmatprep.subr.bf16.mxu0 %v7851
        %8409 = vmatpush2.bf16.msra.mxu0 %v7850
        %8410 = vmatprep.subr.bf16.mxu0 %v7819
        %8411 = vmatpush2.bf16.msra.mxu0 %v7818
        %8412 = vmatprep.subr.bf16.mxu0 %v7787
        %8413 = vmatpush2.bf16.msra.mxu0 %v7786
        %8414 = vmatprep.subr.bf16.mxu0 %v7755
        %8415 = vmatpush2.bf16.msra.mxu0 %v7754
        %8416 = vmatprep.subr.bf16.mxu0 %v7723
        %8417 = vmatpush2.bf16.msra.mxu0 %v7722
        %8418 = vmatprep.subr.bf16.mxu0 %v7691
        %8419 = vmatpush2.bf16.msra.mxu0 %v7690
        %8420 = vmatprep.subr.bf16.mxu0 %v7659
        %8421 = vmatpush2.bf16.msra.mxu0 %v7658
        %8422 = vmatprep.mubr.bf16.mxu0 %v7895
        %8423 = vmatmul.mubr.bf16.gmra.mxu0 %v7894
        %v8424 = vpop.f32.mrf.mxu0
        %v8425 = vadd.f32 0.0, %v8424
        %v8426 = vpop.f32.mrf.mxu0
        %v8427 = vadd.f32 0.0, %v8426
        %v8428 = vpop.f32.mrf.mxu0
        %v8429 = vpop.f32.mrf.mxu0
        %8430 = vdwg.mxu0
        %8431 = vmatprep.subr.bf16.mxu0 %v7629
        %8432 = vmatpush1.bf16.msra.mxu0 %v7628
        %8433 = vmatprep.subr.bf16.mxu0 %v7597
        %8434 = vmatpush1.bf16.msra.mxu0 %v7596
        %8435 = vmatprep.subr.bf16.mxu0 %v7565
        %8436 = vmatpush1.bf16.msra.mxu0 %v7564
        %8437 = vmatprep.subr.bf16.mxu0 %v7533
        %8438 = vmatpush1.bf16.msra.mxu0 %v7532
        %8439 = vmatprep.subr.bf16.mxu0 %v7501
        %8440 = vmatpush1.bf16.msra.mxu0 %v7500
        %8441 = vmatprep.subr.bf16.mxu0 %v7469
        %8442 = vmatpush1.bf16.msra.mxu0 %v7468
        %8443 = vmatprep.subr.bf16.mxu0 %v7437
        %8444 = vmatpush1.bf16.msra.mxu0 %v7436
        %8445 = vmatprep.subr.bf16.mxu0 %v7405
        %8446 = vmatpush1.bf16.msra.mxu0 %v7404
        %8447 = vmatprep.subr.bf16.mxu0 %v7885
        %8448 = vmatpush2.bf16.msra.mxu0 %v7884
        %8449 = vmatprep.subr.bf16.mxu0 %v7853
        %8450 = vmatpush2.bf16.msra.mxu0 %v7852
        %8451 = vmatprep.subr.bf16.mxu0 %v7821
        %8452 = vmatpush2.bf16.msra.mxu0 %v7820
        %8453 = vmatprep.subr.bf16.mxu0 %v7789
        %8454 = vmatpush2.bf16.msra.mxu0 %v7788
        %8455 = vmatprep.subr.bf16.mxu0 %v7757
        %8456 = vmatpush2.bf16.msra.mxu0 %v7756
        %8457 = vmatprep.subr.bf16.mxu0 %v7725
        %8458 = vmatpush2.bf16.msra.mxu0 %v7724
        %8459 = vmatprep.subr.bf16.mxu0 %v7693
        %8460 = vmatpush2.bf16.msra.mxu0 %v7692
        %8461 = vmatprep.subr.bf16.mxu0 %v7661
        %8462 = vmatpush2.bf16.msra.mxu0 %v7660
        %8463 = vmatprep.mubr.bf16.mxu0 %v7895
        %8464 = vmatmul.mubr.bf16.gmra.mxu0 %v7894
        %v8465 = vpop.f32.mrf.mxu0
        %v8466 = vadd.f32 0.0, %v8465
        %v8467 = vpop.f32.mrf.mxu0
        %v8468 = vadd.f32 0.0, %v8467
        %v8469 = vpop.f32.mrf.mxu0
        %v8470 = vpop.f32.mrf.mxu0
        %8471 = vdwg.mxu0
        %8472 = vmatprep.subr.bf16.mxu0 %v7631
        %8473 = vmatpush1.bf16.msra.mxu0 %v7630
        %8474 = vmatprep.subr.bf16.mxu0 %v7599
        %8475 = vmatpush1.bf16.msra.mxu0 %v7598
        %8476 = vmatprep.subr.bf16.mxu0 %v7567
        %8477 = vmatpush1.bf16.msra.mxu0 %v7566
        %8478 = vmatprep.subr.bf16.mxu0 %v7535
        %8479 = vmatpush1.bf16.msra.mxu0 %v7534
        %8480 = vmatprep.subr.bf16.mxu0 %v7503
        %8481 = vmatpush1.bf16.msra.mxu0 %v7502
        %8482 = vmatprep.subr.bf16.mxu0 %v7471
        %8483 = vmatpush1.bf16.msra.mxu0 %v7470
        %8484 = vmatprep.subr.bf16.mxu0 %v7439
        %8485 = vmatpush1.bf16.msra.mxu0 %v7438
        %8486 = vmatprep.subr.bf16.mxu0 %v7407
        %8487 = vmatpush1.bf16.msra.mxu0 %v7406
        %8488 = vmatprep.subr.bf16.mxu0 %v7887
        %8489 = vmatpush2.bf16.msra.mxu0 %v7886
        %8490 = vmatprep.subr.bf16.mxu0 %v7855
        %8491 = vmatpush2.bf16.msra.mxu0 %v7854
        %8492 = vmatprep.subr.bf16.mxu0 %v7823
        %8493 = vmatpush2.bf16.msra.mxu0 %v7822
        %8494 = vmatprep.subr.bf16.mxu0 %v7791
        %8495 = vmatpush2.bf16.msra.mxu0 %v7790
        %8496 = vmatprep.subr.bf16.mxu0 %v7759
        %8497 = vmatpush2.bf16.msra.mxu0 %v7758
        %8498 = vmatprep.subr.bf16.mxu0 %v7727
        %8499 = vmatpush2.bf16.msra.mxu0 %v7726
        %8500 = vmatprep.subr.bf16.mxu0 %v7695
        %8501 = vmatpush2.bf16.msra.mxu0 %v7694
        %8502 = vmatprep.subr.bf16.mxu0 %v7663
        %8503 = vmatpush2.bf16.msra.mxu0 %v7662
        %8504 = vmatprep.mubr.bf16.mxu0 %v7895
        %8505 = vmatmul.mubr.bf16.gmra.mxu0 %v7894
        %v8506 = vpop.f32.mrf.mxu0
        %v8507 = vadd.f32 0.0, %v8506
        %v8508 = vpop.f32.mrf.mxu0
        %v8509 = vadd.f32 0.0, %v8508
        %v8510 = vpop.f32.mrf.mxu0
        %v8511 = vpop.f32.mrf.mxu0
        %8512 = vdwg.mxu0
        %8513 = vmatprep.subr.bf16.mxu0 %v7633
        %8514 = vmatpush1.bf16.msra.mxu0 %v7632
        %8515 = vmatprep.subr.bf16.mxu0 %v7601
        %8516 = vmatpush1.bf16.msra.mxu0 %v7600
        %8517 = vmatprep.subr.bf16.mxu0 %v7569
        %8518 = vmatpush1.bf16.msra.mxu0 %v7568
        %8519 = vmatprep.subr.bf16.mxu0 %v7537
        %8520 = vmatpush1.bf16.msra.mxu0 %v7536
        %8521 = vmatprep.subr.bf16.mxu0 %v7505
        %8522 = vmatpush1.bf16.msra.mxu0 %v7504
        %8523 = vmatprep.subr.bf16.mxu0 %v7473
        %8524 = vmatpush1.bf16.msra.mxu0 %v7472
        %8525 = vmatprep.subr.bf16.mxu0 %v7441
        %8526 = vmatpush1.bf16.msra.mxu0 %v7440
        %8527 = vmatprep.subr.bf16.mxu0 %v7409
        %8528 = vmatpush1.bf16.msra.mxu0 %v7408
        %8529 = vmatprep.subr.bf16.mxu0 %v7889
        %8530 = vmatpush2.bf16.msra.mxu0 %v7888
        %8531 = vmatprep.subr.bf16.mxu0 %v7857
        %8532 = vmatpush2.bf16.msra.mxu0 %v7856
        %8533 = vmatprep.subr.bf16.mxu0 %v7825
        %8534 = vmatpush2.bf16.msra.mxu0 %v7824
        %8535 = vmatprep.subr.bf16.mxu0 %v7793
        %8536 = vmatpush2.bf16.msra.mxu0 %v7792
        %8537 = vmatprep.subr.bf16.mxu0 %v7761
        %8538 = vmatpush2.bf16.msra.mxu0 %v7760
        %8539 = vmatprep.subr.bf16.mxu0 %v7729
        %8540 = vmatpush2.bf16.msra.mxu0 %v7728
        %8541 = vmatprep.subr.bf16.mxu0 %v7697
        %8542 = vmatpush2.bf16.msra.mxu0 %v7696
        %8543 = vmatprep.subr.bf16.mxu0 %v7665
        %8544 = vmatpush2.bf16.msra.mxu0 %v7664
        %8545 = vmatprep.mubr.bf16.mxu0 %v7895
        %8546 = vmatmul.mubr.bf16.gmra.mxu0 %v7894
        %v8547 = vpop.f32.mrf.mxu0
        %v8548 = vadd.f32 0.0, %v8547
        %v8549 = vpop.f32.mrf.mxu0
        %v8550 = vadd.f32 0.0, %v8549
        %v8551 = vpop.f32.mrf.mxu0
        %v8552 = vpop.f32.mrf.mxu0
        %8553 = vdwg.mxu0
        %v8554 = vld [vmem:[%s656] sm:$0xff]
        %v8555 = vld [vmem:[%s656 + $0x8] sm:$0xff]
        %v8556 = vld [vmem:[%s656 + $0x10] sm:$0xff]
        %v8557 = vld [vmem:[%s656 + $0x18] sm:$0xff]
        %v8562 = vlaneseq
        %v8563 = vshrl.u32 %v8562, 7
        %v8564 = vsub.s32 0, %v8563
        %v8565 = vrot.slane %v8554, %v8564
        %v8566 = vlaneseq
        %v8567 = vshrl.u32 %v8566, 7
        %v8568 = vsub.s32 1, %v8567
        %v8569 = vrot.slane %v8554, %v8568
        %v8570 = vlaneseq
        %v8571 = vshrl.u32 %v8570, 7
        %v8572 = vsub.s32 2, %v8571
        %v8573 = vrot.slane %v8554, %v8572
        %v8574 = vlaneseq
        %v8575 = vshrl.u32 %v8574, 7
        %v8576 = vsub.s32 3, %v8575
        %v8577 = vrot.slane %v8554, %v8576
        %v8578 = vlaneseq
        %v8579 = vshrl.u32 %v8578, 7
        %v8580 = vsub.s32 4, %v8579
        %v8581 = vrot.slane %v8554, %v8580
        %v8582 = vlaneseq
        %v8583 = vshrl.u32 %v8582, 7
        %v8584 = vsub.s32 5, %v8583
        %v8585 = vrot.slane %v8554, %v8584
        %v8586 = vlaneseq
        %v8587 = vshrl.u32 %v8586, 7
        %v8588 = vsub.s32 6, %v8587
        %v8589 = vrot.slane %v8554, %v8588
        %v8590 = vlaneseq
        %v8591 = vshrl.u32 %v8590, 7
        %v8592 = vsub.s32 7, %v8591
        %v8593 = vrot.slane %v8554, %v8592
        %v8594 = vlaneseq
        %v8595 = vshrl.u32 %v8594, 7
        %v8596 = vsub.s32 0, %v8595
        %v8597 = vrot.slane %v8555, %v8596
        %v8598 = vlaneseq
        %v8599 = vshrl.u32 %v8598, 7
        %v8600 = vsub.s32 1, %v8599
        %v8601 = vrot.slane %v8555, %v8600
        %v8602 = vlaneseq
        %v8603 = vshrl.u32 %v8602, 7
        %v8604 = vsub.s32 2, %v8603
        %v8605 = vrot.slane %v8555, %v8604
        %v8606 = vlaneseq
        %v8607 = vshrl.u32 %v8606, 7
        %v8608 = vsub.s32 3, %v8607
        %v8609 = vrot.slane %v8555, %v8608
        %v8610 = vlaneseq
        %v8611 = vshrl.u32 %v8610, 7
        %v8612 = vsub.s32 4, %v8611
        %v8613 = vrot.slane %v8555, %v8612
        %v8614 = vlaneseq
        %v8615 = vshrl.u32 %v8614, 7
        %v8616 = vsub.s32 5, %v8615
        %v8617 = vrot.slane %v8555, %v8616
        %v8618 = vlaneseq
        %v8619 = vshrl.u32 %v8618, 7
        %v8620 = vsub.s32 6, %v8619
        %v8621 = vrot.slane %v8555, %v8620
        %v8622 = vlaneseq
        %v8623 = vshrl.u32 %v8622, 7
        %v8624 = vsub.s32 7, %v8623
        %v8625 = vrot.slane %v8555, %v8624
        %v8626 = vlaneseq
        %v8627 = vshrl.u32 %v8626, 7
        %v8628 = vsub.s32 0, %v8627
        %v8629 = vrot.slane %v8556, %v8628
        %v8630 = vlaneseq
        %v8631 = vshrl.u32 %v8630, 7
        %v8632 = vsub.s32 1, %v8631
        %v8633 = vrot.slane %v8556, %v8632
        %v8634 = vlaneseq
        %v8635 = vshrl.u32 %v8634, 7
        %v8636 = vsub.s32 2, %v8635
        %v8637 = vrot.slane %v8556, %v8636
        %v8638 = vlaneseq
        %v8639 = vshrl.u32 %v8638, 7
        %v8640 = vsub.s32 3, %v8639
        %v8641 = vrot.slane %v8556, %v8640
        %v8642 = vlaneseq
        %v8643 = vshrl.u32 %v8642, 7
        %v8644 = vsub.s32 4, %v8643
        %v8645 = vrot.slane %v8556, %v8644
        %v8646 = vlaneseq
        %v8647 = vshrl.u32 %v8646, 7
        %v8648 = vsub.s32 5, %v8647
        %v8649 = vrot.slane %v8556, %v8648
        %v8650 = vlaneseq
        %v8651 = vshrl.u32 %v8650, 7
        %v8652 = vsub.s32 6, %v8651
        %v8653 = vrot.slane %v8556, %v8652
        %v8654 = vlaneseq
        %v8655 = vshrl.u32 %v8654, 7
        %v8656 = vsub.s32 7, %v8655
        %v8657 = vrot.slane %v8556, %v8656
        %v8658 = vlaneseq
        %v8659 = vshrl.u32 %v8658, 7
        %v8660 = vsub.s32 0, %v8659
        %v8661 = vrot.slane %v8557, %v8660
        %v8662 = vlaneseq
        %v8663 = vshrl.u32 %v8662, 7
        %v8664 = vsub.s32 1, %v8663
        %v8665 = vrot.slane %v8557, %v8664
        %v8666 = vlaneseq
        %v8667 = vshrl.u32 %v8666, 7
        %v8668 = vsub.s32 2, %v8667
        %v8669 = vrot.slane %v8557, %v8668
        %v8670 = vlaneseq
        %v8671 = vshrl.u32 %v8670, 7
        %v8672 = vsub.s32 3, %v8671
        %v8673 = vrot.slane %v8557, %v8672
        %v8674 = vlaneseq
        %v8675 = vshrl.u32 %v8674, 7
        %v8676 = vsub.s32 4, %v8675
        %v8677 = vrot.slane %v8557, %v8676
        %v8678 = vlaneseq
        %v8679 = vshrl.u32 %v8678, 7
        %v8680 = vsub.s32 5, %v8679
        %v8681 = vrot.slane %v8557, %v8680
        %v8682 = vlaneseq
        %v8683 = vshrl.u32 %v8682, 7
        %v8684 = vsub.s32 6, %v8683
        %v8685 = vrot.slane %v8557, %v8684
        %v8686 = vlaneseq
        %v8687 = vshrl.u32 %v8686, 7
        %v8688 = vsub.s32 7, %v8687
        %v8689 = vrot.slane %v8557, %v8688
        %v8722 = vmul.f32 %v7933, %v8565
        %v8723 = vmul.f32 %v7935, %v8569
        %v8724 = vmul.f32 %v7974, %v8573
        %v8725 = vmul.f32 %v7976, %v8577
        %v8726 = vmul.f32 %v8015, %v8581
        %v8727 = vmul.f32 %v8017, %v8585
        %v8728 = vmul.f32 %v8056, %v8589
        %v8729 = vmul.f32 %v8058, %v8593
        %v8730 = vmul.f32 %v8097, %v8597
        %v8731 = vmul.f32 %v8099, %v8601
        %v8732 = vmul.f32 %v8138, %v8605
        %v8733 = vmul.f32 %v8140, %v8609
        %v8734 = vmul.f32 %v8179, %v8613
        %v8735 = vmul.f32 %v8181, %v8617
        %v8736 = vmul.f32 %v8220, %v8621
        %v8737 = vmul.f32 %v8222, %v8625
        %v8738 = vmul.f32 %v8261, %v8629
        %v8739 = vmul.f32 %v8263, %v8633
        %v8740 = vmul.f32 %v8302, %v8637
        %v8741 = vmul.f32 %v8304, %v8641
        %v8742 = vmul.f32 %v8343, %v8645
        %v8743 = vmul.f32 %v8345, %v8649
        %v8744 = vmul.f32 %v8384, %v8653
        %v8745 = vmul.f32 %v8386, %v8657
        %v8746 = vmul.f32 %v8425, %v8661
        %v8747 = vmul.f32 %v8427, %v8665
        %v8748 = vmul.f32 %v8466, %v8669
        %v8749 = vmul.f32 %v8468, %v8673
        %v8750 = vmul.f32 %v8507, %v8677
        %v8751 = vmul.f32 %v8509, %v8681
        %v8752 = vmul.f32 %v8548, %v8685
        %v8753 = vmul.f32 %v8550, %v8689
        %v8754 = vld [vmem:[%s665] sm:$0xff]
        %v8755 = vld [vmem:[%s665 + $0x8] sm:$0xff]
        %v8756 = vld [vmem:[%s665 + $0x10] sm:$0xff]
        %v8757 = vld [vmem:[%s665 + $0x18] sm:$0xff]
        %v8762 = vlaneseq
        %v8763 = vshrl.u32 %v8762, 7
        %v8764 = vsub.s32 0, %v8763
        %v8765 = vrot.slane %v8754, %v8764
        %v8766 = vlaneseq
        %v8767 = vshrl.u32 %v8766, 7
        %v8768 = vsub.s32 1, %v8767
        %v8769 = vrot.slane %v8754, %v8768
        %v8770 = vlaneseq
        %v8771 = vshrl.u32 %v8770, 7
        %v8772 = vsub.s32 2, %v8771
        %v8773 = vrot.slane %v8754, %v8772
        %v8774 = vlaneseq
        %v8775 = vshrl.u32 %v8774, 7
        %v8776 = vsub.s32 3, %v8775
        %v8777 = vrot.slane %v8754, %v8776
        %v8778 = vlaneseq
        %v8779 = vshrl.u32 %v8778, 7
        %v8780 = vsub.s32 4, %v8779
        %v8781 = vrot.slane %v8754, %v8780
        %v8782 = vlaneseq
        %v8783 = vshrl.u32 %v8782, 7
        %v8784 = vsub.s32 5, %v8783
        %v8785 = vrot.slane %v8754, %v8784
        %v8786 = vlaneseq
        %v8787 = vshrl.u32 %v8786, 7
        %v8788 = vsub.s32 6, %v8787
        %v8789 = vrot.slane %v8754, %v8788
        %v8790 = vlaneseq
        %v8791 = vshrl.u32 %v8790, 7
        %v8792 = vsub.s32 7, %v8791
        %v8793 = vrot.slane %v8754, %v8792
        %v8794 = vlaneseq
        %v8795 = vshrl.u32 %v8794, 7
        %v8796 = vsub.s32 0, %v8795
        %v8797 = vrot.slane %v8755, %v8796
        %v8798 = vlaneseq
        %v8799 = vshrl.u32 %v8798, 7
        %v8800 = vsub.s32 1, %v8799
        %v8801 = vrot.slane %v8755, %v8800
        %v8802 = vlaneseq
        %v8803 = vshrl.u32 %v8802, 7
        %v8804 = vsub.s32 2, %v8803
        %v8805 = vrot.slane %v8755, %v8804
        %v8806 = vlaneseq
        %v8807 = vshrl.u32 %v8806, 7
        %v8808 = vsub.s32 3, %v8807
        %v8809 = vrot.slane %v8755, %v8808
        %v8810 = vlaneseq
        %v8811 = vshrl.u32 %v8810, 7
        %v8812 = vsub.s32 4, %v8811
        %v8813 = vrot.slane %v8755, %v8812
        %v8814 = vlaneseq
        %v8815 = vshrl.u32 %v8814, 7
        %v8816 = vsub.s32 5, %v8815
        %v8817 = vrot.slane %v8755, %v8816
        %v8818 = vlaneseq
        %v8819 = vshrl.u32 %v8818, 7
        %v8820 = vsub.s32 6, %v8819
        %v8821 = vrot.slane %v8755, %v8820
        %v8822 = vlaneseq
        %v8823 = vshrl.u32 %v8822, 7
        %v8824 = vsub.s32 7, %v8823
        %v8825 = vrot.slane %v8755, %v8824
        %v8826 = vlaneseq
        %v8827 = vshrl.u32 %v8826, 7
        %v8828 = vsub.s32 0, %v8827
        %v8829 = vrot.slane %v8756, %v8828
        %v8830 = vlaneseq
        %v8831 = vshrl.u32 %v8830, 7
        %v8832 = vsub.s32 1, %v8831
        %v8833 = vrot.slane %v8756, %v8832
        %v8834 = vlaneseq
        %v8835 = vshrl.u32 %v8834, 7
        %v8836 = vsub.s32 2, %v8835
        %v8837 = vrot.slane %v8756, %v8836
        %v8838 = vlaneseq
        %v8839 = vshrl.u32 %v8838, 7
        %v8840 = vsub.s32 3, %v8839
        %v8841 = vrot.slane %v8756, %v8840
        %v8842 = vlaneseq
        %v8843 = vshrl.u32 %v8842, 7
        %v8844 = vsub.s32 4, %v8843
        %v8845 = vrot.slane %v8756, %v8844
        %v8846 = vlaneseq
        %v8847 = vshrl.u32 %v8846, 7
        %v8848 = vsub.s32 5, %v8847
        %v8849 = vrot.slane %v8756, %v8848
        %v8850 = vlaneseq
        %v8851 = vshrl.u32 %v8850, 7
        %v8852 = vsub.s32 6, %v8851
        %v8853 = vrot.slane %v8756, %v8852
        %v8854 = vlaneseq
        %v8855 = vshrl.u32 %v8854, 7
        %v8856 = vsub.s32 7, %v8855
        %v8857 = vrot.slane %v8756, %v8856
        %v8858 = vlaneseq
        %v8859 = vshrl.u32 %v8858, 7
        %v8860 = vsub.s32 0, %v8859
        %v8861 = vrot.slane %v8757, %v8860
        %v8862 = vlaneseq
        %v8863 = vshrl.u32 %v8862, 7
        %v8864 = vsub.s32 1, %v8863
        %v8865 = vrot.slane %v8757, %v8864
        %v8866 = vlaneseq
        %v8867 = vshrl.u32 %v8866, 7
        %v8868 = vsub.s32 2, %v8867
        %v8869 = vrot.slane %v8757, %v8868
        %v8870 = vlaneseq
        %v8871 = vshrl.u32 %v8870, 7
        %v8872 = vsub.s32 3, %v8871
        %v8873 = vrot.slane %v8757, %v8872
        %v8874 = vlaneseq
        %v8875 = vshrl.u32 %v8874, 7
        %v8876 = vsub.s32 4, %v8875
        %v8877 = vrot.slane %v8757, %v8876
        %v8878 = vlaneseq
        %v8879 = vshrl.u32 %v8878, 7
        %v8880 = vsub.s32 5, %v8879
        %v8881 = vrot.slane %v8757, %v8880
        %v8882 = vlaneseq
        %v8883 = vshrl.u32 %v8882, 7
        %v8884 = vsub.s32 6, %v8883
        %v8885 = vrot.slane %v8757, %v8884
        %v8886 = vlaneseq
        %v8887 = vshrl.u32 %v8886, 7
        %v8888 = vsub.s32 7, %v8887
        %v8889 = vrot.slane %v8757, %v8888
        %v8922 = vadd.f32 %v8722, %v8765
        %v8923 = vadd.f32 %v8723, %v8769
        %v8924 = vadd.f32 %v8724, %v8773
        %v8925 = vadd.f32 %v8725, %v8777
        %v8926 = vadd.f32 %v8726, %v8781
        %v8927 = vadd.f32 %v8727, %v8785
        %v8928 = vadd.f32 %v8728, %v8789
        %v8929 = vadd.f32 %v8729, %v8793
        %v8930 = vadd.f32 %v8730, %v8797
        %v8931 = vadd.f32 %v8731, %v8801
        %v8932 = vadd.f32 %v8732, %v8805
        %v8933 = vadd.f32 %v8733, %v8809
        %v8934 = vadd.f32 %v8734, %v8813
        %v8935 = vadd.f32 %v8735, %v8817
        %v8936 = vadd.f32 %v8736, %v8821
        %v8937 = vadd.f32 %v8737, %v8825
        %v8938 = vadd.f32 %v8738, %v8829
        %v8939 = vadd.f32 %v8739, %v8833
        %v8940 = vadd.f32 %v8740, %v8837
        %v8941 = vadd.f32 %v8741, %v8841
        %v8942 = vadd.f32 %v8742, %v8845
        %v8943 = vadd.f32 %v8743, %v8849
        %v8944 = vadd.f32 %v8744, %v8853
        %v8945 = vadd.f32 %v8745, %v8857
        %v8946 = vadd.f32 %v8746, %v8861
        %v8947 = vadd.f32 %v8747, %v8865
        %v8948 = vadd.f32 %v8748, %v8869
        %v8949 = vadd.f32 %v8749, %v8873
        %v8950 = vadd.f32 %v8750, %v8877
        %v8951 = vadd.f32 %v8751, %v8881
        %v8952 = vadd.f32 %v8752, %v8885
        %v8953 = vadd.f32 %v8753, %v8889
        %v8954 = vlaneseq
        %v8955 = vand.u32 %v8954, 127
        %v8956 = vadd.s32 %v8955, 128
        %v8957 = vadd.s32 %v8955, 256
        %v8958 = vadd.s32 %v8955, 384
        %v8959 = vadd.s32 %v8955, 512
        %v8960 = vadd.s32 %v8955, 640
        %v8961 = vadd.s32 %v8955, 768
        %v8962 = vadd.s32 %v8955, 896
        %v8963 = vadd.s32 %v8955, 1024
        %v8964 = vadd.s32 %v8955, 1152
        %v8965 = vadd.s32 %v8955, 1280
        %v8966 = vadd.s32 %v8955, 1408
        %v8967 = vadd.s32 %v8955, 1536
        %v8968 = vadd.s32 %v8955, 1664
        %v8969 = vadd.s32 %v8955, 1792
        %v8970 = vadd.s32 %v8955, 1920
        %v8971 = vadd.s32 %v8955, 2048
        %v8972 = vadd.s32 %v8955, 2176
        %v8973 = vadd.s32 %v8955, 2304
        %v8974 = vadd.s32 %v8955, 2432
        %v8975 = vadd.s32 %v8955, 2560
        %v8976 = vadd.s32 %v8955, 2688
        %v8977 = vadd.s32 %v8955, 2816
        %v8978 = vadd.s32 %v8955, 2944
        %v8979 = vadd.s32 %v8955, 3072
        %v8980 = vadd.s32 %v8955, 3200
        %v8981 = vadd.s32 %v8955, 3328
        %v8982 = vadd.s32 %v8955, 3456
        %v8983 = vadd.s32 %v8955, 3584
        %v8984 = vadd.s32 %v8955, 3712
        %v8985 = vadd.s32 %v8955, 3840
        %v8986 = vadd.s32 %v8955, 3968
        %s8987 = smul.u32 %s39, 4096
        %v8988 = vstv %s8987
        %v8989 = vadd.s32 %v8955, %v8988
        %v8990 = vadd.s32 %v8956, %v8988
        %v8991 = vadd.s32 %v8957, %v8988
        %v8992 = vadd.s32 %v8958, %v8988
        %v8993 = vadd.s32 %v8959, %v8988
        %v8994 = vadd.s32 %v8960, %v8988
        %v8995 = vadd.s32 %v8961, %v8988
        %v8996 = vadd.s32 %v8962, %v8988
        %v8997 = vadd.s32 %v8963, %v8988
        %v8998 = vadd.s32 %v8964, %v8988
        %v8999 = vadd.s32 %v8965, %v8988
        %v9000 = vadd.s32 %v8966, %v8988
        %v9001 = vadd.s32 %v8967, %v8988
        %v9002 = vadd.s32 %v8968, %v8988
        %v9003 = vadd.s32 %v8969, %v8988
        %v9004 = vadd.s32 %v8970, %v8988
        %v9005 = vadd.s32 %v8971, %v8988
        %v9006 = vadd.s32 %v8972, %v8988
        %v9007 = vadd.s32 %v8973, %v8988
        %v9008 = vadd.s32 %v8974, %v8988
        %v9009 = vadd.s32 %v8975, %v8988
        %v9010 = vadd.s32 %v8976, %v8988
        %v9011 = vadd.s32 %v8977, %v8988
        %v9012 = vadd.s32 %v8978, %v8988
        %v9013 = vadd.s32 %v8979, %v8988
        %v9014 = vadd.s32 %v8980, %v8988
        %v9015 = vadd.s32 %v8981, %v8988
        %v9016 = vadd.s32 %v8982, %v8988
        %v9017 = vadd.s32 %v8983, %v8988
        %v9018 = vadd.s32 %v8984, %v8988
        %v9019 = vadd.s32 %v8985, %v8988
        %v9020 = vadd.s32 %v8986, %v8988
        %v9021 = vmax.f32 %v8922, %v8926
        %v9022 = vmax.f32 %v8923, %v8927
        %v9023 = vmax.f32 %v8924, %v8928
        %v9024 = vmax.f32 %v8925, %v8929
        %v9025 = vmax.f32 %v9021, %v8930
        %v9026 = vmax.f32 %v9022, %v8931
        %v9027 = vmax.f32 %v9023, %v8932
        %v9028 = vmax.f32 %v9024, %v8933
        %v9029 = vmax.f32 %v9025, %v8934
        %v9030 = vmax.f32 %v9026, %v8935
        %v9031 = vmax.f32 %v9027, %v8936
        %v9032 = vmax.f32 %v9028, %v8937
        %v9033 = vmax.f32 %v9029, %v8938
        %v9034 = vmax.f32 %v9030, %v8939
        %v9035 = vmax.f32 %v9031, %v8940
        %v9036 = vmax.f32 %v9032, %v8941
        %v9037 = vmax.f32 %v9033, %v8942
        %v9038 = vmax.f32 %v9034, %v8943
        %v9039 = vmax.f32 %v9035, %v8944
        %v9040 = vmax.f32 %v9036, %v8945
        %v9041 = vmax.f32 %v9037, %v8946
        %v9042 = vmax.f32 %v9038, %v8947
        %v9043 = vmax.f32 %v9039, %v8948
        %v9044 = vmax.f32 %v9040, %v8949
        %v9045 = vmax.f32 %v9041, %v8950
        %v9046 = vmax.f32 %v9042, %v8951
        %v9047 = vmax.f32 %v9043, %v8952
        %v9048 = vmax.f32 %v9044, %v8953
        %v9049 = vmax.f32 %v9045, %v9046
        %v9050 = vmax.f32 %v9047, %v9048
        %v9051 = vmax.f32 %v9049, %v9050
        %9052 = vmax.xlane.f32.xlu0 %v9051
        %v9053 = vpop.xlane.xlu0 %9052
        %vm9054 = vcmp.eq.f32.partialorder %v8922, %v9053
        %vm9055 = vcmp.eq.f32.partialorder %v8923, %v9053
        %vm9056 = vcmp.eq.f32.partialorder %v8924, %v9053
        %vm9057 = vcmp.eq.f32.partialorder %v8925, %v9053
        %vm9058 = vcmp.eq.f32.partialorder %v8926, %v9053
        %vm9059 = vcmp.eq.f32.partialorder %v8927, %v9053
        %vm9060 = vcmp.eq.f32.partialorder %v8928, %v9053
        %vm9061 = vcmp.eq.f32.partialorder %v8929, %v9053
        %vm9062 = vcmp.eq.f32.partialorder %v8930, %v9053
        %vm9063 = vcmp.eq.f32.partialorder %v8931, %v9053
        %vm9064 = vcmp.eq.f32.partialorder %v8932, %v9053
        %vm9065 = vcmp.eq.f32.partialorder %v8933, %v9053
        %vm9066 = vcmp.eq.f32.partialorder %v8934, %v9053
        %vm9067 = vcmp.eq.f32.partialorder %v8935, %v9053
        %vm9068 = vcmp.eq.f32.partialorder %v8936, %v9053
        %vm9069 = vcmp.eq.f32.partialorder %v8937, %v9053
        %vm9070 = vcmp.eq.f32.partialorder %v8938, %v9053
        %vm9071 = vcmp.eq.f32.partialorder %v8939, %v9053
        %vm9072 = vcmp.eq.f32.partialorder %v8940, %v9053
        %vm9073 = vcmp.eq.f32.partialorder %v8941, %v9053
        %vm9074 = vcmp.eq.f32.partialorder %v8942, %v9053
        %vm9075 = vcmp.eq.f32.partialorder %v8943, %v9053
        %vm9076 = vcmp.eq.f32.partialorder %v8944, %v9053
        %vm9077 = vcmp.eq.f32.partialorder %v8945, %v9053
        %vm9078 = vcmp.eq.f32.partialorder %v8946, %v9053
        %vm9079 = vcmp.eq.f32.partialorder %v8947, %v9053
        %vm9080 = vcmp.eq.f32.partialorder %v8948, %v9053
        %vm9081 = vcmp.eq.f32.partialorder %v8949, %v9053
        %vm9082 = vcmp.eq.f32.partialorder %v8950, %v9053
        %vm9083 = vcmp.eq.f32.partialorder %v8951, %v9053
        %vm9084 = vcmp.eq.f32.partialorder %v8952, %v9053
        %vm9085 = vcmp.eq.f32.partialorder %v8953, %v9053
        %v9086 = vsel %vm9054, %v8989, 2147483647
        %v9087 = vsel %vm9055, %v8990, 2147483647
        %v9088 = vsel %vm9056, %v8991, 2147483647
        %v9089 = vsel %vm9057, %v8992, 2147483647
        %v9090 = vsel %vm9058, %v8993, 2147483647
        %v9091 = vsel %vm9059, %v8994, 2147483647
        %v9092 = vsel %vm9060, %v8995, 2147483647
        %v9093 = vsel %vm9061, %v8996, 2147483647
        %v9094 = vsel %vm9062, %v8997, 2147483647
        %v9095 = vsel %vm9063, %v8998, 2147483647
        %v9096 = vsel %vm9064, %v8999, 2147483647
        %v9097 = vsel %vm9065, %v9000, 2147483647
        %v9098 = vsel %vm9066, %v9001, 2147483647
        %v9099 = vsel %vm9067, %v9002, 2147483647
        %v9100 = vsel %vm9068, %v9003, 2147483647
        %v9101 = vsel %vm9069, %v9004, 2147483647
        %v9102 = vsel %vm9070, %v9005, 2147483647
        %v9103 = vsel %vm9071, %v9006, 2147483647
        %v9104 = vsel %vm9072, %v9007, 2147483647
        %v9105 = vsel %vm9073, %v9008, 2147483647
        %v9106 = vsel %vm9074, %v9009, 2147483647
        %v9107 = vsel %vm9075, %v9010, 2147483647
        %v9108 = vsel %vm9076, %v9011, 2147483647
        %v9109 = vsel %vm9077, %v9012, 2147483647
        %v9110 = vsel %vm9078, %v9013, 2147483647
        %v9111 = vsel %vm9079, %v9014, 2147483647
        %v9112 = vsel %vm9080, %v9015, 2147483647
        %v9113 = vsel %vm9081, %v9016, 2147483647
        %v9114 = vsel %vm9082, %v9017, 2147483647
        %v9115 = vsel %vm9083, %v9018, 2147483647
        %v9116 = vsel %vm9084, %v9019, 2147483647
        %v9117 = vsel %vm9085, %v9020, 2147483647
        %vm9118 = vcmp.lt.s32.totalorder %v9086, %v9090
        %v9119 = vsel %vm9118, %v9086, %v9090
        %vm9120 = vcmp.lt.s32.totalorder %v9087, %v9091
        %v9121 = vsel %vm9120, %v9087, %v9091
        %vm9122 = vcmp.lt.s32.totalorder %v9088, %v9092
        %v9123 = vsel %vm9122, %v9088, %v9092
        %vm9124 = vcmp.lt.s32.totalorder %v9089, %v9093
        %v9125 = vsel %vm9124, %v9089, %v9093
        %vm9126 = vcmp.lt.s32.totalorder %v9119, %v9094
        %v9127 = vsel %vm9126, %v9119, %v9094
        %vm9128 = vcmp.lt.s32.totalorder %v9121, %v9095
        %v9129 = vsel %vm9128, %v9121, %v9095
        %vm9130 = vcmp.lt.s32.totalorder %v9123, %v9096
        %v9131 = vsel %vm9130, %v9123, %v9096
        %vm9132 = vcmp.lt.s32.totalorder %v9125, %v9097
        %v9133 = vsel %vm9132, %v9125, %v9097
        %vm9134 = vcmp.lt.s32.totalorder %v9127, %v9098
        %v9135 = vsel %vm9134, %v9127, %v9098
        %vm9136 = vcmp.lt.s32.totalorder %v9129, %v9099
        %v9137 = vsel %vm9136, %v9129, %v9099
        %vm9138 = vcmp.lt.s32.totalorder %v9131, %v9100
        %v9139 = vsel %vm9138, %v9131, %v9100
        %vm9140 = vcmp.lt.s32.totalorder %v9133, %v9101
        %v9141 = vsel %vm9140, %v9133, %v9101
        %vm9142 = vcmp.lt.s32.totalorder %v9135, %v9102
        %v9143 = vsel %vm9142, %v9135, %v9102
        %vm9144 = vcmp.lt.s32.totalorder %v9137, %v9103
        %v9145 = vsel %vm9144, %v9137, %v9103
        %vm9146 = vcmp.lt.s32.totalorder %v9139, %v9104
        %v9147 = vsel %vm9146, %v9139, %v9104
        %vm9148 = vcmp.lt.s32.totalorder %v9141, %v9105
        %v9149 = vsel %vm9148, %v9141, %v9105
        %vm9150 = vcmp.lt.s32.totalorder %v9143, %v9106
        %v9151 = vsel %vm9150, %v9143, %v9106
        %vm9152 = vcmp.lt.s32.totalorder %v9145, %v9107
        %v9153 = vsel %vm9152, %v9145, %v9107
        %vm9154 = vcmp.lt.s32.totalorder %v9147, %v9108
        %v9155 = vsel %vm9154, %v9147, %v9108
        %vm9156 = vcmp.lt.s32.totalorder %v9149, %v9109
        %v9157 = vsel %vm9156, %v9149, %v9109
        %vm9158 = vcmp.lt.s32.totalorder %v9151, %v9110
        %v9159 = vsel %vm9158, %v9151, %v9110
        %vm9160 = vcmp.lt.s32.totalorder %v9153, %v9111
        %v9161 = vsel %vm9160, %v9153, %v9111
        %vm9162 = vcmp.lt.s32.totalorder %v9155, %v9112
        %v9163 = vsel %vm9162, %v9155, %v9112
        %vm9164 = vcmp.lt.s32.totalorder %v9157, %v9113
        %v9165 = vsel %vm9164, %v9157, %v9113
        %vm9166 = vcmp.lt.s32.totalorder %v9159, %v9114
        %v9167 = vsel %vm9166, %v9159, %v9114
        %vm9168 = vcmp.lt.s32.totalorder %v9161, %v9115
        %v9169 = vsel %vm9168, %v9161, %v9115
        %vm9170 = vcmp.lt.s32.totalorder %v9163, %v9116
        %v9171 = vsel %vm9170, %v9163, %v9116
        %vm9172 = vcmp.lt.s32.totalorder %v9165, %v9117
        %v9173 = vsel %vm9172, %v9165, %v9117
        %vm9174 = vcmp.lt.s32.totalorder %v9167, %v9169
        %v9175 = vsel %vm9174, %v9167, %v9169
        %vm9176 = vcmp.lt.s32.totalorder %v9171, %v9173
        %v9177 = vsel %vm9176, %v9171, %v9173
        %vm9178 = vcmp.lt.s32.totalorder %v9175, %v9177
        %v9179 = vsel %vm9178, %v9175, %v9177
        %v9180 = vand.u32 %v9179, 65535
        %v9181 = vshra.s32 %v9179, 16
        %v9182 = vcvt.s32.f32 %v9180
        %v9183 = vcvt.s32.f32 %v9181
        %9184 = vmin.xlane.f32.xlu0 %v9183
        %v9185 = vpop.xlane.xlu0 %9184
        %vm9186 = vcmp.eq.f32.partialorder %v9183, %v9185
        %v9187 = vsel %vm9186, %v9182, inf
        %9188 = vmin.xlane.f32.xlu0 %v9187
        %v9189 = vpop.xlane.xlu0 %9188
        %v9190 = vcvt.f32.s32 %v9189
        %v9191 = vcvt.f32.s32 %v9185
        %v9192 = vshll.u32 %v9191, 16
        %v9193 = vadd.s32 %v9192, %v9190
        %v9194 = vld [vmem:[#allocation5] sm:$0xff]
        %vm9195 = vcmp.gt.f32.partialorder %v9053, %v9194
        %v9196 = vld [vmem:[#allocation6] sm:$0xff]
        %v9197 = vsel %vm9195, %v9193, %v9196
        %vm9198 = vcmask 7168
        %9199 = vst.msk [vmem:[#allocation6] sm:$0xff] %vm9198, %v9197
        %v9200 = vld [vmem:[#allocation5] sm:$0xff]
        %v9201 = vmax.f32 %v9200, %v9053
        %9202 = vst.msk [vmem:[#allocation5] sm:$0xff] %vm9198, %v9201
        %p9203 = scmp.eq.s32.totalorder %s39, 1
        // Predicated region
        $region133: #{mim_processor_forward.1} parent=79 // pred_check
          %p9204 = pneg %p9203
        $region134: #{mim_processor_forward.1} parent=79 // pred_check_branch
          %9206 = sbr.rel (%p9204) target = $region136
        $region135: #{mim_processor_forward.1} parent=79 // pred_region
          %v9207 = vld [vmem:[#allocation6] sm:$0xff]
          %v9208 = vld [vmem:[%s14] sm:$0xff]
          %vm9209 = vcmp.lt.f32.partialorder %v9208, 0.4
          %v9210 = vsel %vm9209, 1, 0
          %v9211 = vcvt.s32.f32 %v9210
          %9212 = vst.msk [vmem:[%s16] sm:$0xff] %vm9198, %v9211
          %v9213 = vsel %vm9209, %v9207, 4294967196
          %9214 = vst.msk [vmem:[%s15] sm:$0xff] %vm9198, %v9213
        $region136: #{mim_processor_forward.1} parent=79 // pred_fallthru
          _
        // Predicated region
        $region137: #{mim_processor_forward.1} parent=79 // pred_check
          %p9215 = pneg %p382
        $region138: #{mim_processor_forward.1} parent=79 // pred_check_branch
          %9217 = sbr.rel (%p9215) target = $region140
        $region139: #{mim_processor_forward.1} parent=79 // pred_region
          _
        $region140: #{mim_processor_forward.1} parent=79 // pred_fallthru
          _
        // Predicated region
        $region141: #{mim_processor_forward.1} parent=79 // pred_check
          %p9218 = pneg %p403
        $region142: #{mim_processor_forward.1} parent=79 // pred_check_branch
          %9220 = sbr.rel (%p9218) target = $region144
        $region143: #{mim_processor_forward.1} parent=79 // pred_region
          _
        $region144: #{mim_processor_forward.1} parent=79 // pred_fallthru
          _
        // Predicated region
        $region145: #{mim_processor_forward.1} parent=79 // pred_check
          %p9221 = pneg %p382
        $region146: #{mim_processor_forward.1} parent=79 // pred_check_branch
          %9223 = sbr.rel (%p9221) target = $region148
        $region147: #{mim_processor_forward.1} parent=79 // pred_region
          _
        $region148: #{mim_processor_forward.1} parent=79 // pred_fallthru
          _
        // Predicated region
        $region149: #{mim_processor_forward.1} parent=79 // pred_check
          %p9224 = pneg %p403
        $region150: #{mim_processor_forward.1} parent=79 // pred_check_branch
          %9226 = sbr.rel (%p9224) target = $region152
        $region151: #{mim_processor_forward.1} parent=79 // pred_region
          _
        $region152: #{mim_processor_forward.1} parent=79 // pred_fallthru
          _
      $region80: #{mim_processor_forward.1} parent=5 // pred_fallthru
        _
      %p9227 = scmp.le.s32.totalorder 2, %s34
      // Predicated region
      $region153: #{mim_processor_forward.1} parent=5 // pred_check
        %p9228 = pneg %p9227
      $region154: #{mim_processor_forward.1} parent=5 // pred_check_branch
        %9230 = sbr.rel (%p9228) target = $region156
      $region155: #{mim_processor_forward.1} parent=5 // pred_region
        %s9231 = ssub.s32 %s34, 2
      $region156: #{mim_processor_forward.1} parent=5 // pred_fallthru
        _
    $region6: #{mim_processor_forward.1} parent=1 // loop_footer
      %s38 = sadd.s32 1, %s34
    $region7: #{mim_processor_forward.1} parent=1 // loop_footer_branch
      %33 = sbr.rel target = $region3
    $region8: #{mim_processor_forward.1} parent=1 // loop_exit
      _
    %9232 = vsyncpa [#allocation8], 1
    %s9233 = scalar_lea.sflag [#allocation8], 1
    %9234 = vsyncpa %s9233, 1
    %9235 = vsyncpa [#allocation10], 1
    %9236 = vsyncpa [#allocation13], 1
    %9237 = vsyncpa [#allocation16], 1
    %9238 = vsyncpa [#allocation19], 1
    %9239 = vsyncpa [#allocation22], 1
    %s9240 = scalar_lea.sflag [#allocation22], 1
    %9241 = vsyncpa %s9240, 1
    %9242 = vsyncpa [#allocation25], 1
    %s9243 = scalar_lea.sflag [#allocation25], 1
    %9244 = vsyncpa %s9243, 1

</llo_original>
